<compile_context>
chip_gen: v6e
topology: v6e:2x2x1
jax: 0.10.0
libtpu: 0.0.40
codegen_flags: <defaults>
</compile_context>

<pallas_src>
import jax
import jax.numpy as jnp
from jax import lax
from jax.experimental import pallas as pl
from jax.experimental.pallas import tpu as pltpu

EMB_DIM = 300
E_PAD = 384              # per-tap lane padding -> 128-aligned im2col concat offsets
N_FILT = 128
KS = (3, 7, 11)          # conv kernel heights (ascending)
K_MAX = max(KS)
K_MIN = min(KS)
HID = 84
HID_PAD = 128            # lane-dense padded hidden dim
N_CLS = 2
N_CLS_PAD = 128          # lane-dense padded class dim (padded logits masked to -1e30)
NEG = -1.0e30            # large-negative additive mask value (avoids inf arithmetic)


def _round_up(x, m):
    return (x + m - 1) // m * m


# ----------------------------------------------------------------------------------
# Kernel
# ----------------------------------------------------------------------------------
def _make_kernel(TB, T_PAD, TCHUNK, n_chunks):
    def kernel(emb_ref,      # (TB, L_pad, E_PAD)      bf16
               mask_ref,     # (1, T_PAD, 3*N_FILT)    f32 additive (0 / -1e30)
               wf_ref,       # (K_MAX*E_PAD, 3*N_FILT) bf16 fused conv weights
               bf_ref,       # (1, 3*N_FILT)           f32 fused conv bias
               lw1_ref,      # (3*N_FILT, HID_PAD)     bf16
               lb1_ref,      # (1, HID_PAD)            f32
               lw2_ref,      # (HID_PAD, N_CLS_PAD)    bf16
               lb2_ref,      # (1, N_CLS_PAD)          f32 (padded entries = -1e30)
               out_ref):     # (TB, N_CLS_PAD)         f32

        def conv_chunk(t0, tlen):
            # im2col: K_MAX shifted windows concatenated along lanes (offsets 384*i,
            # all 128-aligned) -> single fused MXU matmul against the packed weights.
            cols = [emb_ref[:, pl.ds(t0 + i, tlen), :] for i in range(K_MAX)]
            x = jnp.concatenate(cols, axis=-1)                  # (TB, tlen, K_MAX*E_PAD)
            x = x.reshape(TB * tlen, K_MAX * E_PAD)             # tlen % 16 == 0 -> free
            acc = jnp.dot(x, wf_ref[...],
                          preferred_element_type=jnp.float32)   # (TB*tlen, 384) f32
            acc = acc.reshape(TB, tlen, 3 * N_FILT)
            acc = acc + mask_ref[:, pl.ds(t0, tlen), :]         # kill invalid windows
            return jnp.max(acc, axis=1)                         # (TB, 384) f32

        if n_chunks == 1:
            pooled = conv_chunk(0, T_PAD)
        else:
            # Online max over fixed-size time chunks bounds the im2col VMEM footprint.
            def body(c, m):
                t0 = pl.multiple_of(c * TCHUNK, TCHUNK)
                return jnp.maximum(m, conv_chunk(t0, TCHUNK))
            pooled = lax.fori_loop(0, n_chunks, body,
                                   jnp.full((TB, 3 * N_FILT), NEG, jnp.float32))

        # conv bias after the max (max(x) + b == max(x + b))
        feat = pooled + bf_ref[...]                              # (TB, 384) f32

        # classifier: Linear -> ReLU -> (Dropout = identity) -> Linear -> Softmax
        h = jnp.dot(feat.astype(jnp.bfloat16), lw1_ref[...],
                    preferred_element_type=jnp.float32) + lb1_ref[...]
        h = jnp.maximum(h, 0.0)                                  # (TB, HID_PAD)
        logits = jnp.dot(h.astype(jnp.bfloat16), lw2_ref[...],
                         preferred_element_type=jnp.float32) + lb2_ref[...]
        logits = logits - jnp.max(logits, axis=-1, keepdims=True)
        ev = jnp.exp(logits)                                     # padded lanes -> 0
        out_ref[...] = (ev / jnp.sum(ev, axis=-1, keepdims=True)).astype(out_ref.dtype)

    return kernel


# ----------------------------------------------------------------------------------
# Parameter packing (fuse/pad per-branch conv + classifier params into kernel layout)
# ----------------------------------------------------------------------------------
def pack_params(params):
    w1, b1, w2, b2, w3, b3, lw1, lb1, lw2, lb2 = params
    C = N_FILT
    wf = jnp.zeros((K_MAX, E_PAD, 3 * C), jnp.float32)
    wf = wf.at[:KS[0], :EMB_DIM, 0 * C:1 * C].set(w1)
    wf = wf.at[:KS[1], :EMB_DIM, 1 * C:2 * C].set(w2)
    wf = wf.at[:KS[2], :EMB_DIM, 2 * C:3 * C].set(w3)
    wf = wf.reshape(K_MAX * E_PAD, 3 * C).astype(jnp.bfloat16)
    bf = jnp.concatenate([b1, b2, b3], axis=-1).astype(jnp.float32)      # (1, 384)

    lw1p = jnp.zeros((3 * C, HID_PAD), jnp.float32).at[:, :HID].set(lw1)
    lb1p = jnp.zeros((1, HID_PAD), jnp.float32).at[:, :HID].set(lb1)
    lw2p = jnp.zeros((HID_PAD, N_CLS_PAD), jnp.float32).at[:HID, :N_CLS].set(lw2)
    lb2p = jnp.full((1, N_CLS_PAD), NEG, jnp.float32).at[:, :N_CLS].set(lb2)
    return (wf, bf, lw1p.astype(jnp.bfloat16), lb1p,
            lw2p.astype(jnp.bfloat16), lb2p)


def _build_time_mask(L, T_PAD):
    """(1, T_PAD, 384) additive mask: 0 on valid windows, NEG on invalid ones."""
    t_idx = jnp.arange(T_PAD, dtype=jnp.int32)[:, None]
    limits = jnp.concatenate(
        [jnp.full((N_FILT,), L - k + 1, jnp.int32) for k in KS])         # (384,)
    mask = jnp.where(t_idx < limits[None, :], 0.0, NEG).astype(jnp.float32)
    return mask[None]


# ----------------------------------------------------------------------------------
# Tile-size selection
# ----------------------------------------------------------------------------------
def _vmem_budget_bytes():
    """Per-generation VMEM budget for tiling (v5e/v6e: 128 MiB phys; v7x: 64 MiB)."""
    try:
        kind = jax.devices()[0].device_kind.lower()
    except Exception:  # pragma: no cover
        kind = ""
    if ("v5" in kind) or ("v6" in kind):
        return 100 * 1024 * 1024
    return 40 * 1024 * 1024        # v7x / unknown: conservative


def _pick_batch_tile(B, L_pad, T_PAD, TCHUNK, budget):
    fixed = (2 * K_MAX * E_PAD * 3 * N_FILT * 2                      # wf (dbl-buffered)
             + 2 * (3 * N_FILT * HID_PAD + HID_PAD * N_CLS_PAD) * 2  # lw1 / lw2
             + 2 * T_PAD * 3 * N_FILT * 4                            # mask
             + (4 << 20))                                            # headroom
    per_tb = (2 * L_pad * E_PAD * 2            # emb tile (dbl-buffered, bf16)
              + TCHUNK * K_MAX * E_PAD * 2     # im2col chunk (bf16)
              + TCHUNK * 3 * N_FILT * 4        # f32 matmul acc chunk
              + 2 * N_CLS_PAD * 4              # out tile
              + 8 * 3 * N_FILT * 4)            # pooled/feat/h temporaries
    tb = max(8, (budget - fixed) // per_tb)
    tb = min(tb, 128)
    # v7x megacore: keep >= 2 grid steps when the batch is big enough to allow it.
    tb = min(tb, max(8, _round_up(-(-B // 2), 8)))
    return int(tb // 8 * 8)


# ----------------------------------------------------------------------------------
# Forward wrapper
# ----------------------------------------------------------------------------------
def textcnn_forward(emb, params, *, max_time_chunk=256):
    B, L, E = emb.shape
    assert E == EMB_DIM and L >= K_MAX, "seq len must be >= widest conv kernel"

    T = L - K_MIN + 1                                    # number of k=3 windows
    tchunk_cap = max(16, _round_up(max_time_chunk, 16))
    n_chunks = -(-T // tchunk_cap)
    TCHUNK = _round_up(-(-T // n_chunks), 16)            # multiple of 16 (bf16 sublanes)
    T_PAD = n_chunks * TCHUNK
    L_pad = T_PAD + (K_MAX - 1)

    wf, bf, lw1p, lb1p, lw2p, lb2p = pack_params(params)
    mask = _build_time_mask(L, T_PAD)

    budget = _vmem_budget_bytes()
    TB = _pick_batch_tile(B, L_pad, T_PAD, TCHUNK, budget)
    Bp = _round_up(B, TB)

    # Pad batch / sequence / embedding lanes in one shot, cast to bf16 at the boundary
    # (f32 accumulation happens inside the kernel on the MXU).
    emb_p = jnp.pad(emb, ((0, Bp - B), (0, L_pad - L), (0, E_PAD - E))
                    ).astype(jnp.bfloat16)

    grid = (Bp // TB,)

    flops = (2 * Bp * T_PAD * (K_MAX * E_PAD) * (3 * N_FILT)
             + 2 * Bp * (3 * N_FILT * HID_PAD + HID_PAD * N_CLS_PAD))
    ins = (emb_p, mask, wf, bf, lw1p, lb1p, lw2p, lb2p)
    bytes_accessed = (sum(int(a.size) * a.dtype.itemsize for a in ins)
                      + Bp * N_CLS_PAD * 4)

    out = pl.pallas_call(
        _make_kernel(TB, T_PAD, TCHUNK, n_chunks),
        out_shape=jax.ShapeDtypeStruct((Bp, N_CLS_PAD), jnp.float32),
        grid=grid,
        in_specs=[
            pl.BlockSpec((TB, L_pad, E_PAD), lambda b: (b, 0, 0)),        # emb tile
            pl.BlockSpec((1, T_PAD, 3 * N_FILT), lambda b: (0, 0, 0)),    # mask (resident)
            pl.BlockSpec((K_MAX * E_PAD, 3 * N_FILT), lambda b: (0, 0)),  # fused conv W
            pl.BlockSpec((1, 3 * N_FILT), lambda b: (0, 0)),
            pl.BlockSpec((3 * N_FILT, HID_PAD), lambda b: (0, 0)),
            pl.BlockSpec((1, HID_PAD), lambda b: (0, 0)),
            pl.BlockSpec((HID_PAD, N_CLS_PAD), lambda b: (0, 0)),
            pl.BlockSpec((1, N_CLS_PAD), lambda b: (0, 0)),
        ],
        out_specs=pl.BlockSpec((TB, N_CLS_PAD), lambda b: (b, 0)),
        compiler_params=pltpu.CompilerParams(
            dimension_semantics=("parallel",),
            vmem_limit_bytes=int(budget)),
        cost_estimate=pl.CostEstimate(
            flops=int(flops), transcendentals=int(Bp * N_CLS_PAD),
            bytes_accessed=int(bytes_accessed)),
    )(*ins)
    return out[:B, :N_CLS]


# ----------------------------------------------------------------------------------
# Params / reference / test
# ----------------------------------------------------------------------------------
def init_params(vocab_size, key):
    keys = jax.random.split(key, 12)
    emb_table = jax.random.normal(keys[0], (vocab_size, EMB_DIM), jnp.float32) * 0.1
    params = []
    for idx, k in enumerate(KS):
        w = jax.random.normal(keys[1 + 2 * idx], (k, EMB_DIM, N_FILT), jnp.float32) * 0.05
        b = jax.random.normal(keys[2 + 2 * idx], (1, N_FILT), jnp.float32) * 0.05
        params += [w, b]
    lw1 = jax.random.normal(keys[7], (N_FILT * 3, HID), jnp.float32) * 0.05
    lb1 = jax.random.normal(keys[8], (1, HID), jnp.float32) * 0.05
    lw2 = jax.random.normal(keys[9], (HID, N_CLS), jnp.float32) * 0.05
    lb2 = jax.random.normal(keys[10], (1, N_CLS), jnp.float32) * 0.05
    params += [lw1, lb1, lw2, lb2]
    return emb_table, params


def ref_forward(emb, params):
    """Pure-JAX f32 reference mirroring the PyTorch module (eval mode)."""
    w1, b1, w2, b2, w3, b3, lw1, lb1, lw2, lb2 = params

    def branch(w, b, k):
        T = emb.shape[1] - k + 1
        acc = jnp.zeros((emb.shape[0], T, N_FILT), jnp.float32)
        for i in range(k):
            acc = acc + jnp.einsum('bte,ec->btc', emb[:, i:i + T, :], w[i])
        return jnp.max(acc + b[None], axis=1)

    feat = jnp.concatenate(
        [branch(w1, b1, KS[0]), branch(w2, b2, KS[1]), branch(w3, b3, KS[2])], -1)
    h = jnp.maximum(feat @ lw1 + lb1, 0.0)
    return jax.nn.softmax(h @ lw2 + lb2, axis=-1)


if __name__ == "__main__":
    key = jax.random.PRNGKey(0)
    vocab_size = 100
    emb_table, params = init_params(vocab_size, key)

    # --- test 1: small sequence, single time chunk -------------------------------
    B, L = 2, 16
    ids = jax.random.randint(jax.random.PRNGKey(1), (B, L), 0, vocab_size, jnp.int32)
    emb = emb_table[ids]                       # (B, L, 300) f32; gather is JAX glue
    out = jax.block_until_ready(textcnn_forward(emb, params))
    assert out.shape == (B, N_CLS)
    assert bool(jnp.all(jnp.isfinite(out)))
    ref = ref_forward(emb, params)
    assert bool(jnp.allclose(out, ref, atol=5e-2)), (out, ref)

    # --- test 2: exercise the in-kernel time-chunked (online max) path -----------
    B2, L2 = 2, 40
    ids2 = jax.random.randint(jax.random.PRNGKey(2), (B2, L2), 0, vocab_size, jnp.int32)
    emb2 = emb_table[ids2]
    out2 = jax.block_until_ready(textcnn_forward(emb2, params, max_time_chunk=16))
    assert out2.shape == (B2, N_CLS)
    assert bool(jnp.all(jnp.isfinite(out2)))
    ref2 = ref_forward(emb2, params)
    assert bool(jnp.allclose(out2, ref2, atol=5e-2)), (out2, ref2)

    print("KERNEL_OK")
</pallas_src>

<mosaic_0001>
module attributes {stable_mosaic.version = 11 : i64} {
  func.func @kernel(%arg0: i32, %arg1: memref<8x26x384xbf16, #tpu.memory_space<vmem>>, %arg2: memref<1x16x384xf32, #tpu.memory_space<vmem>>, %arg3: memref<4224x384xbf16, #tpu.memory_space<vmem>>, %arg4: memref<1x384xf32, #tpu.memory_space<vmem>>, %arg5: memref<384x128xbf16, #tpu.memory_space<vmem>>, %arg6: memref<1x128xf32, #tpu.memory_space<vmem>>, %arg7: memref<128x128xbf16, #tpu.memory_space<vmem>>, %arg8: memref<1x128xf32, #tpu.memory_space<vmem>>, %arg9: memref<8x128xf32, #tpu.memory_space<vmem>>) attributes {dimension_semantics = [#tpu.dimension_semantics<parallel>], iteration_bounds = array<i64: 1>, scalar_prefetch = 0 : i64, scratch_operands = 0 : i64, tpu.core_type = #tpu.core_type<tc>, window_params = [{transform_indices = @transform_0, window_bounds = array<i64: 8, 26, 384>}, {pipeline_mode = #tpu.pipeline_mode<synchronous>, transform_indices = @transform_1, window_bounds = array<i64: 1, 16, 384>}, {pipeline_mode = #tpu.pipeline_mode<synchronous>, transform_indices = @transform_2, window_bounds = array<i64: 4224, 384>}, {pipeline_mode = #tpu.pipeline_mode<synchronous>, transform_indices = @transform_3, window_bounds = array<i64: 1, 384>}, {pipeline_mode = #tpu.pipeline_mode<synchronous>, transform_indices = @transform_4, window_bounds = array<i64: 384, 128>}, {pipeline_mode = #tpu.pipeline_mode<synchronous>, transform_indices = @transform_5, window_bounds = array<i64: 1, 128>}, {pipeline_mode = #tpu.pipeline_mode<synchronous>, transform_indices = @transform_6, window_bounds = array<i64: 128, 128>}, {pipeline_mode = #tpu.pipeline_mode<synchronous>, transform_indices = @transform_7, window_bounds = array<i64: 1, 128>}, {transform_indices = @transform_8, window_bounds = array<i64: 8, 128>}]} {
    %c0 = arith.constant 0 : index
    %c0_0 = arith.constant 0 : index
    %c0_1 = arith.constant 0 : index
    %0 = vector.load %arg1[%c0, %c0_0, %c0_1] : memref<8x26x384xbf16, #tpu.memory_space<vmem>>, vector<8x16x384xbf16>
    %c0_2 = arith.constant 0 : index
    %c1 = arith.constant 1 : index
    %c0_3 = arith.constant 0 : index
    %1 = vector.load %arg1[%c0_2, %c1, %c0_3] : memref<8x26x384xbf16, #tpu.memory_space<vmem>>, vector<8x16x384xbf16>
    %c0_4 = arith.constant 0 : index
    %c2 = arith.constant 2 : index
    %c0_5 = arith.constant 0 : index
    %2 = vector.load %arg1[%c0_4, %c2, %c0_5] : memref<8x26x384xbf16, #tpu.memory_space<vmem>>, vector<8x16x384xbf16>
    %c0_6 = arith.constant 0 : index
    %c3 = arith.constant 3 : index
    %c0_7 = arith.constant 0 : index
    %3 = vector.load %arg1[%c0_6, %c3, %c0_7] : memref<8x26x384xbf16, #tpu.memory_space<vmem>>, vector<8x16x384xbf16>
    %c0_8 = arith.constant 0 : index
    %c4 = arith.constant 4 : index
    %c0_9 = arith.constant 0 : index
    %4 = vector.load %arg1[%c0_8, %c4, %c0_9] : memref<8x26x384xbf16, #tpu.memory_space<vmem>>, vector<8x16x384xbf16>
    %c0_10 = arith.constant 0 : index
    %c5 = arith.constant 5 : index
    %c0_11 = arith.constant 0 : index
    %5 = vector.load %arg1[%c0_10, %c5, %c0_11] : memref<8x26x384xbf16, #tpu.memory_space<vmem>>, vector<8x16x384xbf16>
    %c0_12 = arith.constant 0 : index
    %c6 = arith.constant 6 : index
    %c0_13 = arith.constant 0 : index
    %6 = vector.load %arg1[%c0_12, %c6, %c0_13] : memref<8x26x384xbf16, #tpu.memory_space<vmem>>, vector<8x16x384xbf16>
    %c0_14 = arith.constant 0 : index
    %c7 = arith.constant 7 : index
    %c0_15 = arith.constant 0 : index
    %7 = vector.load %arg1[%c0_14, %c7, %c0_15] : memref<8x26x384xbf16, #tpu.memory_space<vmem>>, vector<8x16x384xbf16>
    %c0_16 = arith.constant 0 : index
    %c8 = arith.constant 8 : index
    %c0_17 = arith.constant 0 : index
    %8 = vector.load %arg1[%c0_16, %c8, %c0_17] : memref<8x26x384xbf16, #tpu.memory_space<vmem>>, vector<8x16x384xbf16>
    %c0_18 = arith.constant 0 : index
    %c9 = arith.constant 9 : index
    %c0_19 = arith.constant 0 : index
    %9 = vector.load %arg1[%c0_18, %c9, %c0_19] : memref<8x26x384xbf16, #tpu.memory_space<vmem>>, vector<8x16x384xbf16>
    %c0_20 = arith.constant 0 : index
    %c10 = arith.constant 10 : index
    %c0_21 = arith.constant 0 : index
    %10 = vector.load %arg1[%c0_20, %c10, %c0_21] : memref<8x26x384xbf16, #tpu.memory_space<vmem>>, vector<8x16x384xbf16>
    %11 = tpu.concatenate %0, %1, %2, %3, %4, %5, %6, %7, %8, %9, %10 in 2 : vector<8x16x384xbf16>, vector<8x16x384xbf16>, vector<8x16x384xbf16>, vector<8x16x384xbf16>, vector<8x16x384xbf16>, vector<8x16x384xbf16>, vector<8x16x384xbf16>, vector<8x16x384xbf16>, vector<8x16x384xbf16>, vector<8x16x384xbf16>, vector<8x16x384xbf16> -> vector<8x16x4224xbf16>
    %12 = vector.shape_cast %11 : vector<8x16x4224xbf16> to vector<128x4224xbf16>
    %c0_22 = arith.constant 0 : index
    %c0_23 = arith.constant 0 : index
    %13 = vector.load %arg3[%c0_22, %c0_23] : memref<4224x384xbf16, #tpu.memory_space<vmem>>, vector<4224x384xbf16>
    %cst = arith.constant dense<0.000000e+00> : vector<128x384xf32>
    %14 = tpu.matmul %12, %13, %cst {dimension_numbers = #tpu.dot_dimension_numbers<[1], [0], [0], [1], [0, 0, 1, 1], [], []>} : vector<128x4224xbf16>, vector<4224x384xbf16>, vector<128x384xf32> -> vector<128x384xf32>
    %15 = vector.shape_cast %14 : vector<128x384xf32> to vector<8x16x384xf32>
    %c0_24 = arith.constant 0 : index
    %c0_25 = arith.constant 0 : index
    %c0_26 = arith.constant 0 : index
    %16 = vector.load %arg2[%c0_24, %c0_25, %c0_26] : memref<1x16x384xf32, #tpu.memory_space<vmem>>, vector<1x16x384xf32>
    %17 = vector.broadcast %16 : vector<1x16x384xf32> to vector<8x16x384xf32>
    %18 = arith.addf %15, %17 : vector<8x16x384xf32>
    %cst_27 = arith.constant dense<0xFF800000> : vector<8x384xf32>
    %19 = vector.multi_reduction <maximumf>, %18, %cst_27 [1] : vector<8x16x384xf32> to vector<8x384xf32>
    %c0_28 = arith.constant 0 : index
    %c0_29 = arith.constant 0 : index
    %20 = vector.load %arg4[%c0_28, %c0_29] : memref<1x384xf32, #tpu.memory_space<vmem>>, vector<1x384xf32>
    %21 = vector.broadcast %20 : vector<1x384xf32> to vector<8x384xf32>
    %22 = arith.addf %19, %21 : vector<8x384xf32>
    %23 = arith.truncf %22 : vector<8x384xf32> to vector<8x384xbf16>
    %c0_30 = arith.constant 0 : index
    %c0_31 = arith.constant 0 : index
    %24 = vector.load %arg5[%c0_30, %c0_31] : memref<384x128xbf16, #tpu.memory_space<vmem>>, vector<384x128xbf16>
    %cst_32 = arith.constant dense<0.000000e+00> : vector<8x128xf32>
    %25 = tpu.matmul %23, %24, %cst_32 {dimension_numbers = #tpu.dot_dimension_numbers<[1], [0], [0], [1], [0, 0, 1, 1], [], []>} : vector<8x384xbf16>, vector<384x128xbf16>, vector<8x128xf32> -> vector<8x128xf32>
    %c0_33 = arith.constant 0 : index
    %c0_34 = arith.constant 0 : index
    %26 = vector.load %arg6[%c0_33, %c0_34] : memref<1x128xf32, #tpu.memory_space<vmem>>, vector<1x128xf32>
    %27 = vector.broadcast %26 : vector<1x128xf32> to vector<8x128xf32>
    %28 = arith.addf %25, %27 : vector<8x128xf32>
    %cst_35 = arith.constant 0.000000e+00 : f32
    %29 = vector.broadcast %cst_35 : f32 to vector<8x128xf32>
    %30 = arith.maximumf %28, %29 : vector<8x128xf32>
    %31 = arith.truncf %30 : vector<8x128xf32> to vector<8x128xbf16>
    %c0_36 = arith.constant 0 : index
    %c0_37 = arith.constant 0 : index
    %32 = vector.load %arg7[%c0_36, %c0_37] : memref<128x128xbf16, #tpu.memory_space<vmem>>, vector<128x128xbf16>
    %cst_38 = arith.constant dense<0.000000e+00> : vector<8x128xf32>
    %33 = tpu.matmul %31, %32, %cst_38 {dimension_numbers = #tpu.dot_dimension_numbers<[1], [0], [0], [1], [0, 0, 1, 1], [], []>} : vector<8x128xbf16>, vector<128x128xbf16>, vector<8x128xf32> -> vector<8x128xf32>
    %c0_39 = arith.constant 0 : index
    %c0_40 = arith.constant 0 : index
    %34 = vector.load %arg8[%c0_39, %c0_40] : memref<1x128xf32, #tpu.memory_space<vmem>>, vector<1x128xf32>
    %35 = vector.broadcast %34 : vector<1x128xf32> to vector<8x128xf32>
    %36 = arith.addf %33, %35 : vector<8x128xf32>
    %cst_41 = arith.constant dense<0xFF800000> : vector<8xf32>
    %37 = vector.multi_reduction <maximumf>, %36, %cst_41 [1] : vector<8x128xf32> to vector<8xf32>
    %38 = vector.shape_cast %37 : vector<8xf32> to vector<8x1xf32>
    %39 = vector.broadcast %38 : vector<8x1xf32> to vector<8x128xf32>
    %40 = arith.subf %36, %39 : vector<8x128xf32>
    %41 = math.exp %40 : vector<8x128xf32>
    %cst_42 = arith.constant dense<0.000000e+00> : vector<8xf32>
    %42 = vector.multi_reduction <add>, %41, %cst_42 [1] : vector<8x128xf32> to vector<8xf32>
    %43 = vector.shape_cast %42 : vector<8xf32> to vector<8x1xf32>
    %44 = vector.broadcast %43 : vector<8x1xf32> to vector<8x128xf32>
    %45 = arith.divf %41, %44 : vector<8x128xf32>
    %c0_43 = arith.constant 0 : index
    %c0_44 = arith.constant 0 : index
    %46 = vector.load %arg9[%c0_43, %c0_44] : memref<8x128xf32, #tpu.memory_space<vmem>>, vector<8x128xf32>
    tpu.vector_store %arg9[%c0_43, %c0_44], %45 {strides = array<i32>} : memref<8x128xf32, #tpu.memory_space<vmem>>, vector<8x128xf32>,
    return
  }
  func.func @transform_0(%arg0: i32) -> (i32, i32, i32) {
    %c0_i32 = arith.constant 0 : i32
    %c0_i32_0 = arith.constant 0 : i32
    %c0_i32_1 = arith.constant 0 : i32
    return %arg0, %c0_i32, %c0_i32_0 : i32, i32, i32
  }
  func.func @transform_1(%arg0: i32) -> (i32, i32, i32) {
    %c0_i32 = arith.constant 0 : i32
    %c0_i32_0 = arith.constant 0 : i32
    %c0_i32_1 = arith.constant 0 : i32
    %c0_i32_2 = arith.constant 0 : i32
    return %c0_i32, %c0_i32_0, %c0_i32_1 : i32, i32, i32
  }
  func.func @transform_2(%arg0: i32) -> (i32, i32) {
    %c0_i32 = arith.constant 0 : i32
    %c0_i32_0 = arith.constant 0 : i32
    %c0_i32_1 = arith.constant 0 : i32
    return %c0_i32, %c0_i32_0 : i32, i32
  }
  func.func @transform_3(%arg0: i32) -> (i32, i32) {
    %c0_i32 = arith.constant 0 : i32
    %c0_i32_0 = arith.constant 0 : i32
    %c0_i32_1 = arith.constant 0 : i32
    return %c0_i32, %c0_i32_0 : i32, i32
  }
  func.func @transform_4(%arg0: i32) -> (i32, i32) {
    %c0_i32 = arith.constant 0 : i32
    %c0_i32_0 = arith.constant 0 : i32
    %c0_i32_1 = arith.constant 0 : i32
    return %c0_i32, %c0_i32_0 : i32, i32
  }
  func.func @transform_5(%arg0: i32) -> (i32, i32) {
    %c0_i32 = arith.constant 0 : i32
    %c0_i32_0 = arith.constant 0 : i32
    %c0_i32_1 = arith.constant 0 : i32
    return %c0_i32, %c0_i32_0 : i32, i32
  }
  func.func @transform_6(%arg0: i32) -> (i32, i32) {
    %c0_i32 = arith.constant 0 : i32
    %c0_i32_0 = arith.constant 0 : i32
    %c0_i32_1 = arith.constant 0 : i32
    return %c0_i32, %c0_i32_0 : i32, i32
  }
  func.func @transform_7(%arg0: i32) -> (i32, i32) {
    %c0_i32 = arith.constant 0 : i32
    %c0_i32_0 = arith.constant 0 : i32
    %c0_i32_1 = arith.constant 0 : i32
    return %c0_i32, %c0_i32_0 : i32, i32
  }
  func.func @transform_8(%arg0: i32) -> (i32, i32) {
    %c0_i32 = arith.constant 0 : i32
    %c0_i32_0 = arith.constant 0 : i32
    return %arg0, %c0_i32 : i32, i32
  }
}

</mosaic_0001>

<llo_original>
// kernel: tpu_custom_call.1
$region0: #{tpu_custom_call.1}
  #allocation0 [shape = 'u32[]', space=smem, size = 0x4, offset = 0x4, fixed_abs, tag = 'smem constant byte address 0x4 - core index']
  #allocation1 [shape = 'u32[144,128]{1,0:T(1,128)}', space=vmem, size = 0x12000, scoped, tag = 'internal scratch']
  %s0 = inlined_call_operand.vmem [shape: bf16[8,26,384], index: 0, kind: input, shape index: {}]
  %s1 = inlined_call_operand.hbm [shape: f32[1,16,384], index: 1, kind: input, shape index: {}]
  %s2 = inlined_call_operand.hbm [shape: bf16[4224,384], index: 2, kind: input, shape index: {}]
  %s3 = inlined_call_operand.hbm [shape: f32[1,384], index: 3, kind: input, shape index: {}]
  %s4 = inlined_call_operand.hbm [shape: bf16[384,128], index: 4, kind: input, shape index: {}]
  %s5 = inlined_call_operand.hbm [shape: f32[1,128], index: 5, kind: input, shape index: {}]
  %s6 = inlined_call_operand.hbm [shape: bf16[128,128], index: 6, kind: input, shape index: {}]
  %s7 = inlined_call_operand.hbm [shape: f32[1,128], index: 7, kind: input, shape index: {}]
  %s8 = inlined_call_operand.hbm [shape: f32[8,128], index: 8, kind: output, shape index: {}]
  %s9 = sld [smem:[#allocation0]]
  $region70: #{tpu_custom_call.1} parent=0
    _
  %s11 = ssub.s32 1, %s9
  %s12 = scalar_select 0, %s11, %s9
  $region1: #{tpu_custom_call.1} parent=0
    #allocation2 [shape = 'u8[24576]{0}', space=vmem, size = 0x6000, scoped, tag = 'input window, operand 1, single buffered']
    #allocation3 [shape = 's32[1]{0}', space=sflag, size = 0x4, scoped, tag = 'scoped memory for tpu_custom_call.1']
    #allocation4 [shape = 's32[1]{0}', space=sflag, size = 0x4, scoped, tag = 'scoped memory for tpu_custom_call.1']
    #allocation5 [shape = 'u8[3244032]{0}', space=vmem, size = 0x318000, scoped, tag = 'input window, operand 2, single buffered']
    #allocation6 [shape = 's32[1]{0}', space=sflag, size = 0x4, scoped, tag = 'scoped memory for tpu_custom_call.1']
    #allocation7 [shape = 'u8[1536]{0}', space=vmem, size = 0x800, scoped, tag = 'input window, operand 3, single buffered']
    #allocation8 [shape = 'u8[98304]{0}', space=vmem, size = 0x18000, scoped, tag = 'input window, operand 4, single buffered']
    #allocation9 [shape = 's32[1]{0}', space=sflag, size = 0x4, scoped, tag = 'scoped memory for tpu_custom_call.1']
    #allocation10 [shape = 'u8[512]{0}', space=vmem, size = 0x400, scoped, tag = 'input window, operand 5, single buffered']
    #allocation11 [shape = 'u8[32768]{0}', space=vmem, size = 0x8000, scoped, tag = 'input window, operand 6, single buffered']
    #allocation12 [shape = 's32[1]{0}', space=sflag, size = 0x4, scoped, tag = 'scoped memory for tpu_custom_call.1']
    #allocation13 [shape = 'u8[512]{0}', space=vmem, size = 0x400, scoped, tag = 'input window, operand 7, single buffered']
    #allocation14 [shape = 'u8[4096]{0}', space=vmem, size = 0x1000, scoped, tag = 'output window, operand 0, single buffered']
    %13 = vsyncpa [#allocation3], 0
    %14 = vsyncpa [#allocation6], 0
    %15 = vsyncpa [#allocation9], 0
    %16 = vsyncpa [#allocation12], 0
    %17 = vsyncpa [#allocation4], 0
    // Predicated region
    $region2: #{tpu_custom_call.1} parent=1 // pred_check
      _
    $region3: #{tpu_custom_call.1} parent=1 // pred_check_branch
      %19 = sbr.rel (0) target = $region5
    $region4: #{tpu_custom_call.1} parent=1 // pred_region
      _
    $region5: #{tpu_custom_call.1} parent=1 // pred_fallthru
      _
    // Predicated region
    $region6: #{tpu_custom_call.1} parent=1 // pred_check
      _
    $region7: #{tpu_custom_call.1} parent=1 // pred_check_branch
      %21 = sbr.rel (0) target = $region9
    $region8: #{tpu_custom_call.1} parent=1 // pred_region
      %s23 = ssub.s32 768, 768
      %24 = vsyncadd [#allocation3], %s23
      %s25 = sshll.u32 [#allocation2], 4
      %s26 = int_to_ptr.vmem [resolvable:$true] %s25
      %31 = dma.hbm_to_vmem [thread:$0]  %s1, 768, %s26, [#allocation3], 384, 384, 24
    $region9: #{tpu_custom_call.1} parent=1 // pred_fallthru
      _
    // Predicated region
    $region10: #{tpu_custom_call.1} parent=1 // pred_check
      _
    $region11: #{tpu_custom_call.1} parent=1 // pred_check_branch
      %33 = sbr.rel (0) target = $region13
    $region12: #{tpu_custom_call.1} parent=1 // pred_region
      %s35 = ssub.s32 101376, 101376
      %36 = vsyncadd [#allocation6], %s35
      %s37 = sshll.u32 [#allocation5], 4
      %s38 = int_to_ptr.vmem [resolvable:$true] %s37
      %43 = dma.hbm_to_vmem [thread:$0]  %s2, 101376, %s38, [#allocation6], 192, 192, 12
    $region13: #{tpu_custom_call.1} parent=1 // pred_fallthru
      _
    // Predicated region
    $region14: #{tpu_custom_call.1} parent=1 // pred_check
      _
    $region15: #{tpu_custom_call.1} parent=1 // pred_check_branch
      %45 = sbr.rel (0) target = $region17
    $region16: #{tpu_custom_call.1} parent=1 // pred_region
      %s47 = ssub.s32 48, 48
      %48 = vsyncadd [#allocation6], %s47
      %s50 = sshll.u32 [#allocation7], 4
      %s51 = int_to_ptr.vmem [resolvable:$true] %s50
      %53 = dma.hbm_to_vmem [thread:$0]  %s3, 48, %s51, [#allocation6]
    $region17: #{tpu_custom_call.1} parent=1 // pred_fallthru
      _
    // Predicated region
    $region18: #{tpu_custom_call.1} parent=1 // pred_check
      _
    $region19: #{tpu_custom_call.1} parent=1 // pred_check_branch
      %55 = sbr.rel (0) target = $region21
    $region20: #{tpu_custom_call.1} parent=1 // pred_region
      %s57 = ssub.s32 3072, 3072
      %58 = vsyncadd [#allocation9], %s57
      %s59 = sshll.u32 [#allocation8], 4
      %s60 = int_to_ptr.vmem [resolvable:$true] %s59
      %65 = dma.hbm_to_vmem [thread:$0]  %s4, 3072, %s60, [#allocation9], 64, 64, 4
    $region21: #{tpu_custom_call.1} parent=1 // pred_fallthru
      _
    // Predicated region
    $region22: #{tpu_custom_call.1} parent=1 // pred_check
      _
    $region23: #{tpu_custom_call.1} parent=1 // pred_check_branch
      %67 = sbr.rel (0) target = $region25
    $region24: #{tpu_custom_call.1} parent=1 // pred_region
      %s69 = ssub.s32 16, 16
      %70 = vsyncadd [#allocation9], %s69
      %s72 = sshll.u32 [#allocation10], 4
      %s73 = int_to_ptr.vmem [resolvable:$true] %s72
      %75 = dma.hbm_to_vmem [thread:$0]  %s5, 16, %s73, [#allocation9]
    $region25: #{tpu_custom_call.1} parent=1 // pred_fallthru
      _
    // Predicated region
    $region26: #{tpu_custom_call.1} parent=1 // pred_check
      _
    $region27: #{tpu_custom_call.1} parent=1 // pred_check_branch
      %77 = sbr.rel (0) target = $region29
    $region28: #{tpu_custom_call.1} parent=1 // pred_region
      %s79 = ssub.s32 1024, 1024
      %80 = vsyncadd [#allocation12], %s79
      %s81 = sshll.u32 [#allocation11], 4
      %s82 = int_to_ptr.vmem [resolvable:$true] %s81
      %87 = dma.hbm_to_vmem [thread:$0]  %s6, 1024, %s82, [#allocation12], 64, 64, 4
    $region29: #{tpu_custom_call.1} parent=1 // pred_fallthru
      _
    // Predicated region
    $region30: #{tpu_custom_call.1} parent=1 // pred_check
      _
    $region31: #{tpu_custom_call.1} parent=1 // pred_check_branch
      %89 = sbr.rel (0) target = $region33
    $region32: #{tpu_custom_call.1} parent=1 // pred_region
      %s91 = ssub.s32 16, 16
      %92 = vsyncadd [#allocation12], %s91
      %s94 = sshll.u32 [#allocation13], 4
      %s95 = int_to_ptr.vmem [resolvable:$true] %s94
      %97 = dma.hbm_to_vmem [thread:$0]  %s7, 16, %s95, [#allocation12]
    $region33: #{tpu_custom_call.1} parent=1 // pred_fallthru
      _
    // Predicated region
    $region34: #{tpu_custom_call.1} parent=1 // pred_check
      _
    $region35: #{tpu_custom_call.1} parent=1 // pred_check_branch
      %99 = sbr.rel (0) target = $region37
    $region36: #{tpu_custom_call.1} parent=1 // pred_region
      %100 = dma.done [#allocation3], 768
    $region37: #{tpu_custom_call.1} parent=1 // pred_fallthru
      _
    // Predicated region
    $region38: #{tpu_custom_call.1} parent=1 // pred_check
      _
    $region39: #{tpu_custom_call.1} parent=1 // pred_check_branch
      %102 = sbr.rel (0) target = $region41
    $region40: #{tpu_custom_call.1} parent=1 // pred_region
      %103 = dma.done [#allocation6], 101376
    $region41: #{tpu_custom_call.1} parent=1 // pred_fallthru
      _
    // Predicated region
    $region42: #{tpu_custom_call.1} parent=1 // pred_check
      _
    $region43: #{tpu_custom_call.1} parent=1 // pred_check_branch
      %105 = sbr.rel (0) target = $region45
    $region44: #{tpu_custom_call.1} parent=1 // pred_region
      %106 = dma.done [#allocation6], 48
    $region45: #{tpu_custom_call.1} parent=1 // pred_fallthru
      _
    // Predicated region
    $region46: #{tpu_custom_call.1} parent=1 // pred_check
      _
    $region47: #{tpu_custom_call.1} parent=1 // pred_check_branch
      %108 = sbr.rel (0) target = $region49
    $region48: #{tpu_custom_call.1} parent=1 // pred_region
      %109 = dma.done [#allocation9], 3072
    $region49: #{tpu_custom_call.1} parent=1 // pred_fallthru
      _
    // Predicated region
    $region50: #{tpu_custom_call.1} parent=1 // pred_check
      _
    $region51: #{tpu_custom_call.1} parent=1 // pred_check_branch
      %111 = sbr.rel (0) target = $region53
    $region52: #{tpu_custom_call.1} parent=1 // pred_region
      %112 = dma.done [#allocation9], 16
    $region53: #{tpu_custom_call.1} parent=1 // pred_fallthru
      _
    // Predicated region
    $region54: #{tpu_custom_call.1} parent=1 // pred_check
      _
    $region55: #{tpu_custom_call.1} parent=1 // pred_check_branch
      %114 = sbr.rel (0) target = $region57
    $region56: #{tpu_custom_call.1} parent=1 // pred_region
      %115 = dma.done [#allocation12], 1024
    $region57: #{tpu_custom_call.1} parent=1 // pred_fallthru
      _
    // Predicated region
    $region58: #{tpu_custom_call.1} parent=1 // pred_check
      _
    $region59: #{tpu_custom_call.1} parent=1 // pred_check_branch
      %117 = sbr.rel (0) target = $region61
    $region60: #{tpu_custom_call.1} parent=1 // pred_region
      %118 = dma.done [#allocation12], 16
    $region61: #{tpu_custom_call.1} parent=1 // pred_fallthru
      _
    %v120 = vld [vmem:[%s0] sm:$0xff]
    %v121 = vld [vmem:[%s0 + $0x8] sm:$0xf]
    %v122 = vld [vmem:[%s0 + $0xc] sm:$0xff]
    %v123 = vld [vmem:[%s0 + $0x14] sm:$0xf]
    %v124 = vld [vmem:[%s0 + $0x30] sm:$0xff]
    %v125 = vld [vmem:[%s0 + $0x38] sm:$0xf]
    %v126 = vld [vmem:[%s0 + $0x3c] sm:$0xff]
    %v127 = vld [vmem:[%s0 + $0x44] sm:$0xf]
    %v128 = vld [vmem:[%s0 + $0x60] sm:$0xff]
    %v129 = vld [vmem:[%s0 + $0x68] sm:$0xf]
    %v130 = vld [vmem:[%s0 + $0x6c] sm:$0xff]
    %v131 = vld [vmem:[%s0 + $0x74] sm:$0xf]
    %v132 = vld [vmem:[%s0 + $0x90] sm:$0xff]
    %v133 = vld [vmem:[%s0 + $0x98] sm:$0xf]
    %v134 = vld [vmem:[%s0 + $0x9c] sm:$0xff]
    %v135 = vld [vmem:[%s0 + $0xa4] sm:$0xf]
    %v136 = vld [vmem:[%s0 + $0xc0] sm:$0xff]
    %v137 = vld [vmem:[%s0 + $0xc8] sm:$0xf]
    %v138 = vld [vmem:[%s0 + $0xcc] sm:$0xff]
    %v139 = vld [vmem:[%s0 + $0xd4] sm:$0xf]
    %v140 = vld [vmem:[%s0 + $0xf0] sm:$0xff]
    %v141 = vld [vmem:[%s0 + $0xf8] sm:$0xf]
    %v142 = vld [vmem:[%s0 + $0xfc] sm:$0xff]
    %v143 = vld [vmem:[%s0 + $0x104] sm:$0xf]
    %v144 = vld [vmem:[%s0 + $0x120] sm:$0xff]
    %v145 = vld [vmem:[%s0 + $0x128] sm:$0xf]
    %v146 = vld [vmem:[%s0 + $0x12c] sm:$0xff]
    %v147 = vld [vmem:[%s0 + $0x134] sm:$0xf]
    %v148 = vld [vmem:[%s0 + $0x150] sm:$0xff]
    %v149 = vld [vmem:[%s0 + $0x158] sm:$0xf]
    %v150 = vld [vmem:[%s0 + $0x15c] sm:$0xff]
    %v151 = vld [vmem:[%s0 + $0x164] sm:$0xf]
    %v152 = vld [vmem:[%s0 + $0x18] sm:$0x11]
    %v153 = vld [vmem:[%s0 + $0x20] sm:$0x1]
    %v154 = vld [vmem:[%s0 + $0x48] sm:$0x11]
    %v155 = vld [vmem:[%s0 + $0x50] sm:$0x1]
    %v156 = vld [vmem:[%s0 + $0x78] sm:$0x11]
    %v157 = vld [vmem:[%s0 + $0x80] sm:$0x1]
    %v158 = vld [vmem:[%s0 + $0xa8] sm:$0x11]
    %v159 = vld [vmem:[%s0 + $0xb0] sm:$0x1]
    %v160 = vld [vmem:[%s0 + $0xd8] sm:$0x11]
    %v161 = vld [vmem:[%s0 + $0xe0] sm:$0x1]
    %v162 = vld [vmem:[%s0 + $0x108] sm:$0x11]
    %v163 = vld [vmem:[%s0 + $0x110] sm:$0x1]
    %v164 = vld [vmem:[%s0 + $0x138] sm:$0x11]
    %v165 = vld [vmem:[%s0 + $0x140] sm:$0x1]
    %v166 = vld [vmem:[%s0 + $0x168] sm:$0x11]
    %v167 = vld [vmem:[%s0 + $0x170] sm:$0x1]
    %v168 = vld [vmem:[%s0] sm:$0xee]
    %v169 = vld [vmem:[%s0 + $0x8] sm:$0xe]
    %v170 = vld [vmem:[%s0 + $0x30] sm:$0xee]
    %v171 = vld [vmem:[%s0 + $0x38] sm:$0xe]
    %v172 = vld [vmem:[%s0 + $0x60] sm:$0xee]
    %v173 = vld [vmem:[%s0 + $0x68] sm:$0xe]
    %v174 = vld [vmem:[%s0 + $0x90] sm:$0xee]
    %v175 = vld [vmem:[%s0 + $0x98] sm:$0xe]
    %v176 = vld [vmem:[%s0 + $0xc0] sm:$0xee]
    %v177 = vld [vmem:[%s0 + $0xc8] sm:$0xe]
    %v178 = vld [vmem:[%s0 + $0xf0] sm:$0xee]
    %v179 = vld [vmem:[%s0 + $0xf8] sm:$0xe]
    %v180 = vld [vmem:[%s0 + $0x120] sm:$0xee]
    %v181 = vld [vmem:[%s0 + $0x128] sm:$0xe]
    %v182 = vld [vmem:[%s0 + $0x150] sm:$0xee]
    %v183 = vld [vmem:[%s0 + $0x158] sm:$0xe]
    %v184 = vld [vmem:[%s0 + $0x18] sm:$0x33]
    %v185 = vld [vmem:[%s0 + $0x20] sm:$0x3]
    %v186 = vld [vmem:[%s0 + $0x48] sm:$0x33]
    %v187 = vld [vmem:[%s0 + $0x50] sm:$0x3]
    %v188 = vld [vmem:[%s0 + $0x78] sm:$0x33]
    %v189 = vld [vmem:[%s0 + $0x80] sm:$0x3]
    %v190 = vld [vmem:[%s0 + $0xa8] sm:$0x33]
    %v191 = vld [vmem:[%s0 + $0xb0] sm:$0x3]
    %v192 = vld [vmem:[%s0 + $0xd8] sm:$0x33]
    %v193 = vld [vmem:[%s0 + $0xe0] sm:$0x3]
    %v194 = vld [vmem:[%s0 + $0x108] sm:$0x33]
    %v195 = vld [vmem:[%s0 + $0x110] sm:$0x3]
    %v196 = vld [vmem:[%s0 + $0x138] sm:$0x33]
    %v197 = vld [vmem:[%s0 + $0x140] sm:$0x3]
    %v198 = vld [vmem:[%s0 + $0x168] sm:$0x33]
    %v199 = vld [vmem:[%s0 + $0x170] sm:$0x3]
    %v200 = vld [vmem:[%s0] sm:$0xcc]
    %v201 = vld [vmem:[%s0 + $0x8] sm:$0xc]
    %v202 = vld [vmem:[%s0 + $0x30] sm:$0xcc]
    %v203 = vld [vmem:[%s0 + $0x38] sm:$0xc]
    %v204 = vld [vmem:[%s0 + $0x60] sm:$0xcc]
    %v205 = vld [vmem:[%s0 + $0x68] sm:$0xc]
    %v206 = vld [vmem:[%s0 + $0x90] sm:$0xcc]
    %v207 = vld [vmem:[%s0 + $0x98] sm:$0xc]
    %v208 = vld [vmem:[%s0 + $0xc0] sm:$0xcc]
    %v209 = vld [vmem:[%s0 + $0xc8] sm:$0xc]
    %v210 = vld [vmem:[%s0 + $0xf0] sm:$0xcc]
    %v211 = vld [vmem:[%s0 + $0xf8] sm:$0xc]
    %v212 = vld [vmem:[%s0 + $0x120] sm:$0xcc]
    %v213 = vld [vmem:[%s0 + $0x128] sm:$0xc]
    %v214 = vld [vmem:[%s0 + $0x150] sm:$0xcc]
    %v215 = vld [vmem:[%s0 + $0x158] sm:$0xc]
    %v216 = vld [vmem:[%s0 + $0x18] sm:$0x77]
    %v217 = vld [vmem:[%s0 + $0x20] sm:$0x7]
    %v218 = vld [vmem:[%s0 + $0x48] sm:$0x77]
    %v219 = vld [vmem:[%s0 + $0x50] sm:$0x7]
    %v220 = vld [vmem:[%s0 + $0x78] sm:$0x77]
    %v221 = vld [vmem:[%s0 + $0x80] sm:$0x7]
    %v222 = vld [vmem:[%s0 + $0xa8] sm:$0x77]
    %v223 = vld [vmem:[%s0 + $0xb0] sm:$0x7]
    %v224 = vld [vmem:[%s0 + $0xd8] sm:$0x77]
    %v225 = vld [vmem:[%s0 + $0xe0] sm:$0x7]
    %v226 = vld [vmem:[%s0 + $0x108] sm:$0x77]
    %v227 = vld [vmem:[%s0 + $0x110] sm:$0x7]
    %v228 = vld [vmem:[%s0 + $0x138] sm:$0x77]
    %v229 = vld [vmem:[%s0 + $0x140] sm:$0x7]
    %v230 = vld [vmem:[%s0 + $0x168] sm:$0x77]
    %v231 = vld [vmem:[%s0 + $0x170] sm:$0x7]
    %v232 = vld [vmem:[%s0] sm:$0x88]
    %v233 = vld [vmem:[%s0 + $0x8] sm:$0x8]
    %v234 = vld [vmem:[%s0 + $0x30] sm:$0x88]
    %v235 = vld [vmem:[%s0 + $0x38] sm:$0x8]
    %v236 = vld [vmem:[%s0 + $0x60] sm:$0x88]
    %v237 = vld [vmem:[%s0 + $0x68] sm:$0x8]
    %v238 = vld [vmem:[%s0 + $0x90] sm:$0x88]
    %v239 = vld [vmem:[%s0 + $0x98] sm:$0x8]
    %v240 = vld [vmem:[%s0 + $0xc0] sm:$0x88]
    %v241 = vld [vmem:[%s0 + $0xc8] sm:$0x8]
    %v242 = vld [vmem:[%s0 + $0xf0] sm:$0x88]
    %v243 = vld [vmem:[%s0 + $0xf8] sm:$0x8]
    %v244 = vld [vmem:[%s0 + $0x120] sm:$0x88]
    %v245 = vld [vmem:[%s0 + $0x128] sm:$0x8]
    %v246 = vld [vmem:[%s0 + $0x150] sm:$0x88]
    %v247 = vld [vmem:[%s0 + $0x158] sm:$0x8]
    %v248 = vld [vmem:[%s0 + $0x18] sm:$0xff]
    %v249 = vld [vmem:[%s0 + $0x20] sm:$0xf]
    %v250 = vld [vmem:[%s0 + $0x48] sm:$0xff]
    %v251 = vld [vmem:[%s0 + $0x50] sm:$0xf]
    %v252 = vld [vmem:[%s0 + $0x78] sm:$0xff]
    %v253 = vld [vmem:[%s0 + $0x80] sm:$0xf]
    %v254 = vld [vmem:[%s0 + $0xa8] sm:$0xff]
    %v255 = vld [vmem:[%s0 + $0xb0] sm:$0xf]
    %v256 = vld [vmem:[%s0 + $0xd8] sm:$0xff]
    %v257 = vld [vmem:[%s0 + $0xe0] sm:$0xf]
    %v258 = vld [vmem:[%s0 + $0x108] sm:$0xff]
    %v259 = vld [vmem:[%s0 + $0x110] sm:$0xf]
    %v260 = vld [vmem:[%s0 + $0x138] sm:$0xff]
    %v261 = vld [vmem:[%s0 + $0x140] sm:$0xf]
    %v262 = vld [vmem:[%s0 + $0x168] sm:$0xff]
    %v263 = vld [vmem:[%s0 + $0x170] sm:$0xf]
    %v264 = vld [vmem:[%s0 + $0x24] sm:$0x11]
    %v265 = vld [vmem:[%s0 + $0x2c] sm:$0x1]
    %v266 = vld [vmem:[%s0 + $0x54] sm:$0x11]
    %v267 = vld [vmem:[%s0 + $0x5c] sm:$0x1]
    %v268 = vld [vmem:[%s0 + $0x84] sm:$0x11]
    %v269 = vld [vmem:[%s0 + $0x8c] sm:$0x1]
    %v270 = vld [vmem:[%s0 + $0xb4] sm:$0x11]
    %v271 = vld [vmem:[%s0 + $0xbc] sm:$0x1]
    %v272 = vld [vmem:[%s0 + $0xe4] sm:$0x11]
    %v273 = vld [vmem:[%s0 + $0xec] sm:$0x1]
    %v274 = vld [vmem:[%s0 + $0x114] sm:$0x11]
    %v275 = vld [vmem:[%s0 + $0x11c] sm:$0x1]
    %v276 = vld [vmem:[%s0 + $0x144] sm:$0x11]
    %v277 = vld [vmem:[%s0 + $0x14c] sm:$0x1]
    %v278 = vld [vmem:[%s0 + $0x174] sm:$0x11]
    %v279 = vld [vmem:[%s0 + $0x17c] sm:$0x1]
    %v280 = vld [vmem:[%s0 + $0xc] sm:$0xee]
    %v281 = vld [vmem:[%s0 + $0x14] sm:$0xe]
    %v282 = vld [vmem:[%s0 + $0x3c] sm:$0xee]
    %v283 = vld [vmem:[%s0 + $0x44] sm:$0xe]
    %v284 = vld [vmem:[%s0 + $0x6c] sm:$0xee]
    %v285 = vld [vmem:[%s0 + $0x74] sm:$0xe]
    %v286 = vld [vmem:[%s0 + $0x9c] sm:$0xee]
    %v287 = vld [vmem:[%s0 + $0xa4] sm:$0xe]
    %v288 = vld [vmem:[%s0 + $0xcc] sm:$0xee]
    %v289 = vld [vmem:[%s0 + $0xd4] sm:$0xe]
    %v290 = vld [vmem:[%s0 + $0xfc] sm:$0xee]
    %v291 = vld [vmem:[%s0 + $0x104] sm:$0xe]
    %v292 = vld [vmem:[%s0 + $0x12c] sm:$0xee]
    %v293 = vld [vmem:[%s0 + $0x134] sm:$0xe]
    %v294 = vld [vmem:[%s0 + $0x15c] sm:$0xee]
    %v295 = vld [vmem:[%s0 + $0x164] sm:$0xe]
    %v328 = vunpack.c.l.b16 %v120
    %v329 = vunpack.c.h.b16 %v120
    %v330 = vunpack.c.l.b16 %v121
    %v331 = vunpack.c.l.b16 %v122
    %v332 = vunpack.c.h.b16 %v122
    %v333 = vunpack.c.l.b16 %v123
    %v334 = vunpack.c.l.b16 %v124
    %v335 = vunpack.c.h.b16 %v124
    %v336 = vunpack.c.l.b16 %v125
    %v337 = vunpack.c.l.b16 %v126
    %v338 = vunpack.c.h.b16 %v126
    %v339 = vunpack.c.l.b16 %v127
    %v340 = vunpack.c.l.b16 %v128
    %v341 = vunpack.c.h.b16 %v128
    %v342 = vunpack.c.l.b16 %v129
    %v343 = vunpack.c.l.b16 %v130
    %v344 = vunpack.c.h.b16 %v130
    %v345 = vunpack.c.l.b16 %v131
    %v346 = vunpack.c.l.b16 %v132
    %v347 = vunpack.c.h.b16 %v132
    %v348 = vunpack.c.l.b16 %v133
    %v349 = vunpack.c.l.b16 %v134
    %v350 = vunpack.c.h.b16 %v134
    %v351 = vunpack.c.l.b16 %v135
    %v352 = vunpack.c.l.b16 %v136
    %v353 = vunpack.c.h.b16 %v136
    %v354 = vunpack.c.l.b16 %v137
    %v355 = vunpack.c.l.b16 %v138
    %v356 = vunpack.c.h.b16 %v138
    %v357 = vunpack.c.l.b16 %v139
    %v358 = vunpack.c.l.b16 %v140
    %v359 = vunpack.c.h.b16 %v140
    %v360 = vunpack.c.l.b16 %v141
    %v361 = vunpack.c.l.b16 %v142
    %v362 = vunpack.c.h.b16 %v142
    %v363 = vunpack.c.l.b16 %v143
    %v364 = vunpack.c.l.b16 %v144
    %v365 = vunpack.c.h.b16 %v144
    %v366 = vunpack.c.l.b16 %v145
    %v367 = vunpack.c.l.b16 %v146
    %v368 = vunpack.c.h.b16 %v146
    %v369 = vunpack.c.l.b16 %v147
    %v370 = vunpack.c.l.b16 %v148
    %v371 = vunpack.c.h.b16 %v148
    %v372 = vunpack.c.l.b16 %v149
    %v373 = vunpack.c.l.b16 %v150
    %v374 = vunpack.c.h.b16 %v150
    %v375 = vunpack.c.l.b16 %v151
    %v376 = vpack.c.b16 %v331, %v328
    %v377 = vpack.c.b16 %v332, %v329
    %v378 = vpack.c.b16 %v333, %v330
    %v379 = vpack.c.b16 %v337, %v334
    %v380 = vpack.c.b16 %v338, %v335
    %v381 = vpack.c.b16 %v339, %v336
    %v382 = vpack.c.b16 %v343, %v340
    %v383 = vpack.c.b16 %v344, %v341
    %v384 = vpack.c.b16 %v345, %v342
    %v385 = vpack.c.b16 %v349, %v346
    %v386 = vpack.c.b16 %v350, %v347
    %v387 = vpack.c.b16 %v351, %v348
    %v388 = vpack.c.b16 %v355, %v352
    %v389 = vpack.c.b16 %v356, %v353
    %v390 = vpack.c.b16 %v357, %v354
    %v391 = vpack.c.b16 %v361, %v358
    %v392 = vpack.c.b16 %v362, %v359
    %v393 = vpack.c.b16 %v363, %v360
    %v394 = vpack.c.b16 %v367, %v364
    %v395 = vpack.c.b16 %v368, %v365
    %v396 = vpack.c.b16 %v369, %v366
    %v397 = vpack.c.b16 %v373, %v370
    %v398 = vpack.c.b16 %v374, %v371
    %v399 = vpack.c.b16 %v375, %v372
    %v440 = vunpack.c.l.b16 %v152
    %v441 = vunpack.c.h.b16 %v152
    %v442 = vunpack.c.l.b16 %v153
    %v443 = vunpack.c.l.b16 %v154
    %v444 = vunpack.c.h.b16 %v154
    %v445 = vunpack.c.l.b16 %v155
    %v446 = vunpack.c.l.b16 %v156
    %v447 = vunpack.c.h.b16 %v156
    %v448 = vunpack.c.l.b16 %v157
    %v449 = vunpack.c.l.b16 %v158
    %v450 = vunpack.c.h.b16 %v158
    %v451 = vunpack.c.l.b16 %v159
    %v452 = vunpack.c.l.b16 %v160
    %v453 = vunpack.c.h.b16 %v160
    %v454 = vunpack.c.l.b16 %v161
    %v455 = vunpack.c.l.b16 %v162
    %v456 = vunpack.c.h.b16 %v162
    %v457 = vunpack.c.l.b16 %v163
    %v458 = vunpack.c.l.b16 %v164
    %v459 = vunpack.c.h.b16 %v164
    %v460 = vunpack.c.l.b16 %v165
    %v461 = vunpack.c.l.b16 %v166
    %v462 = vunpack.c.h.b16 %v166
    %v463 = vunpack.c.l.b16 %v167
    %v464 = vpack.c.b16 %v440, %v440
    %v465 = vpack.c.b16 %v441, %v441
    %v466 = vpack.c.b16 %v442, %v442
    %v467 = vpack.c.b16 %v443, %v443
    %v468 = vpack.c.b16 %v444, %v444
    %v469 = vpack.c.b16 %v445, %v445
    %v470 = vpack.c.b16 %v446, %v446
    %v471 = vpack.c.b16 %v447, %v447
    %v472 = vpack.c.b16 %v448, %v448
    %v473 = vpack.c.b16 %v449, %v449
    %v474 = vpack.c.b16 %v450, %v450
    %v475 = vpack.c.b16 %v451, %v451
    %v476 = vpack.c.b16 %v452, %v452
    %v477 = vpack.c.b16 %v453, %v453
    %v478 = vpack.c.b16 %v454, %v454
    %v479 = vpack.c.b16 %v455, %v455
    %v480 = vpack.c.b16 %v456, %v456
    %v481 = vpack.c.b16 %v457, %v457
    %v482 = vpack.c.b16 %v458, %v458
    %v483 = vpack.c.b16 %v459, %v459
    %v484 = vpack.c.b16 %v460, %v460
    %v485 = vpack.c.b16 %v461, %v461
    %v486 = vpack.c.b16 %v462, %v462
    %v487 = vpack.c.b16 %v463, %v463
    %vm488 = vsmask.f32 7424
    %v490 = vshrl.u32 %v376, 16
    %v492 = vshll.u32 %v376, 16
    %v494 = vrot.slane %v492, 1
    %v495 = vor.u32 %v490, %v494
    %v497 = vshll.u32 %v464, 16
    %v499 = vrot.slane %v497, 1
    %v500 = vsel %vm488, %v495, %v499
    %v502 = vshrl.u32 %v377, 16
    %v504 = vshll.u32 %v377, 16
    %v506 = vrot.slane %v504, 1
    %v507 = vor.u32 %v502, %v506
    %v509 = vshll.u32 %v465, 16
    %v511 = vrot.slane %v509, 1
    %v512 = vsel %vm488, %v507, %v511
    %v514 = vshrl.u32 %v378, 16
    %v516 = vshll.u32 %v378, 16
    %v518 = vrot.slane %v516, 1
    %v519 = vor.u32 %v514, %v518
    %v521 = vshll.u32 %v466, 16
    %v523 = vrot.slane %v521, 1
    %v524 = vsel %vm488, %v519, %v523
    %v526 = vshrl.u32 %v379, 16
    %v528 = vshll.u32 %v379, 16
    %v530 = vrot.slane %v528, 1
    %v531 = vor.u32 %v526, %v530
    %v533 = vshll.u32 %v467, 16
    %v535 = vrot.slane %v533, 1
    %v536 = vsel %vm488, %v531, %v535
    %v538 = vshrl.u32 %v380, 16
    %v540 = vshll.u32 %v380, 16
    %v542 = vrot.slane %v540, 1
    %v543 = vor.u32 %v538, %v542
    %v545 = vshll.u32 %v468, 16
    %v547 = vrot.slane %v545, 1
    %v548 = vsel %vm488, %v543, %v547
    %v550 = vshrl.u32 %v381, 16
    %v552 = vshll.u32 %v381, 16
    %v554 = vrot.slane %v552, 1
    %v555 = vor.u32 %v550, %v554
    %v557 = vshll.u32 %v469, 16
    %v559 = vrot.slane %v557, 1
    %v560 = vsel %vm488, %v555, %v559
    %v562 = vshrl.u32 %v382, 16
    %v564 = vshll.u32 %v382, 16
    %v566 = vrot.slane %v564, 1
    %v567 = vor.u32 %v562, %v566
    %v569 = vshll.u32 %v470, 16
    %v571 = vrot.slane %v569, 1
    %v572 = vsel %vm488, %v567, %v571
    %v574 = vshrl.u32 %v383, 16
    %v576 = vshll.u32 %v383, 16
    %v578 = vrot.slane %v576, 1
    %v579 = vor.u32 %v574, %v578
    %v581 = vshll.u32 %v471, 16
    %v583 = vrot.slane %v581, 1
    %v584 = vsel %vm488, %v579, %v583
    %v586 = vshrl.u32 %v384, 16
    %v588 = vshll.u32 %v384, 16
    %v590 = vrot.slane %v588, 1
    %v591 = vor.u32 %v586, %v590
    %v593 = vshll.u32 %v472, 16
    %v595 = vrot.slane %v593, 1
    %v596 = vsel %vm488, %v591, %v595
    %v598 = vshrl.u32 %v385, 16
    %v600 = vshll.u32 %v385, 16
    %v602 = vrot.slane %v600, 1
    %v603 = vor.u32 %v598, %v602
    %v605 = vshll.u32 %v473, 16
    %v607 = vrot.slane %v605, 1
    %v608 = vsel %vm488, %v603, %v607
    %v610 = vshrl.u32 %v386, 16
    %v612 = vshll.u32 %v386, 16
    %v614 = vrot.slane %v612, 1
    %v615 = vor.u32 %v610, %v614
    %v617 = vshll.u32 %v474, 16
    %v619 = vrot.slane %v617, 1
    %v620 = vsel %vm488, %v615, %v619
    %v622 = vshrl.u32 %v387, 16
    %v624 = vshll.u32 %v387, 16
    %v626 = vrot.slane %v624, 1
    %v627 = vor.u32 %v622, %v626
    %v629 = vshll.u32 %v475, 16
    %v631 = vrot.slane %v629, 1
    %v632 = vsel %vm488, %v627, %v631
    %v634 = vshrl.u32 %v388, 16
    %v636 = vshll.u32 %v388, 16
    %v638 = vrot.slane %v636, 1
    %v639 = vor.u32 %v634, %v638
    %v641 = vshll.u32 %v476, 16
    %v643 = vrot.slane %v641, 1
    %v644 = vsel %vm488, %v639, %v643
    %v646 = vshrl.u32 %v389, 16
    %v648 = vshll.u32 %v389, 16
    %v650 = vrot.slane %v648, 1
    %v651 = vor.u32 %v646, %v650
    %v653 = vshll.u32 %v477, 16
    %v655 = vrot.slane %v653, 1
    %v656 = vsel %vm488, %v651, %v655
    %v658 = vshrl.u32 %v390, 16
    %v660 = vshll.u32 %v390, 16
    %v662 = vrot.slane %v660, 1
    %v663 = vor.u32 %v658, %v662
    %v665 = vshll.u32 %v478, 16
    %v667 = vrot.slane %v665, 1
    %v668 = vsel %vm488, %v663, %v667
    %v670 = vshrl.u32 %v391, 16
    %v672 = vshll.u32 %v391, 16
    %v674 = vrot.slane %v672, 1
    %v675 = vor.u32 %v670, %v674
    %v677 = vshll.u32 %v479, 16
    %v679 = vrot.slane %v677, 1
    %v680 = vsel %vm488, %v675, %v679
    %v682 = vshrl.u32 %v392, 16
    %v684 = vshll.u32 %v392, 16
    %v686 = vrot.slane %v684, 1
    %v687 = vor.u32 %v682, %v686
    %v689 = vshll.u32 %v480, 16
    %v691 = vrot.slane %v689, 1
    %v692 = vsel %vm488, %v687, %v691
    %v694 = vshrl.u32 %v393, 16
    %v696 = vshll.u32 %v393, 16
    %v698 = vrot.slane %v696, 1
    %v699 = vor.u32 %v694, %v698
    %v701 = vshll.u32 %v481, 16
    %v703 = vrot.slane %v701, 1
    %v704 = vsel %vm488, %v699, %v703
    %v706 = vshrl.u32 %v394, 16
    %v708 = vshll.u32 %v394, 16
    %v710 = vrot.slane %v708, 1
    %v711 = vor.u32 %v706, %v710
    %v713 = vshll.u32 %v482, 16
    %v715 = vrot.slane %v713, 1
    %v716 = vsel %vm488, %v711, %v715
    %v718 = vshrl.u32 %v395, 16
    %v720 = vshll.u32 %v395, 16
    %v722 = vrot.slane %v720, 1
    %v723 = vor.u32 %v718, %v722
    %v725 = vshll.u32 %v483, 16
    %v727 = vrot.slane %v725, 1
    %v728 = vsel %vm488, %v723, %v727
    %v730 = vshrl.u32 %v396, 16
    %v732 = vshll.u32 %v396, 16
    %v734 = vrot.slane %v732, 1
    %v735 = vor.u32 %v730, %v734
    %v737 = vshll.u32 %v484, 16
    %v739 = vrot.slane %v737, 1
    %v740 = vsel %vm488, %v735, %v739
    %v742 = vshrl.u32 %v397, 16
    %v744 = vshll.u32 %v397, 16
    %v746 = vrot.slane %v744, 1
    %v747 = vor.u32 %v742, %v746
    %v749 = vshll.u32 %v485, 16
    %v751 = vrot.slane %v749, 1
    %v752 = vsel %vm488, %v747, %v751
    %v754 = vshrl.u32 %v398, 16
    %v756 = vshll.u32 %v398, 16
    %v758 = vrot.slane %v756, 1
    %v759 = vor.u32 %v754, %v758
    %v761 = vshll.u32 %v486, 16
    %v763 = vrot.slane %v761, 1
    %v764 = vsel %vm488, %v759, %v763
    %v766 = vshrl.u32 %v399, 16
    %v768 = vshll.u32 %v399, 16
    %v770 = vrot.slane %v768, 1
    %v771 = vor.u32 %v766, %v770
    %v773 = vshll.u32 %v487, 16
    %v775 = vrot.slane %v773, 1
    %v776 = vsel %vm488, %v771, %v775
    %v817 = vunpack.c.l.b16 %v168
    %v818 = vunpack.c.h.b16 %v168
    %v819 = vunpack.c.l.b16 %v169
    %v820 = vunpack.c.l.b16 %v170
    %v821 = vunpack.c.h.b16 %v170
    %v822 = vunpack.c.l.b16 %v171
    %v823 = vunpack.c.l.b16 %v172
    %v824 = vunpack.c.h.b16 %v172
    %v825 = vunpack.c.l.b16 %v173
    %v826 = vunpack.c.l.b16 %v174
    %v827 = vunpack.c.h.b16 %v174
    %v828 = vunpack.c.l.b16 %v175
    %v829 = vunpack.c.l.b16 %v176
    %v830 = vunpack.c.h.b16 %v176
    %v831 = vunpack.c.l.b16 %v177
    %v832 = vunpack.c.l.b16 %v178
    %v833 = vunpack.c.h.b16 %v178
    %v834 = vunpack.c.l.b16 %v179
    %v835 = vunpack.c.l.b16 %v180
    %v836 = vunpack.c.h.b16 %v180
    %v837 = vunpack.c.l.b16 %v181
    %v838 = vunpack.c.l.b16 %v182
    %v839 = vunpack.c.h.b16 %v182
    %v840 = vunpack.c.l.b16 %v183
    %v841 = vpack.c.b16 %v331, %v817
    %v842 = vpack.c.b16 %v332, %v818
    %v843 = vpack.c.b16 %v333, %v819
    %v844 = vpack.c.b16 %v337, %v820
    %v845 = vpack.c.b16 %v338, %v821
    %v846 = vpack.c.b16 %v339, %v822
    %v847 = vpack.c.b16 %v343, %v823
    %v848 = vpack.c.b16 %v344, %v824
    %v849 = vpack.c.b16 %v345, %v825
    %v850 = vpack.c.b16 %v349, %v826
    %v851 = vpack.c.b16 %v350, %v827
    %v852 = vpack.c.b16 %v351, %v828
    %v853 = vpack.c.b16 %v355, %v829
    %v854 = vpack.c.b16 %v356, %v830
    %v855 = vpack.c.b16 %v357, %v831
    %v856 = vpack.c.b16 %v361, %v832
    %v857 = vpack.c.b16 %v362, %v833
    %v858 = vpack.c.b16 %v363, %v834
    %v859 = vpack.c.b16 %v367, %v835
    %v860 = vpack.c.b16 %v368, %v836
    %v861 = vpack.c.b16 %v369, %v837
    %v862 = vpack.c.b16 %v373, %v838
    %v863 = vpack.c.b16 %v374, %v839
    %v864 = vpack.c.b16 %v375, %v840
    %vm865 = vcmask 1046528
    %v866 = vrot.slane %v841, 1
    %v867 = vrot.slane %v464, 1
    %v868 = vsel %vm865, %v866, %v867
    %v869 = vrot.slane %v842, 1
    %v870 = vrot.slane %v465, 1
    %v871 = vsel %vm865, %v869, %v870
    %v872 = vrot.slane %v843, 1
    %v873 = vrot.slane %v466, 1
    %v874 = vsel %vm865, %v872, %v873
    %v875 = vrot.slane %v844, 1
    %v876 = vrot.slane %v467, 1
    %v877 = vsel %vm865, %v875, %v876
    %v878 = vrot.slane %v845, 1
    %v879 = vrot.slane %v468, 1
    %v880 = vsel %vm865, %v878, %v879
    %v881 = vrot.slane %v846, 1
    %v882 = vrot.slane %v469, 1
    %v883 = vsel %vm865, %v881, %v882
    %v884 = vrot.slane %v847, 1
    %v885 = vrot.slane %v470, 1
    %v886 = vsel %vm865, %v884, %v885
    %v887 = vrot.slane %v848, 1
    %v888 = vrot.slane %v471, 1
    %v889 = vsel %vm865, %v887, %v888
    %v890 = vrot.slane %v849, 1
    %v891 = vrot.slane %v472, 1
    %v892 = vsel %vm865, %v890, %v891
    %v893 = vrot.slane %v850, 1
    %v894 = vrot.slane %v473, 1
    %v895 = vsel %vm865, %v893, %v894
    %v896 = vrot.slane %v851, 1
    %v897 = vrot.slane %v474, 1
    %v898 = vsel %vm865, %v896, %v897
    %v899 = vrot.slane %v852, 1
    %v900 = vrot.slane %v475, 1
    %v901 = vsel %vm865, %v899, %v900
    %v902 = vrot.slane %v853, 1
    %v903 = vrot.slane %v476, 1
    %v904 = vsel %vm865, %v902, %v903
    %v905 = vrot.slane %v854, 1
    %v906 = vrot.slane %v477, 1
    %v907 = vsel %vm865, %v905, %v906
    %v908 = vrot.slane %v855, 1
    %v909 = vrot.slane %v478, 1
    %v910 = vsel %vm865, %v908, %v909
    %v911 = vrot.slane %v856, 1
    %v912 = vrot.slane %v479, 1
    %v913 = vsel %vm865, %v911, %v912
    %v914 = vrot.slane %v857, 1
    %v915 = vrot.slane %v480, 1
    %v916 = vsel %vm865, %v914, %v915
    %v917 = vrot.slane %v858, 1
    %v918 = vrot.slane %v481, 1
    %v919 = vsel %vm865, %v917, %v918
    %v920 = vrot.slane %v859, 1
    %v921 = vrot.slane %v482, 1
    %v922 = vsel %vm865, %v920, %v921
    %v923 = vrot.slane %v860, 1
    %v924 = vrot.slane %v483, 1
    %v925 = vsel %vm865, %v923, %v924
    %v926 = vrot.slane %v861, 1
    %v927 = vrot.slane %v484, 1
    %v928 = vsel %vm865, %v926, %v927
    %v929 = vrot.slane %v862, 1
    %v930 = vrot.slane %v485, 1
    %v931 = vsel %vm865, %v929, %v930
    %v932 = vrot.slane %v863, 1
    %v933 = vrot.slane %v486, 1
    %v934 = vsel %vm865, %v932, %v933
    %v935 = vrot.slane %v864, 1
    %v936 = vrot.slane %v487, 1
    %v937 = vsel %vm865, %v935, %v936
    %v978 = vunpack.c.l.b16 %v184
    %v979 = vunpack.c.h.b16 %v184
    %v980 = vunpack.c.l.b16 %v185
    %v981 = vunpack.c.l.b16 %v186
    %v982 = vunpack.c.h.b16 %v186
    %v983 = vunpack.c.l.b16 %v187
    %v984 = vunpack.c.l.b16 %v188
    %v985 = vunpack.c.h.b16 %v188
    %v986 = vunpack.c.l.b16 %v189
    %v987 = vunpack.c.l.b16 %v190
    %v988 = vunpack.c.h.b16 %v190
    %v989 = vunpack.c.l.b16 %v191
    %v990 = vunpack.c.l.b16 %v192
    %v991 = vunpack.c.h.b16 %v192
    %v992 = vunpack.c.l.b16 %v193
    %v993 = vunpack.c.l.b16 %v194
    %v994 = vunpack.c.h.b16 %v194
    %v995 = vunpack.c.l.b16 %v195
    %v996 = vunpack.c.l.b16 %v196
    %v997 = vunpack.c.h.b16 %v196
    %v998 = vunpack.c.l.b16 %v197
    %v999 = vunpack.c.l.b16 %v198
    %v1000 = vunpack.c.h.b16 %v198
    %v1001 = vunpack.c.l.b16 %v199
    %v1002 = vpack.c.b16 %v978, %v978
    %v1003 = vpack.c.b16 %v979, %v979
    %v1004 = vpack.c.b16 %v980, %v980
    %v1005 = vpack.c.b16 %v981, %v981
    %v1006 = vpack.c.b16 %v982, %v982
    %v1007 = vpack.c.b16 %v983, %v983
    %v1008 = vpack.c.b16 %v984, %v984
    %v1009 = vpack.c.b16 %v985, %v985
    %v1010 = vpack.c.b16 %v986, %v986
    %v1011 = vpack.c.b16 %v987, %v987
    %v1012 = vpack.c.b16 %v988, %v988
    %v1013 = vpack.c.b16 %v989, %v989
    %v1014 = vpack.c.b16 %v990, %v990
    %v1015 = vpack.c.b16 %v991, %v991
    %v1016 = vpack.c.b16 %v992, %v992
    %v1017 = vpack.c.b16 %v993, %v993
    %v1018 = vpack.c.b16 %v994, %v994
    %v1019 = vpack.c.b16 %v995, %v995
    %v1020 = vpack.c.b16 %v996, %v996
    %v1021 = vpack.c.b16 %v997, %v997
    %v1022 = vpack.c.b16 %v998, %v998
    %v1023 = vpack.c.b16 %v999, %v999
    %v1024 = vpack.c.b16 %v1000, %v1000
    %v1025 = vpack.c.b16 %v1001, %v1001
    %vm1026 = vsmask.f32 6400
    %v1028 = vshrl.u32 %v841, 16
    %v1030 = vrot.slane %v1028, 1
    %v1031 = vshll.u32 %v841, 16
    %v1033 = vrot.slane %v1031, 2
    %v1034 = vor.u32 %v1030, %v1033
    %v1036 = vshrl.u32 %v1002, 16
    %v1038 = vrot.slane %v1036, 1
    %v1039 = vshll.u32 %v1002, 16
    %v1041 = vrot.slane %v1039, 2
    %v1042 = vor.u32 %v1038, %v1041
    %v1043 = vsel %vm1026, %v1034, %v1042
    %v1045 = vshrl.u32 %v842, 16
    %v1047 = vrot.slane %v1045, 1
    %v1048 = vshll.u32 %v842, 16
    %v1050 = vrot.slane %v1048, 2
    %v1051 = vor.u32 %v1047, %v1050
    %v1053 = vshrl.u32 %v1003, 16
    %v1055 = vrot.slane %v1053, 1
    %v1056 = vshll.u32 %v1003, 16
    %v1058 = vrot.slane %v1056, 2
    %v1059 = vor.u32 %v1055, %v1058
    %v1060 = vsel %vm1026, %v1051, %v1059
    %v1062 = vshrl.u32 %v843, 16
    %v1064 = vrot.slane %v1062, 1
    %v1065 = vshll.u32 %v843, 16
    %v1067 = vrot.slane %v1065, 2
    %v1068 = vor.u32 %v1064, %v1067
    %v1070 = vshrl.u32 %v1004, 16
    %v1072 = vrot.slane %v1070, 1
    %v1073 = vshll.u32 %v1004, 16
    %v1075 = vrot.slane %v1073, 2
    %v1076 = vor.u32 %v1072, %v1075
    %v1077 = vsel %vm1026, %v1068, %v1076
    %v1079 = vshrl.u32 %v844, 16
    %v1081 = vrot.slane %v1079, 1
    %v1082 = vshll.u32 %v844, 16
    %v1084 = vrot.slane %v1082, 2
    %v1085 = vor.u32 %v1081, %v1084
    %v1087 = vshrl.u32 %v1005, 16
    %v1089 = vrot.slane %v1087, 1
    %v1090 = vshll.u32 %v1005, 16
    %v1092 = vrot.slane %v1090, 2
    %v1093 = vor.u32 %v1089, %v1092
    %v1094 = vsel %vm1026, %v1085, %v1093
    %v1096 = vshrl.u32 %v845, 16
    %v1098 = vrot.slane %v1096, 1
    %v1099 = vshll.u32 %v845, 16
    %v1101 = vrot.slane %v1099, 2
    %v1102 = vor.u32 %v1098, %v1101
    %v1104 = vshrl.u32 %v1006, 16
    %v1106 = vrot.slane %v1104, 1
    %v1107 = vshll.u32 %v1006, 16
    %v1109 = vrot.slane %v1107, 2
    %v1110 = vor.u32 %v1106, %v1109
    %v1111 = vsel %vm1026, %v1102, %v1110
    %v1113 = vshrl.u32 %v846, 16
    %v1115 = vrot.slane %v1113, 1
    %v1116 = vshll.u32 %v846, 16
    %v1118 = vrot.slane %v1116, 2
    %v1119 = vor.u32 %v1115, %v1118
    %v1121 = vshrl.u32 %v1007, 16
    %v1123 = vrot.slane %v1121, 1
    %v1124 = vshll.u32 %v1007, 16
    %v1126 = vrot.slane %v1124, 2
    %v1127 = vor.u32 %v1123, %v1126
    %v1128 = vsel %vm1026, %v1119, %v1127
    %v1130 = vshrl.u32 %v847, 16
    %v1132 = vrot.slane %v1130, 1
    %v1133 = vshll.u32 %v847, 16
    %v1135 = vrot.slane %v1133, 2
    %v1136 = vor.u32 %v1132, %v1135
    %v1138 = vshrl.u32 %v1008, 16
    %v1140 = vrot.slane %v1138, 1
    %v1141 = vshll.u32 %v1008, 16
    %v1143 = vrot.slane %v1141, 2
    %v1144 = vor.u32 %v1140, %v1143
    %v1145 = vsel %vm1026, %v1136, %v1144
    %v1147 = vshrl.u32 %v848, 16
    %v1149 = vrot.slane %v1147, 1
    %v1150 = vshll.u32 %v848, 16
    %v1152 = vrot.slane %v1150, 2
    %v1153 = vor.u32 %v1149, %v1152
    %v1155 = vshrl.u32 %v1009, 16
    %v1157 = vrot.slane %v1155, 1
    %v1158 = vshll.u32 %v1009, 16
    %v1160 = vrot.slane %v1158, 2
    %v1161 = vor.u32 %v1157, %v1160
    %v1162 = vsel %vm1026, %v1153, %v1161
    %v1164 = vshrl.u32 %v849, 16
    %v1166 = vrot.slane %v1164, 1
    %v1167 = vshll.u32 %v849, 16
    %v1169 = vrot.slane %v1167, 2
    %v1170 = vor.u32 %v1166, %v1169
    %v1172 = vshrl.u32 %v1010, 16
    %v1174 = vrot.slane %v1172, 1
    %v1175 = vshll.u32 %v1010, 16
    %v1177 = vrot.slane %v1175, 2
    %v1178 = vor.u32 %v1174, %v1177
    %v1179 = vsel %vm1026, %v1170, %v1178
    %v1181 = vshrl.u32 %v850, 16
    %v1183 = vrot.slane %v1181, 1
    %v1184 = vshll.u32 %v850, 16
    %v1186 = vrot.slane %v1184, 2
    %v1187 = vor.u32 %v1183, %v1186
    %v1189 = vshrl.u32 %v1011, 16
    %v1191 = vrot.slane %v1189, 1
    %v1192 = vshll.u32 %v1011, 16
    %v1194 = vrot.slane %v1192, 2
    %v1195 = vor.u32 %v1191, %v1194
    %v1196 = vsel %vm1026, %v1187, %v1195
    %v1198 = vshrl.u32 %v851, 16
    %v1200 = vrot.slane %v1198, 1
    %v1201 = vshll.u32 %v851, 16
    %v1203 = vrot.slane %v1201, 2
    %v1204 = vor.u32 %v1200, %v1203
    %v1206 = vshrl.u32 %v1012, 16
    %v1208 = vrot.slane %v1206, 1
    %v1209 = vshll.u32 %v1012, 16
    %v1211 = vrot.slane %v1209, 2
    %v1212 = vor.u32 %v1208, %v1211
    %v1213 = vsel %vm1026, %v1204, %v1212
    %v1215 = vshrl.u32 %v852, 16
    %v1217 = vrot.slane %v1215, 1
    %v1218 = vshll.u32 %v852, 16
    %v1220 = vrot.slane %v1218, 2
    %v1221 = vor.u32 %v1217, %v1220
    %v1223 = vshrl.u32 %v1013, 16
    %v1225 = vrot.slane %v1223, 1
    %v1226 = vshll.u32 %v1013, 16
    %v1228 = vrot.slane %v1226, 2
    %v1229 = vor.u32 %v1225, %v1228
    %v1230 = vsel %vm1026, %v1221, %v1229
    %v1232 = vshrl.u32 %v853, 16
    %v1234 = vrot.slane %v1232, 1
    %v1235 = vshll.u32 %v853, 16
    %v1237 = vrot.slane %v1235, 2
    %v1238 = vor.u32 %v1234, %v1237
    %v1240 = vshrl.u32 %v1014, 16
    %v1242 = vrot.slane %v1240, 1
    %v1243 = vshll.u32 %v1014, 16
    %v1245 = vrot.slane %v1243, 2
    %v1246 = vor.u32 %v1242, %v1245
    %v1247 = vsel %vm1026, %v1238, %v1246
    %v1249 = vshrl.u32 %v854, 16
    %v1251 = vrot.slane %v1249, 1
    %v1252 = vshll.u32 %v854, 16
    %v1254 = vrot.slane %v1252, 2
    %v1255 = vor.u32 %v1251, %v1254
    %v1257 = vshrl.u32 %v1015, 16
    %v1259 = vrot.slane %v1257, 1
    %v1260 = vshll.u32 %v1015, 16
    %v1262 = vrot.slane %v1260, 2
    %v1263 = vor.u32 %v1259, %v1262
    %v1264 = vsel %vm1026, %v1255, %v1263
    %v1266 = vshrl.u32 %v855, 16
    %v1268 = vrot.slane %v1266, 1
    %v1269 = vshll.u32 %v855, 16
    %v1271 = vrot.slane %v1269, 2
    %v1272 = vor.u32 %v1268, %v1271
    %v1274 = vshrl.u32 %v1016, 16
    %v1276 = vrot.slane %v1274, 1
    %v1277 = vshll.u32 %v1016, 16
    %v1279 = vrot.slane %v1277, 2
    %v1280 = vor.u32 %v1276, %v1279
    %v1281 = vsel %vm1026, %v1272, %v1280
    %v1283 = vshrl.u32 %v856, 16
    %v1285 = vrot.slane %v1283, 1
    %v1286 = vshll.u32 %v856, 16
    %v1288 = vrot.slane %v1286, 2
    %v1289 = vor.u32 %v1285, %v1288
    %v1291 = vshrl.u32 %v1017, 16
    %v1293 = vrot.slane %v1291, 1
    %v1294 = vshll.u32 %v1017, 16
    %v1296 = vrot.slane %v1294, 2
    %v1297 = vor.u32 %v1293, %v1296
    %v1298 = vsel %vm1026, %v1289, %v1297
    %v1300 = vshrl.u32 %v857, 16
    %v1302 = vrot.slane %v1300, 1
    %v1303 = vshll.u32 %v857, 16
    %v1305 = vrot.slane %v1303, 2
    %v1306 = vor.u32 %v1302, %v1305
    %v1308 = vshrl.u32 %v1018, 16
    %v1310 = vrot.slane %v1308, 1
    %v1311 = vshll.u32 %v1018, 16
    %v1313 = vrot.slane %v1311, 2
    %v1314 = vor.u32 %v1310, %v1313
    %v1315 = vsel %vm1026, %v1306, %v1314
    %v1317 = vshrl.u32 %v858, 16
    %v1319 = vrot.slane %v1317, 1
    %v1320 = vshll.u32 %v858, 16
    %v1322 = vrot.slane %v1320, 2
    %v1323 = vor.u32 %v1319, %v1322
    %v1325 = vshrl.u32 %v1019, 16
    %v1327 = vrot.slane %v1325, 1
    %v1328 = vshll.u32 %v1019, 16
    %v1330 = vrot.slane %v1328, 2
    %v1331 = vor.u32 %v1327, %v1330
    %v1332 = vsel %vm1026, %v1323, %v1331
    %v1334 = vshrl.u32 %v859, 16
    %v1336 = vrot.slane %v1334, 1
    %v1337 = vshll.u32 %v859, 16
    %v1339 = vrot.slane %v1337, 2
    %v1340 = vor.u32 %v1336, %v1339
    %v1342 = vshrl.u32 %v1020, 16
    %v1344 = vrot.slane %v1342, 1
    %v1345 = vshll.u32 %v1020, 16
    %v1347 = vrot.slane %v1345, 2
    %v1348 = vor.u32 %v1344, %v1347
    %v1349 = vsel %vm1026, %v1340, %v1348
    %v1351 = vshrl.u32 %v860, 16
    %v1353 = vrot.slane %v1351, 1
    %v1354 = vshll.u32 %v860, 16
    %v1356 = vrot.slane %v1354, 2
    %v1357 = vor.u32 %v1353, %v1356
    %v1359 = vshrl.u32 %v1021, 16
    %v1361 = vrot.slane %v1359, 1
    %v1362 = vshll.u32 %v1021, 16
    %v1364 = vrot.slane %v1362, 2
    %v1365 = vor.u32 %v1361, %v1364
    %v1366 = vsel %vm1026, %v1357, %v1365
    %v1368 = vshrl.u32 %v861, 16
    %v1370 = vrot.slane %v1368, 1
    %v1371 = vshll.u32 %v861, 16
    %v1373 = vrot.slane %v1371, 2
    %v1374 = vor.u32 %v1370, %v1373
    %v1376 = vshrl.u32 %v1022, 16
    %v1378 = vrot.slane %v1376, 1
    %v1379 = vshll.u32 %v1022, 16
    %v1381 = vrot.slane %v1379, 2
    %v1382 = vor.u32 %v1378, %v1381
    %v1383 = vsel %vm1026, %v1374, %v1382
    %v1385 = vshrl.u32 %v862, 16
    %v1387 = vrot.slane %v1385, 1
    %v1388 = vshll.u32 %v862, 16
    %v1390 = vrot.slane %v1388, 2
    %v1391 = vor.u32 %v1387, %v1390
    %v1393 = vshrl.u32 %v1023, 16
    %v1395 = vrot.slane %v1393, 1
    %v1396 = vshll.u32 %v1023, 16
    %v1398 = vrot.slane %v1396, 2
    %v1399 = vor.u32 %v1395, %v1398
    %v1400 = vsel %vm1026, %v1391, %v1399
    %v1402 = vshrl.u32 %v863, 16
    %v1404 = vrot.slane %v1402, 1
    %v1405 = vshll.u32 %v863, 16
    %v1407 = vrot.slane %v1405, 2
    %v1408 = vor.u32 %v1404, %v1407
    %v1410 = vshrl.u32 %v1024, 16
    %v1412 = vrot.slane %v1410, 1
    %v1413 = vshll.u32 %v1024, 16
    %v1415 = vrot.slane %v1413, 2
    %v1416 = vor.u32 %v1412, %v1415
    %v1417 = vsel %vm1026, %v1408, %v1416
    %v1419 = vshrl.u32 %v864, 16
    %v1421 = vrot.slane %v1419, 1
    %v1422 = vshll.u32 %v864, 16
    %v1424 = vrot.slane %v1422, 2
    %v1425 = vor.u32 %v1421, %v1424
    %v1427 = vshrl.u32 %v1025, 16
    %v1429 = vrot.slane %v1427, 1
    %v1430 = vshll.u32 %v1025, 16
    %v1432 = vrot.slane %v1430, 2
    %v1433 = vor.u32 %v1429, %v1432
    %v1434 = vsel %vm1026, %v1425, %v1433
    %v1475 = vunpack.c.l.b16 %v200
    %v1476 = vunpack.c.h.b16 %v200
    %v1477 = vunpack.c.l.b16 %v201
    %v1478 = vunpack.c.l.b16 %v202
    %v1479 = vunpack.c.h.b16 %v202
    %v1480 = vunpack.c.l.b16 %v203
    %v1481 = vunpack.c.l.b16 %v204
    %v1482 = vunpack.c.h.b16 %v204
    %v1483 = vunpack.c.l.b16 %v205
    %v1484 = vunpack.c.l.b16 %v206
    %v1485 = vunpack.c.h.b16 %v206
    %v1486 = vunpack.c.l.b16 %v207
    %v1487 = vunpack.c.l.b16 %v208
    %v1488 = vunpack.c.h.b16 %v208
    %v1489 = vunpack.c.l.b16 %v209
    %v1490 = vunpack.c.l.b16 %v210
    %v1491 = vunpack.c.h.b16 %v210
    %v1492 = vunpack.c.l.b16 %v211
    %v1493 = vunpack.c.l.b16 %v212
    %v1494 = vunpack.c.h.b16 %v212
    %v1495 = vunpack.c.l.b16 %v213
    %v1496 = vunpack.c.l.b16 %v214
    %v1497 = vunpack.c.h.b16 %v214
    %v1498 = vunpack.c.l.b16 %v215
    %v1499 = vpack.c.b16 %v331, %v1475
    %v1500 = vpack.c.b16 %v332, %v1476
    %v1501 = vpack.c.b16 %v333, %v1477
    %v1502 = vpack.c.b16 %v337, %v1478
    %v1503 = vpack.c.b16 %v338, %v1479
    %v1504 = vpack.c.b16 %v339, %v1480
    %v1505 = vpack.c.b16 %v343, %v1481
    %v1506 = vpack.c.b16 %v344, %v1482
    %v1507 = vpack.c.b16 %v345, %v1483
    %v1508 = vpack.c.b16 %v349, %v1484
    %v1509 = vpack.c.b16 %v350, %v1485
    %v1510 = vpack.c.b16 %v351, %v1486
    %v1511 = vpack.c.b16 %v355, %v1487
    %v1512 = vpack.c.b16 %v356, %v1488
    %v1513 = vpack.c.b16 %v357, %v1489
    %v1514 = vpack.c.b16 %v361, %v1490
    %v1515 = vpack.c.b16 %v362, %v1491
    %v1516 = vpack.c.b16 %v363, %v1492
    %v1517 = vpack.c.b16 %v367, %v1493
    %v1518 = vpack.c.b16 %v368, %v1494
    %v1519 = vpack.c.b16 %v369, %v1495
    %v1520 = vpack.c.b16 %v373, %v1496
    %v1521 = vpack.c.b16 %v374, %v1497
    %v1522 = vpack.c.b16 %v375, %v1498
    %vm1523 = vcmask 1045504
    %v1524 = vrot.slane %v1499, 2
    %v1525 = vrot.slane %v1002, 2
    %v1526 = vsel %vm1523, %v1524, %v1525
    %v1527 = vrot.slane %v1500, 2
    %v1528 = vrot.slane %v1003, 2
    %v1529 = vsel %vm1523, %v1527, %v1528
    %v1530 = vrot.slane %v1501, 2
    %v1531 = vrot.slane %v1004, 2
    %v1532 = vsel %vm1523, %v1530, %v1531
    %v1533 = vrot.slane %v1502, 2
    %v1534 = vrot.slane %v1005, 2
    %v1535 = vsel %vm1523, %v1533, %v1534
    %v1536 = vrot.slane %v1503, 2
    %v1537 = vrot.slane %v1006, 2
    %v1538 = vsel %vm1523, %v1536, %v1537
    %v1539 = vrot.slane %v1504, 2
    %v1540 = vrot.slane %v1007, 2
    %v1541 = vsel %vm1523, %v1539, %v1540
    %v1542 = vrot.slane %v1505, 2
    %v1543 = vrot.slane %v1008, 2
    %v1544 = vsel %vm1523, %v1542, %v1543
    %v1545 = vrot.slane %v1506, 2
    %v1546 = vrot.slane %v1009, 2
    %v1547 = vsel %vm1523, %v1545, %v1546
    %v1548 = vrot.slane %v1507, 2
    %v1549 = vrot.slane %v1010, 2
    %v1550 = vsel %vm1523, %v1548, %v1549
    %v1551 = vrot.slane %v1508, 2
    %v1552 = vrot.slane %v1011, 2
    %v1553 = vsel %vm1523, %v1551, %v1552
    %v1554 = vrot.slane %v1509, 2
    %v1555 = vrot.slane %v1012, 2
    %v1556 = vsel %vm1523, %v1554, %v1555
    %v1557 = vrot.slane %v1510, 2
    %v1558 = vrot.slane %v1013, 2
    %v1559 = vsel %vm1523, %v1557, %v1558
    %v1560 = vrot.slane %v1511, 2
    %v1561 = vrot.slane %v1014, 2
    %v1562 = vsel %vm1523, %v1560, %v1561
    %v1563 = vrot.slane %v1512, 2
    %v1564 = vrot.slane %v1015, 2
    %v1565 = vsel %vm1523, %v1563, %v1564
    %v1566 = vrot.slane %v1513, 2
    %v1567 = vrot.slane %v1016, 2
    %v1568 = vsel %vm1523, %v1566, %v1567
    %v1569 = vrot.slane %v1514, 2
    %v1570 = vrot.slane %v1017, 2
    %v1571 = vsel %vm1523, %v1569, %v1570
    %v1572 = vrot.slane %v1515, 2
    %v1573 = vrot.slane %v1018, 2
    %v1574 = vsel %vm1523, %v1572, %v1573
    %v1575 = vrot.slane %v1516, 2
    %v1576 = vrot.slane %v1019, 2
    %v1577 = vsel %vm1523, %v1575, %v1576
    %v1578 = vrot.slane %v1517, 2
    %v1579 = vrot.slane %v1020, 2
    %v1580 = vsel %vm1523, %v1578, %v1579
    %v1581 = vrot.slane %v1518, 2
    %v1582 = vrot.slane %v1021, 2
    %v1583 = vsel %vm1523, %v1581, %v1582
    %v1584 = vrot.slane %v1519, 2
    %v1585 = vrot.slane %v1022, 2
    %v1586 = vsel %vm1523, %v1584, %v1585
    %v1587 = vrot.slane %v1520, 2
    %v1588 = vrot.slane %v1023, 2
    %v1589 = vsel %vm1523, %v1587, %v1588
    %v1590 = vrot.slane %v1521, 2
    %v1591 = vrot.slane %v1024, 2
    %v1592 = vsel %vm1523, %v1590, %v1591
    %v1593 = vrot.slane %v1522, 2
    %v1594 = vrot.slane %v1025, 2
    %v1595 = vsel %vm1523, %v1593, %v1594
    %v1636 = vunpack.c.l.b16 %v216
    %v1637 = vunpack.c.h.b16 %v216
    %v1638 = vunpack.c.l.b16 %v217
    %v1639 = vunpack.c.l.b16 %v218
    %v1640 = vunpack.c.h.b16 %v218
    %v1641 = vunpack.c.l.b16 %v219
    %v1642 = vunpack.c.l.b16 %v220
    %v1643 = vunpack.c.h.b16 %v220
    %v1644 = vunpack.c.l.b16 %v221
    %v1645 = vunpack.c.l.b16 %v222
    %v1646 = vunpack.c.h.b16 %v222
    %v1647 = vunpack.c.l.b16 %v223
    %v1648 = vunpack.c.l.b16 %v224
    %v1649 = vunpack.c.h.b16 %v224
    %v1650 = vunpack.c.l.b16 %v225
    %v1651 = vunpack.c.l.b16 %v226
    %v1652 = vunpack.c.h.b16 %v226
    %v1653 = vunpack.c.l.b16 %v227
    %v1654 = vunpack.c.l.b16 %v228
    %v1655 = vunpack.c.h.b16 %v228
    %v1656 = vunpack.c.l.b16 %v229
    %v1657 = vunpack.c.l.b16 %v230
    %v1658 = vunpack.c.h.b16 %v230
    %v1659 = vunpack.c.l.b16 %v231
    %v1660 = vpack.c.b16 %v1636, %v1636
    %v1661 = vpack.c.b16 %v1637, %v1637
    %v1662 = vpack.c.b16 %v1638, %v1638
    %v1663 = vpack.c.b16 %v1639, %v1639
    %v1664 = vpack.c.b16 %v1640, %v1640
    %v1665 = vpack.c.b16 %v1641, %v1641
    %v1666 = vpack.c.b16 %v1642, %v1642
    %v1667 = vpack.c.b16 %v1643, %v1643
    %v1668 = vpack.c.b16 %v1644, %v1644
    %v1669 = vpack.c.b16 %v1645, %v1645
    %v1670 = vpack.c.b16 %v1646, %v1646
    %v1671 = vpack.c.b16 %v1647, %v1647
    %v1672 = vpack.c.b16 %v1648, %v1648
    %v1673 = vpack.c.b16 %v1649, %v1649
    %v1674 = vpack.c.b16 %v1650, %v1650
    %v1675 = vpack.c.b16 %v1651, %v1651
    %v1676 = vpack.c.b16 %v1652, %v1652
    %v1677 = vpack.c.b16 %v1653, %v1653
    %v1678 = vpack.c.b16 %v1654, %v1654
    %v1679 = vpack.c.b16 %v1655, %v1655
    %v1680 = vpack.c.b16 %v1656, %v1656
    %v1681 = vpack.c.b16 %v1657, %v1657
    %v1682 = vpack.c.b16 %v1658, %v1658
    %v1683 = vpack.c.b16 %v1659, %v1659
    %vm1684 = vsmask.f32 5376
    %v1686 = vshrl.u32 %v1499, 16
    %v1688 = vrot.slane %v1686, 2
    %v1689 = vshll.u32 %v1499, 16
    %v1691 = vrot.slane %v1689, 3
    %v1692 = vor.u32 %v1688, %v1691
    %v1694 = vshrl.u32 %v1660, 16
    %v1696 = vrot.slane %v1694, 2
    %v1697 = vshll.u32 %v1660, 16
    %v1699 = vrot.slane %v1697, 3
    %v1700 = vor.u32 %v1696, %v1699
    %v1701 = vsel %vm1684, %v1692, %v1700
    %v1703 = vshrl.u32 %v1500, 16
    %v1705 = vrot.slane %v1703, 2
    %v1706 = vshll.u32 %v1500, 16
    %v1708 = vrot.slane %v1706, 3
    %v1709 = vor.u32 %v1705, %v1708
    %v1711 = vshrl.u32 %v1661, 16
    %v1713 = vrot.slane %v1711, 2
    %v1714 = vshll.u32 %v1661, 16
    %v1716 = vrot.slane %v1714, 3
    %v1717 = vor.u32 %v1713, %v1716
    %v1718 = vsel %vm1684, %v1709, %v1717
    %v1720 = vshrl.u32 %v1501, 16
    %v1722 = vrot.slane %v1720, 2
    %v1723 = vshll.u32 %v1501, 16
    %v1725 = vrot.slane %v1723, 3
    %v1726 = vor.u32 %v1722, %v1725
    %v1728 = vshrl.u32 %v1662, 16
    %v1730 = vrot.slane %v1728, 2
    %v1731 = vshll.u32 %v1662, 16
    %v1733 = vrot.slane %v1731, 3
    %v1734 = vor.u32 %v1730, %v1733
    %v1735 = vsel %vm1684, %v1726, %v1734
    %v1737 = vshrl.u32 %v1502, 16
    %v1739 = vrot.slane %v1737, 2
    %v1740 = vshll.u32 %v1502, 16
    %v1742 = vrot.slane %v1740, 3
    %v1743 = vor.u32 %v1739, %v1742
    %v1745 = vshrl.u32 %v1663, 16
    %v1747 = vrot.slane %v1745, 2
    %v1748 = vshll.u32 %v1663, 16
    %v1750 = vrot.slane %v1748, 3
    %v1751 = vor.u32 %v1747, %v1750
    %v1752 = vsel %vm1684, %v1743, %v1751
    %v1754 = vshrl.u32 %v1503, 16
    %v1756 = vrot.slane %v1754, 2
    %v1757 = vshll.u32 %v1503, 16
    %v1759 = vrot.slane %v1757, 3
    %v1760 = vor.u32 %v1756, %v1759
    %v1762 = vshrl.u32 %v1664, 16
    %v1764 = vrot.slane %v1762, 2
    %v1765 = vshll.u32 %v1664, 16
    %v1767 = vrot.slane %v1765, 3
    %v1768 = vor.u32 %v1764, %v1767
    %v1769 = vsel %vm1684, %v1760, %v1768
    %v1771 = vshrl.u32 %v1504, 16
    %v1773 = vrot.slane %v1771, 2
    %v1774 = vshll.u32 %v1504, 16
    %v1776 = vrot.slane %v1774, 3
    %v1777 = vor.u32 %v1773, %v1776
    %v1779 = vshrl.u32 %v1665, 16
    %v1781 = vrot.slane %v1779, 2
    %v1782 = vshll.u32 %v1665, 16
    %v1784 = vrot.slane %v1782, 3
    %v1785 = vor.u32 %v1781, %v1784
    %v1786 = vsel %vm1684, %v1777, %v1785
    %v1788 = vshrl.u32 %v1505, 16
    %v1790 = vrot.slane %v1788, 2
    %v1791 = vshll.u32 %v1505, 16
    %v1793 = vrot.slane %v1791, 3
    %v1794 = vor.u32 %v1790, %v1793
    %v1796 = vshrl.u32 %v1666, 16
    %v1798 = vrot.slane %v1796, 2
    %v1799 = vshll.u32 %v1666, 16
    %v1801 = vrot.slane %v1799, 3
    %v1802 = vor.u32 %v1798, %v1801
    %v1803 = vsel %vm1684, %v1794, %v1802
    %v1805 = vshrl.u32 %v1506, 16
    %v1807 = vrot.slane %v1805, 2
    %v1808 = vshll.u32 %v1506, 16
    %v1810 = vrot.slane %v1808, 3
    %v1811 = vor.u32 %v1807, %v1810
    %v1813 = vshrl.u32 %v1667, 16
    %v1815 = vrot.slane %v1813, 2
    %v1816 = vshll.u32 %v1667, 16
    %v1818 = vrot.slane %v1816, 3
    %v1819 = vor.u32 %v1815, %v1818
    %v1820 = vsel %vm1684, %v1811, %v1819
    %v1822 = vshrl.u32 %v1507, 16
    %v1824 = vrot.slane %v1822, 2
    %v1825 = vshll.u32 %v1507, 16
    %v1827 = vrot.slane %v1825, 3
    %v1828 = vor.u32 %v1824, %v1827
    %v1830 = vshrl.u32 %v1668, 16
    %v1832 = vrot.slane %v1830, 2
    %v1833 = vshll.u32 %v1668, 16
    %v1835 = vrot.slane %v1833, 3
    %v1836 = vor.u32 %v1832, %v1835
    %v1837 = vsel %vm1684, %v1828, %v1836
    %v1839 = vshrl.u32 %v1508, 16
    %v1841 = vrot.slane %v1839, 2
    %v1842 = vshll.u32 %v1508, 16
    %v1844 = vrot.slane %v1842, 3
    %v1845 = vor.u32 %v1841, %v1844
    %v1847 = vshrl.u32 %v1669, 16
    %v1849 = vrot.slane %v1847, 2
    %v1850 = vshll.u32 %v1669, 16
    %v1852 = vrot.slane %v1850, 3
    %v1853 = vor.u32 %v1849, %v1852
    %v1854 = vsel %vm1684, %v1845, %v1853
    %v1856 = vshrl.u32 %v1509, 16
    %v1858 = vrot.slane %v1856, 2
    %v1859 = vshll.u32 %v1509, 16
    %v1861 = vrot.slane %v1859, 3
    %v1862 = vor.u32 %v1858, %v1861
    %v1864 = vshrl.u32 %v1670, 16
    %v1866 = vrot.slane %v1864, 2
    %v1867 = vshll.u32 %v1670, 16
    %v1869 = vrot.slane %v1867, 3
    %v1870 = vor.u32 %v1866, %v1869
    %v1871 = vsel %vm1684, %v1862, %v1870
    %v1873 = vshrl.u32 %v1510, 16
    %v1875 = vrot.slane %v1873, 2
    %v1876 = vshll.u32 %v1510, 16
    %v1878 = vrot.slane %v1876, 3
    %v1879 = vor.u32 %v1875, %v1878
    %v1881 = vshrl.u32 %v1671, 16
    %v1883 = vrot.slane %v1881, 2
    %v1884 = vshll.u32 %v1671, 16
    %v1886 = vrot.slane %v1884, 3
    %v1887 = vor.u32 %v1883, %v1886
    %v1888 = vsel %vm1684, %v1879, %v1887
    %v1890 = vshrl.u32 %v1511, 16
    %v1892 = vrot.slane %v1890, 2
    %v1893 = vshll.u32 %v1511, 16
    %v1895 = vrot.slane %v1893, 3
    %v1896 = vor.u32 %v1892, %v1895
    %v1898 = vshrl.u32 %v1672, 16
    %v1900 = vrot.slane %v1898, 2
    %v1901 = vshll.u32 %v1672, 16
    %v1903 = vrot.slane %v1901, 3
    %v1904 = vor.u32 %v1900, %v1903
    %v1905 = vsel %vm1684, %v1896, %v1904
    %v1907 = vshrl.u32 %v1512, 16
    %v1909 = vrot.slane %v1907, 2
    %v1910 = vshll.u32 %v1512, 16
    %v1912 = vrot.slane %v1910, 3
    %v1913 = vor.u32 %v1909, %v1912
    %v1915 = vshrl.u32 %v1673, 16
    %v1917 = vrot.slane %v1915, 2
    %v1918 = vshll.u32 %v1673, 16
    %v1920 = vrot.slane %v1918, 3
    %v1921 = vor.u32 %v1917, %v1920
    %v1922 = vsel %vm1684, %v1913, %v1921
    %v1924 = vshrl.u32 %v1513, 16
    %v1926 = vrot.slane %v1924, 2
    %v1927 = vshll.u32 %v1513, 16
    %v1929 = vrot.slane %v1927, 3
    %v1930 = vor.u32 %v1926, %v1929
    %v1932 = vshrl.u32 %v1674, 16
    %v1934 = vrot.slane %v1932, 2
    %v1935 = vshll.u32 %v1674, 16
    %v1937 = vrot.slane %v1935, 3
    %v1938 = vor.u32 %v1934, %v1937
    %v1939 = vsel %vm1684, %v1930, %v1938
    %v1941 = vshrl.u32 %v1514, 16
    %v1943 = vrot.slane %v1941, 2
    %v1944 = vshll.u32 %v1514, 16
    %v1946 = vrot.slane %v1944, 3
    %v1947 = vor.u32 %v1943, %v1946
    %v1949 = vshrl.u32 %v1675, 16
    %v1951 = vrot.slane %v1949, 2
    %v1952 = vshll.u32 %v1675, 16
    %v1954 = vrot.slane %v1952, 3
    %v1955 = vor.u32 %v1951, %v1954
    %v1956 = vsel %vm1684, %v1947, %v1955
    %v1958 = vshrl.u32 %v1515, 16
    %v1960 = vrot.slane %v1958, 2
    %v1961 = vshll.u32 %v1515, 16
    %v1963 = vrot.slane %v1961, 3
    %v1964 = vor.u32 %v1960, %v1963
    %v1966 = vshrl.u32 %v1676, 16
    %v1968 = vrot.slane %v1966, 2
    %v1969 = vshll.u32 %v1676, 16
    %v1971 = vrot.slane %v1969, 3
    %v1972 = vor.u32 %v1968, %v1971
    %v1973 = vsel %vm1684, %v1964, %v1972
    %v1975 = vshrl.u32 %v1516, 16
    %v1977 = vrot.slane %v1975, 2
    %v1978 = vshll.u32 %v1516, 16
    %v1980 = vrot.slane %v1978, 3
    %v1981 = vor.u32 %v1977, %v1980
    %v1983 = vshrl.u32 %v1677, 16
    %v1985 = vrot.slane %v1983, 2
    %v1986 = vshll.u32 %v1677, 16
    %v1988 = vrot.slane %v1986, 3
    %v1989 = vor.u32 %v1985, %v1988
    %v1990 = vsel %vm1684, %v1981, %v1989
    %v1992 = vshrl.u32 %v1517, 16
    %v1994 = vrot.slane %v1992, 2
    %v1995 = vshll.u32 %v1517, 16
    %v1997 = vrot.slane %v1995, 3
    %v1998 = vor.u32 %v1994, %v1997
    %v2000 = vshrl.u32 %v1678, 16
    %v2002 = vrot.slane %v2000, 2
    %v2003 = vshll.u32 %v1678, 16
    %v2005 = vrot.slane %v2003, 3
    %v2006 = vor.u32 %v2002, %v2005
    %v2007 = vsel %vm1684, %v1998, %v2006
    %v2009 = vshrl.u32 %v1518, 16
    %v2011 = vrot.slane %v2009, 2
    %v2012 = vshll.u32 %v1518, 16
    %v2014 = vrot.slane %v2012, 3
    %v2015 = vor.u32 %v2011, %v2014
    %v2017 = vshrl.u32 %v1679, 16
    %v2019 = vrot.slane %v2017, 2
    %v2020 = vshll.u32 %v1679, 16
    %v2022 = vrot.slane %v2020, 3
    %v2023 = vor.u32 %v2019, %v2022
    %v2024 = vsel %vm1684, %v2015, %v2023
    %v2026 = vshrl.u32 %v1519, 16
    %v2028 = vrot.slane %v2026, 2
    %v2029 = vshll.u32 %v1519, 16
    %v2031 = vrot.slane %v2029, 3
    %v2032 = vor.u32 %v2028, %v2031
    %v2034 = vshrl.u32 %v1680, 16
    %v2036 = vrot.slane %v2034, 2
    %v2037 = vshll.u32 %v1680, 16
    %v2039 = vrot.slane %v2037, 3
    %v2040 = vor.u32 %v2036, %v2039
    %v2041 = vsel %vm1684, %v2032, %v2040
    %v2043 = vshrl.u32 %v1520, 16
    %v2045 = vrot.slane %v2043, 2
    %v2046 = vshll.u32 %v1520, 16
    %v2048 = vrot.slane %v2046, 3
    %v2049 = vor.u32 %v2045, %v2048
    %v2051 = vshrl.u32 %v1681, 16
    %v2053 = vrot.slane %v2051, 2
    %v2054 = vshll.u32 %v1681, 16
    %v2056 = vrot.slane %v2054, 3
    %v2057 = vor.u32 %v2053, %v2056
    %v2058 = vsel %vm1684, %v2049, %v2057
    %v2060 = vshrl.u32 %v1521, 16
    %v2062 = vrot.slane %v2060, 2
    %v2063 = vshll.u32 %v1521, 16
    %v2065 = vrot.slane %v2063, 3
    %v2066 = vor.u32 %v2062, %v2065
    %v2068 = vshrl.u32 %v1682, 16
    %v2070 = vrot.slane %v2068, 2
    %v2071 = vshll.u32 %v1682, 16
    %v2073 = vrot.slane %v2071, 3
    %v2074 = vor.u32 %v2070, %v2073
    %v2075 = vsel %vm1684, %v2066, %v2074
    %v2077 = vshrl.u32 %v1522, 16
    %v2079 = vrot.slane %v2077, 2
    %v2080 = vshll.u32 %v1522, 16
    %v2082 = vrot.slane %v2080, 3
    %v2083 = vor.u32 %v2079, %v2082
    %v2085 = vshrl.u32 %v1683, 16
    %v2087 = vrot.slane %v2085, 2
    %v2088 = vshll.u32 %v1683, 16
    %v2090 = vrot.slane %v2088, 3
    %v2091 = vor.u32 %v2087, %v2090
    %v2092 = vsel %vm1684, %v2083, %v2091
    %v2133 = vunpack.c.l.b16 %v232
    %v2134 = vunpack.c.h.b16 %v232
    %v2135 = vunpack.c.l.b16 %v233
    %v2136 = vunpack.c.l.b16 %v234
    %v2137 = vunpack.c.h.b16 %v234
    %v2138 = vunpack.c.l.b16 %v235
    %v2139 = vunpack.c.l.b16 %v236
    %v2140 = vunpack.c.h.b16 %v236
    %v2141 = vunpack.c.l.b16 %v237
    %v2142 = vunpack.c.l.b16 %v238
    %v2143 = vunpack.c.h.b16 %v238
    %v2144 = vunpack.c.l.b16 %v239
    %v2145 = vunpack.c.l.b16 %v240
    %v2146 = vunpack.c.h.b16 %v240
    %v2147 = vunpack.c.l.b16 %v241
    %v2148 = vunpack.c.l.b16 %v242
    %v2149 = vunpack.c.h.b16 %v242
    %v2150 = vunpack.c.l.b16 %v243
    %v2151 = vunpack.c.l.b16 %v244
    %v2152 = vunpack.c.h.b16 %v244
    %v2153 = vunpack.c.l.b16 %v245
    %v2154 = vunpack.c.l.b16 %v246
    %v2155 = vunpack.c.h.b16 %v246
    %v2156 = vunpack.c.l.b16 %v247
    %v2157 = vpack.c.b16 %v331, %v2133
    %v2158 = vpack.c.b16 %v332, %v2134
    %v2159 = vpack.c.b16 %v333, %v2135
    %v2160 = vpack.c.b16 %v337, %v2136
    %v2161 = vpack.c.b16 %v338, %v2137
    %v2162 = vpack.c.b16 %v339, %v2138
    %v2163 = vpack.c.b16 %v343, %v2139
    %v2164 = vpack.c.b16 %v344, %v2140
    %v2165 = vpack.c.b16 %v345, %v2141
    %v2166 = vpack.c.b16 %v349, %v2142
    %v2167 = vpack.c.b16 %v350, %v2143
    %v2168 = vpack.c.b16 %v351, %v2144
    %v2169 = vpack.c.b16 %v355, %v2145
    %v2170 = vpack.c.b16 %v356, %v2146
    %v2171 = vpack.c.b16 %v357, %v2147
    %v2172 = vpack.c.b16 %v361, %v2148
    %v2173 = vpack.c.b16 %v362, %v2149
    %v2174 = vpack.c.b16 %v363, %v2150
    %v2175 = vpack.c.b16 %v367, %v2151
    %v2176 = vpack.c.b16 %v368, %v2152
    %v2177 = vpack.c.b16 %v369, %v2153
    %v2178 = vpack.c.b16 %v373, %v2154
    %v2179 = vpack.c.b16 %v374, %v2155
    %v2180 = vpack.c.b16 %v375, %v2156
    %vm2181 = vcmask 1044480
    %v2182 = vrot.slane %v2157, 3
    %v2183 = vrot.slane %v1660, 3
    %v2184 = vsel %vm2181, %v2182, %v2183
    %v2185 = vrot.slane %v2158, 3
    %v2186 = vrot.slane %v1661, 3
    %v2187 = vsel %vm2181, %v2185, %v2186
    %v2188 = vrot.slane %v2159, 3
    %v2189 = vrot.slane %v1662, 3
    %v2190 = vsel %vm2181, %v2188, %v2189
    %v2191 = vrot.slane %v2160, 3
    %v2192 = vrot.slane %v1663, 3
    %v2193 = vsel %vm2181, %v2191, %v2192
    %v2194 = vrot.slane %v2161, 3
    %v2195 = vrot.slane %v1664, 3
    %v2196 = vsel %vm2181, %v2194, %v2195
    %v2197 = vrot.slane %v2162, 3
    %v2198 = vrot.slane %v1665, 3
    %v2199 = vsel %vm2181, %v2197, %v2198
    %v2200 = vrot.slane %v2163, 3
    %v2201 = vrot.slane %v1666, 3
    %v2202 = vsel %vm2181, %v2200, %v2201
    %v2203 = vrot.slane %v2164, 3
    %v2204 = vrot.slane %v1667, 3
    %v2205 = vsel %vm2181, %v2203, %v2204
    %v2206 = vrot.slane %v2165, 3
    %v2207 = vrot.slane %v1668, 3
    %v2208 = vsel %vm2181, %v2206, %v2207
    %v2209 = vrot.slane %v2166, 3
    %v2210 = vrot.slane %v1669, 3
    %v2211 = vsel %vm2181, %v2209, %v2210
    %v2212 = vrot.slane %v2167, 3
    %v2213 = vrot.slane %v1670, 3
    %v2214 = vsel %vm2181, %v2212, %v2213
    %v2215 = vrot.slane %v2168, 3
    %v2216 = vrot.slane %v1671, 3
    %v2217 = vsel %vm2181, %v2215, %v2216
    %v2218 = vrot.slane %v2169, 3
    %v2219 = vrot.slane %v1672, 3
    %v2220 = vsel %vm2181, %v2218, %v2219
    %v2221 = vrot.slane %v2170, 3
    %v2222 = vrot.slane %v1673, 3
    %v2223 = vsel %vm2181, %v2221, %v2222
    %v2224 = vrot.slane %v2171, 3
    %v2225 = vrot.slane %v1674, 3
    %v2226 = vsel %vm2181, %v2224, %v2225
    %v2227 = vrot.slane %v2172, 3
    %v2228 = vrot.slane %v1675, 3
    %v2229 = vsel %vm2181, %v2227, %v2228
    %v2230 = vrot.slane %v2173, 3
    %v2231 = vrot.slane %v1676, 3
    %v2232 = vsel %vm2181, %v2230, %v2231
    %v2233 = vrot.slane %v2174, 3
    %v2234 = vrot.slane %v1677, 3
    %v2235 = vsel %vm2181, %v2233, %v2234
    %v2236 = vrot.slane %v2175, 3
    %v2237 = vrot.slane %v1678, 3
    %v2238 = vsel %vm2181, %v2236, %v2237
    %v2239 = vrot.slane %v2176, 3
    %v2240 = vrot.slane %v1679, 3
    %v2241 = vsel %vm2181, %v2239, %v2240
    %v2242 = vrot.slane %v2177, 3
    %v2243 = vrot.slane %v1680, 3
    %v2244 = vsel %vm2181, %v2242, %v2243
    %v2245 = vrot.slane %v2178, 3
    %v2246 = vrot.slane %v1681, 3
    %v2247 = vsel %vm2181, %v2245, %v2246
    %v2248 = vrot.slane %v2179, 3
    %v2249 = vrot.slane %v1682, 3
    %v2250 = vsel %vm2181, %v2248, %v2249
    %v2251 = vrot.slane %v2180, 3
    %v2252 = vrot.slane %v1683, 3
    %v2253 = vsel %vm2181, %v2251, %v2252
    %v2294 = vunpack.c.l.b16 %v248
    %v2295 = vunpack.c.h.b16 %v248
    %v2296 = vunpack.c.l.b16 %v249
    %v2297 = vunpack.c.l.b16 %v250
    %v2298 = vunpack.c.h.b16 %v250
    %v2299 = vunpack.c.l.b16 %v251
    %v2300 = vunpack.c.l.b16 %v252
    %v2301 = vunpack.c.h.b16 %v252
    %v2302 = vunpack.c.l.b16 %v253
    %v2303 = vunpack.c.l.b16 %v254
    %v2304 = vunpack.c.h.b16 %v254
    %v2305 = vunpack.c.l.b16 %v255
    %v2306 = vunpack.c.l.b16 %v256
    %v2307 = vunpack.c.h.b16 %v256
    %v2308 = vunpack.c.l.b16 %v257
    %v2309 = vunpack.c.l.b16 %v258
    %v2310 = vunpack.c.h.b16 %v258
    %v2311 = vunpack.c.l.b16 %v259
    %v2312 = vunpack.c.l.b16 %v260
    %v2313 = vunpack.c.h.b16 %v260
    %v2314 = vunpack.c.l.b16 %v261
    %v2315 = vunpack.c.l.b16 %v262
    %v2316 = vunpack.c.h.b16 %v262
    %v2317 = vunpack.c.l.b16 %v263
    %v2318 = vpack.c.b16 %v2294, %v2294
    %v2319 = vpack.c.b16 %v2295, %v2295
    %v2320 = vpack.c.b16 %v2296, %v2296
    %v2321 = vpack.c.b16 %v2297, %v2297
    %v2322 = vpack.c.b16 %v2298, %v2298
    %v2323 = vpack.c.b16 %v2299, %v2299
    %v2324 = vpack.c.b16 %v2300, %v2300
    %v2325 = vpack.c.b16 %v2301, %v2301
    %v2326 = vpack.c.b16 %v2302, %v2302
    %v2327 = vpack.c.b16 %v2303, %v2303
    %v2328 = vpack.c.b16 %v2304, %v2304
    %v2329 = vpack.c.b16 %v2305, %v2305
    %v2330 = vpack.c.b16 %v2306, %v2306
    %v2331 = vpack.c.b16 %v2307, %v2307
    %v2332 = vpack.c.b16 %v2308, %v2308
    %v2333 = vpack.c.b16 %v2309, %v2309
    %v2334 = vpack.c.b16 %v2310, %v2310
    %v2335 = vpack.c.b16 %v2311, %v2311
    %v2336 = vpack.c.b16 %v2312, %v2312
    %v2337 = vpack.c.b16 %v2313, %v2313
    %v2338 = vpack.c.b16 %v2314, %v2314
    %v2339 = vpack.c.b16 %v2315, %v2315
    %v2340 = vpack.c.b16 %v2316, %v2316
    %v2341 = vpack.c.b16 %v2317, %v2317
    %vm2342 = vsmask.f32 4352
    %v2344 = vshrl.u32 %v2157, 16
    %v2346 = vrot.slane %v2344, 3
    %v2347 = vshll.u32 %v2157, 16
    %v2349 = vrot.slane %v2347, 4
    %v2350 = vor.u32 %v2346, %v2349
    %v2352 = vshrl.u32 %v2318, 16
    %v2354 = vrot.slane %v2352, 3
    %v2355 = vshll.u32 %v2318, 16
    %v2357 = vrot.slane %v2355, 4
    %v2358 = vor.u32 %v2354, %v2357
    %v2359 = vsel %vm2342, %v2350, %v2358
    %v2361 = vshrl.u32 %v2158, 16
    %v2363 = vrot.slane %v2361, 3
    %v2364 = vshll.u32 %v2158, 16
    %v2366 = vrot.slane %v2364, 4
    %v2367 = vor.u32 %v2363, %v2366
    %v2369 = vshrl.u32 %v2319, 16
    %v2371 = vrot.slane %v2369, 3
    %v2372 = vshll.u32 %v2319, 16
    %v2374 = vrot.slane %v2372, 4
    %v2375 = vor.u32 %v2371, %v2374
    %v2376 = vsel %vm2342, %v2367, %v2375
    %v2378 = vshrl.u32 %v2159, 16
    %v2380 = vrot.slane %v2378, 3
    %v2381 = vshll.u32 %v2159, 16
    %v2383 = vrot.slane %v2381, 4
    %v2384 = vor.u32 %v2380, %v2383
    %v2386 = vshrl.u32 %v2320, 16
    %v2388 = vrot.slane %v2386, 3
    %v2389 = vshll.u32 %v2320, 16
    %v2391 = vrot.slane %v2389, 4
    %v2392 = vor.u32 %v2388, %v2391
    %v2393 = vsel %vm2342, %v2384, %v2392
    %v2395 = vshrl.u32 %v2160, 16
    %v2397 = vrot.slane %v2395, 3
    %v2398 = vshll.u32 %v2160, 16
    %v2400 = vrot.slane %v2398, 4
    %v2401 = vor.u32 %v2397, %v2400
    %v2403 = vshrl.u32 %v2321, 16
    %v2405 = vrot.slane %v2403, 3
    %v2406 = vshll.u32 %v2321, 16
    %v2408 = vrot.slane %v2406, 4
    %v2409 = vor.u32 %v2405, %v2408
    %v2410 = vsel %vm2342, %v2401, %v2409
    %v2412 = vshrl.u32 %v2161, 16
    %v2414 = vrot.slane %v2412, 3
    %v2415 = vshll.u32 %v2161, 16
    %v2417 = vrot.slane %v2415, 4
    %v2418 = vor.u32 %v2414, %v2417
    %v2420 = vshrl.u32 %v2322, 16
    %v2422 = vrot.slane %v2420, 3
    %v2423 = vshll.u32 %v2322, 16
    %v2425 = vrot.slane %v2423, 4
    %v2426 = vor.u32 %v2422, %v2425
    %v2427 = vsel %vm2342, %v2418, %v2426
    %v2429 = vshrl.u32 %v2162, 16
    %v2431 = vrot.slane %v2429, 3
    %v2432 = vshll.u32 %v2162, 16
    %v2434 = vrot.slane %v2432, 4
    %v2435 = vor.u32 %v2431, %v2434
    %v2437 = vshrl.u32 %v2323, 16
    %v2439 = vrot.slane %v2437, 3
    %v2440 = vshll.u32 %v2323, 16
    %v2442 = vrot.slane %v2440, 4
    %v2443 = vor.u32 %v2439, %v2442
    %v2444 = vsel %vm2342, %v2435, %v2443
    %v2446 = vshrl.u32 %v2163, 16
    %v2448 = vrot.slane %v2446, 3
    %v2449 = vshll.u32 %v2163, 16
    %v2451 = vrot.slane %v2449, 4
    %v2452 = vor.u32 %v2448, %v2451
    %v2454 = vshrl.u32 %v2324, 16
    %v2456 = vrot.slane %v2454, 3
    %v2457 = vshll.u32 %v2324, 16
    %v2459 = vrot.slane %v2457, 4
    %v2460 = vor.u32 %v2456, %v2459
    %v2461 = vsel %vm2342, %v2452, %v2460
    %v2463 = vshrl.u32 %v2164, 16
    %v2465 = vrot.slane %v2463, 3
    %v2466 = vshll.u32 %v2164, 16
    %v2468 = vrot.slane %v2466, 4
    %v2469 = vor.u32 %v2465, %v2468
    %v2471 = vshrl.u32 %v2325, 16
    %v2473 = vrot.slane %v2471, 3
    %v2474 = vshll.u32 %v2325, 16
    %v2476 = vrot.slane %v2474, 4
    %v2477 = vor.u32 %v2473, %v2476
    %v2478 = vsel %vm2342, %v2469, %v2477
    %v2480 = vshrl.u32 %v2165, 16
    %v2482 = vrot.slane %v2480, 3
    %v2483 = vshll.u32 %v2165, 16
    %v2485 = vrot.slane %v2483, 4
    %v2486 = vor.u32 %v2482, %v2485
    %v2488 = vshrl.u32 %v2326, 16
    %v2490 = vrot.slane %v2488, 3
    %v2491 = vshll.u32 %v2326, 16
    %v2493 = vrot.slane %v2491, 4
    %v2494 = vor.u32 %v2490, %v2493
    %v2495 = vsel %vm2342, %v2486, %v2494
    %v2497 = vshrl.u32 %v2166, 16
    %v2499 = vrot.slane %v2497, 3
    %v2500 = vshll.u32 %v2166, 16
    %v2502 = vrot.slane %v2500, 4
    %v2503 = vor.u32 %v2499, %v2502
    %v2505 = vshrl.u32 %v2327, 16
    %v2507 = vrot.slane %v2505, 3
    %v2508 = vshll.u32 %v2327, 16
    %v2510 = vrot.slane %v2508, 4
    %v2511 = vor.u32 %v2507, %v2510
    %v2512 = vsel %vm2342, %v2503, %v2511
    %v2514 = vshrl.u32 %v2167, 16
    %v2516 = vrot.slane %v2514, 3
    %v2517 = vshll.u32 %v2167, 16
    %v2519 = vrot.slane %v2517, 4
    %v2520 = vor.u32 %v2516, %v2519
    %v2522 = vshrl.u32 %v2328, 16
    %v2524 = vrot.slane %v2522, 3
    %v2525 = vshll.u32 %v2328, 16
    %v2527 = vrot.slane %v2525, 4
    %v2528 = vor.u32 %v2524, %v2527
    %v2529 = vsel %vm2342, %v2520, %v2528
    %v2531 = vshrl.u32 %v2168, 16
    %v2533 = vrot.slane %v2531, 3
    %v2534 = vshll.u32 %v2168, 16
    %v2536 = vrot.slane %v2534, 4
    %v2537 = vor.u32 %v2533, %v2536
    %v2539 = vshrl.u32 %v2329, 16
    %v2541 = vrot.slane %v2539, 3
    %v2542 = vshll.u32 %v2329, 16
    %v2544 = vrot.slane %v2542, 4
    %v2545 = vor.u32 %v2541, %v2544
    %v2546 = vsel %vm2342, %v2537, %v2545
    %v2548 = vshrl.u32 %v2169, 16
    %v2550 = vrot.slane %v2548, 3
    %v2551 = vshll.u32 %v2169, 16
    %v2553 = vrot.slane %v2551, 4
    %v2554 = vor.u32 %v2550, %v2553
    %v2556 = vshrl.u32 %v2330, 16
    %v2558 = vrot.slane %v2556, 3
    %v2559 = vshll.u32 %v2330, 16
    %v2561 = vrot.slane %v2559, 4
    %v2562 = vor.u32 %v2558, %v2561
    %v2563 = vsel %vm2342, %v2554, %v2562
    %v2565 = vshrl.u32 %v2170, 16
    %v2567 = vrot.slane %v2565, 3
    %v2568 = vshll.u32 %v2170, 16
    %v2570 = vrot.slane %v2568, 4
    %v2571 = vor.u32 %v2567, %v2570
    %v2573 = vshrl.u32 %v2331, 16
    %v2575 = vrot.slane %v2573, 3
    %v2576 = vshll.u32 %v2331, 16
    %v2578 = vrot.slane %v2576, 4
    %v2579 = vor.u32 %v2575, %v2578
    %v2580 = vsel %vm2342, %v2571, %v2579
    %v2582 = vshrl.u32 %v2171, 16
    %v2584 = vrot.slane %v2582, 3
    %v2585 = vshll.u32 %v2171, 16
    %v2587 = vrot.slane %v2585, 4
    %v2588 = vor.u32 %v2584, %v2587
    %v2590 = vshrl.u32 %v2332, 16
    %v2592 = vrot.slane %v2590, 3
    %v2593 = vshll.u32 %v2332, 16
    %v2595 = vrot.slane %v2593, 4
    %v2596 = vor.u32 %v2592, %v2595
    %v2597 = vsel %vm2342, %v2588, %v2596
    %v2599 = vshrl.u32 %v2172, 16
    %v2601 = vrot.slane %v2599, 3
    %v2602 = vshll.u32 %v2172, 16
    %v2604 = vrot.slane %v2602, 4
    %v2605 = vor.u32 %v2601, %v2604
    %v2607 = vshrl.u32 %v2333, 16
    %v2609 = vrot.slane %v2607, 3
    %v2610 = vshll.u32 %v2333, 16
    %v2612 = vrot.slane %v2610, 4
    %v2613 = vor.u32 %v2609, %v2612
    %v2614 = vsel %vm2342, %v2605, %v2613
    %v2616 = vshrl.u32 %v2173, 16
    %v2618 = vrot.slane %v2616, 3
    %v2619 = vshll.u32 %v2173, 16
    %v2621 = vrot.slane %v2619, 4
    %v2622 = vor.u32 %v2618, %v2621
    %v2624 = vshrl.u32 %v2334, 16
    %v2626 = vrot.slane %v2624, 3
    %v2627 = vshll.u32 %v2334, 16
    %v2629 = vrot.slane %v2627, 4
    %v2630 = vor.u32 %v2626, %v2629
    %v2631 = vsel %vm2342, %v2622, %v2630
    %v2633 = vshrl.u32 %v2174, 16
    %v2635 = vrot.slane %v2633, 3
    %v2636 = vshll.u32 %v2174, 16
    %v2638 = vrot.slane %v2636, 4
    %v2639 = vor.u32 %v2635, %v2638
    %v2641 = vshrl.u32 %v2335, 16
    %v2643 = vrot.slane %v2641, 3
    %v2644 = vshll.u32 %v2335, 16
    %v2646 = vrot.slane %v2644, 4
    %v2647 = vor.u32 %v2643, %v2646
    %v2648 = vsel %vm2342, %v2639, %v2647
    %v2650 = vshrl.u32 %v2175, 16
    %v2652 = vrot.slane %v2650, 3
    %v2653 = vshll.u32 %v2175, 16
    %v2655 = vrot.slane %v2653, 4
    %v2656 = vor.u32 %v2652, %v2655
    %v2658 = vshrl.u32 %v2336, 16
    %v2660 = vrot.slane %v2658, 3
    %v2661 = vshll.u32 %v2336, 16
    %v2663 = vrot.slane %v2661, 4
    %v2664 = vor.u32 %v2660, %v2663
    %v2665 = vsel %vm2342, %v2656, %v2664
    %v2667 = vshrl.u32 %v2176, 16
    %v2669 = vrot.slane %v2667, 3
    %v2670 = vshll.u32 %v2176, 16
    %v2672 = vrot.slane %v2670, 4
    %v2673 = vor.u32 %v2669, %v2672
    %v2675 = vshrl.u32 %v2337, 16
    %v2677 = vrot.slane %v2675, 3
    %v2678 = vshll.u32 %v2337, 16
    %v2680 = vrot.slane %v2678, 4
    %v2681 = vor.u32 %v2677, %v2680
    %v2682 = vsel %vm2342, %v2673, %v2681
    %v2684 = vshrl.u32 %v2177, 16
    %v2686 = vrot.slane %v2684, 3
    %v2687 = vshll.u32 %v2177, 16
    %v2689 = vrot.slane %v2687, 4
    %v2690 = vor.u32 %v2686, %v2689
    %v2692 = vshrl.u32 %v2338, 16
    %v2694 = vrot.slane %v2692, 3
    %v2695 = vshll.u32 %v2338, 16
    %v2697 = vrot.slane %v2695, 4
    %v2698 = vor.u32 %v2694, %v2697
    %v2699 = vsel %vm2342, %v2690, %v2698
    %v2701 = vshrl.u32 %v2178, 16
    %v2703 = vrot.slane %v2701, 3
    %v2704 = vshll.u32 %v2178, 16
    %v2706 = vrot.slane %v2704, 4
    %v2707 = vor.u32 %v2703, %v2706
    %v2709 = vshrl.u32 %v2339, 16
    %v2711 = vrot.slane %v2709, 3
    %v2712 = vshll.u32 %v2339, 16
    %v2714 = vrot.slane %v2712, 4
    %v2715 = vor.u32 %v2711, %v2714
    %v2716 = vsel %vm2342, %v2707, %v2715
    %v2718 = vshrl.u32 %v2179, 16
    %v2720 = vrot.slane %v2718, 3
    %v2721 = vshll.u32 %v2179, 16
    %v2723 = vrot.slane %v2721, 4
    %v2724 = vor.u32 %v2720, %v2723
    %v2726 = vshrl.u32 %v2340, 16
    %v2728 = vrot.slane %v2726, 3
    %v2729 = vshll.u32 %v2340, 16
    %v2731 = vrot.slane %v2729, 4
    %v2732 = vor.u32 %v2728, %v2731
    %v2733 = vsel %vm2342, %v2724, %v2732
    %v2735 = vshrl.u32 %v2180, 16
    %v2737 = vrot.slane %v2735, 3
    %v2738 = vshll.u32 %v2180, 16
    %v2740 = vrot.slane %v2738, 4
    %v2741 = vor.u32 %v2737, %v2740
    %v2743 = vshrl.u32 %v2341, 16
    %v2745 = vrot.slane %v2743, 3
    %v2746 = vshll.u32 %v2341, 16
    %v2748 = vrot.slane %v2746, 4
    %v2749 = vor.u32 %v2745, %v2748
    %v2750 = vsel %vm2342, %v2741, %v2749
    %v2775 = vpack.c.b16 %v2294, %v331
    %v2776 = vpack.c.b16 %v2295, %v332
    %v2777 = vpack.c.b16 %v2296, %v333
    %v2778 = vpack.c.b16 %v2297, %v337
    %v2779 = vpack.c.b16 %v2298, %v338
    %v2780 = vpack.c.b16 %v2299, %v339
    %v2781 = vpack.c.b16 %v2300, %v343
    %v2782 = vpack.c.b16 %v2301, %v344
    %v2783 = vpack.c.b16 %v2302, %v345
    %v2784 = vpack.c.b16 %v2303, %v349
    %v2785 = vpack.c.b16 %v2304, %v350
    %v2786 = vpack.c.b16 %v2305, %v351
    %v2787 = vpack.c.b16 %v2306, %v355
    %v2788 = vpack.c.b16 %v2307, %v356
    %v2789 = vpack.c.b16 %v2308, %v357
    %v2790 = vpack.c.b16 %v2309, %v361
    %v2791 = vpack.c.b16 %v2310, %v362
    %v2792 = vpack.c.b16 %v2311, %v363
    %v2793 = vpack.c.b16 %v2312, %v367
    %v2794 = vpack.c.b16 %v2313, %v368
    %v2795 = vpack.c.b16 %v2314, %v369
    %v2796 = vpack.c.b16 %v2315, %v373
    %v2797 = vpack.c.b16 %v2316, %v374
    %v2798 = vpack.c.b16 %v2317, %v375
    %v2839 = vunpack.c.l.b16 %v264
    %v2840 = vunpack.c.h.b16 %v264
    %v2841 = vunpack.c.l.b16 %v265
    %v2842 = vunpack.c.l.b16 %v266
    %v2843 = vunpack.c.h.b16 %v266
    %v2844 = vunpack.c.l.b16 %v267
    %v2845 = vunpack.c.l.b16 %v268
    %v2846 = vunpack.c.h.b16 %v268
    %v2847 = vunpack.c.l.b16 %v269
    %v2848 = vunpack.c.l.b16 %v270
    %v2849 = vunpack.c.h.b16 %v270
    %v2850 = vunpack.c.l.b16 %v271
    %v2851 = vunpack.c.l.b16 %v272
    %v2852 = vunpack.c.h.b16 %v272
    %v2853 = vunpack.c.l.b16 %v273
    %v2854 = vunpack.c.l.b16 %v274
    %v2855 = vunpack.c.h.b16 %v274
    %v2856 = vunpack.c.l.b16 %v275
    %v2857 = vunpack.c.l.b16 %v276
    %v2858 = vunpack.c.h.b16 %v276
    %v2859 = vunpack.c.l.b16 %v277
    %v2860 = vunpack.c.l.b16 %v278
    %v2861 = vunpack.c.h.b16 %v278
    %v2862 = vunpack.c.l.b16 %v279
    %v2863 = vpack.c.b16 %v2839, %v2839
    %v2864 = vpack.c.b16 %v2840, %v2840
    %v2865 = vpack.c.b16 %v2841, %v2841
    %v2866 = vpack.c.b16 %v2842, %v2842
    %v2867 = vpack.c.b16 %v2843, %v2843
    %v2868 = vpack.c.b16 %v2844, %v2844
    %v2869 = vpack.c.b16 %v2845, %v2845
    %v2870 = vpack.c.b16 %v2846, %v2846
    %v2871 = vpack.c.b16 %v2847, %v2847
    %v2872 = vpack.c.b16 %v2848, %v2848
    %v2873 = vpack.c.b16 %v2849, %v2849
    %v2874 = vpack.c.b16 %v2850, %v2850
    %v2875 = vpack.c.b16 %v2851, %v2851
    %v2876 = vpack.c.b16 %v2852, %v2852
    %v2877 = vpack.c.b16 %v2853, %v2853
    %v2878 = vpack.c.b16 %v2854, %v2854
    %v2879 = vpack.c.b16 %v2855, %v2855
    %v2880 = vpack.c.b16 %v2856, %v2856
    %v2881 = vpack.c.b16 %v2857, %v2857
    %v2882 = vpack.c.b16 %v2858, %v2858
    %v2883 = vpack.c.b16 %v2859, %v2859
    %v2884 = vpack.c.b16 %v2860, %v2860
    %v2885 = vpack.c.b16 %v2861, %v2861
    %v2886 = vpack.c.b16 %v2862, %v2862
    %v2888 = vshrl.u32 %v2775, 16
    %v2890 = vshll.u32 %v2775, 16
    %v2892 = vrot.slane %v2890, 1
    %v2893 = vor.u32 %v2888, %v2892
    %v2895 = vshll.u32 %v2863, 16
    %v2897 = vrot.slane %v2895, 1
    %v2898 = vsel %vm488, %v2893, %v2897
    %v2900 = vshrl.u32 %v2776, 16
    %v2902 = vshll.u32 %v2776, 16
    %v2904 = vrot.slane %v2902, 1
    %v2905 = vor.u32 %v2900, %v2904
    %v2907 = vshll.u32 %v2864, 16
    %v2909 = vrot.slane %v2907, 1
    %v2910 = vsel %vm488, %v2905, %v2909
    %v2912 = vshrl.u32 %v2777, 16
    %v2914 = vshll.u32 %v2777, 16
    %v2916 = vrot.slane %v2914, 1
    %v2917 = vor.u32 %v2912, %v2916
    %v2919 = vshll.u32 %v2865, 16
    %v2921 = vrot.slane %v2919, 1
    %v2922 = vsel %vm488, %v2917, %v2921
    %v2924 = vshrl.u32 %v2778, 16
    %v2926 = vshll.u32 %v2778, 16
    %v2928 = vrot.slane %v2926, 1
    %v2929 = vor.u32 %v2924, %v2928
    %v2931 = vshll.u32 %v2866, 16
    %v2933 = vrot.slane %v2931, 1
    %v2934 = vsel %vm488, %v2929, %v2933
    %v2936 = vshrl.u32 %v2779, 16
    %v2938 = vshll.u32 %v2779, 16
    %v2940 = vrot.slane %v2938, 1
    %v2941 = vor.u32 %v2936, %v2940
    %v2943 = vshll.u32 %v2867, 16
    %v2945 = vrot.slane %v2943, 1
    %v2946 = vsel %vm488, %v2941, %v2945
    %v2948 = vshrl.u32 %v2780, 16
    %v2950 = vshll.u32 %v2780, 16
    %v2952 = vrot.slane %v2950, 1
    %v2953 = vor.u32 %v2948, %v2952
    %v2955 = vshll.u32 %v2868, 16
    %v2957 = vrot.slane %v2955, 1
    %v2958 = vsel %vm488, %v2953, %v2957
    %v2960 = vshrl.u32 %v2781, 16
    %v2962 = vshll.u32 %v2781, 16
    %v2964 = vrot.slane %v2962, 1
    %v2965 = vor.u32 %v2960, %v2964
    %v2967 = vshll.u32 %v2869, 16
    %v2969 = vrot.slane %v2967, 1
    %v2970 = vsel %vm488, %v2965, %v2969
    %v2972 = vshrl.u32 %v2782, 16
    %v2974 = vshll.u32 %v2782, 16
    %v2976 = vrot.slane %v2974, 1
    %v2977 = vor.u32 %v2972, %v2976
    %v2979 = vshll.u32 %v2870, 16
    %v2981 = vrot.slane %v2979, 1
    %v2982 = vsel %vm488, %v2977, %v2981
    %v2984 = vshrl.u32 %v2783, 16
    %v2986 = vshll.u32 %v2783, 16
    %v2988 = vrot.slane %v2986, 1
    %v2989 = vor.u32 %v2984, %v2988
    %v2991 = vshll.u32 %v2871, 16
    %v2993 = vrot.slane %v2991, 1
    %v2994 = vsel %vm488, %v2989, %v2993
    %v2996 = vshrl.u32 %v2784, 16
    %v2998 = vshll.u32 %v2784, 16
    %v3000 = vrot.slane %v2998, 1
    %v3001 = vor.u32 %v2996, %v3000
    %v3003 = vshll.u32 %v2872, 16
    %v3005 = vrot.slane %v3003, 1
    %v3006 = vsel %vm488, %v3001, %v3005
    %v3008 = vshrl.u32 %v2785, 16
    %v3010 = vshll.u32 %v2785, 16
    %v3012 = vrot.slane %v3010, 1
    %v3013 = vor.u32 %v3008, %v3012
    %v3015 = vshll.u32 %v2873, 16
    %v3017 = vrot.slane %v3015, 1
    %v3018 = vsel %vm488, %v3013, %v3017
    %v3020 = vshrl.u32 %v2786, 16
    %v3022 = vshll.u32 %v2786, 16
    %v3024 = vrot.slane %v3022, 1
    %v3025 = vor.u32 %v3020, %v3024
    %v3027 = vshll.u32 %v2874, 16
    %v3029 = vrot.slane %v3027, 1
    %v3030 = vsel %vm488, %v3025, %v3029
    %v3032 = vshrl.u32 %v2787, 16
    %v3034 = vshll.u32 %v2787, 16
    %v3036 = vrot.slane %v3034, 1
    %v3037 = vor.u32 %v3032, %v3036
    %v3039 = vshll.u32 %v2875, 16
    %v3041 = vrot.slane %v3039, 1
    %v3042 = vsel %vm488, %v3037, %v3041
    %v3044 = vshrl.u32 %v2788, 16
    %v3046 = vshll.u32 %v2788, 16
    %v3048 = vrot.slane %v3046, 1
    %v3049 = vor.u32 %v3044, %v3048
    %v3051 = vshll.u32 %v2876, 16
    %v3053 = vrot.slane %v3051, 1
    %v3054 = vsel %vm488, %v3049, %v3053
    %v3056 = vshrl.u32 %v2789, 16
    %v3058 = vshll.u32 %v2789, 16
    %v3060 = vrot.slane %v3058, 1
    %v3061 = vor.u32 %v3056, %v3060
    %v3063 = vshll.u32 %v2877, 16
    %v3065 = vrot.slane %v3063, 1
    %v3066 = vsel %vm488, %v3061, %v3065
    %v3068 = vshrl.u32 %v2790, 16
    %v3070 = vshll.u32 %v2790, 16
    %v3072 = vrot.slane %v3070, 1
    %v3073 = vor.u32 %v3068, %v3072
    %v3075 = vshll.u32 %v2878, 16
    %v3077 = vrot.slane %v3075, 1
    %v3078 = vsel %vm488, %v3073, %v3077
    %v3080 = vshrl.u32 %v2791, 16
    %v3082 = vshll.u32 %v2791, 16
    %v3084 = vrot.slane %v3082, 1
    %v3085 = vor.u32 %v3080, %v3084
    %v3087 = vshll.u32 %v2879, 16
    %v3089 = vrot.slane %v3087, 1
    %v3090 = vsel %vm488, %v3085, %v3089
    %v3092 = vshrl.u32 %v2792, 16
    %v3094 = vshll.u32 %v2792, 16
    %v3096 = vrot.slane %v3094, 1
    %v3097 = vor.u32 %v3092, %v3096
    %v3099 = vshll.u32 %v2880, 16
    %v3101 = vrot.slane %v3099, 1
    %v3102 = vsel %vm488, %v3097, %v3101
    %v3104 = vshrl.u32 %v2793, 16
    %v3106 = vshll.u32 %v2793, 16
    %v3108 = vrot.slane %v3106, 1
    %v3109 = vor.u32 %v3104, %v3108
    %v3111 = vshll.u32 %v2881, 16
    %v3113 = vrot.slane %v3111, 1
    %v3114 = vsel %vm488, %v3109, %v3113
    %v3116 = vshrl.u32 %v2794, 16
    %v3118 = vshll.u32 %v2794, 16
    %v3120 = vrot.slane %v3118, 1
    %v3121 = vor.u32 %v3116, %v3120
    %v3123 = vshll.u32 %v2882, 16
    %v3125 = vrot.slane %v3123, 1
    %v3126 = vsel %vm488, %v3121, %v3125
    %v3128 = vshrl.u32 %v2795, 16
    %v3130 = vshll.u32 %v2795, 16
    %v3132 = vrot.slane %v3130, 1
    %v3133 = vor.u32 %v3128, %v3132
    %v3135 = vshll.u32 %v2883, 16
    %v3137 = vrot.slane %v3135, 1
    %v3138 = vsel %vm488, %v3133, %v3137
    %v3140 = vshrl.u32 %v2796, 16
    %v3142 = vshll.u32 %v2796, 16
    %v3144 = vrot.slane %v3142, 1
    %v3145 = vor.u32 %v3140, %v3144
    %v3147 = vshll.u32 %v2884, 16
    %v3149 = vrot.slane %v3147, 1
    %v3150 = vsel %vm488, %v3145, %v3149
    %v3152 = vshrl.u32 %v2797, 16
    %v3154 = vshll.u32 %v2797, 16
    %v3156 = vrot.slane %v3154, 1
    %v3157 = vor.u32 %v3152, %v3156
    %v3159 = vshll.u32 %v2885, 16
    %v3161 = vrot.slane %v3159, 1
    %v3162 = vsel %vm488, %v3157, %v3161
    %v3164 = vshrl.u32 %v2798, 16
    %v3166 = vshll.u32 %v2798, 16
    %v3168 = vrot.slane %v3166, 1
    %v3169 = vor.u32 %v3164, %v3168
    %v3171 = vshll.u32 %v2886, 16
    %v3173 = vrot.slane %v3171, 1
    %v3174 = vsel %vm488, %v3169, %v3173
    %v3215 = vunpack.c.l.b16 %v280
    %v3216 = vunpack.c.h.b16 %v280
    %v3217 = vunpack.c.l.b16 %v281
    %v3218 = vunpack.c.l.b16 %v282
    %v3219 = vunpack.c.h.b16 %v282
    %v3220 = vunpack.c.l.b16 %v283
    %v3221 = vunpack.c.l.b16 %v284
    %v3222 = vunpack.c.h.b16 %v284
    %v3223 = vunpack.c.l.b16 %v285
    %v3224 = vunpack.c.l.b16 %v286
    %v3225 = vunpack.c.h.b16 %v286
    %v3226 = vunpack.c.l.b16 %v287
    %v3227 = vunpack.c.l.b16 %v288
    %v3228 = vunpack.c.h.b16 %v288
    %v3229 = vunpack.c.l.b16 %v289
    %v3230 = vunpack.c.l.b16 %v290
    %v3231 = vunpack.c.h.b16 %v290
    %v3232 = vunpack.c.l.b16 %v291
    %v3233 = vunpack.c.l.b16 %v292
    %v3234 = vunpack.c.h.b16 %v292
    %v3235 = vunpack.c.l.b16 %v293
    %v3236 = vunpack.c.l.b16 %v294
    %v3237 = vunpack.c.h.b16 %v294
    %v3238 = vunpack.c.l.b16 %v295
    %v3239 = vpack.c.b16 %v2294, %v3215
    %v3240 = vpack.c.b16 %v2295, %v3216
    %v3241 = vpack.c.b16 %v2296, %v3217
    %v3242 = vpack.c.b16 %v2297, %v3218
    %v3243 = vpack.c.b16 %v2298, %v3219
    %v3244 = vpack.c.b16 %v2299, %v3220
    %v3245 = vpack.c.b16 %v2300, %v3221
    %v3246 = vpack.c.b16 %v2301, %v3222
    %v3247 = vpack.c.b16 %v2302, %v3223
    %v3248 = vpack.c.b16 %v2303, %v3224
    %v3249 = vpack.c.b16 %v2304, %v3225
    %v3250 = vpack.c.b16 %v2305, %v3226
    %v3251 = vpack.c.b16 %v2306, %v3227
    %v3252 = vpack.c.b16 %v2307, %v3228
    %v3253 = vpack.c.b16 %v2308, %v3229
    %v3254 = vpack.c.b16 %v2309, %v3230
    %v3255 = vpack.c.b16 %v2310, %v3231
    %v3256 = vpack.c.b16 %v2311, %v3232
    %v3257 = vpack.c.b16 %v2312, %v3233
    %v3258 = vpack.c.b16 %v2313, %v3234
    %v3259 = vpack.c.b16 %v2314, %v3235
    %v3260 = vpack.c.b16 %v2315, %v3236
    %v3261 = vpack.c.b16 %v2316, %v3237
    %v3262 = vpack.c.b16 %v2317, %v3238
    %v3263 = vrot.slane %v3239, 1
    %v3264 = vrot.slane %v2863, 1
    %v3265 = vsel %vm865, %v3263, %v3264
    %v3266 = vrot.slane %v3240, 1
    %v3267 = vrot.slane %v2864, 1
    %v3268 = vsel %vm865, %v3266, %v3267
    %v3269 = vrot.slane %v3241, 1
    %v3270 = vrot.slane %v2865, 1
    %v3271 = vsel %vm865, %v3269, %v3270
    %v3272 = vrot.slane %v3242, 1
    %v3273 = vrot.slane %v2866, 1
    %v3274 = vsel %vm865, %v3272, %v3273
    %v3275 = vrot.slane %v3243, 1
    %v3276 = vrot.slane %v2867, 1
    %v3277 = vsel %vm865, %v3275, %v3276
    %v3278 = vrot.slane %v3244, 1
    %v3279 = vrot.slane %v2868, 1
    %v3280 = vsel %vm865, %v3278, %v3279
    %v3281 = vrot.slane %v3245, 1
    %v3282 = vrot.slane %v2869, 1
    %v3283 = vsel %vm865, %v3281, %v3282
    %v3284 = vrot.slane %v3246, 1
    %v3285 = vrot.slane %v2870, 1
    %v3286 = vsel %vm865, %v3284, %v3285
    %v3287 = vrot.slane %v3247, 1
    %v3288 = vrot.slane %v2871, 1
    %v3289 = vsel %vm865, %v3287, %v3288
    %v3290 = vrot.slane %v3248, 1
    %v3291 = vrot.slane %v2872, 1
    %v3292 = vsel %vm865, %v3290, %v3291
    %v3293 = vrot.slane %v3249, 1
    %v3294 = vrot.slane %v2873, 1
    %v3295 = vsel %vm865, %v3293, %v3294
    %v3296 = vrot.slane %v3250, 1
    %v3297 = vrot.slane %v2874, 1
    %v3298 = vsel %vm865, %v3296, %v3297
    %v3299 = vrot.slane %v3251, 1
    %v3300 = vrot.slane %v2875, 1
    %v3301 = vsel %vm865, %v3299, %v3300
    %v3302 = vrot.slane %v3252, 1
    %v3303 = vrot.slane %v2876, 1
    %v3304 = vsel %vm865, %v3302, %v3303
    %v3305 = vrot.slane %v3253, 1
    %v3306 = vrot.slane %v2877, 1
    %v3307 = vsel %vm865, %v3305, %v3306
    %v3308 = vrot.slane %v3254, 1
    %v3309 = vrot.slane %v2878, 1
    %v3310 = vsel %vm865, %v3308, %v3309
    %v3311 = vrot.slane %v3255, 1
    %v3312 = vrot.slane %v2879, 1
    %v3313 = vsel %vm865, %v3311, %v3312
    %v3314 = vrot.slane %v3256, 1
    %v3315 = vrot.slane %v2880, 1
    %v3316 = vsel %vm865, %v3314, %v3315
    %v3317 = vrot.slane %v3257, 1
    %v3318 = vrot.slane %v2881, 1
    %v3319 = vsel %vm865, %v3317, %v3318
    %v3320 = vrot.slane %v3258, 1
    %v3321 = vrot.slane %v2882, 1
    %v3322 = vsel %vm865, %v3320, %v3321
    %v3323 = vrot.slane %v3259, 1
    %v3324 = vrot.slane %v2883, 1
    %v3325 = vsel %vm865, %v3323, %v3324
    %v3326 = vrot.slane %v3260, 1
    %v3327 = vrot.slane %v2884, 1
    %v3328 = vsel %vm865, %v3326, %v3327
    %v3329 = vrot.slane %v3261, 1
    %v3330 = vrot.slane %v2885, 1
    %v3331 = vsel %vm865, %v3329, %v3330
    %v3332 = vrot.slane %v3262, 1
    %v3333 = vrot.slane %v2886, 1
    %v3334 = vsel %vm865, %v3332, %v3333
    %v3359 = vld [vmem:[#allocation5] sm:$0xff]
    %v3360 = vld [vmem:[#allocation5 + $0x8] sm:$0xf]
    %v3361 = vld [vmem:[#allocation5 + $0xc] sm:$0xff]
    %v3362 = vld [vmem:[#allocation5 + $0x14] sm:$0xf]
    %v3363 = vld [vmem:[#allocation5 + $0x18] sm:$0xff]
    %v3364 = vld [vmem:[#allocation5 + $0x20] sm:$0xf]
    %v3365 = vld [vmem:[#allocation5 + $0x24] sm:$0xff]
    %v3366 = vld [vmem:[#allocation5 + $0x2c] sm:$0xf]
    %v3367 = vld [vmem:[#allocation5 + $0x30] sm:$0xff]
    %v3368 = vld [vmem:[#allocation5 + $0x38] sm:$0xf]
    %v3369 = vld [vmem:[#allocation5 + $0x3c] sm:$0xff]
    %v3370 = vld [vmem:[#allocation5 + $0x44] sm:$0xf]
    %v3371 = vld [vmem:[#allocation5 + $0x48] sm:$0xff]
    %v3372 = vld [vmem:[#allocation5 + $0x50] sm:$0xf]
    %v3373 = vld [vmem:[#allocation5 + $0x54] sm:$0xff]
    %v3374 = vld [vmem:[#allocation5 + $0x5c] sm:$0xf]
    %v3375 = vld [vmem:[#allocation5 + $0x60] sm:$0xff]
    %v3376 = vld [vmem:[#allocation5 + $0x68] sm:$0xf]
    %v3377 = vld [vmem:[#allocation5 + $0x6c] sm:$0xff]
    %v3378 = vld [vmem:[#allocation5 + $0x74] sm:$0xf]
    %v3379 = vld [vmem:[#allocation5 + $0x78] sm:$0xff]
    %v3380 = vld [vmem:[#allocation5 + $0x80] sm:$0xf]
    %v3381 = vld [vmem:[#allocation5 + $0x84] sm:$0xff]
    %v3382 = vld [vmem:[#allocation5 + $0x8c] sm:$0xf]
    %v3383 = vld [vmem:[#allocation5 + $0x90] sm:$0xff]
    %v3384 = vld [vmem:[#allocation5 + $0x98] sm:$0xf]
    %v3385 = vld [vmem:[#allocation5 + $0x9c] sm:$0xff]
    %v3386 = vld [vmem:[#allocation5 + $0xa4] sm:$0xf]
    %v3387 = vld [vmem:[#allocation5 + $0xa8] sm:$0xff]
    %v3388 = vld [vmem:[#allocation5 + $0xb0] sm:$0xf]
    %v3389 = vld [vmem:[#allocation5 + $0xb4] sm:$0xff]
    %v3390 = vld [vmem:[#allocation5 + $0xbc] sm:$0xf]
    %v3391 = vld [vmem:[#allocation5 + $0xc0] sm:$0xff]
    %v3392 = vld [vmem:[#allocation5 + $0xc8] sm:$0xf]
    %v3393 = vld [vmem:[#allocation5 + $0xcc] sm:$0xff]
    %v3394 = vld [vmem:[#allocation5 + $0xd4] sm:$0xf]
    %v3395 = vld [vmem:[#allocation5 + $0xd8] sm:$0xff]
    %v3396 = vld [vmem:[#allocation5 + $0xe0] sm:$0xf]
    %v3397 = vld [vmem:[#allocation5 + $0xe4] sm:$0xff]
    %v3398 = vld [vmem:[#allocation5 + $0xec] sm:$0xf]
    %v3399 = vld [vmem:[#allocation5 + $0xf0] sm:$0xff]
    %v3400 = vld [vmem:[#allocation5 + $0xf8] sm:$0xf]
    %v3401 = vld [vmem:[#allocation5 + $0xfc] sm:$0xff]
    %v3402 = vld [vmem:[#allocation5 + $0x104] sm:$0xf]
    %v3403 = vld [vmem:[#allocation5 + $0x108] sm:$0xff]
    %v3404 = vld [vmem:[#allocation5 + $0x110] sm:$0xf]
    %v3405 = vld [vmem:[#allocation5 + $0x114] sm:$0xff]
    %v3406 = vld [vmem:[#allocation5 + $0x11c] sm:$0xf]
    %v3407 = vld [vmem:[#allocation5 + $0x120] sm:$0xff]
    %v3408 = vld [vmem:[#allocation5 + $0x128] sm:$0xf]
    %v3409 = vld [vmem:[#allocation5 + $0x12c] sm:$0xff]
    %v3410 = vld [vmem:[#allocation5 + $0x134] sm:$0xf]
    %v3411 = vld [vmem:[#allocation5 + $0x138] sm:$0xff]
    %v3412 = vld [vmem:[#allocation5 + $0x140] sm:$0xf]
    %v3413 = vld [vmem:[#allocation5 + $0x144] sm:$0xff]
    %v3414 = vld [vmem:[#allocation5 + $0x14c] sm:$0xf]
    %v3415 = vld [vmem:[#allocation5 + $0x150] sm:$0xff]
    %v3416 = vld [vmem:[#allocation5 + $0x158] sm:$0xf]
    %v3417 = vld [vmem:[#allocation5 + $0x15c] sm:$0xff]
    %v3418 = vld [vmem:[#allocation5 + $0x164] sm:$0xf]
    %v3419 = vld [vmem:[#allocation5 + $0x168] sm:$0xff]
    %v3420 = vld [vmem:[#allocation5 + $0x170] sm:$0xf]
    %v3421 = vld [vmem:[#allocation5 + $0x174] sm:$0xff]
    %v3422 = vld [vmem:[#allocation5 + $0x17c] sm:$0xf]
    %v3423 = vld [vmem:[#allocation5 + $0x180] sm:$0xff]
    %v3424 = vld [vmem:[#allocation5 + $0x188] sm:$0xf]
    %v3425 = vld [vmem:[#allocation5 + $0x18c] sm:$0xff]
    %v3426 = vld [vmem:[#allocation5 + $0x194] sm:$0xf]
    %v3427 = vld [vmem:[#allocation5 + $0x198] sm:$0xff]
    %v3428 = vld [vmem:[#allocation5 + $0x1a0] sm:$0xf]
    %v3429 = vld [vmem:[#allocation5 + $0x1a4] sm:$0xff]
    %v3430 = vld [vmem:[#allocation5 + $0x1ac] sm:$0xf]
    %v3431 = vld [vmem:[#allocation5 + $0x1b0] sm:$0xff]
    %v3432 = vld [vmem:[#allocation5 + $0x1b8] sm:$0xf]
    %v3433 = vld [vmem:[#allocation5 + $0x1bc] sm:$0xff]
    %v3434 = vld [vmem:[#allocation5 + $0x1c4] sm:$0xf]
    %v3435 = vld [vmem:[#allocation5 + $0x1c8] sm:$0xff]
    %v3436 = vld [vmem:[#allocation5 + $0x1d0] sm:$0xf]
    %v3437 = vld [vmem:[#allocation5 + $0x1d4] sm:$0xff]
    %v3438 = vld [vmem:[#allocation5 + $0x1dc] sm:$0xf]
    %v3439 = vld [vmem:[#allocation5 + $0x1e0] sm:$0xff]
    %v3440 = vld [vmem:[#allocation5 + $0x1e8] sm:$0xf]
    %v3441 = vld [vmem:[#allocation5 + $0x1ec] sm:$0xff]
    %v3442 = vld [vmem:[#allocation5 + $0x1f4] sm:$0xf]
    %v3443 = vld [vmem:[#allocation5 + $0x1f8] sm:$0xff]
    %v3444 = vld [vmem:[#allocation5 + $0x200] sm:$0xf]
    %v3445 = vld [vmem:[#allocation5 + $0x204] sm:$0xff]
    %v3446 = vld [vmem:[#allocation5 + $0x20c] sm:$0xf]
    %v3447 = vld [vmem:[#allocation5 + $0x210] sm:$0xff]
    %v3448 = vld [vmem:[#allocation5 + $0x218] sm:$0xf]
    %v3449 = vld [vmem:[#allocation5 + $0x21c] sm:$0xff]
    %v3450 = vld [vmem:[#allocation5 + $0x224] sm:$0xf]
    %v3451 = vld [vmem:[#allocation5 + $0x228] sm:$0xff]
    %v3452 = vld [vmem:[#allocation5 + $0x230] sm:$0xf]
    %v3453 = vld [vmem:[#allocation5 + $0x234] sm:$0xff]
    %v3454 = vld [vmem:[#allocation5 + $0x23c] sm:$0xf]
    %v3455 = vld [vmem:[#allocation5 + $0x240] sm:$0xff]
    %v3456 = vld [vmem:[#allocation5 + $0x248] sm:$0xf]
    %v3457 = vld [vmem:[#allocation5 + $0x24c] sm:$0xff]
    %v3458 = vld [vmem:[#allocation5 + $0x254] sm:$0xf]
    %v3459 = vld [vmem:[#allocation5 + $0x258] sm:$0xff]
    %v3460 = vld [vmem:[#allocation5 + $0x260] sm:$0xf]
    %v3461 = vld [vmem:[#allocation5 + $0x264] sm:$0xff]
    %v3462 = vld [vmem:[#allocation5 + $0x26c] sm:$0xf]
    %v3463 = vld [vmem:[#allocation5 + $0x270] sm:$0xff]
    %v3464 = vld [vmem:[#allocation5 + $0x278] sm:$0xf]
    %v3465 = vld [vmem:[#allocation5 + $0x27c] sm:$0xff]
    %v3466 = vld [vmem:[#allocation5 + $0x284] sm:$0xf]
    %v3467 = vld [vmem:[#allocation5 + $0x288] sm:$0xff]
    %v3468 = vld [vmem:[#allocation5 + $0x290] sm:$0xf]
    %v3469 = vld [vmem:[#allocation5 + $0x294] sm:$0xff]
    %v3470 = vld [vmem:[#allocation5 + $0x29c] sm:$0xf]
    %v3471 = vld [vmem:[#allocation5 + $0x2a0] sm:$0xff]
    %v3472 = vld [vmem:[#allocation5 + $0x2a8] sm:$0xf]
    %v3473 = vld [vmem:[#allocation5 + $0x2ac] sm:$0xff]
    %v3474 = vld [vmem:[#allocation5 + $0x2b4] sm:$0xf]
    %v3475 = vld [vmem:[#allocation5 + $0x2b8] sm:$0xff]
    %v3476 = vld [vmem:[#allocation5 + $0x2c0] sm:$0xf]
    %v3477 = vld [vmem:[#allocation5 + $0x2c4] sm:$0xff]
    %v3478 = vld [vmem:[#allocation5 + $0x2cc] sm:$0xf]
    %v3479 = vld [vmem:[#allocation5 + $0x2d0] sm:$0xff]
    %v3480 = vld [vmem:[#allocation5 + $0x2d8] sm:$0xf]
    %v3481 = vld [vmem:[#allocation5 + $0x2dc] sm:$0xff]
    %v3482 = vld [vmem:[#allocation5 + $0x2e4] sm:$0xf]
    %v3483 = vld [vmem:[#allocation5 + $0x2e8] sm:$0xff]
    %v3484 = vld [vmem:[#allocation5 + $0x2f0] sm:$0xf]
    %v3485 = vld [vmem:[#allocation5 + $0x2f4] sm:$0xff]
    %v3486 = vld [vmem:[#allocation5 + $0x2fc] sm:$0xf]
    %v3487 = vld [vmem:[#allocation5 + $0x300] sm:$0xff]
    %v3488 = vld [vmem:[#allocation5 + $0x308] sm:$0xf]
    %v3489 = vld [vmem:[#allocation5 + $0x30c] sm:$0xff]
    %v3490 = vld [vmem:[#allocation5 + $0x314] sm:$0xf]
    %v3491 = vld [vmem:[#allocation5 + $0x318] sm:$0xff]
    %v3492 = vld [vmem:[#allocation5 + $0x320] sm:$0xf]
    %v3493 = vld [vmem:[#allocation5 + $0x324] sm:$0xff]
    %v3494 = vld [vmem:[#allocation5 + $0x32c] sm:$0xf]
    %v3495 = vld [vmem:[#allocation5 + $0x330] sm:$0xff]
    %v3496 = vld [vmem:[#allocation5 + $0x338] sm:$0xf]
    %v3497 = vld [vmem:[#allocation5 + $0x33c] sm:$0xff]
    %v3498 = vld [vmem:[#allocation5 + $0x344] sm:$0xf]
    %v3499 = vld [vmem:[#allocation5 + $0x348] sm:$0xff]
    %v3500 = vld [vmem:[#allocation5 + $0x350] sm:$0xf]
    %v3501 = vld [vmem:[#allocation5 + $0x354] sm:$0xff]
    %v3502 = vld [vmem:[#allocation5 + $0x35c] sm:$0xf]
    %v3503 = vld [vmem:[#allocation5 + $0x360] sm:$0xff]
    %v3504 = vld [vmem:[#allocation5 + $0x368] sm:$0xf]
    %v3505 = vld [vmem:[#allocation5 + $0x36c] sm:$0xff]
    %v3506 = vld [vmem:[#allocation5 + $0x374] sm:$0xf]
    %v3507 = vld [vmem:[#allocation5 + $0x378] sm:$0xff]
    %v3508 = vld [vmem:[#allocation5 + $0x380] sm:$0xf]
    %v3509 = vld [vmem:[#allocation5 + $0x384] sm:$0xff]
    %v3510 = vld [vmem:[#allocation5 + $0x38c] sm:$0xf]
    %v3511 = vld [vmem:[#allocation5 + $0x390] sm:$0xff]
    %v3512 = vld [vmem:[#allocation5 + $0x398] sm:$0xf]
    %v3513 = vld [vmem:[#allocation5 + $0x39c] sm:$0xff]
    %v3514 = vld [vmem:[#allocation5 + $0x3a4] sm:$0xf]
    %v3515 = vld [vmem:[#allocation5 + $0x3a8] sm:$0xff]
    %v3516 = vld [vmem:[#allocation5 + $0x3b0] sm:$0xf]
    %v3517 = vld [vmem:[#allocation5 + $0x3b4] sm:$0xff]
    %v3518 = vld [vmem:[#allocation5 + $0x3bc] sm:$0xf]
    %v3519 = vld [vmem:[#allocation5 + $0x3c0] sm:$0xff]
    %v3520 = vld [vmem:[#allocation5 + $0x3c8] sm:$0xf]
    %v3521 = vld [vmem:[#allocation5 + $0x3cc] sm:$0xff]
    %v3522 = vld [vmem:[#allocation5 + $0x3d4] sm:$0xf]
    %v3523 = vld [vmem:[#allocation5 + $0x3d8] sm:$0xff]
    %v3524 = vld [vmem:[#allocation5 + $0x3e0] sm:$0xf]
    %v3525 = vld [vmem:[#allocation5 + $0x3e4] sm:$0xff]
    %v3526 = vld [vmem:[#allocation5 + $0x3ec] sm:$0xf]
    %v3527 = vld [vmem:[#allocation5 + $0x3f0] sm:$0xff]
    %v3528 = vld [vmem:[#allocation5 + $0x3f8] sm:$0xf]
    %v3529 = vld [vmem:[#allocation5 + $0x3fc] sm:$0xff]
    %v3530 = vld [vmem:[#allocation5 + $0x404] sm:$0xf]
    %v3531 = vld [vmem:[#allocation5 + $0x408] sm:$0xff]
    %v3532 = vld [vmem:[#allocation5 + $0x410] sm:$0xf]
    %v3533 = vld [vmem:[#allocation5 + $0x414] sm:$0xff]
    %v3534 = vld [vmem:[#allocation5 + $0x41c] sm:$0xf]
    %v3535 = vld [vmem:[#allocation5 + $0x420] sm:$0xff]
    %v3536 = vld [vmem:[#allocation5 + $0x428] sm:$0xf]
    %v3537 = vld [vmem:[#allocation5 + $0x42c] sm:$0xff]
    %v3538 = vld [vmem:[#allocation5 + $0x434] sm:$0xf]
    %v3539 = vld [vmem:[#allocation5 + $0x438] sm:$0xff]
    %v3540 = vld [vmem:[#allocation5 + $0x440] sm:$0xf]
    %v3541 = vld [vmem:[#allocation5 + $0x444] sm:$0xff]
    %v3542 = vld [vmem:[#allocation5 + $0x44c] sm:$0xf]
    %v3543 = vld [vmem:[#allocation5 + $0x450] sm:$0xff]
    %v3544 = vld [vmem:[#allocation5 + $0x458] sm:$0xf]
    %v3545 = vld [vmem:[#allocation5 + $0x45c] sm:$0xff]
    %v3546 = vld [vmem:[#allocation5 + $0x464] sm:$0xf]
    %v3547 = vld [vmem:[#allocation5 + $0x468] sm:$0xff]
    %v3548 = vld [vmem:[#allocation5 + $0x470] sm:$0xf]
    %v3549 = vld [vmem:[#allocation5 + $0x474] sm:$0xff]
    %v3550 = vld [vmem:[#allocation5 + $0x47c] sm:$0xf]
    %v3551 = vld [vmem:[#allocation5 + $0x480] sm:$0xff]
    %v3552 = vld [vmem:[#allocation5 + $0x488] sm:$0xf]
    %v3553 = vld [vmem:[#allocation5 + $0x48c] sm:$0xff]
    %v3554 = vld [vmem:[#allocation5 + $0x494] sm:$0xf]
    %v3555 = vld [vmem:[#allocation5 + $0x498] sm:$0xff]
    %v3556 = vld [vmem:[#allocation5 + $0x4a0] sm:$0xf]
    %v3557 = vld [vmem:[#allocation5 + $0x4a4] sm:$0xff]
    %v3558 = vld [vmem:[#allocation5 + $0x4ac] sm:$0xf]
    %v3559 = vld [vmem:[#allocation5 + $0x4b0] sm:$0xff]
    %v3560 = vld [vmem:[#allocation5 + $0x4b8] sm:$0xf]
    %v3561 = vld [vmem:[#allocation5 + $0x4bc] sm:$0xff]
    %v3562 = vld [vmem:[#allocation5 + $0x4c4] sm:$0xf]
    %v3563 = vld [vmem:[#allocation5 + $0x4c8] sm:$0xff]
    %v3564 = vld [vmem:[#allocation5 + $0x4d0] sm:$0xf]
    %v3565 = vld [vmem:[#allocation5 + $0x4d4] sm:$0xff]
    %v3566 = vld [vmem:[#allocation5 + $0x4dc] sm:$0xf]
    %v3567 = vld [vmem:[#allocation5 + $0x4e0] sm:$0xff]
    %v3568 = vld [vmem:[#allocation5 + $0x4e8] sm:$0xf]
    %v3569 = vld [vmem:[#allocation5 + $0x4ec] sm:$0xff]
    %v3570 = vld [vmem:[#allocation5 + $0x4f4] sm:$0xf]
    %v3571 = vld [vmem:[#allocation5 + $0x4f8] sm:$0xff]
    %v3572 = vld [vmem:[#allocation5 + $0x500] sm:$0xf]
    %v3573 = vld [vmem:[#allocation5 + $0x504] sm:$0xff]
    %v3574 = vld [vmem:[#allocation5 + $0x50c] sm:$0xf]
    %v3575 = vld [vmem:[#allocation5 + $0x510] sm:$0xff]
    %v3576 = vld [vmem:[#allocation5 + $0x518] sm:$0xf]
    %v3577 = vld [vmem:[#allocation5 + $0x51c] sm:$0xff]
    %v3578 = vld [vmem:[#allocation5 + $0x524] sm:$0xf]
    %v3579 = vld [vmem:[#allocation5 + $0x528] sm:$0xff]
    %v3580 = vld [vmem:[#allocation5 + $0x530] sm:$0xf]
    %v3581 = vld [vmem:[#allocation5 + $0x534] sm:$0xff]
    %v3582 = vld [vmem:[#allocation5 + $0x53c] sm:$0xf]
    %v3583 = vld [vmem:[#allocation5 + $0x540] sm:$0xff]
    %v3584 = vld [vmem:[#allocation5 + $0x548] sm:$0xf]
    %v3585 = vld [vmem:[#allocation5 + $0x54c] sm:$0xff]
    %v3586 = vld [vmem:[#allocation5 + $0x554] sm:$0xf]
    %v3587 = vld [vmem:[#allocation5 + $0x558] sm:$0xff]
    %v3588 = vld [vmem:[#allocation5 + $0x560] sm:$0xf]
    %v3589 = vld [vmem:[#allocation5 + $0x564] sm:$0xff]
    %v3590 = vld [vmem:[#allocation5 + $0x56c] sm:$0xf]
    %v3591 = vld [vmem:[#allocation5 + $0x570] sm:$0xff]
    %v3592 = vld [vmem:[#allocation5 + $0x578] sm:$0xf]
    %v3593 = vld [vmem:[#allocation5 + $0x57c] sm:$0xff]
    %v3594 = vld [vmem:[#allocation5 + $0x584] sm:$0xf]
    %v3595 = vld [vmem:[#allocation5 + $0x588] sm:$0xff]
    %v3596 = vld [vmem:[#allocation5 + $0x590] sm:$0xf]
    %v3597 = vld [vmem:[#allocation5 + $0x594] sm:$0xff]
    %v3598 = vld [vmem:[#allocation5 + $0x59c] sm:$0xf]
    %v3599 = vld [vmem:[#allocation5 + $0x5a0] sm:$0xff]
    %v3600 = vld [vmem:[#allocation5 + $0x5a8] sm:$0xf]
    %v3601 = vld [vmem:[#allocation5 + $0x5ac] sm:$0xff]
    %v3602 = vld [vmem:[#allocation5 + $0x5b4] sm:$0xf]
    %v3603 = vld [vmem:[#allocation5 + $0x5b8] sm:$0xff]
    %v3604 = vld [vmem:[#allocation5 + $0x5c0] sm:$0xf]
    %v3605 = vld [vmem:[#allocation5 + $0x5c4] sm:$0xff]
    %v3606 = vld [vmem:[#allocation5 + $0x5cc] sm:$0xf]
    %v3607 = vld [vmem:[#allocation5 + $0x5d0] sm:$0xff]
    %v3608 = vld [vmem:[#allocation5 + $0x5d8] sm:$0xf]
    %v3609 = vld [vmem:[#allocation5 + $0x5dc] sm:$0xff]
    %v3610 = vld [vmem:[#allocation5 + $0x5e4] sm:$0xf]
    %v3611 = vld [vmem:[#allocation5 + $0x5e8] sm:$0xff]
    %v3612 = vld [vmem:[#allocation5 + $0x5f0] sm:$0xf]
    %v3613 = vld [vmem:[#allocation5 + $0x5f4] sm:$0xff]
    %v3614 = vld [vmem:[#allocation5 + $0x5fc] sm:$0xf]
    %v3615 = vld [vmem:[#allocation5 + $0x600] sm:$0xff]
    %v3616 = vld [vmem:[#allocation5 + $0x608] sm:$0xf]
    %v3617 = vld [vmem:[#allocation5 + $0x60c] sm:$0xff]
    %v3618 = vld [vmem:[#allocation5 + $0x614] sm:$0xf]
    %v3619 = vld [vmem:[#allocation5 + $0x618] sm:$0xff]
    %v3620 = vld [vmem:[#allocation5 + $0x620] sm:$0xf]
    %v3621 = vld [vmem:[#allocation5 + $0x624] sm:$0xff]
    %v3622 = vld [vmem:[#allocation5 + $0x62c] sm:$0xf]
    %v3623 = vld [vmem:[#allocation5 + $0x630] sm:$0xff]
    %v3624 = vld [vmem:[#allocation5 + $0x638] sm:$0xf]
    %v3625 = vld [vmem:[#allocation5 + $0x63c] sm:$0xff]
    %v3626 = vld [vmem:[#allocation5 + $0x644] sm:$0xf]
    %v3627 = vld [vmem:[#allocation5 + $0x648] sm:$0xff]
    %v3628 = vld [vmem:[#allocation5 + $0x650] sm:$0xf]
    %v3629 = vld [vmem:[#allocation5 + $0x654] sm:$0xff]
    %v3630 = vld [vmem:[#allocation5 + $0x65c] sm:$0xf]
    %v3631 = vld [vmem:[#allocation5 + $0x660] sm:$0xff]
    %v3632 = vld [vmem:[#allocation5 + $0x668] sm:$0xf]
    %v3633 = vld [vmem:[#allocation5 + $0x66c] sm:$0xff]
    %v3634 = vld [vmem:[#allocation5 + $0x674] sm:$0xf]
    %v3635 = vld [vmem:[#allocation5 + $0x678] sm:$0xff]
    %v3636 = vld [vmem:[#allocation5 + $0x680] sm:$0xf]
    %v3637 = vld [vmem:[#allocation5 + $0x684] sm:$0xff]
    %v3638 = vld [vmem:[#allocation5 + $0x68c] sm:$0xf]
    %v3639 = vld [vmem:[#allocation5 + $0x690] sm:$0xff]
    %v3640 = vld [vmem:[#allocation5 + $0x698] sm:$0xf]
    %v3641 = vld [vmem:[#allocation5 + $0x69c] sm:$0xff]
    %v3642 = vld [vmem:[#allocation5 + $0x6a4] sm:$0xf]
    %v3643 = vld [vmem:[#allocation5 + $0x6a8] sm:$0xff]
    %v3644 = vld [vmem:[#allocation5 + $0x6b0] sm:$0xf]
    %v3645 = vld [vmem:[#allocation5 + $0x6b4] sm:$0xff]
    %v3646 = vld [vmem:[#allocation5 + $0x6bc] sm:$0xf]
    %v3647 = vld [vmem:[#allocation5 + $0x6c0] sm:$0xff]
    %v3648 = vld [vmem:[#allocation5 + $0x6c8] sm:$0xf]
    %v3649 = vld [vmem:[#allocation5 + $0x6cc] sm:$0xff]
    %v3650 = vld [vmem:[#allocation5 + $0x6d4] sm:$0xf]
    %v3651 = vld [vmem:[#allocation5 + $0x6d8] sm:$0xff]
    %v3652 = vld [vmem:[#allocation5 + $0x6e0] sm:$0xf]
    %v3653 = vld [vmem:[#allocation5 + $0x6e4] sm:$0xff]
    %v3654 = vld [vmem:[#allocation5 + $0x6ec] sm:$0xf]
    %v3655 = vld [vmem:[#allocation5 + $0x6f0] sm:$0xff]
    %v3656 = vld [vmem:[#allocation5 + $0x6f8] sm:$0xf]
    %v3657 = vld [vmem:[#allocation5 + $0x6fc] sm:$0xff]
    %v3658 = vld [vmem:[#allocation5 + $0x704] sm:$0xf]
    %v3659 = vld [vmem:[#allocation5 + $0x708] sm:$0xff]
    %v3660 = vld [vmem:[#allocation5 + $0x710] sm:$0xf]
    %v3661 = vld [vmem:[#allocation5 + $0x714] sm:$0xff]
    %v3662 = vld [vmem:[#allocation5 + $0x71c] sm:$0xf]
    %v3663 = vld [vmem:[#allocation5 + $0x720] sm:$0xff]
    %v3664 = vld [vmem:[#allocation5 + $0x728] sm:$0xf]
    %v3665 = vld [vmem:[#allocation5 + $0x72c] sm:$0xff]
    %v3666 = vld [vmem:[#allocation5 + $0x734] sm:$0xf]
    %v3667 = vld [vmem:[#allocation5 + $0x738] sm:$0xff]
    %v3668 = vld [vmem:[#allocation5 + $0x740] sm:$0xf]
    %v3669 = vld [vmem:[#allocation5 + $0x744] sm:$0xff]
    %v3670 = vld [vmem:[#allocation5 + $0x74c] sm:$0xf]
    %v3671 = vld [vmem:[#allocation5 + $0x750] sm:$0xff]
    %v3672 = vld [vmem:[#allocation5 + $0x758] sm:$0xf]
    %v3673 = vld [vmem:[#allocation5 + $0x75c] sm:$0xff]
    %v3674 = vld [vmem:[#allocation5 + $0x764] sm:$0xf]
    %v3675 = vld [vmem:[#allocation5 + $0x768] sm:$0xff]
    %v3676 = vld [vmem:[#allocation5 + $0x770] sm:$0xf]
    %v3677 = vld [vmem:[#allocation5 + $0x774] sm:$0xff]
    %v3678 = vld [vmem:[#allocation5 + $0x77c] sm:$0xf]
    %v3679 = vld [vmem:[#allocation5 + $0x780] sm:$0xff]
    %v3680 = vld [vmem:[#allocation5 + $0x788] sm:$0xf]
    %v3681 = vld [vmem:[#allocation5 + $0x78c] sm:$0xff]
    %v3682 = vld [vmem:[#allocation5 + $0x794] sm:$0xf]
    %v3683 = vld [vmem:[#allocation5 + $0x798] sm:$0xff]
    %v3684 = vld [vmem:[#allocation5 + $0x7a0] sm:$0xf]
    %v3685 = vld [vmem:[#allocation5 + $0x7a4] sm:$0xff]
    %v3686 = vld [vmem:[#allocation5 + $0x7ac] sm:$0xf]
    %v3687 = vld [vmem:[#allocation5 + $0x7b0] sm:$0xff]
    %v3688 = vld [vmem:[#allocation5 + $0x7b8] sm:$0xf]
    %v3689 = vld [vmem:[#allocation5 + $0x7bc] sm:$0xff]
    %v3690 = vld [vmem:[#allocation5 + $0x7c4] sm:$0xf]
    %v3691 = vld [vmem:[#allocation5 + $0x7c8] sm:$0xff]
    %v3692 = vld [vmem:[#allocation5 + $0x7d0] sm:$0xf]
    %v3693 = vld [vmem:[#allocation5 + $0x7d4] sm:$0xff]
    %v3694 = vld [vmem:[#allocation5 + $0x7dc] sm:$0xf]
    %v3695 = vld [vmem:[#allocation5 + $0x7e0] sm:$0xff]
    %v3696 = vld [vmem:[#allocation5 + $0x7e8] sm:$0xf]
    %v3697 = vld [vmem:[#allocation5 + $0x7ec] sm:$0xff]
    %v3698 = vld [vmem:[#allocation5 + $0x7f4] sm:$0xf]
    %v3699 = vld [vmem:[#allocation5 + $0x7f8] sm:$0xff]
    %v3700 = vld [vmem:[#allocation5 + $0x800] sm:$0xf]
    %v3701 = vld [vmem:[#allocation5 + $0x804] sm:$0xff]
    %v3702 = vld [vmem:[#allocation5 + $0x80c] sm:$0xf]
    %v3703 = vld [vmem:[#allocation5 + $0x810] sm:$0xff]
    %v3704 = vld [vmem:[#allocation5 + $0x818] sm:$0xf]
    %v3705 = vld [vmem:[#allocation5 + $0x81c] sm:$0xff]
    %v3706 = vld [vmem:[#allocation5 + $0x824] sm:$0xf]
    %v3707 = vld [vmem:[#allocation5 + $0x828] sm:$0xff]
    %v3708 = vld [vmem:[#allocation5 + $0x830] sm:$0xf]
    %v3709 = vld [vmem:[#allocation5 + $0x834] sm:$0xff]
    %v3710 = vld [vmem:[#allocation5 + $0x83c] sm:$0xf]
    %v3711 = vld [vmem:[#allocation5 + $0x840] sm:$0xff]
    %v3712 = vld [vmem:[#allocation5 + $0x848] sm:$0xf]
    %v3713 = vld [vmem:[#allocation5 + $0x84c] sm:$0xff]
    %v3714 = vld [vmem:[#allocation5 + $0x854] sm:$0xf]
    %v3715 = vld [vmem:[#allocation5 + $0x858] sm:$0xff]
    %v3716 = vld [vmem:[#allocation5 + $0x860] sm:$0xf]
    %v3717 = vld [vmem:[#allocation5 + $0x864] sm:$0xff]
    %v3718 = vld [vmem:[#allocation5 + $0x86c] sm:$0xf]
    %v3719 = vld [vmem:[#allocation5 + $0x870] sm:$0xff]
    %v3720 = vld [vmem:[#allocation5 + $0x878] sm:$0xf]
    %v3721 = vld [vmem:[#allocation5 + $0x87c] sm:$0xff]
    %v3722 = vld [vmem:[#allocation5 + $0x884] sm:$0xf]
    %v3723 = vld [vmem:[#allocation5 + $0x888] sm:$0xff]
    %v3724 = vld [vmem:[#allocation5 + $0x890] sm:$0xf]
    %v3725 = vld [vmem:[#allocation5 + $0x894] sm:$0xff]
    %v3726 = vld [vmem:[#allocation5 + $0x89c] sm:$0xf]
    %v3727 = vld [vmem:[#allocation5 + $0x8a0] sm:$0xff]
    %v3728 = vld [vmem:[#allocation5 + $0x8a8] sm:$0xf]
    %v3729 = vld [vmem:[#allocation5 + $0x8ac] sm:$0xff]
    %v3730 = vld [vmem:[#allocation5 + $0x8b4] sm:$0xf]
    %v3731 = vld [vmem:[#allocation5 + $0x8b8] sm:$0xff]
    %v3732 = vld [vmem:[#allocation5 + $0x8c0] sm:$0xf]
    %v3733 = vld [vmem:[#allocation5 + $0x8c4] sm:$0xff]
    %v3734 = vld [vmem:[#allocation5 + $0x8cc] sm:$0xf]
    %v3735 = vld [vmem:[#allocation5 + $0x8d0] sm:$0xff]
    %v3736 = vld [vmem:[#allocation5 + $0x8d8] sm:$0xf]
    %v3737 = vld [vmem:[#allocation5 + $0x8dc] sm:$0xff]
    %v3738 = vld [vmem:[#allocation5 + $0x8e4] sm:$0xf]
    %v3739 = vld [vmem:[#allocation5 + $0x8e8] sm:$0xff]
    %v3740 = vld [vmem:[#allocation5 + $0x8f0] sm:$0xf]
    %v3741 = vld [vmem:[#allocation5 + $0x8f4] sm:$0xff]
    %v3742 = vld [vmem:[#allocation5 + $0x8fc] sm:$0xf]
    %v3743 = vld [vmem:[#allocation5 + $0x900] sm:$0xff]
    %v3744 = vld [vmem:[#allocation5 + $0x908] sm:$0xf]
    %v3745 = vld [vmem:[#allocation5 + $0x90c] sm:$0xff]
    %v3746 = vld [vmem:[#allocation5 + $0x914] sm:$0xf]
    %v3747 = vld [vmem:[#allocation5 + $0x918] sm:$0xff]
    %v3748 = vld [vmem:[#allocation5 + $0x920] sm:$0xf]
    %v3749 = vld [vmem:[#allocation5 + $0x924] sm:$0xff]
    %v3750 = vld [vmem:[#allocation5 + $0x92c] sm:$0xf]
    %v3751 = vld [vmem:[#allocation5 + $0x930] sm:$0xff]
    %v3752 = vld [vmem:[#allocation5 + $0x938] sm:$0xf]
    %v3753 = vld [vmem:[#allocation5 + $0x93c] sm:$0xff]
    %v3754 = vld [vmem:[#allocation5 + $0x944] sm:$0xf]
    %v3755 = vld [vmem:[#allocation5 + $0x948] sm:$0xff]
    %v3756 = vld [vmem:[#allocation5 + $0x950] sm:$0xf]
    %v3757 = vld [vmem:[#allocation5 + $0x954] sm:$0xff]
    %v3758 = vld [vmem:[#allocation5 + $0x95c] sm:$0xf]
    %v3759 = vld [vmem:[#allocation5 + $0x960] sm:$0xff]
    %v3760 = vld [vmem:[#allocation5 + $0x968] sm:$0xf]
    %v3761 = vld [vmem:[#allocation5 + $0x96c] sm:$0xff]
    %v3762 = vld [vmem:[#allocation5 + $0x974] sm:$0xf]
    %v3763 = vld [vmem:[#allocation5 + $0x978] sm:$0xff]
    %v3764 = vld [vmem:[#allocation5 + $0x980] sm:$0xf]
    %v3765 = vld [vmem:[#allocation5 + $0x984] sm:$0xff]
    %v3766 = vld [vmem:[#allocation5 + $0x98c] sm:$0xf]
    %v3767 = vld [vmem:[#allocation5 + $0x990] sm:$0xff]
    %v3768 = vld [vmem:[#allocation5 + $0x998] sm:$0xf]
    %v3769 = vld [vmem:[#allocation5 + $0x99c] sm:$0xff]
    %v3770 = vld [vmem:[#allocation5 + $0x9a4] sm:$0xf]
    %v3771 = vld [vmem:[#allocation5 + $0x9a8] sm:$0xff]
    %v3772 = vld [vmem:[#allocation5 + $0x9b0] sm:$0xf]
    %v3773 = vld [vmem:[#allocation5 + $0x9b4] sm:$0xff]
    %v3774 = vld [vmem:[#allocation5 + $0x9bc] sm:$0xf]
    %v3775 = vld [vmem:[#allocation5 + $0x9c0] sm:$0xff]
    %v3776 = vld [vmem:[#allocation5 + $0x9c8] sm:$0xf]
    %v3777 = vld [vmem:[#allocation5 + $0x9cc] sm:$0xff]
    %v3778 = vld [vmem:[#allocation5 + $0x9d4] sm:$0xf]
    %v3779 = vld [vmem:[#allocation5 + $0x9d8] sm:$0xff]
    %v3780 = vld [vmem:[#allocation5 + $0x9e0] sm:$0xf]
    %v3781 = vld [vmem:[#allocation5 + $0x9e4] sm:$0xff]
    %v3782 = vld [vmem:[#allocation5 + $0x9ec] sm:$0xf]
    %v3783 = vld [vmem:[#allocation5 + $0x9f0] sm:$0xff]
    %v3784 = vld [vmem:[#allocation5 + $0x9f8] sm:$0xf]
    %v3785 = vld [vmem:[#allocation5 + $0x9fc] sm:$0xff]
    %v3786 = vld [vmem:[#allocation5 + $0xa04] sm:$0xf]
    %v3787 = vld [vmem:[#allocation5 + $0xa08] sm:$0xff]
    %v3788 = vld [vmem:[#allocation5 + $0xa10] sm:$0xf]
    %v3789 = vld [vmem:[#allocation5 + $0xa14] sm:$0xff]
    %v3790 = vld [vmem:[#allocation5 + $0xa1c] sm:$0xf]
    %v3791 = vld [vmem:[#allocation5 + $0xa20] sm:$0xff]
    %v3792 = vld [vmem:[#allocation5 + $0xa28] sm:$0xf]
    %v3793 = vld [vmem:[#allocation5 + $0xa2c] sm:$0xff]
    %v3794 = vld [vmem:[#allocation5 + $0xa34] sm:$0xf]
    %v3795 = vld [vmem:[#allocation5 + $0xa38] sm:$0xff]
    %v3796 = vld [vmem:[#allocation5 + $0xa40] sm:$0xf]
    %v3797 = vld [vmem:[#allocation5 + $0xa44] sm:$0xff]
    %v3798 = vld [vmem:[#allocation5 + $0xa4c] sm:$0xf]
    %v3799 = vld [vmem:[#allocation5 + $0xa50] sm:$0xff]
    %v3800 = vld [vmem:[#allocation5 + $0xa58] sm:$0xf]
    %v3801 = vld [vmem:[#allocation5 + $0xa5c] sm:$0xff]
    %v3802 = vld [vmem:[#allocation5 + $0xa64] sm:$0xf]
    %v3803 = vld [vmem:[#allocation5 + $0xa68] sm:$0xff]
    %v3804 = vld [vmem:[#allocation5 + $0xa70] sm:$0xf]
    %v3805 = vld [vmem:[#allocation5 + $0xa74] sm:$0xff]
    %v3806 = vld [vmem:[#allocation5 + $0xa7c] sm:$0xf]
    %v3807 = vld [vmem:[#allocation5 + $0xa80] sm:$0xff]
    %v3808 = vld [vmem:[#allocation5 + $0xa88] sm:$0xf]
    %v3809 = vld [vmem:[#allocation5 + $0xa8c] sm:$0xff]
    %v3810 = vld [vmem:[#allocation5 + $0xa94] sm:$0xf]
    %v3811 = vld [vmem:[#allocation5 + $0xa98] sm:$0xff]
    %v3812 = vld [vmem:[#allocation5 + $0xaa0] sm:$0xf]
    %v3813 = vld [vmem:[#allocation5 + $0xaa4] sm:$0xff]
    %v3814 = vld [vmem:[#allocation5 + $0xaac] sm:$0xf]
    %v3815 = vld [vmem:[#allocation5 + $0xab0] sm:$0xff]
    %v3816 = vld [vmem:[#allocation5 + $0xab8] sm:$0xf]
    %v3817 = vld [vmem:[#allocation5 + $0xabc] sm:$0xff]
    %v3818 = vld [vmem:[#allocation5 + $0xac4] sm:$0xf]
    %v3819 = vld [vmem:[#allocation5 + $0xac8] sm:$0xff]
    %v3820 = vld [vmem:[#allocation5 + $0xad0] sm:$0xf]
    %v3821 = vld [vmem:[#allocation5 + $0xad4] sm:$0xff]
    %v3822 = vld [vmem:[#allocation5 + $0xadc] sm:$0xf]
    %v3823 = vld [vmem:[#allocation5 + $0xae0] sm:$0xff]
    %v3824 = vld [vmem:[#allocation5 + $0xae8] sm:$0xf]
    %v3825 = vld [vmem:[#allocation5 + $0xaec] sm:$0xff]
    %v3826 = vld [vmem:[#allocation5 + $0xaf4] sm:$0xf]
    %v3827 = vld [vmem:[#allocation5 + $0xaf8] sm:$0xff]
    %v3828 = vld [vmem:[#allocation5 + $0xb00] sm:$0xf]
    %v3829 = vld [vmem:[#allocation5 + $0xb04] sm:$0xff]
    %v3830 = vld [vmem:[#allocation5 + $0xb0c] sm:$0xf]
    %v3831 = vld [vmem:[#allocation5 + $0xb10] sm:$0xff]
    %v3832 = vld [vmem:[#allocation5 + $0xb18] sm:$0xf]
    %v3833 = vld [vmem:[#allocation5 + $0xb1c] sm:$0xff]
    %v3834 = vld [vmem:[#allocation5 + $0xb24] sm:$0xf]
    %v3835 = vld [vmem:[#allocation5 + $0xb28] sm:$0xff]
    %v3836 = vld [vmem:[#allocation5 + $0xb30] sm:$0xf]
    %v3837 = vld [vmem:[#allocation5 + $0xb34] sm:$0xff]
    %v3838 = vld [vmem:[#allocation5 + $0xb3c] sm:$0xf]
    %v3839 = vld [vmem:[#allocation5 + $0xb40] sm:$0xff]
    %v3840 = vld [vmem:[#allocation5 + $0xb48] sm:$0xf]
    %v3841 = vld [vmem:[#allocation5 + $0xb4c] sm:$0xff]
    %v3842 = vld [vmem:[#allocation5 + $0xb54] sm:$0xf]
    %v3843 = vld [vmem:[#allocation5 + $0xb58] sm:$0xff]
    %v3844 = vld [vmem:[#allocation5 + $0xb60] sm:$0xf]
    %v3845 = vld [vmem:[#allocation5 + $0xb64] sm:$0xff]
    %v3846 = vld [vmem:[#allocation5 + $0xb6c] sm:$0xf]
    %v3847 = vld [vmem:[#allocation5 + $0xb70] sm:$0xff]
    %v3848 = vld [vmem:[#allocation5 + $0xb78] sm:$0xf]
    %v3849 = vld [vmem:[#allocation5 + $0xb7c] sm:$0xff]
    %v3850 = vld [vmem:[#allocation5 + $0xb84] sm:$0xf]
    %v3851 = vld [vmem:[#allocation5 + $0xb88] sm:$0xff]
    %v3852 = vld [vmem:[#allocation5 + $0xb90] sm:$0xf]
    %v3853 = vld [vmem:[#allocation5 + $0xb94] sm:$0xff]
    %v3854 = vld [vmem:[#allocation5 + $0xb9c] sm:$0xf]
    %v3855 = vld [vmem:[#allocation5 + $0xba0] sm:$0xff]
    %v3856 = vld [vmem:[#allocation5 + $0xba8] sm:$0xf]
    %v3857 = vld [vmem:[#allocation5 + $0xbac] sm:$0xff]
    %v3858 = vld [vmem:[#allocation5 + $0xbb4] sm:$0xf]
    %v3859 = vld [vmem:[#allocation5 + $0xbb8] sm:$0xff]
    %v3860 = vld [vmem:[#allocation5 + $0xbc0] sm:$0xf]
    %v3861 = vld [vmem:[#allocation5 + $0xbc4] sm:$0xff]
    %v3862 = vld [vmem:[#allocation5 + $0xbcc] sm:$0xf]
    %v3863 = vld [vmem:[#allocation5 + $0xbd0] sm:$0xff]
    %v3864 = vld [vmem:[#allocation5 + $0xbd8] sm:$0xf]
    %v3865 = vld [vmem:[#allocation5 + $0xbdc] sm:$0xff]
    %v3866 = vld [vmem:[#allocation5 + $0xbe4] sm:$0xf]
    %v3867 = vld [vmem:[#allocation5 + $0xbe8] sm:$0xff]
    %v3868 = vld [vmem:[#allocation5 + $0xbf0] sm:$0xf]
    %v3869 = vld [vmem:[#allocation5 + $0xbf4] sm:$0xff]
    %v3870 = vld [vmem:[#allocation5 + $0xbfc] sm:$0xf]
    %v3871 = vld [vmem:[#allocation5 + $0xc00] sm:$0xff]
    %v3872 = vld [vmem:[#allocation5 + $0xc08] sm:$0xf]
    %v3873 = vld [vmem:[#allocation5 + $0xc0c] sm:$0xff]
    %v3874 = vld [vmem:[#allocation5 + $0xc14] sm:$0xf]
    %v3875 = vld [vmem:[#allocation5 + $0xc18] sm:$0xff]
    %v3876 = vld [vmem:[#allocation5 + $0xc20] sm:$0xf]
    %v3877 = vld [vmem:[#allocation5 + $0xc24] sm:$0xff]
    %v3878 = vld [vmem:[#allocation5 + $0xc2c] sm:$0xf]
    %v3879 = vld [vmem:[#allocation5 + $0xc30] sm:$0xff]
    %v3880 = vld [vmem:[#allocation5 + $0xc38] sm:$0xf]
    %v3881 = vld [vmem:[#allocation5 + $0xc3c] sm:$0xff]
    %v3882 = vld [vmem:[#allocation5 + $0xc44] sm:$0xf]
    %v3883 = vld [vmem:[#allocation5 + $0xc48] sm:$0xff]
    %v3884 = vld [vmem:[#allocation5 + $0xc50] sm:$0xf]
    %v3885 = vld [vmem:[#allocation5 + $0xc54] sm:$0xff]
    %v3886 = vld [vmem:[#allocation5 + $0xc5c] sm:$0xf]
    %v3887 = vld [vmem:[#allocation5 + $0xc60] sm:$0xff]
    %v3888 = vld [vmem:[#allocation5 + $0xc68] sm:$0xf]
    %v3889 = vld [vmem:[#allocation5 + $0xc6c] sm:$0xff]
    %v3890 = vld [vmem:[#allocation5 + $0xc74] sm:$0xf]
    %v3891 = vld [vmem:[#allocation5 + $0xc78] sm:$0xff]
    %v3892 = vld [vmem:[#allocation5 + $0xc80] sm:$0xf]
    %v3893 = vld [vmem:[#allocation5 + $0xc84] sm:$0xff]
    %v3894 = vld [vmem:[#allocation5 + $0xc8c] sm:$0xf]
    %v3895 = vld [vmem:[#allocation5 + $0xc90] sm:$0xff]
    %v3896 = vld [vmem:[#allocation5 + $0xc98] sm:$0xf]
    %v3897 = vld [vmem:[#allocation5 + $0xc9c] sm:$0xff]
    %v3898 = vld [vmem:[#allocation5 + $0xca4] sm:$0xf]
    %v3899 = vld [vmem:[#allocation5 + $0xca8] sm:$0xff]
    %v3900 = vld [vmem:[#allocation5 + $0xcb0] sm:$0xf]
    %v3901 = vld [vmem:[#allocation5 + $0xcb4] sm:$0xff]
    %v3902 = vld [vmem:[#allocation5 + $0xcbc] sm:$0xf]
    %v3903 = vld [vmem:[#allocation5 + $0xcc0] sm:$0xff]
    %v3904 = vld [vmem:[#allocation5 + $0xcc8] sm:$0xf]
    %v3905 = vld [vmem:[#allocation5 + $0xccc] sm:$0xff]
    %v3906 = vld [vmem:[#allocation5 + $0xcd4] sm:$0xf]
    %v3907 = vld [vmem:[#allocation5 + $0xcd8] sm:$0xff]
    %v3908 = vld [vmem:[#allocation5 + $0xce0] sm:$0xf]
    %v3909 = vld [vmem:[#allocation5 + $0xce4] sm:$0xff]
    %v3910 = vld [vmem:[#allocation5 + $0xcec] sm:$0xf]
    %v3911 = vld [vmem:[#allocation5 + $0xcf0] sm:$0xff]
    %v3912 = vld [vmem:[#allocation5 + $0xcf8] sm:$0xf]
    %v3913 = vld [vmem:[#allocation5 + $0xcfc] sm:$0xff]
    %v3914 = vld [vmem:[#allocation5 + $0xd04] sm:$0xf]
    %v3915 = vld [vmem:[#allocation5 + $0xd08] sm:$0xff]
    %v3916 = vld [vmem:[#allocation5 + $0xd10] sm:$0xf]
    %v3917 = vld [vmem:[#allocation5 + $0xd14] sm:$0xff]
    %v3918 = vld [vmem:[#allocation5 + $0xd1c] sm:$0xf]
    %v3919 = vld [vmem:[#allocation5 + $0xd20] sm:$0xff]
    %v3920 = vld [vmem:[#allocation5 + $0xd28] sm:$0xf]
    %v3921 = vld [vmem:[#allocation5 + $0xd2c] sm:$0xff]
    %v3922 = vld [vmem:[#allocation5 + $0xd34] sm:$0xf]
    %v3923 = vld [vmem:[#allocation5 + $0xd38] sm:$0xff]
    %v3924 = vld [vmem:[#allocation5 + $0xd40] sm:$0xf]
    %v3925 = vld [vmem:[#allocation5 + $0xd44] sm:$0xff]
    %v3926 = vld [vmem:[#allocation5 + $0xd4c] sm:$0xf]
    %v3927 = vld [vmem:[#allocation5 + $0xd50] sm:$0xff]
    %v3928 = vld [vmem:[#allocation5 + $0xd58] sm:$0xf]
    %v3929 = vld [vmem:[#allocation5 + $0xd5c] sm:$0xff]
    %v3930 = vld [vmem:[#allocation5 + $0xd64] sm:$0xf]
    %v3931 = vld [vmem:[#allocation5 + $0xd68] sm:$0xff]
    %v3932 = vld [vmem:[#allocation5 + $0xd70] sm:$0xf]
    %v3933 = vld [vmem:[#allocation5 + $0xd74] sm:$0xff]
    %v3934 = vld [vmem:[#allocation5 + $0xd7c] sm:$0xf]
    %v3935 = vld [vmem:[#allocation5 + $0xd80] sm:$0xff]
    %v3936 = vld [vmem:[#allocation5 + $0xd88] sm:$0xf]
    %v3937 = vld [vmem:[#allocation5 + $0xd8c] sm:$0xff]
    %v3938 = vld [vmem:[#allocation5 + $0xd94] sm:$0xf]
    %v3939 = vld [vmem:[#allocation5 + $0xd98] sm:$0xff]
    %v3940 = vld [vmem:[#allocation5 + $0xda0] sm:$0xf]
    %v3941 = vld [vmem:[#allocation5 + $0xda4] sm:$0xff]
    %v3942 = vld [vmem:[#allocation5 + $0xdac] sm:$0xf]
    %v3943 = vld [vmem:[#allocation5 + $0xdb0] sm:$0xff]
    %v3944 = vld [vmem:[#allocation5 + $0xdb8] sm:$0xf]
    %v3945 = vld [vmem:[#allocation5 + $0xdbc] sm:$0xff]
    %v3946 = vld [vmem:[#allocation5 + $0xdc4] sm:$0xf]
    %v3947 = vld [vmem:[#allocation5 + $0xdc8] sm:$0xff]
    %v3948 = vld [vmem:[#allocation5 + $0xdd0] sm:$0xf]
    %v3949 = vld [vmem:[#allocation5 + $0xdd4] sm:$0xff]
    %v3950 = vld [vmem:[#allocation5 + $0xddc] sm:$0xf]
    %v3951 = vld [vmem:[#allocation5 + $0xde0] sm:$0xff]
    %v3952 = vld [vmem:[#allocation5 + $0xde8] sm:$0xf]
    %v3953 = vld [vmem:[#allocation5 + $0xdec] sm:$0xff]
    %v3954 = vld [vmem:[#allocation5 + $0xdf4] sm:$0xf]
    %v3955 = vld [vmem:[#allocation5 + $0xdf8] sm:$0xff]
    %v3956 = vld [vmem:[#allocation5 + $0xe00] sm:$0xf]
    %v3957 = vld [vmem:[#allocation5 + $0xe04] sm:$0xff]
    %v3958 = vld [vmem:[#allocation5 + $0xe0c] sm:$0xf]
    %v3959 = vld [vmem:[#allocation5 + $0xe10] sm:$0xff]
    %v3960 = vld [vmem:[#allocation5 + $0xe18] sm:$0xf]
    %v3961 = vld [vmem:[#allocation5 + $0xe1c] sm:$0xff]
    %v3962 = vld [vmem:[#allocation5 + $0xe24] sm:$0xf]
    %v3963 = vld [vmem:[#allocation5 + $0xe28] sm:$0xff]
    %v3964 = vld [vmem:[#allocation5 + $0xe30] sm:$0xf]
    %v3965 = vld [vmem:[#allocation5 + $0xe34] sm:$0xff]
    %v3966 = vld [vmem:[#allocation5 + $0xe3c] sm:$0xf]
    %v3967 = vld [vmem:[#allocation5 + $0xe40] sm:$0xff]
    %v3968 = vld [vmem:[#allocation5 + $0xe48] sm:$0xf]
    %v3969 = vld [vmem:[#allocation5 + $0xe4c] sm:$0xff]
    %v3970 = vld [vmem:[#allocation5 + $0xe54] sm:$0xf]
    %v3971 = vld [vmem:[#allocation5 + $0xe58] sm:$0xff]
    %v3972 = vld [vmem:[#allocation5 + $0xe60] sm:$0xf]
    %v3973 = vld [vmem:[#allocation5 + $0xe64] sm:$0xff]
    %v3974 = vld [vmem:[#allocation5 + $0xe6c] sm:$0xf]
    %v3975 = vld [vmem:[#allocation5 + $0xe70] sm:$0xff]
    %v3976 = vld [vmem:[#allocation5 + $0xe78] sm:$0xf]
    %v3977 = vld [vmem:[#allocation5 + $0xe7c] sm:$0xff]
    %v3978 = vld [vmem:[#allocation5 + $0xe84] sm:$0xf]
    %v3979 = vld [vmem:[#allocation5 + $0xe88] sm:$0xff]
    %v3980 = vld [vmem:[#allocation5 + $0xe90] sm:$0xf]
    %v3981 = vld [vmem:[#allocation5 + $0xe94] sm:$0xff]
    %v3982 = vld [vmem:[#allocation5 + $0xe9c] sm:$0xf]
    %v3983 = vld [vmem:[#allocation5 + $0xea0] sm:$0xff]
    %v3984 = vld [vmem:[#allocation5 + $0xea8] sm:$0xf]
    %v3985 = vld [vmem:[#allocation5 + $0xeac] sm:$0xff]
    %v3986 = vld [vmem:[#allocation5 + $0xeb4] sm:$0xf]
    %v3987 = vld [vmem:[#allocation5 + $0xeb8] sm:$0xff]
    %v3988 = vld [vmem:[#allocation5 + $0xec0] sm:$0xf]
    %v3989 = vld [vmem:[#allocation5 + $0xec4] sm:$0xff]
    %v3990 = vld [vmem:[#allocation5 + $0xecc] sm:$0xf]
    %v3991 = vld [vmem:[#allocation5 + $0xed0] sm:$0xff]
    %v3992 = vld [vmem:[#allocation5 + $0xed8] sm:$0xf]
    %v3993 = vld [vmem:[#allocation5 + $0xedc] sm:$0xff]
    %v3994 = vld [vmem:[#allocation5 + $0xee4] sm:$0xf]
    %v3995 = vld [vmem:[#allocation5 + $0xee8] sm:$0xff]
    %v3996 = vld [vmem:[#allocation5 + $0xef0] sm:$0xf]
    %v3997 = vld [vmem:[#allocation5 + $0xef4] sm:$0xff]
    %v3998 = vld [vmem:[#allocation5 + $0xefc] sm:$0xf]
    %v3999 = vld [vmem:[#allocation5 + $0xf00] sm:$0xff]
    %v4000 = vld [vmem:[#allocation5 + $0xf08] sm:$0xf]
    %v4001 = vld [vmem:[#allocation5 + $0xf0c] sm:$0xff]
    %v4002 = vld [vmem:[#allocation5 + $0xf14] sm:$0xf]
    %v4003 = vld [vmem:[#allocation5 + $0xf18] sm:$0xff]
    %v4004 = vld [vmem:[#allocation5 + $0xf20] sm:$0xf]
    %v4005 = vld [vmem:[#allocation5 + $0xf24] sm:$0xff]
    %v4006 = vld [vmem:[#allocation5 + $0xf2c] sm:$0xf]
    %v4007 = vld [vmem:[#allocation5 + $0xf30] sm:$0xff]
    %v4008 = vld [vmem:[#allocation5 + $0xf38] sm:$0xf]
    %v4009 = vld [vmem:[#allocation5 + $0xf3c] sm:$0xff]
    %v4010 = vld [vmem:[#allocation5 + $0xf44] sm:$0xf]
    %v4011 = vld [vmem:[#allocation5 + $0xf48] sm:$0xff]
    %v4012 = vld [vmem:[#allocation5 + $0xf50] sm:$0xf]
    %v4013 = vld [vmem:[#allocation5 + $0xf54] sm:$0xff]
    %v4014 = vld [vmem:[#allocation5 + $0xf5c] sm:$0xf]
    %v4015 = vld [vmem:[#allocation5 + $0xf60] sm:$0xff]
    %v4016 = vld [vmem:[#allocation5 + $0xf68] sm:$0xf]
    %v4017 = vld [vmem:[#allocation5 + $0xf6c] sm:$0xff]
    %v4018 = vld [vmem:[#allocation5 + $0xf74] sm:$0xf]
    %v4019 = vld [vmem:[#allocation5 + $0xf78] sm:$0xff]
    %v4020 = vld [vmem:[#allocation5 + $0xf80] sm:$0xf]
    %v4021 = vld [vmem:[#allocation5 + $0xf84] sm:$0xff]
    %v4022 = vld [vmem:[#allocation5 + $0xf8c] sm:$0xf]
    %v4023 = vld [vmem:[#allocation5 + $0xf90] sm:$0xff]
    %v4024 = vld [vmem:[#allocation5 + $0xf98] sm:$0xf]
    %v4025 = vld [vmem:[#allocation5 + $0xf9c] sm:$0xff]
    %v4026 = vld [vmem:[#allocation5 + $0xfa4] sm:$0xf]
    %v4027 = vld [vmem:[#allocation5 + $0xfa8] sm:$0xff]
    %v4028 = vld [vmem:[#allocation5 + $0xfb0] sm:$0xf]
    %v4029 = vld [vmem:[#allocation5 + $0xfb4] sm:$0xff]
    %v4030 = vld [vmem:[#allocation5 + $0xfbc] sm:$0xf]
    %v4031 = vld [vmem:[#allocation5 + $0xfc0] sm:$0xff]
    %v4032 = vld [vmem:[#allocation5 + $0xfc8] sm:$0xf]
    %v4033 = vld [vmem:[#allocation5 + $0xfcc] sm:$0xff]
    %v4034 = vld [vmem:[#allocation5 + $0xfd4] sm:$0xf]
    %v4035 = vld [vmem:[#allocation5 + $0xfd8] sm:$0xff]
    %v4036 = vld [vmem:[#allocation5 + $0xfe0] sm:$0xf]
    %v4037 = vld [vmem:[#allocation5 + $0xfe4] sm:$0xff]
    %v4038 = vld [vmem:[#allocation5 + $0xfec] sm:$0xf]
    %v4039 = vld [vmem:[#allocation5 + $0xff0] sm:$0xff]
    %v4040 = vld [vmem:[#allocation5 + $0xff8] sm:$0xf]
    %v4041 = vld [vmem:[#allocation5 + $0xffc] sm:$0xff]
    %v4042 = vld [vmem:[#allocation5 + $0x1004] sm:$0xf]
    %v4043 = vld [vmem:[#allocation5 + $0x1008] sm:$0xff]
    %v4044 = vld [vmem:[#allocation5 + $0x1010] sm:$0xf]
    %v4045 = vld [vmem:[#allocation5 + $0x1014] sm:$0xff]
    %v4046 = vld [vmem:[#allocation5 + $0x101c] sm:$0xf]
    %v4047 = vld [vmem:[#allocation5 + $0x1020] sm:$0xff]
    %v4048 = vld [vmem:[#allocation5 + $0x1028] sm:$0xf]
    %v4049 = vld [vmem:[#allocation5 + $0x102c] sm:$0xff]
    %v4050 = vld [vmem:[#allocation5 + $0x1034] sm:$0xf]
    %v4051 = vld [vmem:[#allocation5 + $0x1038] sm:$0xff]
    %v4052 = vld [vmem:[#allocation5 + $0x1040] sm:$0xf]
    %v4053 = vld [vmem:[#allocation5 + $0x1044] sm:$0xff]
    %v4054 = vld [vmem:[#allocation5 + $0x104c] sm:$0xf]
    %v4055 = vld [vmem:[#allocation5 + $0x1050] sm:$0xff]
    %v4056 = vld [vmem:[#allocation5 + $0x1058] sm:$0xf]
    %v4057 = vld [vmem:[#allocation5 + $0x105c] sm:$0xff]
    %v4058 = vld [vmem:[#allocation5 + $0x1064] sm:$0xf]
    %v4059 = vld [vmem:[#allocation5 + $0x1068] sm:$0xff]
    %v4060 = vld [vmem:[#allocation5 + $0x1070] sm:$0xf]
    %v4061 = vld [vmem:[#allocation5 + $0x1074] sm:$0xff]
    %v4062 = vld [vmem:[#allocation5 + $0x107c] sm:$0xf]
    %v4063 = vld [vmem:[#allocation5 + $0x1080] sm:$0xff]
    %v4064 = vld [vmem:[#allocation5 + $0x1088] sm:$0xf]
    %v4065 = vld [vmem:[#allocation5 + $0x108c] sm:$0xff]
    %v4066 = vld [vmem:[#allocation5 + $0x1094] sm:$0xf]
    %v4067 = vld [vmem:[#allocation5 + $0x1098] sm:$0xff]
    %v4068 = vld [vmem:[#allocation5 + $0x10a0] sm:$0xf]
    %v4069 = vld [vmem:[#allocation5 + $0x10a4] sm:$0xff]
    %v4070 = vld [vmem:[#allocation5 + $0x10ac] sm:$0xf]
    %v4071 = vld [vmem:[#allocation5 + $0x10b0] sm:$0xff]
    %v4072 = vld [vmem:[#allocation5 + $0x10b8] sm:$0xf]
    %v4073 = vld [vmem:[#allocation5 + $0x10bc] sm:$0xff]
    %v4074 = vld [vmem:[#allocation5 + $0x10c4] sm:$0xf]
    %v4075 = vld [vmem:[#allocation5 + $0x10c8] sm:$0xff]
    %v4076 = vld [vmem:[#allocation5 + $0x10d0] sm:$0xf]
    %v4077 = vld [vmem:[#allocation5 + $0x10d4] sm:$0xff]
    %v4078 = vld [vmem:[#allocation5 + $0x10dc] sm:$0xf]
    %v4079 = vld [vmem:[#allocation5 + $0x10e0] sm:$0xff]
    %v4080 = vld [vmem:[#allocation5 + $0x10e8] sm:$0xf]
    %v4081 = vld [vmem:[#allocation5 + $0x10ec] sm:$0xff]
    %v4082 = vld [vmem:[#allocation5 + $0x10f4] sm:$0xf]
    %v4083 = vld [vmem:[#allocation5 + $0x10f8] sm:$0xff]
    %v4084 = vld [vmem:[#allocation5 + $0x1100] sm:$0xf]
    %v4085 = vld [vmem:[#allocation5 + $0x1104] sm:$0xff]
    %v4086 = vld [vmem:[#allocation5 + $0x110c] sm:$0xf]
    %v4087 = vld [vmem:[#allocation5 + $0x1110] sm:$0xff]
    %v4088 = vld [vmem:[#allocation5 + $0x1118] sm:$0xf]
    %v4089 = vld [vmem:[#allocation5 + $0x111c] sm:$0xff]
    %v4090 = vld [vmem:[#allocation5 + $0x1124] sm:$0xf]
    %v4091 = vld [vmem:[#allocation5 + $0x1128] sm:$0xff]
    %v4092 = vld [vmem:[#allocation5 + $0x1130] sm:$0xf]
    %v4093 = vld [vmem:[#allocation5 + $0x1134] sm:$0xff]
    %v4094 = vld [vmem:[#allocation5 + $0x113c] sm:$0xf]
    %v4095 = vld [vmem:[#allocation5 + $0x1140] sm:$0xff]
    %v4096 = vld [vmem:[#allocation5 + $0x1148] sm:$0xf]
    %v4097 = vld [vmem:[#allocation5 + $0x114c] sm:$0xff]
    %v4098 = vld [vmem:[#allocation5 + $0x1154] sm:$0xf]
    %v4099 = vld [vmem:[#allocation5 + $0x1158] sm:$0xff]
    %v4100 = vld [vmem:[#allocation5 + $0x1160] sm:$0xf]
    %v4101 = vld [vmem:[#allocation5 + $0x1164] sm:$0xff]
    %v4102 = vld [vmem:[#allocation5 + $0x116c] sm:$0xf]
    %v4103 = vld [vmem:[#allocation5 + $0x1170] sm:$0xff]
    %v4104 = vld [vmem:[#allocation5 + $0x1178] sm:$0xf]
    %v4105 = vld [vmem:[#allocation5 + $0x117c] sm:$0xff]
    %v4106 = vld [vmem:[#allocation5 + $0x1184] sm:$0xf]
    %v4107 = vld [vmem:[#allocation5 + $0x1188] sm:$0xff]
    %v4108 = vld [vmem:[#allocation5 + $0x1190] sm:$0xf]
    %v4109 = vld [vmem:[#allocation5 + $0x1194] sm:$0xff]
    %v4110 = vld [vmem:[#allocation5 + $0x119c] sm:$0xf]
    %v4111 = vld [vmem:[#allocation5 + $0x11a0] sm:$0xff]
    %v4112 = vld [vmem:[#allocation5 + $0x11a8] sm:$0xf]
    %v4113 = vld [vmem:[#allocation5 + $0x11ac] sm:$0xff]
    %v4114 = vld [vmem:[#allocation5 + $0x11b4] sm:$0xf]
    %v4115 = vld [vmem:[#allocation5 + $0x11b8] sm:$0xff]
    %v4116 = vld [vmem:[#allocation5 + $0x11c0] sm:$0xf]
    %v4117 = vld [vmem:[#allocation5 + $0x11c4] sm:$0xff]
    %v4118 = vld [vmem:[#allocation5 + $0x11cc] sm:$0xf]
    %v4119 = vld [vmem:[#allocation5 + $0x11d0] sm:$0xff]
    %v4120 = vld [vmem:[#allocation5 + $0x11d8] sm:$0xf]
    %v4121 = vld [vmem:[#allocation5 + $0x11dc] sm:$0xff]
    %v4122 = vld [vmem:[#allocation5 + $0x11e4] sm:$0xf]
    %v4123 = vld [vmem:[#allocation5 + $0x11e8] sm:$0xff]
    %v4124 = vld [vmem:[#allocation5 + $0x11f0] sm:$0xf]
    %v4125 = vld [vmem:[#allocation5 + $0x11f4] sm:$0xff]
    %v4126 = vld [vmem:[#allocation5 + $0x11fc] sm:$0xf]
    %v4127 = vld [vmem:[#allocation5 + $0x1200] sm:$0xff]
    %v4128 = vld [vmem:[#allocation5 + $0x1208] sm:$0xf]
    %v4129 = vld [vmem:[#allocation5 + $0x120c] sm:$0xff]
    %v4130 = vld [vmem:[#allocation5 + $0x1214] sm:$0xf]
    %v4131 = vld [vmem:[#allocation5 + $0x1218] sm:$0xff]
    %v4132 = vld [vmem:[#allocation5 + $0x1220] sm:$0xf]
    %v4133 = vld [vmem:[#allocation5 + $0x1224] sm:$0xff]
    %v4134 = vld [vmem:[#allocation5 + $0x122c] sm:$0xf]
    %v4135 = vld [vmem:[#allocation5 + $0x1230] sm:$0xff]
    %v4136 = vld [vmem:[#allocation5 + $0x1238] sm:$0xf]
    %v4137 = vld [vmem:[#allocation5 + $0x123c] sm:$0xff]
    %v4138 = vld [vmem:[#allocation5 + $0x1244] sm:$0xf]
    %v4139 = vld [vmem:[#allocation5 + $0x1248] sm:$0xff]
    %v4140 = vld [vmem:[#allocation5 + $0x1250] sm:$0xf]
    %v4141 = vld [vmem:[#allocation5 + $0x1254] sm:$0xff]
    %v4142 = vld [vmem:[#allocation5 + $0x125c] sm:$0xf]
    %v4143 = vld [vmem:[#allocation5 + $0x1260] sm:$0xff]
    %v4144 = vld [vmem:[#allocation5 + $0x1268] sm:$0xf]
    %v4145 = vld [vmem:[#allocation5 + $0x126c] sm:$0xff]
    %v4146 = vld [vmem:[#allocation5 + $0x1274] sm:$0xf]
    %v4147 = vld [vmem:[#allocation5 + $0x1278] sm:$0xff]
    %v4148 = vld [vmem:[#allocation5 + $0x1280] sm:$0xf]
    %v4149 = vld [vmem:[#allocation5 + $0x1284] sm:$0xff]
    %v4150 = vld [vmem:[#allocation5 + $0x128c] sm:$0xf]
    %v4151 = vld [vmem:[#allocation5 + $0x1290] sm:$0xff]
    %v4152 = vld [vmem:[#allocation5 + $0x1298] sm:$0xf]
    %v4153 = vld [vmem:[#allocation5 + $0x129c] sm:$0xff]
    %v4154 = vld [vmem:[#allocation5 + $0x12a4] sm:$0xf]
    %v4155 = vld [vmem:[#allocation5 + $0x12a8] sm:$0xff]
    %v4156 = vld [vmem:[#allocation5 + $0x12b0] sm:$0xf]
    %v4157 = vld [vmem:[#allocation5 + $0x12b4] sm:$0xff]
    %v4158 = vld [vmem:[#allocation5 + $0x12bc] sm:$0xf]
    %v4159 = vld [vmem:[#allocation5 + $0x12c0] sm:$0xff]
    %v4160 = vld [vmem:[#allocation5 + $0x12c8] sm:$0xf]
    %v4161 = vld [vmem:[#allocation5 + $0x12cc] sm:$0xff]
    %v4162 = vld [vmem:[#allocation5 + $0x12d4] sm:$0xf]
    %v4163 = vld [vmem:[#allocation5 + $0x12d8] sm:$0xff]
    %v4164 = vld [vmem:[#allocation5 + $0x12e0] sm:$0xf]
    %v4165 = vld [vmem:[#allocation5 + $0x12e4] sm:$0xff]
    %v4166 = vld [vmem:[#allocation5 + $0x12ec] sm:$0xf]
    %v4167 = vld [vmem:[#allocation5 + $0x12f0] sm:$0xff]
    %v4168 = vld [vmem:[#allocation5 + $0x12f8] sm:$0xf]
    %v4169 = vld [vmem:[#allocation5 + $0x12fc] sm:$0xff]
    %v4170 = vld [vmem:[#allocation5 + $0x1304] sm:$0xf]
    %v4171 = vld [vmem:[#allocation5 + $0x1308] sm:$0xff]
    %v4172 = vld [vmem:[#allocation5 + $0x1310] sm:$0xf]
    %v4173 = vld [vmem:[#allocation5 + $0x1314] sm:$0xff]
    %v4174 = vld [vmem:[#allocation5 + $0x131c] sm:$0xf]
    %v4175 = vld [vmem:[#allocation5 + $0x1320] sm:$0xff]
    %v4176 = vld [vmem:[#allocation5 + $0x1328] sm:$0xf]
    %v4177 = vld [vmem:[#allocation5 + $0x132c] sm:$0xff]
    %v4178 = vld [vmem:[#allocation5 + $0x1334] sm:$0xf]
    %v4179 = vld [vmem:[#allocation5 + $0x1338] sm:$0xff]
    %v4180 = vld [vmem:[#allocation5 + $0x1340] sm:$0xf]
    %v4181 = vld [vmem:[#allocation5 + $0x1344] sm:$0xff]
    %v4182 = vld [vmem:[#allocation5 + $0x134c] sm:$0xf]
    %v4183 = vld [vmem:[#allocation5 + $0x1350] sm:$0xff]
    %v4184 = vld [vmem:[#allocation5 + $0x1358] sm:$0xf]
    %v4185 = vld [vmem:[#allocation5 + $0x135c] sm:$0xff]
    %v4186 = vld [vmem:[#allocation5 + $0x1364] sm:$0xf]
    %v4187 = vld [vmem:[#allocation5 + $0x1368] sm:$0xff]
    %v4188 = vld [vmem:[#allocation5 + $0x1370] sm:$0xf]
    %v4189 = vld [vmem:[#allocation5 + $0x1374] sm:$0xff]
    %v4190 = vld [vmem:[#allocation5 + $0x137c] sm:$0xf]
    %v4191 = vld [vmem:[#allocation5 + $0x1380] sm:$0xff]
    %v4192 = vld [vmem:[#allocation5 + $0x1388] sm:$0xf]
    %v4193 = vld [vmem:[#allocation5 + $0x138c] sm:$0xff]
    %v4194 = vld [vmem:[#allocation5 + $0x1394] sm:$0xf]
    %v4195 = vld [vmem:[#allocation5 + $0x1398] sm:$0xff]
    %v4196 = vld [vmem:[#allocation5 + $0x13a0] sm:$0xf]
    %v4197 = vld [vmem:[#allocation5 + $0x13a4] sm:$0xff]
    %v4198 = vld [vmem:[#allocation5 + $0x13ac] sm:$0xf]
    %v4199 = vld [vmem:[#allocation5 + $0x13b0] sm:$0xff]
    %v4200 = vld [vmem:[#allocation5 + $0x13b8] sm:$0xf]
    %v4201 = vld [vmem:[#allocation5 + $0x13bc] sm:$0xff]
    %v4202 = vld [vmem:[#allocation5 + $0x13c4] sm:$0xf]
    %v4203 = vld [vmem:[#allocation5 + $0x13c8] sm:$0xff]
    %v4204 = vld [vmem:[#allocation5 + $0x13d0] sm:$0xf]
    %v4205 = vld [vmem:[#allocation5 + $0x13d4] sm:$0xff]
    %v4206 = vld [vmem:[#allocation5 + $0x13dc] sm:$0xf]
    %v4207 = vld [vmem:[#allocation5 + $0x13e0] sm:$0xff]
    %v4208 = vld [vmem:[#allocation5 + $0x13e8] sm:$0xf]
    %v4209 = vld [vmem:[#allocation5 + $0x13ec] sm:$0xff]
    %v4210 = vld [vmem:[#allocation5 + $0x13f4] sm:$0xf]
    %v4211 = vld [vmem:[#allocation5 + $0x13f8] sm:$0xff]
    %v4212 = vld [vmem:[#allocation5 + $0x1400] sm:$0xf]
    %v4213 = vld [vmem:[#allocation5 + $0x1404] sm:$0xff]
    %v4214 = vld [vmem:[#allocation5 + $0x140c] sm:$0xf]
    %v4215 = vld [vmem:[#allocation5 + $0x1410] sm:$0xff]
    %v4216 = vld [vmem:[#allocation5 + $0x1418] sm:$0xf]
    %v4217 = vld [vmem:[#allocation5 + $0x141c] sm:$0xff]
    %v4218 = vld [vmem:[#allocation5 + $0x1424] sm:$0xf]
    %v4219 = vld [vmem:[#allocation5 + $0x1428] sm:$0xff]
    %v4220 = vld [vmem:[#allocation5 + $0x1430] sm:$0xf]
    %v4221 = vld [vmem:[#allocation5 + $0x1434] sm:$0xff]
    %v4222 = vld [vmem:[#allocation5 + $0x143c] sm:$0xf]
    %v4223 = vld [vmem:[#allocation5 + $0x1440] sm:$0xff]
    %v4224 = vld [vmem:[#allocation5 + $0x1448] sm:$0xf]
    %v4225 = vld [vmem:[#allocation5 + $0x144c] sm:$0xff]
    %v4226 = vld [vmem:[#allocation5 + $0x1454] sm:$0xf]
    %v4227 = vld [vmem:[#allocation5 + $0x1458] sm:$0xff]
    %v4228 = vld [vmem:[#allocation5 + $0x1460] sm:$0xf]
    %v4229 = vld [vmem:[#allocation5 + $0x1464] sm:$0xff]
    %v4230 = vld [vmem:[#allocation5 + $0x146c] sm:$0xf]
    %v4231 = vld [vmem:[#allocation5 + $0x1470] sm:$0xff]
    %v4232 = vld [vmem:[#allocation5 + $0x1478] sm:$0xf]
    %v4233 = vld [vmem:[#allocation5 + $0x147c] sm:$0xff]
    %v4234 = vld [vmem:[#allocation5 + $0x1484] sm:$0xf]
    %v4235 = vld [vmem:[#allocation5 + $0x1488] sm:$0xff]
    %v4236 = vld [vmem:[#allocation5 + $0x1490] sm:$0xf]
    %v4237 = vld [vmem:[#allocation5 + $0x1494] sm:$0xff]
    %v4238 = vld [vmem:[#allocation5 + $0x149c] sm:$0xf]
    %v4239 = vld [vmem:[#allocation5 + $0x14a0] sm:$0xff]
    %v4240 = vld [vmem:[#allocation5 + $0x14a8] sm:$0xf]
    %v4241 = vld [vmem:[#allocation5 + $0x14ac] sm:$0xff]
    %v4242 = vld [vmem:[#allocation5 + $0x14b4] sm:$0xf]
    %v4243 = vld [vmem:[#allocation5 + $0x14b8] sm:$0xff]
    %v4244 = vld [vmem:[#allocation5 + $0x14c0] sm:$0xf]
    %v4245 = vld [vmem:[#allocation5 + $0x14c4] sm:$0xff]
    %v4246 = vld [vmem:[#allocation5 + $0x14cc] sm:$0xf]
    %v4247 = vld [vmem:[#allocation5 + $0x14d0] sm:$0xff]
    %v4248 = vld [vmem:[#allocation5 + $0x14d8] sm:$0xf]
    %v4249 = vld [vmem:[#allocation5 + $0x14dc] sm:$0xff]
    %v4250 = vld [vmem:[#allocation5 + $0x14e4] sm:$0xf]
    %v4251 = vld [vmem:[#allocation5 + $0x14e8] sm:$0xff]
    %v4252 = vld [vmem:[#allocation5 + $0x14f0] sm:$0xf]
    %v4253 = vld [vmem:[#allocation5 + $0x14f4] sm:$0xff]
    %v4254 = vld [vmem:[#allocation5 + $0x14fc] sm:$0xf]
    %v4255 = vld [vmem:[#allocation5 + $0x1500] sm:$0xff]
    %v4256 = vld [vmem:[#allocation5 + $0x1508] sm:$0xf]
    %v4257 = vld [vmem:[#allocation5 + $0x150c] sm:$0xff]
    %v4258 = vld [vmem:[#allocation5 + $0x1514] sm:$0xf]
    %v4259 = vld [vmem:[#allocation5 + $0x1518] sm:$0xff]
    %v4260 = vld [vmem:[#allocation5 + $0x1520] sm:$0xf]
    %v4261 = vld [vmem:[#allocation5 + $0x1524] sm:$0xff]
    %v4262 = vld [vmem:[#allocation5 + $0x152c] sm:$0xf]
    %v4263 = vld [vmem:[#allocation5 + $0x1530] sm:$0xff]
    %v4264 = vld [vmem:[#allocation5 + $0x1538] sm:$0xf]
    %v4265 = vld [vmem:[#allocation5 + $0x153c] sm:$0xff]
    %v4266 = vld [vmem:[#allocation5 + $0x1544] sm:$0xf]
    %v4267 = vld [vmem:[#allocation5 + $0x1548] sm:$0xff]
    %v4268 = vld [vmem:[#allocation5 + $0x1550] sm:$0xf]
    %v4269 = vld [vmem:[#allocation5 + $0x1554] sm:$0xff]
    %v4270 = vld [vmem:[#allocation5 + $0x155c] sm:$0xf]
    %v4271 = vld [vmem:[#allocation5 + $0x1560] sm:$0xff]
    %v4272 = vld [vmem:[#allocation5 + $0x1568] sm:$0xf]
    %v4273 = vld [vmem:[#allocation5 + $0x156c] sm:$0xff]
    %v4274 = vld [vmem:[#allocation5 + $0x1574] sm:$0xf]
    %v4275 = vld [vmem:[#allocation5 + $0x1578] sm:$0xff]
    %v4276 = vld [vmem:[#allocation5 + $0x1580] sm:$0xf]
    %v4277 = vld [vmem:[#allocation5 + $0x1584] sm:$0xff]
    %v4278 = vld [vmem:[#allocation5 + $0x158c] sm:$0xf]
    %v4279 = vld [vmem:[#allocation5 + $0x1590] sm:$0xff]
    %v4280 = vld [vmem:[#allocation5 + $0x1598] sm:$0xf]
    %v4281 = vld [vmem:[#allocation5 + $0x159c] sm:$0xff]
    %v4282 = vld [vmem:[#allocation5 + $0x15a4] sm:$0xf]
    %v4283 = vld [vmem:[#allocation5 + $0x15a8] sm:$0xff]
    %v4284 = vld [vmem:[#allocation5 + $0x15b0] sm:$0xf]
    %v4285 = vld [vmem:[#allocation5 + $0x15b4] sm:$0xff]
    %v4286 = vld [vmem:[#allocation5 + $0x15bc] sm:$0xf]
    %v4287 = vld [vmem:[#allocation5 + $0x15c0] sm:$0xff]
    %v4288 = vld [vmem:[#allocation5 + $0x15c8] sm:$0xf]
    %v4289 = vld [vmem:[#allocation5 + $0x15cc] sm:$0xff]
    %v4290 = vld [vmem:[#allocation5 + $0x15d4] sm:$0xf]
    %v4291 = vld [vmem:[#allocation5 + $0x15d8] sm:$0xff]
    %v4292 = vld [vmem:[#allocation5 + $0x15e0] sm:$0xf]
    %v4293 = vld [vmem:[#allocation5 + $0x15e4] sm:$0xff]
    %v4294 = vld [vmem:[#allocation5 + $0x15ec] sm:$0xf]
    %v4295 = vld [vmem:[#allocation5 + $0x15f0] sm:$0xff]
    %v4296 = vld [vmem:[#allocation5 + $0x15f8] sm:$0xf]
    %v4297 = vld [vmem:[#allocation5 + $0x15fc] sm:$0xff]
    %v4298 = vld [vmem:[#allocation5 + $0x1604] sm:$0xf]
    %v4299 = vld [vmem:[#allocation5 + $0x1608] sm:$0xff]
    %v4300 = vld [vmem:[#allocation5 + $0x1610] sm:$0xf]
    %v4301 = vld [vmem:[#allocation5 + $0x1614] sm:$0xff]
    %v4302 = vld [vmem:[#allocation5 + $0x161c] sm:$0xf]
    %v4303 = vld [vmem:[#allocation5 + $0x1620] sm:$0xff]
    %v4304 = vld [vmem:[#allocation5 + $0x1628] sm:$0xf]
    %v4305 = vld [vmem:[#allocation5 + $0x162c] sm:$0xff]
    %v4306 = vld [vmem:[#allocation5 + $0x1634] sm:$0xf]
    %v4307 = vld [vmem:[#allocation5 + $0x1638] sm:$0xff]
    %v4308 = vld [vmem:[#allocation5 + $0x1640] sm:$0xf]
    %v4309 = vld [vmem:[#allocation5 + $0x1644] sm:$0xff]
    %v4310 = vld [vmem:[#allocation5 + $0x164c] sm:$0xf]
    %v4311 = vld [vmem:[#allocation5 + $0x1650] sm:$0xff]
    %v4312 = vld [vmem:[#allocation5 + $0x1658] sm:$0xf]
    %v4313 = vld [vmem:[#allocation5 + $0x165c] sm:$0xff]
    %v4314 = vld [vmem:[#allocation5 + $0x1664] sm:$0xf]
    %v4315 = vld [vmem:[#allocation5 + $0x1668] sm:$0xff]
    %v4316 = vld [vmem:[#allocation5 + $0x1670] sm:$0xf]
    %v4317 = vld [vmem:[#allocation5 + $0x1674] sm:$0xff]
    %v4318 = vld [vmem:[#allocation5 + $0x167c] sm:$0xf]
    %v4319 = vld [vmem:[#allocation5 + $0x1680] sm:$0xff]
    %v4320 = vld [vmem:[#allocation5 + $0x1688] sm:$0xf]
    %v4321 = vld [vmem:[#allocation5 + $0x168c] sm:$0xff]
    %v4322 = vld [vmem:[#allocation5 + $0x1694] sm:$0xf]
    %v4323 = vld [vmem:[#allocation5 + $0x1698] sm:$0xff]
    %v4324 = vld [vmem:[#allocation5 + $0x16a0] sm:$0xf]
    %v4325 = vld [vmem:[#allocation5 + $0x16a4] sm:$0xff]
    %v4326 = vld [vmem:[#allocation5 + $0x16ac] sm:$0xf]
    %v4327 = vld [vmem:[#allocation5 + $0x16b0] sm:$0xff]
    %v4328 = vld [vmem:[#allocation5 + $0x16b8] sm:$0xf]
    %v4329 = vld [vmem:[#allocation5 + $0x16bc] sm:$0xff]
    %v4330 = vld [vmem:[#allocation5 + $0x16c4] sm:$0xf]
    %v4331 = vld [vmem:[#allocation5 + $0x16c8] sm:$0xff]
    %v4332 = vld [vmem:[#allocation5 + $0x16d0] sm:$0xf]
    %v4333 = vld [vmem:[#allocation5 + $0x16d4] sm:$0xff]
    %v4334 = vld [vmem:[#allocation5 + $0x16dc] sm:$0xf]
    %v4335 = vld [vmem:[#allocation5 + $0x16e0] sm:$0xff]
    %v4336 = vld [vmem:[#allocation5 + $0x16e8] sm:$0xf]
    %v4337 = vld [vmem:[#allocation5 + $0x16ec] sm:$0xff]
    %v4338 = vld [vmem:[#allocation5 + $0x16f4] sm:$0xf]
    %v4339 = vld [vmem:[#allocation5 + $0x16f8] sm:$0xff]
    %v4340 = vld [vmem:[#allocation5 + $0x1700] sm:$0xf]
    %v4341 = vld [vmem:[#allocation5 + $0x1704] sm:$0xff]
    %v4342 = vld [vmem:[#allocation5 + $0x170c] sm:$0xf]
    %v4343 = vld [vmem:[#allocation5 + $0x1710] sm:$0xff]
    %v4344 = vld [vmem:[#allocation5 + $0x1718] sm:$0xf]
    %v4345 = vld [vmem:[#allocation5 + $0x171c] sm:$0xff]
    %v4346 = vld [vmem:[#allocation5 + $0x1724] sm:$0xf]
    %v4347 = vld [vmem:[#allocation5 + $0x1728] sm:$0xff]
    %v4348 = vld [vmem:[#allocation5 + $0x1730] sm:$0xf]
    %v4349 = vld [vmem:[#allocation5 + $0x1734] sm:$0xff]
    %v4350 = vld [vmem:[#allocation5 + $0x173c] sm:$0xf]
    %v4351 = vld [vmem:[#allocation5 + $0x1740] sm:$0xff]
    %v4352 = vld [vmem:[#allocation5 + $0x1748] sm:$0xf]
    %v4353 = vld [vmem:[#allocation5 + $0x174c] sm:$0xff]
    %v4354 = vld [vmem:[#allocation5 + $0x1754] sm:$0xf]
    %v4355 = vld [vmem:[#allocation5 + $0x1758] sm:$0xff]
    %v4356 = vld [vmem:[#allocation5 + $0x1760] sm:$0xf]
    %v4357 = vld [vmem:[#allocation5 + $0x1764] sm:$0xff]
    %v4358 = vld [vmem:[#allocation5 + $0x176c] sm:$0xf]
    %v4359 = vld [vmem:[#allocation5 + $0x1770] sm:$0xff]
    %v4360 = vld [vmem:[#allocation5 + $0x1778] sm:$0xf]
    %v4361 = vld [vmem:[#allocation5 + $0x177c] sm:$0xff]
    %v4362 = vld [vmem:[#allocation5 + $0x1784] sm:$0xf]
    %v4363 = vld [vmem:[#allocation5 + $0x1788] sm:$0xff]
    %v4364 = vld [vmem:[#allocation5 + $0x1790] sm:$0xf]
    %v4365 = vld [vmem:[#allocation5 + $0x1794] sm:$0xff]
    %v4366 = vld [vmem:[#allocation5 + $0x179c] sm:$0xf]
    %v4367 = vld [vmem:[#allocation5 + $0x17a0] sm:$0xff]
    %v4368 = vld [vmem:[#allocation5 + $0x17a8] sm:$0xf]
    %v4369 = vld [vmem:[#allocation5 + $0x17ac] sm:$0xff]
    %v4370 = vld [vmem:[#allocation5 + $0x17b4] sm:$0xf]
    %v4371 = vld [vmem:[#allocation5 + $0x17b8] sm:$0xff]
    %v4372 = vld [vmem:[#allocation5 + $0x17c0] sm:$0xf]
    %v4373 = vld [vmem:[#allocation5 + $0x17c4] sm:$0xff]
    %v4374 = vld [vmem:[#allocation5 + $0x17cc] sm:$0xf]
    %v4375 = vld [vmem:[#allocation5 + $0x17d0] sm:$0xff]
    %v4376 = vld [vmem:[#allocation5 + $0x17d8] sm:$0xf]
    %v4377 = vld [vmem:[#allocation5 + $0x17dc] sm:$0xff]
    %v4378 = vld [vmem:[#allocation5 + $0x17e4] sm:$0xf]
    %v4379 = vld [vmem:[#allocation5 + $0x17e8] sm:$0xff]
    %v4380 = vld [vmem:[#allocation5 + $0x17f0] sm:$0xf]
    %v4381 = vld [vmem:[#allocation5 + $0x17f4] sm:$0xff]
    %v4382 = vld [vmem:[#allocation5 + $0x17fc] sm:$0xf]
    %v4383 = vld [vmem:[#allocation5 + $0x1800] sm:$0xff]
    %v4384 = vld [vmem:[#allocation5 + $0x1808] sm:$0xf]
    %v4385 = vld [vmem:[#allocation5 + $0x180c] sm:$0xff]
    %v4386 = vld [vmem:[#allocation5 + $0x1814] sm:$0xf]
    %v4387 = vld [vmem:[#allocation5 + $0x1818] sm:$0xff]
    %v4388 = vld [vmem:[#allocation5 + $0x1820] sm:$0xf]
    %v4389 = vld [vmem:[#allocation5 + $0x1824] sm:$0xff]
    %v4390 = vld [vmem:[#allocation5 + $0x182c] sm:$0xf]
    %v4391 = vld [vmem:[#allocation5 + $0x1830] sm:$0xff]
    %v4392 = vld [vmem:[#allocation5 + $0x1838] sm:$0xf]
    %v4393 = vld [vmem:[#allocation5 + $0x183c] sm:$0xff]
    %v4394 = vld [vmem:[#allocation5 + $0x1844] sm:$0xf]
    %v4395 = vld [vmem:[#allocation5 + $0x1848] sm:$0xff]
    %v4396 = vld [vmem:[#allocation5 + $0x1850] sm:$0xf]
    %v4397 = vld [vmem:[#allocation5 + $0x1854] sm:$0xff]
    %v4398 = vld [vmem:[#allocation5 + $0x185c] sm:$0xf]
    %v4399 = vld [vmem:[#allocation5 + $0x1860] sm:$0xff]
    %v4400 = vld [vmem:[#allocation5 + $0x1868] sm:$0xf]
    %v4401 = vld [vmem:[#allocation5 + $0x186c] sm:$0xff]
    %v4402 = vld [vmem:[#allocation5 + $0x1874] sm:$0xf]
    %v4403 = vld [vmem:[#allocation5 + $0x1878] sm:$0xff]
    %v4404 = vld [vmem:[#allocation5 + $0x1880] sm:$0xf]
    %v4405 = vld [vmem:[#allocation5 + $0x1884] sm:$0xff]
    %v4406 = vld [vmem:[#allocation5 + $0x188c] sm:$0xf]
    %v4407 = vld [vmem:[#allocation5 + $0x1890] sm:$0xff]
    %v4408 = vld [vmem:[#allocation5 + $0x1898] sm:$0xf]
    %v4409 = vld [vmem:[#allocation5 + $0x189c] sm:$0xff]
    %v4410 = vld [vmem:[#allocation5 + $0x18a4] sm:$0xf]
    %v4411 = vld [vmem:[#allocation5 + $0x18a8] sm:$0xff]
    %v4412 = vld [vmem:[#allocation5 + $0x18b0] sm:$0xf]
    %v4413 = vld [vmem:[#allocation5 + $0x18b4] sm:$0xff]
    %v4414 = vld [vmem:[#allocation5 + $0x18bc] sm:$0xf]
    %v5471 = vunpack.c.l.b16 %v3359
    %v5472 = vunpack.c.h.b16 %v3359
    %v5473 = vunpack.c.l.b16 %v3360
    %v5474 = vunpack.c.l.b16 %v3361
    %v5475 = vunpack.c.h.b16 %v3361
    %v5476 = vunpack.c.l.b16 %v3362
    %v5477 = vunpack.c.l.b16 %v3363
    %v5478 = vunpack.c.h.b16 %v3363
    %v5479 = vunpack.c.l.b16 %v3364
    %v5480 = vunpack.c.l.b16 %v3365
    %v5481 = vunpack.c.h.b16 %v3365
    %v5482 = vunpack.c.l.b16 %v3366
    %v5483 = vunpack.c.l.b16 %v3367
    %v5484 = vunpack.c.h.b16 %v3367
    %v5485 = vunpack.c.l.b16 %v3368
    %v5486 = vunpack.c.l.b16 %v3369
    %v5487 = vunpack.c.h.b16 %v3369
    %v5488 = vunpack.c.l.b16 %v3370
    %v5489 = vunpack.c.l.b16 %v3371
    %v5490 = vunpack.c.h.b16 %v3371
    %v5491 = vunpack.c.l.b16 %v3372
    %v5492 = vunpack.c.l.b16 %v3373
    %v5493 = vunpack.c.h.b16 %v3373
    %v5494 = vunpack.c.l.b16 %v3374
    %v5495 = vunpack.c.l.b16 %v3375
    %v5496 = vunpack.c.h.b16 %v3375
    %v5497 = vunpack.c.l.b16 %v3376
    %v5498 = vunpack.c.l.b16 %v3377
    %v5499 = vunpack.c.h.b16 %v3377
    %v5500 = vunpack.c.l.b16 %v3378
    %v5501 = vunpack.c.l.b16 %v3379
    %v5502 = vunpack.c.h.b16 %v3379
    %v5503 = vunpack.c.l.b16 %v3380
    %v5504 = vunpack.c.l.b16 %v3381
    %v5505 = vunpack.c.h.b16 %v3381
    %v5506 = vunpack.c.l.b16 %v3382
    %v5507 = vunpack.c.l.b16 %v3383
    %v5508 = vunpack.c.h.b16 %v3383
    %v5509 = vunpack.c.l.b16 %v3384
    %v5510 = vunpack.c.l.b16 %v3385
    %v5511 = vunpack.c.h.b16 %v3385
    %v5512 = vunpack.c.l.b16 %v3386
    %v5513 = vunpack.c.l.b16 %v3387
    %v5514 = vunpack.c.h.b16 %v3387
    %v5515 = vunpack.c.l.b16 %v3388
    %v5516 = vunpack.c.l.b16 %v3389
    %v5517 = vunpack.c.h.b16 %v3389
    %v5518 = vunpack.c.l.b16 %v3390
    %v5519 = vunpack.c.l.b16 %v3391
    %v5520 = vunpack.c.h.b16 %v3391
    %v5521 = vunpack.c.l.b16 %v3392
    %v5522 = vunpack.c.l.b16 %v3393
    %v5523 = vunpack.c.h.b16 %v3393
    %v5524 = vunpack.c.l.b16 %v3394
    %v5525 = vunpack.c.l.b16 %v3395
    %v5526 = vunpack.c.h.b16 %v3395
    %v5527 = vunpack.c.l.b16 %v3396
    %v5528 = vunpack.c.l.b16 %v3397
    %v5529 = vunpack.c.h.b16 %v3397
    %v5530 = vunpack.c.l.b16 %v3398
    %v5531 = vunpack.c.l.b16 %v3399
    %v5532 = vunpack.c.h.b16 %v3399
    %v5533 = vunpack.c.l.b16 %v3400
    %v5534 = vunpack.c.l.b16 %v3401
    %v5535 = vunpack.c.h.b16 %v3401
    %v5536 = vunpack.c.l.b16 %v3402
    %v5537 = vunpack.c.l.b16 %v3403
    %v5538 = vunpack.c.h.b16 %v3403
    %v5539 = vunpack.c.l.b16 %v3404
    %v5540 = vunpack.c.l.b16 %v3405
    %v5541 = vunpack.c.h.b16 %v3405
    %v5542 = vunpack.c.l.b16 %v3406
    %v5543 = vunpack.c.l.b16 %v3407
    %v5544 = vunpack.c.h.b16 %v3407
    %v5545 = vunpack.c.l.b16 %v3408
    %v5546 = vunpack.c.l.b16 %v3409
    %v5547 = vunpack.c.h.b16 %v3409
    %v5548 = vunpack.c.l.b16 %v3410
    %v5549 = vunpack.c.l.b16 %v3411
    %v5550 = vunpack.c.h.b16 %v3411
    %v5551 = vunpack.c.l.b16 %v3412
    %v5552 = vunpack.c.l.b16 %v3413
    %v5553 = vunpack.c.h.b16 %v3413
    %v5554 = vunpack.c.l.b16 %v3414
    %v5555 = vunpack.c.l.b16 %v3415
    %v5556 = vunpack.c.h.b16 %v3415
    %v5557 = vunpack.c.l.b16 %v3416
    %v5558 = vunpack.c.l.b16 %v3417
    %v5559 = vunpack.c.h.b16 %v3417
    %v5560 = vunpack.c.l.b16 %v3418
    %v5561 = vunpack.c.l.b16 %v3419
    %v5562 = vunpack.c.h.b16 %v3419
    %v5563 = vunpack.c.l.b16 %v3420
    %v5564 = vunpack.c.l.b16 %v3421
    %v5565 = vunpack.c.h.b16 %v3421
    %v5566 = vunpack.c.l.b16 %v3422
    %v5567 = vunpack.c.l.b16 %v3423
    %v5568 = vunpack.c.h.b16 %v3423
    %v5569 = vunpack.c.l.b16 %v3424
    %v5570 = vunpack.c.l.b16 %v3425
    %v5571 = vunpack.c.h.b16 %v3425
    %v5572 = vunpack.c.l.b16 %v3426
    %v5573 = vunpack.c.l.b16 %v3427
    %v5574 = vunpack.c.h.b16 %v3427
    %v5575 = vunpack.c.l.b16 %v3428
    %v5576 = vunpack.c.l.b16 %v3429
    %v5577 = vunpack.c.h.b16 %v3429
    %v5578 = vunpack.c.l.b16 %v3430
    %v5579 = vunpack.c.l.b16 %v3431
    %v5580 = vunpack.c.h.b16 %v3431
    %v5581 = vunpack.c.l.b16 %v3432
    %v5582 = vunpack.c.l.b16 %v3433
    %v5583 = vunpack.c.h.b16 %v3433
    %v5584 = vunpack.c.l.b16 %v3434
    %v5585 = vunpack.c.l.b16 %v3435
    %v5586 = vunpack.c.h.b16 %v3435
    %v5587 = vunpack.c.l.b16 %v3436
    %v5588 = vunpack.c.l.b16 %v3437
    %v5589 = vunpack.c.h.b16 %v3437
    %v5590 = vunpack.c.l.b16 %v3438
    %v5591 = vunpack.c.l.b16 %v3439
    %v5592 = vunpack.c.h.b16 %v3439
    %v5593 = vunpack.c.l.b16 %v3440
    %v5594 = vunpack.c.l.b16 %v3441
    %v5595 = vunpack.c.h.b16 %v3441
    %v5596 = vunpack.c.l.b16 %v3442
    %v5597 = vunpack.c.l.b16 %v3443
    %v5598 = vunpack.c.h.b16 %v3443
    %v5599 = vunpack.c.l.b16 %v3444
    %v5600 = vunpack.c.l.b16 %v3445
    %v5601 = vunpack.c.h.b16 %v3445
    %v5602 = vunpack.c.l.b16 %v3446
    %v5603 = vunpack.c.l.b16 %v3447
    %v5604 = vunpack.c.h.b16 %v3447
    %v5605 = vunpack.c.l.b16 %v3448
    %v5606 = vunpack.c.l.b16 %v3449
    %v5607 = vunpack.c.h.b16 %v3449
    %v5608 = vunpack.c.l.b16 %v3450
    %v5609 = vunpack.c.l.b16 %v3451
    %v5610 = vunpack.c.h.b16 %v3451
    %v5611 = vunpack.c.l.b16 %v3452
    %v5612 = vunpack.c.l.b16 %v3453
    %v5613 = vunpack.c.h.b16 %v3453
    %v5614 = vunpack.c.l.b16 %v3454
    %v5615 = vunpack.c.l.b16 %v3455
    %v5616 = vunpack.c.h.b16 %v3455
    %v5617 = vunpack.c.l.b16 %v3456
    %v5618 = vunpack.c.l.b16 %v3457
    %v5619 = vunpack.c.h.b16 %v3457
    %v5620 = vunpack.c.l.b16 %v3458
    %v5621 = vunpack.c.l.b16 %v3459
    %v5622 = vunpack.c.h.b16 %v3459
    %v5623 = vunpack.c.l.b16 %v3460
    %v5624 = vunpack.c.l.b16 %v3461
    %v5625 = vunpack.c.h.b16 %v3461
    %v5626 = vunpack.c.l.b16 %v3462
    %v5627 = vunpack.c.l.b16 %v3463
    %v5628 = vunpack.c.h.b16 %v3463
    %v5629 = vunpack.c.l.b16 %v3464
    %v5630 = vunpack.c.l.b16 %v3465
    %v5631 = vunpack.c.h.b16 %v3465
    %v5632 = vunpack.c.l.b16 %v3466
    %v5633 = vunpack.c.l.b16 %v3467
    %v5634 = vunpack.c.h.b16 %v3467
    %v5635 = vunpack.c.l.b16 %v3468
    %v5636 = vunpack.c.l.b16 %v3469
    %v5637 = vunpack.c.h.b16 %v3469
    %v5638 = vunpack.c.l.b16 %v3470
    %v5639 = vunpack.c.l.b16 %v3471
    %v5640 = vunpack.c.h.b16 %v3471
    %v5641 = vunpack.c.l.b16 %v3472
    %v5642 = vunpack.c.l.b16 %v3473
    %v5643 = vunpack.c.h.b16 %v3473
    %v5644 = vunpack.c.l.b16 %v3474
    %v5645 = vunpack.c.l.b16 %v3475
    %v5646 = vunpack.c.h.b16 %v3475
    %v5647 = vunpack.c.l.b16 %v3476
    %v5648 = vunpack.c.l.b16 %v3477
    %v5649 = vunpack.c.h.b16 %v3477
    %v5650 = vunpack.c.l.b16 %v3478
    %v5651 = vunpack.c.l.b16 %v3479
    %v5652 = vunpack.c.h.b16 %v3479
    %v5653 = vunpack.c.l.b16 %v3480
    %v5654 = vunpack.c.l.b16 %v3481
    %v5655 = vunpack.c.h.b16 %v3481
    %v5656 = vunpack.c.l.b16 %v3482
    %v5657 = vunpack.c.l.b16 %v3483
    %v5658 = vunpack.c.h.b16 %v3483
    %v5659 = vunpack.c.l.b16 %v3484
    %v5660 = vunpack.c.l.b16 %v3485
    %v5661 = vunpack.c.h.b16 %v3485
    %v5662 = vunpack.c.l.b16 %v3486
    %v5663 = vunpack.c.l.b16 %v3487
    %v5664 = vunpack.c.h.b16 %v3487
    %v5665 = vunpack.c.l.b16 %v3488
    %v5666 = vunpack.c.l.b16 %v3489
    %v5667 = vunpack.c.h.b16 %v3489
    %v5668 = vunpack.c.l.b16 %v3490
    %v5669 = vunpack.c.l.b16 %v3491
    %v5670 = vunpack.c.h.b16 %v3491
    %v5671 = vunpack.c.l.b16 %v3492
    %v5672 = vunpack.c.l.b16 %v3493
    %v5673 = vunpack.c.h.b16 %v3493
    %v5674 = vunpack.c.l.b16 %v3494
    %v5675 = vunpack.c.l.b16 %v3495
    %v5676 = vunpack.c.h.b16 %v3495
    %v5677 = vunpack.c.l.b16 %v3496
    %v5678 = vunpack.c.l.b16 %v3497
    %v5679 = vunpack.c.h.b16 %v3497
    %v5680 = vunpack.c.l.b16 %v3498
    %v5681 = vunpack.c.l.b16 %v3499
    %v5682 = vunpack.c.h.b16 %v3499
    %v5683 = vunpack.c.l.b16 %v3500
    %v5684 = vunpack.c.l.b16 %v3501
    %v5685 = vunpack.c.h.b16 %v3501
    %v5686 = vunpack.c.l.b16 %v3502
    %v5687 = vunpack.c.l.b16 %v3503
    %v5688 = vunpack.c.h.b16 %v3503
    %v5689 = vunpack.c.l.b16 %v3504
    %v5690 = vunpack.c.l.b16 %v3505
    %v5691 = vunpack.c.h.b16 %v3505
    %v5692 = vunpack.c.l.b16 %v3506
    %v5693 = vunpack.c.l.b16 %v3507
    %v5694 = vunpack.c.h.b16 %v3507
    %v5695 = vunpack.c.l.b16 %v3508
    %v5696 = vunpack.c.l.b16 %v3509
    %v5697 = vunpack.c.h.b16 %v3509
    %v5698 = vunpack.c.l.b16 %v3510
    %v5699 = vunpack.c.l.b16 %v3511
    %v5700 = vunpack.c.h.b16 %v3511
    %v5701 = vunpack.c.l.b16 %v3512
    %v5702 = vunpack.c.l.b16 %v3513
    %v5703 = vunpack.c.h.b16 %v3513
    %v5704 = vunpack.c.l.b16 %v3514
    %v5705 = vunpack.c.l.b16 %v3515
    %v5706 = vunpack.c.h.b16 %v3515
    %v5707 = vunpack.c.l.b16 %v3516
    %v5708 = vunpack.c.l.b16 %v3517
    %v5709 = vunpack.c.h.b16 %v3517
    %v5710 = vunpack.c.l.b16 %v3518
    %v5711 = vunpack.c.l.b16 %v3519
    %v5712 = vunpack.c.h.b16 %v3519
    %v5713 = vunpack.c.l.b16 %v3520
    %v5714 = vunpack.c.l.b16 %v3521
    %v5715 = vunpack.c.h.b16 %v3521
    %v5716 = vunpack.c.l.b16 %v3522
    %v5717 = vunpack.c.l.b16 %v3523
    %v5718 = vunpack.c.h.b16 %v3523
    %v5719 = vunpack.c.l.b16 %v3524
    %v5720 = vunpack.c.l.b16 %v3525
    %v5721 = vunpack.c.h.b16 %v3525
    %v5722 = vunpack.c.l.b16 %v3526
    %v5723 = vunpack.c.l.b16 %v3527
    %v5724 = vunpack.c.h.b16 %v3527
    %v5725 = vunpack.c.l.b16 %v3528
    %v5726 = vunpack.c.l.b16 %v3529
    %v5727 = vunpack.c.h.b16 %v3529
    %v5728 = vunpack.c.l.b16 %v3530
    %v5729 = vunpack.c.l.b16 %v3531
    %v5730 = vunpack.c.h.b16 %v3531
    %v5731 = vunpack.c.l.b16 %v3532
    %v5732 = vunpack.c.l.b16 %v3533
    %v5733 = vunpack.c.h.b16 %v3533
    %v5734 = vunpack.c.l.b16 %v3534
    %v5735 = vunpack.c.l.b16 %v3535
    %v5736 = vunpack.c.h.b16 %v3535
    %v5737 = vunpack.c.l.b16 %v3536
    %v5738 = vunpack.c.l.b16 %v3537
    %v5739 = vunpack.c.h.b16 %v3537
    %v5740 = vunpack.c.l.b16 %v3538
    %v5741 = vunpack.c.l.b16 %v3539
    %v5742 = vunpack.c.h.b16 %v3539
    %v5743 = vunpack.c.l.b16 %v3540
    %v5744 = vunpack.c.l.b16 %v3541
    %v5745 = vunpack.c.h.b16 %v3541
    %v5746 = vunpack.c.l.b16 %v3542
    %v5747 = vunpack.c.l.b16 %v3543
    %v5748 = vunpack.c.h.b16 %v3543
    %v5749 = vunpack.c.l.b16 %v3544
    %v5750 = vunpack.c.l.b16 %v3545
    %v5751 = vunpack.c.h.b16 %v3545
    %v5752 = vunpack.c.l.b16 %v3546
    %v5753 = vunpack.c.l.b16 %v3547
    %v5754 = vunpack.c.h.b16 %v3547
    %v5755 = vunpack.c.l.b16 %v3548
    %v5756 = vunpack.c.l.b16 %v3549
    %v5757 = vunpack.c.h.b16 %v3549
    %v5758 = vunpack.c.l.b16 %v3550
    %v5759 = vunpack.c.l.b16 %v3551
    %v5760 = vunpack.c.h.b16 %v3551
    %v5761 = vunpack.c.l.b16 %v3552
    %v5762 = vunpack.c.l.b16 %v3553
    %v5763 = vunpack.c.h.b16 %v3553
    %v5764 = vunpack.c.l.b16 %v3554
    %v5765 = vunpack.c.l.b16 %v3555
    %v5766 = vunpack.c.h.b16 %v3555
    %v5767 = vunpack.c.l.b16 %v3556
    %v5768 = vunpack.c.l.b16 %v3557
    %v5769 = vunpack.c.h.b16 %v3557
    %v5770 = vunpack.c.l.b16 %v3558
    %v5771 = vunpack.c.l.b16 %v3559
    %v5772 = vunpack.c.h.b16 %v3559
    %v5773 = vunpack.c.l.b16 %v3560
    %v5774 = vunpack.c.l.b16 %v3561
    %v5775 = vunpack.c.h.b16 %v3561
    %v5776 = vunpack.c.l.b16 %v3562
    %v5777 = vunpack.c.l.b16 %v3563
    %v5778 = vunpack.c.h.b16 %v3563
    %v5779 = vunpack.c.l.b16 %v3564
    %v5780 = vunpack.c.l.b16 %v3565
    %v5781 = vunpack.c.h.b16 %v3565
    %v5782 = vunpack.c.l.b16 %v3566
    %v5783 = vunpack.c.l.b16 %v3567
    %v5784 = vunpack.c.h.b16 %v3567
    %v5785 = vunpack.c.l.b16 %v3568
    %v5786 = vunpack.c.l.b16 %v3569
    %v5787 = vunpack.c.h.b16 %v3569
    %v5788 = vunpack.c.l.b16 %v3570
    %v5789 = vunpack.c.l.b16 %v3571
    %v5790 = vunpack.c.h.b16 %v3571
    %v5791 = vunpack.c.l.b16 %v3572
    %v5792 = vunpack.c.l.b16 %v3573
    %v5793 = vunpack.c.h.b16 %v3573
    %v5794 = vunpack.c.l.b16 %v3574
    %v5795 = vunpack.c.l.b16 %v3575
    %v5796 = vunpack.c.h.b16 %v3575
    %v5797 = vunpack.c.l.b16 %v3576
    %v5798 = vunpack.c.l.b16 %v3577
    %v5799 = vunpack.c.h.b16 %v3577
    %v5800 = vunpack.c.l.b16 %v3578
    %v5801 = vunpack.c.l.b16 %v3579
    %v5802 = vunpack.c.h.b16 %v3579
    %v5803 = vunpack.c.l.b16 %v3580
    %v5804 = vunpack.c.l.b16 %v3581
    %v5805 = vunpack.c.h.b16 %v3581
    %v5806 = vunpack.c.l.b16 %v3582
    %v5807 = vunpack.c.l.b16 %v3583
    %v5808 = vunpack.c.h.b16 %v3583
    %v5809 = vunpack.c.l.b16 %v3584
    %v5810 = vunpack.c.l.b16 %v3585
    %v5811 = vunpack.c.h.b16 %v3585
    %v5812 = vunpack.c.l.b16 %v3586
    %v5813 = vunpack.c.l.b16 %v3587
    %v5814 = vunpack.c.h.b16 %v3587
    %v5815 = vunpack.c.l.b16 %v3588
    %v5816 = vunpack.c.l.b16 %v3589
    %v5817 = vunpack.c.h.b16 %v3589
    %v5818 = vunpack.c.l.b16 %v3590
    %v5819 = vunpack.c.l.b16 %v3591
    %v5820 = vunpack.c.h.b16 %v3591
    %v5821 = vunpack.c.l.b16 %v3592
    %v5822 = vunpack.c.l.b16 %v3593
    %v5823 = vunpack.c.h.b16 %v3593
    %v5824 = vunpack.c.l.b16 %v3594
    %v5825 = vunpack.c.l.b16 %v3595
    %v5826 = vunpack.c.h.b16 %v3595
    %v5827 = vunpack.c.l.b16 %v3596
    %v5828 = vunpack.c.l.b16 %v3597
    %v5829 = vunpack.c.h.b16 %v3597
    %v5830 = vunpack.c.l.b16 %v3598
    %v5831 = vunpack.c.l.b16 %v3599
    %v5832 = vunpack.c.h.b16 %v3599
    %v5833 = vunpack.c.l.b16 %v3600
    %v5834 = vunpack.c.l.b16 %v3601
    %v5835 = vunpack.c.h.b16 %v3601
    %v5836 = vunpack.c.l.b16 %v3602
    %v5837 = vunpack.c.l.b16 %v3603
    %v5838 = vunpack.c.h.b16 %v3603
    %v5839 = vunpack.c.l.b16 %v3604
    %v5840 = vunpack.c.l.b16 %v3605
    %v5841 = vunpack.c.h.b16 %v3605
    %v5842 = vunpack.c.l.b16 %v3606
    %v5843 = vunpack.c.l.b16 %v3607
    %v5844 = vunpack.c.h.b16 %v3607
    %v5845 = vunpack.c.l.b16 %v3608
    %v5846 = vunpack.c.l.b16 %v3609
    %v5847 = vunpack.c.h.b16 %v3609
    %v5848 = vunpack.c.l.b16 %v3610
    %v5849 = vunpack.c.l.b16 %v3611
    %v5850 = vunpack.c.h.b16 %v3611
    %v5851 = vunpack.c.l.b16 %v3612
    %v5852 = vunpack.c.l.b16 %v3613
    %v5853 = vunpack.c.h.b16 %v3613
    %v5854 = vunpack.c.l.b16 %v3614
    %v5855 = vunpack.c.l.b16 %v3615
    %v5856 = vunpack.c.h.b16 %v3615
    %v5857 = vunpack.c.l.b16 %v3616
    %v5858 = vunpack.c.l.b16 %v3617
    %v5859 = vunpack.c.h.b16 %v3617
    %v5860 = vunpack.c.l.b16 %v3618
    %v5861 = vunpack.c.l.b16 %v3619
    %v5862 = vunpack.c.h.b16 %v3619
    %v5863 = vunpack.c.l.b16 %v3620
    %v5864 = vunpack.c.l.b16 %v3621
    %v5865 = vunpack.c.h.b16 %v3621
    %v5866 = vunpack.c.l.b16 %v3622
    %v5867 = vunpack.c.l.b16 %v3623
    %v5868 = vunpack.c.h.b16 %v3623
    %v5869 = vunpack.c.l.b16 %v3624
    %v5870 = vunpack.c.l.b16 %v3625
    %v5871 = vunpack.c.h.b16 %v3625
    %v5872 = vunpack.c.l.b16 %v3626
    %v5873 = vunpack.c.l.b16 %v3627
    %v5874 = vunpack.c.h.b16 %v3627
    %v5875 = vunpack.c.l.b16 %v3628
    %v5876 = vunpack.c.l.b16 %v3629
    %v5877 = vunpack.c.h.b16 %v3629
    %v5878 = vunpack.c.l.b16 %v3630
    %v5879 = vunpack.c.l.b16 %v3631
    %v5880 = vunpack.c.h.b16 %v3631
    %v5881 = vunpack.c.l.b16 %v3632
    %v5882 = vunpack.c.l.b16 %v3633
    %v5883 = vunpack.c.h.b16 %v3633
    %v5884 = vunpack.c.l.b16 %v3634
    %v5885 = vunpack.c.l.b16 %v3635
    %v5886 = vunpack.c.h.b16 %v3635
    %v5887 = vunpack.c.l.b16 %v3636
    %v5888 = vunpack.c.l.b16 %v3637
    %v5889 = vunpack.c.h.b16 %v3637
    %v5890 = vunpack.c.l.b16 %v3638
    %v5891 = vunpack.c.l.b16 %v3639
    %v5892 = vunpack.c.h.b16 %v3639
    %v5893 = vunpack.c.l.b16 %v3640
    %v5894 = vunpack.c.l.b16 %v3641
    %v5895 = vunpack.c.h.b16 %v3641
    %v5896 = vunpack.c.l.b16 %v3642
    %v5897 = vunpack.c.l.b16 %v3643
    %v5898 = vunpack.c.h.b16 %v3643
    %v5899 = vunpack.c.l.b16 %v3644
    %v5900 = vunpack.c.l.b16 %v3645
    %v5901 = vunpack.c.h.b16 %v3645
    %v5902 = vunpack.c.l.b16 %v3646
    %v5903 = vunpack.c.l.b16 %v3647
    %v5904 = vunpack.c.h.b16 %v3647
    %v5905 = vunpack.c.l.b16 %v3648
    %v5906 = vunpack.c.l.b16 %v3649
    %v5907 = vunpack.c.h.b16 %v3649
    %v5908 = vunpack.c.l.b16 %v3650
    %v5909 = vunpack.c.l.b16 %v3651
    %v5910 = vunpack.c.h.b16 %v3651
    %v5911 = vunpack.c.l.b16 %v3652
    %v5912 = vunpack.c.l.b16 %v3653
    %v5913 = vunpack.c.h.b16 %v3653
    %v5914 = vunpack.c.l.b16 %v3654
    %v5915 = vunpack.c.l.b16 %v3655
    %v5916 = vunpack.c.h.b16 %v3655
    %v5917 = vunpack.c.l.b16 %v3656
    %v5918 = vunpack.c.l.b16 %v3657
    %v5919 = vunpack.c.h.b16 %v3657
    %v5920 = vunpack.c.l.b16 %v3658
    %v5921 = vunpack.c.l.b16 %v3659
    %v5922 = vunpack.c.h.b16 %v3659
    %v5923 = vunpack.c.l.b16 %v3660
    %v5924 = vunpack.c.l.b16 %v3661
    %v5925 = vunpack.c.h.b16 %v3661
    %v5926 = vunpack.c.l.b16 %v3662
    %v5927 = vunpack.c.l.b16 %v3663
    %v5928 = vunpack.c.h.b16 %v3663
    %v5929 = vunpack.c.l.b16 %v3664
    %v5930 = vunpack.c.l.b16 %v3665
    %v5931 = vunpack.c.h.b16 %v3665
    %v5932 = vunpack.c.l.b16 %v3666
    %v5933 = vunpack.c.l.b16 %v3667
    %v5934 = vunpack.c.h.b16 %v3667
    %v5935 = vunpack.c.l.b16 %v3668
    %v5936 = vunpack.c.l.b16 %v3669
    %v5937 = vunpack.c.h.b16 %v3669
    %v5938 = vunpack.c.l.b16 %v3670
    %v5939 = vunpack.c.l.b16 %v3671
    %v5940 = vunpack.c.h.b16 %v3671
    %v5941 = vunpack.c.l.b16 %v3672
    %v5942 = vunpack.c.l.b16 %v3673
    %v5943 = vunpack.c.h.b16 %v3673
    %v5944 = vunpack.c.l.b16 %v3674
    %v5945 = vunpack.c.l.b16 %v3675
    %v5946 = vunpack.c.h.b16 %v3675
    %v5947 = vunpack.c.l.b16 %v3676
    %v5948 = vunpack.c.l.b16 %v3677
    %v5949 = vunpack.c.h.b16 %v3677
    %v5950 = vunpack.c.l.b16 %v3678
    %v5951 = vunpack.c.l.b16 %v3679
    %v5952 = vunpack.c.h.b16 %v3679
    %v5953 = vunpack.c.l.b16 %v3680
    %v5954 = vunpack.c.l.b16 %v3681
    %v5955 = vunpack.c.h.b16 %v3681
    %v5956 = vunpack.c.l.b16 %v3682
    %v5957 = vunpack.c.l.b16 %v3683
    %v5958 = vunpack.c.h.b16 %v3683
    %v5959 = vunpack.c.l.b16 %v3684
    %v5960 = vunpack.c.l.b16 %v3685
    %v5961 = vunpack.c.h.b16 %v3685
    %v5962 = vunpack.c.l.b16 %v3686
    %v5963 = vunpack.c.l.b16 %v3687
    %v5964 = vunpack.c.h.b16 %v3687
    %v5965 = vunpack.c.l.b16 %v3688
    %v5966 = vunpack.c.l.b16 %v3689
    %v5967 = vunpack.c.h.b16 %v3689
    %v5968 = vunpack.c.l.b16 %v3690
    %v5969 = vunpack.c.l.b16 %v3691
    %v5970 = vunpack.c.h.b16 %v3691
    %v5971 = vunpack.c.l.b16 %v3692
    %v5972 = vunpack.c.l.b16 %v3693
    %v5973 = vunpack.c.h.b16 %v3693
    %v5974 = vunpack.c.l.b16 %v3694
    %v5975 = vunpack.c.l.b16 %v3695
    %v5976 = vunpack.c.h.b16 %v3695
    %v5977 = vunpack.c.l.b16 %v3696
    %v5978 = vunpack.c.l.b16 %v3697
    %v5979 = vunpack.c.h.b16 %v3697
    %v5980 = vunpack.c.l.b16 %v3698
    %v5981 = vunpack.c.l.b16 %v3699
    %v5982 = vunpack.c.h.b16 %v3699
    %v5983 = vunpack.c.l.b16 %v3700
    %v5984 = vunpack.c.l.b16 %v3701
    %v5985 = vunpack.c.h.b16 %v3701
    %v5986 = vunpack.c.l.b16 %v3702
    %v5987 = vunpack.c.l.b16 %v3703
    %v5988 = vunpack.c.h.b16 %v3703
    %v5989 = vunpack.c.l.b16 %v3704
    %v5990 = vunpack.c.l.b16 %v3705
    %v5991 = vunpack.c.h.b16 %v3705
    %v5992 = vunpack.c.l.b16 %v3706
    %v5993 = vunpack.c.l.b16 %v3707
    %v5994 = vunpack.c.h.b16 %v3707
    %v5995 = vunpack.c.l.b16 %v3708
    %v5996 = vunpack.c.l.b16 %v3709
    %v5997 = vunpack.c.h.b16 %v3709
    %v5998 = vunpack.c.l.b16 %v3710
    %v5999 = vunpack.c.l.b16 %v3711
    %v6000 = vunpack.c.h.b16 %v3711
    %v6001 = vunpack.c.l.b16 %v3712
    %v6002 = vunpack.c.l.b16 %v3713
    %v6003 = vunpack.c.h.b16 %v3713
    %v6004 = vunpack.c.l.b16 %v3714
    %v6005 = vunpack.c.l.b16 %v3715
    %v6006 = vunpack.c.h.b16 %v3715
    %v6007 = vunpack.c.l.b16 %v3716
    %v6008 = vunpack.c.l.b16 %v3717
    %v6009 = vunpack.c.h.b16 %v3717
    %v6010 = vunpack.c.l.b16 %v3718
    %v6011 = vunpack.c.l.b16 %v3719
    %v6012 = vunpack.c.h.b16 %v3719
    %v6013 = vunpack.c.l.b16 %v3720
    %v6014 = vunpack.c.l.b16 %v3721
    %v6015 = vunpack.c.h.b16 %v3721
    %v6016 = vunpack.c.l.b16 %v3722
    %v6017 = vunpack.c.l.b16 %v3723
    %v6018 = vunpack.c.h.b16 %v3723
    %v6019 = vunpack.c.l.b16 %v3724
    %v6020 = vunpack.c.l.b16 %v3725
    %v6021 = vunpack.c.h.b16 %v3725
    %v6022 = vunpack.c.l.b16 %v3726
    %v6023 = vunpack.c.l.b16 %v3727
    %v6024 = vunpack.c.h.b16 %v3727
    %v6025 = vunpack.c.l.b16 %v3728
    %v6026 = vunpack.c.l.b16 %v3729
    %v6027 = vunpack.c.h.b16 %v3729
    %v6028 = vunpack.c.l.b16 %v3730
    %v6029 = vunpack.c.l.b16 %v3731
    %v6030 = vunpack.c.h.b16 %v3731
    %v6031 = vunpack.c.l.b16 %v3732
    %v6032 = vunpack.c.l.b16 %v3733
    %v6033 = vunpack.c.h.b16 %v3733
    %v6034 = vunpack.c.l.b16 %v3734
    %v6035 = vunpack.c.l.b16 %v3735
    %v6036 = vunpack.c.h.b16 %v3735
    %v6037 = vunpack.c.l.b16 %v3736
    %v6038 = vunpack.c.l.b16 %v3737
    %v6039 = vunpack.c.h.b16 %v3737
    %v6040 = vunpack.c.l.b16 %v3738
    %v6041 = vunpack.c.l.b16 %v3739
    %v6042 = vunpack.c.h.b16 %v3739
    %v6043 = vunpack.c.l.b16 %v3740
    %v6044 = vunpack.c.l.b16 %v3741
    %v6045 = vunpack.c.h.b16 %v3741
    %v6046 = vunpack.c.l.b16 %v3742
    %v6047 = vunpack.c.l.b16 %v3743
    %v6048 = vunpack.c.h.b16 %v3743
    %v6049 = vunpack.c.l.b16 %v3744
    %v6050 = vunpack.c.l.b16 %v3745
    %v6051 = vunpack.c.h.b16 %v3745
    %v6052 = vunpack.c.l.b16 %v3746
    %v6053 = vunpack.c.l.b16 %v3747
    %v6054 = vunpack.c.h.b16 %v3747
    %v6055 = vunpack.c.l.b16 %v3748
    %v6056 = vunpack.c.l.b16 %v3749
    %v6057 = vunpack.c.h.b16 %v3749
    %v6058 = vunpack.c.l.b16 %v3750
    %v6059 = vunpack.c.l.b16 %v3751
    %v6060 = vunpack.c.h.b16 %v3751
    %v6061 = vunpack.c.l.b16 %v3752
    %v6062 = vunpack.c.l.b16 %v3753
    %v6063 = vunpack.c.h.b16 %v3753
    %v6064 = vunpack.c.l.b16 %v3754
    %v6065 = vunpack.c.l.b16 %v3755
    %v6066 = vunpack.c.h.b16 %v3755
    %v6067 = vunpack.c.l.b16 %v3756
    %v6068 = vunpack.c.l.b16 %v3757
    %v6069 = vunpack.c.h.b16 %v3757
    %v6070 = vunpack.c.l.b16 %v3758
    %v6071 = vunpack.c.l.b16 %v3759
    %v6072 = vunpack.c.h.b16 %v3759
    %v6073 = vunpack.c.l.b16 %v3760
    %v6074 = vunpack.c.l.b16 %v3761
    %v6075 = vunpack.c.h.b16 %v3761
    %v6076 = vunpack.c.l.b16 %v3762
    %v6077 = vunpack.c.l.b16 %v3763
    %v6078 = vunpack.c.h.b16 %v3763
    %v6079 = vunpack.c.l.b16 %v3764
    %v6080 = vunpack.c.l.b16 %v3765
    %v6081 = vunpack.c.h.b16 %v3765
    %v6082 = vunpack.c.l.b16 %v3766
    %v6083 = vunpack.c.l.b16 %v3767
    %v6084 = vunpack.c.h.b16 %v3767
    %v6085 = vunpack.c.l.b16 %v3768
    %v6086 = vunpack.c.l.b16 %v3769
    %v6087 = vunpack.c.h.b16 %v3769
    %v6088 = vunpack.c.l.b16 %v3770
    %v6089 = vunpack.c.l.b16 %v3771
    %v6090 = vunpack.c.h.b16 %v3771
    %v6091 = vunpack.c.l.b16 %v3772
    %v6092 = vunpack.c.l.b16 %v3773
    %v6093 = vunpack.c.h.b16 %v3773
    %v6094 = vunpack.c.l.b16 %v3774
    %v6095 = vunpack.c.l.b16 %v3775
    %v6096 = vunpack.c.h.b16 %v3775
    %v6097 = vunpack.c.l.b16 %v3776
    %v6098 = vunpack.c.l.b16 %v3777
    %v6099 = vunpack.c.h.b16 %v3777
    %v6100 = vunpack.c.l.b16 %v3778
    %v6101 = vunpack.c.l.b16 %v3779
    %v6102 = vunpack.c.h.b16 %v3779
    %v6103 = vunpack.c.l.b16 %v3780
    %v6104 = vunpack.c.l.b16 %v3781
    %v6105 = vunpack.c.h.b16 %v3781
    %v6106 = vunpack.c.l.b16 %v3782
    %v6107 = vunpack.c.l.b16 %v3783
    %v6108 = vunpack.c.h.b16 %v3783
    %v6109 = vunpack.c.l.b16 %v3784
    %v6110 = vunpack.c.l.b16 %v3785
    %v6111 = vunpack.c.h.b16 %v3785
    %v6112 = vunpack.c.l.b16 %v3786
    %v6113 = vunpack.c.l.b16 %v3787
    %v6114 = vunpack.c.h.b16 %v3787
    %v6115 = vunpack.c.l.b16 %v3788
    %v6116 = vunpack.c.l.b16 %v3789
    %v6117 = vunpack.c.h.b16 %v3789
    %v6118 = vunpack.c.l.b16 %v3790
    %v6119 = vunpack.c.l.b16 %v3791
    %v6120 = vunpack.c.h.b16 %v3791
    %v6121 = vunpack.c.l.b16 %v3792
    %v6122 = vunpack.c.l.b16 %v3793
    %v6123 = vunpack.c.h.b16 %v3793
    %v6124 = vunpack.c.l.b16 %v3794
    %v6125 = vunpack.c.l.b16 %v3795
    %v6126 = vunpack.c.h.b16 %v3795
    %v6127 = vunpack.c.l.b16 %v3796
    %v6128 = vunpack.c.l.b16 %v3797
    %v6129 = vunpack.c.h.b16 %v3797
    %v6130 = vunpack.c.l.b16 %v3798
    %v6131 = vunpack.c.l.b16 %v3799
    %v6132 = vunpack.c.h.b16 %v3799
    %v6133 = vunpack.c.l.b16 %v3800
    %v6134 = vunpack.c.l.b16 %v3801
    %v6135 = vunpack.c.h.b16 %v3801
    %v6136 = vunpack.c.l.b16 %v3802
    %v6137 = vunpack.c.l.b16 %v3803
    %v6138 = vunpack.c.h.b16 %v3803
    %v6139 = vunpack.c.l.b16 %v3804
    %v6140 = vunpack.c.l.b16 %v3805
    %v6141 = vunpack.c.h.b16 %v3805
    %v6142 = vunpack.c.l.b16 %v3806
    %v6143 = vunpack.c.l.b16 %v3807
    %v6144 = vunpack.c.h.b16 %v3807
    %v6145 = vunpack.c.l.b16 %v3808
    %v6146 = vunpack.c.l.b16 %v3809
    %v6147 = vunpack.c.h.b16 %v3809
    %v6148 = vunpack.c.l.b16 %v3810
    %v6149 = vunpack.c.l.b16 %v3811
    %v6150 = vunpack.c.h.b16 %v3811
    %v6151 = vunpack.c.l.b16 %v3812
    %v6152 = vunpack.c.l.b16 %v3813
    %v6153 = vunpack.c.h.b16 %v3813
    %v6154 = vunpack.c.l.b16 %v3814
    %v6155 = vunpack.c.l.b16 %v3815
    %v6156 = vunpack.c.h.b16 %v3815
    %v6157 = vunpack.c.l.b16 %v3816
    %v6158 = vunpack.c.l.b16 %v3817
    %v6159 = vunpack.c.h.b16 %v3817
    %v6160 = vunpack.c.l.b16 %v3818
    %v6161 = vunpack.c.l.b16 %v3819
    %v6162 = vunpack.c.h.b16 %v3819
    %v6163 = vunpack.c.l.b16 %v3820
    %v6164 = vunpack.c.l.b16 %v3821
    %v6165 = vunpack.c.h.b16 %v3821
    %v6166 = vunpack.c.l.b16 %v3822
    %v6167 = vunpack.c.l.b16 %v3823
    %v6168 = vunpack.c.h.b16 %v3823
    %v6169 = vunpack.c.l.b16 %v3824
    %v6170 = vunpack.c.l.b16 %v3825
    %v6171 = vunpack.c.h.b16 %v3825
    %v6172 = vunpack.c.l.b16 %v3826
    %v6173 = vunpack.c.l.b16 %v3827
    %v6174 = vunpack.c.h.b16 %v3827
    %v6175 = vunpack.c.l.b16 %v3828
    %v6176 = vunpack.c.l.b16 %v3829
    %v6177 = vunpack.c.h.b16 %v3829
    %v6178 = vunpack.c.l.b16 %v3830
    %v6179 = vunpack.c.l.b16 %v3831
    %v6180 = vunpack.c.h.b16 %v3831
    %v6181 = vunpack.c.l.b16 %v3832
    %v6182 = vunpack.c.l.b16 %v3833
    %v6183 = vunpack.c.h.b16 %v3833
    %v6184 = vunpack.c.l.b16 %v3834
    %v6185 = vunpack.c.l.b16 %v3835
    %v6186 = vunpack.c.h.b16 %v3835
    %v6187 = vunpack.c.l.b16 %v3836
    %v6188 = vunpack.c.l.b16 %v3837
    %v6189 = vunpack.c.h.b16 %v3837
    %v6190 = vunpack.c.l.b16 %v3838
    %v6191 = vunpack.c.l.b16 %v3839
    %v6192 = vunpack.c.h.b16 %v3839
    %v6193 = vunpack.c.l.b16 %v3840
    %v6194 = vunpack.c.l.b16 %v3841
    %v6195 = vunpack.c.h.b16 %v3841
    %v6196 = vunpack.c.l.b16 %v3842
    %v6197 = vunpack.c.l.b16 %v3843
    %v6198 = vunpack.c.h.b16 %v3843
    %v6199 = vunpack.c.l.b16 %v3844
    %v6200 = vunpack.c.l.b16 %v3845
    %v6201 = vunpack.c.h.b16 %v3845
    %v6202 = vunpack.c.l.b16 %v3846
    %v6203 = vunpack.c.l.b16 %v3847
    %v6204 = vunpack.c.h.b16 %v3847
    %v6205 = vunpack.c.l.b16 %v3848
    %v6206 = vunpack.c.l.b16 %v3849
    %v6207 = vunpack.c.h.b16 %v3849
    %v6208 = vunpack.c.l.b16 %v3850
    %v6209 = vunpack.c.l.b16 %v3851
    %v6210 = vunpack.c.h.b16 %v3851
    %v6211 = vunpack.c.l.b16 %v3852
    %v6212 = vunpack.c.l.b16 %v3853
    %v6213 = vunpack.c.h.b16 %v3853
    %v6214 = vunpack.c.l.b16 %v3854
    %v6215 = vunpack.c.l.b16 %v3855
    %v6216 = vunpack.c.h.b16 %v3855
    %v6217 = vunpack.c.l.b16 %v3856
    %v6218 = vunpack.c.l.b16 %v3857
    %v6219 = vunpack.c.h.b16 %v3857
    %v6220 = vunpack.c.l.b16 %v3858
    %v6221 = vunpack.c.l.b16 %v3859
    %v6222 = vunpack.c.h.b16 %v3859
    %v6223 = vunpack.c.l.b16 %v3860
    %v6224 = vunpack.c.l.b16 %v3861
    %v6225 = vunpack.c.h.b16 %v3861
    %v6226 = vunpack.c.l.b16 %v3862
    %v6227 = vunpack.c.l.b16 %v3863
    %v6228 = vunpack.c.h.b16 %v3863
    %v6229 = vunpack.c.l.b16 %v3864
    %v6230 = vunpack.c.l.b16 %v3865
    %v6231 = vunpack.c.h.b16 %v3865
    %v6232 = vunpack.c.l.b16 %v3866
    %v6233 = vunpack.c.l.b16 %v3867
    %v6234 = vunpack.c.h.b16 %v3867
    %v6235 = vunpack.c.l.b16 %v3868
    %v6236 = vunpack.c.l.b16 %v3869
    %v6237 = vunpack.c.h.b16 %v3869
    %v6238 = vunpack.c.l.b16 %v3870
    %v6239 = vunpack.c.l.b16 %v3871
    %v6240 = vunpack.c.h.b16 %v3871
    %v6241 = vunpack.c.l.b16 %v3872
    %v6242 = vunpack.c.l.b16 %v3873
    %v6243 = vunpack.c.h.b16 %v3873
    %v6244 = vunpack.c.l.b16 %v3874
    %v6245 = vunpack.c.l.b16 %v3875
    %v6246 = vunpack.c.h.b16 %v3875
    %v6247 = vunpack.c.l.b16 %v3876
    %v6248 = vunpack.c.l.b16 %v3877
    %v6249 = vunpack.c.h.b16 %v3877
    %v6250 = vunpack.c.l.b16 %v3878
    %v6251 = vunpack.c.l.b16 %v3879
    %v6252 = vunpack.c.h.b16 %v3879
    %v6253 = vunpack.c.l.b16 %v3880
    %v6254 = vunpack.c.l.b16 %v3881
    %v6255 = vunpack.c.h.b16 %v3881
    %v6256 = vunpack.c.l.b16 %v3882
    %v6257 = vunpack.c.l.b16 %v3883
    %v6258 = vunpack.c.h.b16 %v3883
    %v6259 = vunpack.c.l.b16 %v3884
    %v6260 = vunpack.c.l.b16 %v3885
    %v6261 = vunpack.c.h.b16 %v3885
    %v6262 = vunpack.c.l.b16 %v3886
    %v6263 = vunpack.c.l.b16 %v3887
    %v6264 = vunpack.c.h.b16 %v3887
    %v6265 = vunpack.c.l.b16 %v3888
    %v6266 = vunpack.c.l.b16 %v3889
    %v6267 = vunpack.c.h.b16 %v3889
    %v6268 = vunpack.c.l.b16 %v3890
    %v6269 = vunpack.c.l.b16 %v3891
    %v6270 = vunpack.c.h.b16 %v3891
    %v6271 = vunpack.c.l.b16 %v3892
    %v6272 = vunpack.c.l.b16 %v3893
    %v6273 = vunpack.c.h.b16 %v3893
    %v6274 = vunpack.c.l.b16 %v3894
    %v6275 = vunpack.c.l.b16 %v3895
    %v6276 = vunpack.c.h.b16 %v3895
    %v6277 = vunpack.c.l.b16 %v3896
    %v6278 = vunpack.c.l.b16 %v3897
    %v6279 = vunpack.c.h.b16 %v3897
    %v6280 = vunpack.c.l.b16 %v3898
    %v6281 = vunpack.c.l.b16 %v3899
    %v6282 = vunpack.c.h.b16 %v3899
    %v6283 = vunpack.c.l.b16 %v3900
    %v6284 = vunpack.c.l.b16 %v3901
    %v6285 = vunpack.c.h.b16 %v3901
    %v6286 = vunpack.c.l.b16 %v3902
    %v6287 = vunpack.c.l.b16 %v3903
    %v6288 = vunpack.c.h.b16 %v3903
    %v6289 = vunpack.c.l.b16 %v3904
    %v6290 = vunpack.c.l.b16 %v3905
    %v6291 = vunpack.c.h.b16 %v3905
    %v6292 = vunpack.c.l.b16 %v3906
    %v6293 = vunpack.c.l.b16 %v3907
    %v6294 = vunpack.c.h.b16 %v3907
    %v6295 = vunpack.c.l.b16 %v3908
    %v6296 = vunpack.c.l.b16 %v3909
    %v6297 = vunpack.c.h.b16 %v3909
    %v6298 = vunpack.c.l.b16 %v3910
    %v6299 = vunpack.c.l.b16 %v3911
    %v6300 = vunpack.c.h.b16 %v3911
    %v6301 = vunpack.c.l.b16 %v3912
    %v6302 = vunpack.c.l.b16 %v3913
    %v6303 = vunpack.c.h.b16 %v3913
    %v6304 = vunpack.c.l.b16 %v3914
    %v6305 = vunpack.c.l.b16 %v3915
    %v6306 = vunpack.c.h.b16 %v3915
    %v6307 = vunpack.c.l.b16 %v3916
    %v6308 = vunpack.c.l.b16 %v3917
    %v6309 = vunpack.c.h.b16 %v3917
    %v6310 = vunpack.c.l.b16 %v3918
    %v6311 = vunpack.c.l.b16 %v3919
    %v6312 = vunpack.c.h.b16 %v3919
    %v6313 = vunpack.c.l.b16 %v3920
    %v6314 = vunpack.c.l.b16 %v3921
    %v6315 = vunpack.c.h.b16 %v3921
    %v6316 = vunpack.c.l.b16 %v3922
    %v6317 = vunpack.c.l.b16 %v3923
    %v6318 = vunpack.c.h.b16 %v3923
    %v6319 = vunpack.c.l.b16 %v3924
    %v6320 = vunpack.c.l.b16 %v3925
    %v6321 = vunpack.c.h.b16 %v3925
    %v6322 = vunpack.c.l.b16 %v3926
    %v6323 = vunpack.c.l.b16 %v3927
    %v6324 = vunpack.c.h.b16 %v3927
    %v6325 = vunpack.c.l.b16 %v3928
    %v6326 = vunpack.c.l.b16 %v3929
    %v6327 = vunpack.c.h.b16 %v3929
    %v6328 = vunpack.c.l.b16 %v3930
    %v6329 = vunpack.c.l.b16 %v3931
    %v6330 = vunpack.c.h.b16 %v3931
    %v6331 = vunpack.c.l.b16 %v3932
    %v6332 = vunpack.c.l.b16 %v3933
    %v6333 = vunpack.c.h.b16 %v3933
    %v6334 = vunpack.c.l.b16 %v3934
    %v6335 = vunpack.c.l.b16 %v3935
    %v6336 = vunpack.c.h.b16 %v3935
    %v6337 = vunpack.c.l.b16 %v3936
    %v6338 = vunpack.c.l.b16 %v3937
    %v6339 = vunpack.c.h.b16 %v3937
    %v6340 = vunpack.c.l.b16 %v3938
    %v6341 = vunpack.c.l.b16 %v3939
    %v6342 = vunpack.c.h.b16 %v3939
    %v6343 = vunpack.c.l.b16 %v3940
    %v6344 = vunpack.c.l.b16 %v3941
    %v6345 = vunpack.c.h.b16 %v3941
    %v6346 = vunpack.c.l.b16 %v3942
    %v6347 = vunpack.c.l.b16 %v3943
    %v6348 = vunpack.c.h.b16 %v3943
    %v6349 = vunpack.c.l.b16 %v3944
    %v6350 = vunpack.c.l.b16 %v3945
    %v6351 = vunpack.c.h.b16 %v3945
    %v6352 = vunpack.c.l.b16 %v3946
    %v6353 = vunpack.c.l.b16 %v3947
    %v6354 = vunpack.c.h.b16 %v3947
    %v6355 = vunpack.c.l.b16 %v3948
    %v6356 = vunpack.c.l.b16 %v3949
    %v6357 = vunpack.c.h.b16 %v3949
    %v6358 = vunpack.c.l.b16 %v3950
    %v6359 = vunpack.c.l.b16 %v3951
    %v6360 = vunpack.c.h.b16 %v3951
    %v6361 = vunpack.c.l.b16 %v3952
    %v6362 = vunpack.c.l.b16 %v3953
    %v6363 = vunpack.c.h.b16 %v3953
    %v6364 = vunpack.c.l.b16 %v3954
    %v6365 = vunpack.c.l.b16 %v3955
    %v6366 = vunpack.c.h.b16 %v3955
    %v6367 = vunpack.c.l.b16 %v3956
    %v6368 = vunpack.c.l.b16 %v3957
    %v6369 = vunpack.c.h.b16 %v3957
    %v6370 = vunpack.c.l.b16 %v3958
    %v6371 = vunpack.c.l.b16 %v3959
    %v6372 = vunpack.c.h.b16 %v3959
    %v6373 = vunpack.c.l.b16 %v3960
    %v6374 = vunpack.c.l.b16 %v3961
    %v6375 = vunpack.c.h.b16 %v3961
    %v6376 = vunpack.c.l.b16 %v3962
    %v6377 = vunpack.c.l.b16 %v3963
    %v6378 = vunpack.c.h.b16 %v3963
    %v6379 = vunpack.c.l.b16 %v3964
    %v6380 = vunpack.c.l.b16 %v3965
    %v6381 = vunpack.c.h.b16 %v3965
    %v6382 = vunpack.c.l.b16 %v3966
    %v6383 = vunpack.c.l.b16 %v3967
    %v6384 = vunpack.c.h.b16 %v3967
    %v6385 = vunpack.c.l.b16 %v3968
    %v6386 = vunpack.c.l.b16 %v3969
    %v6387 = vunpack.c.h.b16 %v3969
    %v6388 = vunpack.c.l.b16 %v3970
    %v6389 = vunpack.c.l.b16 %v3971
    %v6390 = vunpack.c.h.b16 %v3971
    %v6391 = vunpack.c.l.b16 %v3972
    %v6392 = vunpack.c.l.b16 %v3973
    %v6393 = vunpack.c.h.b16 %v3973
    %v6394 = vunpack.c.l.b16 %v3974
    %v6395 = vunpack.c.l.b16 %v3975
    %v6396 = vunpack.c.h.b16 %v3975
    %v6397 = vunpack.c.l.b16 %v3976
    %v6398 = vunpack.c.l.b16 %v3977
    %v6399 = vunpack.c.h.b16 %v3977
    %v6400 = vunpack.c.l.b16 %v3978
    %v6401 = vunpack.c.l.b16 %v3979
    %v6402 = vunpack.c.h.b16 %v3979
    %v6403 = vunpack.c.l.b16 %v3980
    %v6404 = vunpack.c.l.b16 %v3981
    %v6405 = vunpack.c.h.b16 %v3981
    %v6406 = vunpack.c.l.b16 %v3982
    %v6407 = vunpack.c.l.b16 %v3983
    %v6408 = vunpack.c.h.b16 %v3983
    %v6409 = vunpack.c.l.b16 %v3984
    %v6410 = vunpack.c.l.b16 %v3985
    %v6411 = vunpack.c.h.b16 %v3985
    %v6412 = vunpack.c.l.b16 %v3986
    %v6413 = vunpack.c.l.b16 %v3987
    %v6414 = vunpack.c.h.b16 %v3987
    %v6415 = vunpack.c.l.b16 %v3988
    %v6416 = vunpack.c.l.b16 %v3989
    %v6417 = vunpack.c.h.b16 %v3989
    %v6418 = vunpack.c.l.b16 %v3990
    %v6419 = vunpack.c.l.b16 %v3991
    %v6420 = vunpack.c.h.b16 %v3991
    %v6421 = vunpack.c.l.b16 %v3992
    %v6422 = vunpack.c.l.b16 %v3993
    %v6423 = vunpack.c.h.b16 %v3993
    %v6424 = vunpack.c.l.b16 %v3994
    %v6425 = vunpack.c.l.b16 %v3995
    %v6426 = vunpack.c.h.b16 %v3995
    %v6427 = vunpack.c.l.b16 %v3996
    %v6428 = vunpack.c.l.b16 %v3997
    %v6429 = vunpack.c.h.b16 %v3997
    %v6430 = vunpack.c.l.b16 %v3998
    %v6431 = vunpack.c.l.b16 %v3999
    %v6432 = vunpack.c.h.b16 %v3999
    %v6433 = vunpack.c.l.b16 %v4000
    %v6434 = vunpack.c.l.b16 %v4001
    %v6435 = vunpack.c.h.b16 %v4001
    %v6436 = vunpack.c.l.b16 %v4002
    %v6437 = vunpack.c.l.b16 %v4003
    %v6438 = vunpack.c.h.b16 %v4003
    %v6439 = vunpack.c.l.b16 %v4004
    %v6440 = vunpack.c.l.b16 %v4005
    %v6441 = vunpack.c.h.b16 %v4005
    %v6442 = vunpack.c.l.b16 %v4006
    %v6443 = vunpack.c.l.b16 %v4007
    %v6444 = vunpack.c.h.b16 %v4007
    %v6445 = vunpack.c.l.b16 %v4008
    %v6446 = vunpack.c.l.b16 %v4009
    %v6447 = vunpack.c.h.b16 %v4009
    %v6448 = vunpack.c.l.b16 %v4010
    %v6449 = vunpack.c.l.b16 %v4011
    %v6450 = vunpack.c.h.b16 %v4011
    %v6451 = vunpack.c.l.b16 %v4012
    %v6452 = vunpack.c.l.b16 %v4013
    %v6453 = vunpack.c.h.b16 %v4013
    %v6454 = vunpack.c.l.b16 %v4014
    %v6455 = vunpack.c.l.b16 %v4015
    %v6456 = vunpack.c.h.b16 %v4015
    %v6457 = vunpack.c.l.b16 %v4016
    %v6458 = vunpack.c.l.b16 %v4017
    %v6459 = vunpack.c.h.b16 %v4017
    %v6460 = vunpack.c.l.b16 %v4018
    %v6461 = vunpack.c.l.b16 %v4019
    %v6462 = vunpack.c.h.b16 %v4019
    %v6463 = vunpack.c.l.b16 %v4020
    %v6464 = vunpack.c.l.b16 %v4021
    %v6465 = vunpack.c.h.b16 %v4021
    %v6466 = vunpack.c.l.b16 %v4022
    %v6467 = vunpack.c.l.b16 %v4023
    %v6468 = vunpack.c.h.b16 %v4023
    %v6469 = vunpack.c.l.b16 %v4024
    %v6470 = vunpack.c.l.b16 %v4025
    %v6471 = vunpack.c.h.b16 %v4025
    %v6472 = vunpack.c.l.b16 %v4026
    %v6473 = vunpack.c.l.b16 %v4027
    %v6474 = vunpack.c.h.b16 %v4027
    %v6475 = vunpack.c.l.b16 %v4028
    %v6476 = vunpack.c.l.b16 %v4029
    %v6477 = vunpack.c.h.b16 %v4029
    %v6478 = vunpack.c.l.b16 %v4030
    %v6479 = vunpack.c.l.b16 %v4031
    %v6480 = vunpack.c.h.b16 %v4031
    %v6481 = vunpack.c.l.b16 %v4032
    %v6482 = vunpack.c.l.b16 %v4033
    %v6483 = vunpack.c.h.b16 %v4033
    %v6484 = vunpack.c.l.b16 %v4034
    %v6485 = vunpack.c.l.b16 %v4035
    %v6486 = vunpack.c.h.b16 %v4035
    %v6487 = vunpack.c.l.b16 %v4036
    %v6488 = vunpack.c.l.b16 %v4037
    %v6489 = vunpack.c.h.b16 %v4037
    %v6490 = vunpack.c.l.b16 %v4038
    %v6491 = vunpack.c.l.b16 %v4039
    %v6492 = vunpack.c.h.b16 %v4039
    %v6493 = vunpack.c.l.b16 %v4040
    %v6494 = vunpack.c.l.b16 %v4041
    %v6495 = vunpack.c.h.b16 %v4041
    %v6496 = vunpack.c.l.b16 %v4042
    %v6497 = vunpack.c.l.b16 %v4043
    %v6498 = vunpack.c.h.b16 %v4043
    %v6499 = vunpack.c.l.b16 %v4044
    %v6500 = vunpack.c.l.b16 %v4045
    %v6501 = vunpack.c.h.b16 %v4045
    %v6502 = vunpack.c.l.b16 %v4046
    %v6503 = vunpack.c.l.b16 %v4047
    %v6504 = vunpack.c.h.b16 %v4047
    %v6505 = vunpack.c.l.b16 %v4048
    %v6506 = vunpack.c.l.b16 %v4049
    %v6507 = vunpack.c.h.b16 %v4049
    %v6508 = vunpack.c.l.b16 %v4050
    %v6509 = vunpack.c.l.b16 %v4051
    %v6510 = vunpack.c.h.b16 %v4051
    %v6511 = vunpack.c.l.b16 %v4052
    %v6512 = vunpack.c.l.b16 %v4053
    %v6513 = vunpack.c.h.b16 %v4053
    %v6514 = vunpack.c.l.b16 %v4054
    %v6515 = vunpack.c.l.b16 %v4055
    %v6516 = vunpack.c.h.b16 %v4055
    %v6517 = vunpack.c.l.b16 %v4056
    %v6518 = vunpack.c.l.b16 %v4057
    %v6519 = vunpack.c.h.b16 %v4057
    %v6520 = vunpack.c.l.b16 %v4058
    %v6521 = vunpack.c.l.b16 %v4059
    %v6522 = vunpack.c.h.b16 %v4059
    %v6523 = vunpack.c.l.b16 %v4060
    %v6524 = vunpack.c.l.b16 %v4061
    %v6525 = vunpack.c.h.b16 %v4061
    %v6526 = vunpack.c.l.b16 %v4062
    %v6527 = vunpack.c.l.b16 %v4063
    %v6528 = vunpack.c.h.b16 %v4063
    %v6529 = vunpack.c.l.b16 %v4064
    %v6530 = vunpack.c.l.b16 %v4065
    %v6531 = vunpack.c.h.b16 %v4065
    %v6532 = vunpack.c.l.b16 %v4066
    %v6533 = vunpack.c.l.b16 %v4067
    %v6534 = vunpack.c.h.b16 %v4067
    %v6535 = vunpack.c.l.b16 %v4068
    %v6536 = vunpack.c.l.b16 %v4069
    %v6537 = vunpack.c.h.b16 %v4069
    %v6538 = vunpack.c.l.b16 %v4070
    %v6539 = vunpack.c.l.b16 %v4071
    %v6540 = vunpack.c.h.b16 %v4071
    %v6541 = vunpack.c.l.b16 %v4072
    %v6542 = vunpack.c.l.b16 %v4073
    %v6543 = vunpack.c.h.b16 %v4073
    %v6544 = vunpack.c.l.b16 %v4074
    %v6545 = vunpack.c.l.b16 %v4075
    %v6546 = vunpack.c.h.b16 %v4075
    %v6547 = vunpack.c.l.b16 %v4076
    %v6548 = vunpack.c.l.b16 %v4077
    %v6549 = vunpack.c.h.b16 %v4077
    %v6550 = vunpack.c.l.b16 %v4078
    %v6551 = vunpack.c.l.b16 %v4079
    %v6552 = vunpack.c.h.b16 %v4079
    %v6553 = vunpack.c.l.b16 %v4080
    %v6554 = vunpack.c.l.b16 %v4081
    %v6555 = vunpack.c.h.b16 %v4081
    %v6556 = vunpack.c.l.b16 %v4082
    %v6557 = vunpack.c.l.b16 %v4083
    %v6558 = vunpack.c.h.b16 %v4083
    %v6559 = vunpack.c.l.b16 %v4084
    %v6560 = vunpack.c.l.b16 %v4085
    %v6561 = vunpack.c.h.b16 %v4085
    %v6562 = vunpack.c.l.b16 %v4086
    %v6563 = vunpack.c.l.b16 %v4087
    %v6564 = vunpack.c.h.b16 %v4087
    %v6565 = vunpack.c.l.b16 %v4088
    %v6566 = vunpack.c.l.b16 %v4089
    %v6567 = vunpack.c.h.b16 %v4089
    %v6568 = vunpack.c.l.b16 %v4090
    %v6569 = vunpack.c.l.b16 %v4091
    %v6570 = vunpack.c.h.b16 %v4091
    %v6571 = vunpack.c.l.b16 %v4092
    %v6572 = vunpack.c.l.b16 %v4093
    %v6573 = vunpack.c.h.b16 %v4093
    %v6574 = vunpack.c.l.b16 %v4094
    %v6575 = vunpack.c.l.b16 %v4095
    %v6576 = vunpack.c.h.b16 %v4095
    %v6577 = vunpack.c.l.b16 %v4096
    %v6578 = vunpack.c.l.b16 %v4097
    %v6579 = vunpack.c.h.b16 %v4097
    %v6580 = vunpack.c.l.b16 %v4098
    %v6581 = vunpack.c.l.b16 %v4099
    %v6582 = vunpack.c.h.b16 %v4099
    %v6583 = vunpack.c.l.b16 %v4100
    %v6584 = vunpack.c.l.b16 %v4101
    %v6585 = vunpack.c.h.b16 %v4101
    %v6586 = vunpack.c.l.b16 %v4102
    %v6587 = vunpack.c.l.b16 %v4103
    %v6588 = vunpack.c.h.b16 %v4103
    %v6589 = vunpack.c.l.b16 %v4104
    %v6590 = vunpack.c.l.b16 %v4105
    %v6591 = vunpack.c.h.b16 %v4105
    %v6592 = vunpack.c.l.b16 %v4106
    %v6593 = vunpack.c.l.b16 %v4107
    %v6594 = vunpack.c.h.b16 %v4107
    %v6595 = vunpack.c.l.b16 %v4108
    %v6596 = vunpack.c.l.b16 %v4109
    %v6597 = vunpack.c.h.b16 %v4109
    %v6598 = vunpack.c.l.b16 %v4110
    %v6599 = vunpack.c.l.b16 %v4111
    %v6600 = vunpack.c.h.b16 %v4111
    %v6601 = vunpack.c.l.b16 %v4112
    %v6602 = vunpack.c.l.b16 %v4113
    %v6603 = vunpack.c.h.b16 %v4113
    %v6604 = vunpack.c.l.b16 %v4114
    %v6605 = vunpack.c.l.b16 %v4115
    %v6606 = vunpack.c.h.b16 %v4115
    %v6607 = vunpack.c.l.b16 %v4116
    %v6608 = vunpack.c.l.b16 %v4117
    %v6609 = vunpack.c.h.b16 %v4117
    %v6610 = vunpack.c.l.b16 %v4118
    %v6611 = vunpack.c.l.b16 %v4119
    %v6612 = vunpack.c.h.b16 %v4119
    %v6613 = vunpack.c.l.b16 %v4120
    %v6614 = vunpack.c.l.b16 %v4121
    %v6615 = vunpack.c.h.b16 %v4121
    %v6616 = vunpack.c.l.b16 %v4122
    %v6617 = vunpack.c.l.b16 %v4123
    %v6618 = vunpack.c.h.b16 %v4123
    %v6619 = vunpack.c.l.b16 %v4124
    %v6620 = vunpack.c.l.b16 %v4125
    %v6621 = vunpack.c.h.b16 %v4125
    %v6622 = vunpack.c.l.b16 %v4126
    %v6623 = vunpack.c.l.b16 %v4127
    %v6624 = vunpack.c.h.b16 %v4127
    %v6625 = vunpack.c.l.b16 %v4128
    %v6626 = vunpack.c.l.b16 %v4129
    %v6627 = vunpack.c.h.b16 %v4129
    %v6628 = vunpack.c.l.b16 %v4130
    %v6629 = vunpack.c.l.b16 %v4131
    %v6630 = vunpack.c.h.b16 %v4131
    %v6631 = vunpack.c.l.b16 %v4132
    %v6632 = vunpack.c.l.b16 %v4133
    %v6633 = vunpack.c.h.b16 %v4133
    %v6634 = vunpack.c.l.b16 %v4134
    %v6635 = vunpack.c.l.b16 %v4135
    %v6636 = vunpack.c.h.b16 %v4135
    %v6637 = vunpack.c.l.b16 %v4136
    %v6638 = vunpack.c.l.b16 %v4137
    %v6639 = vunpack.c.h.b16 %v4137
    %v6640 = vunpack.c.l.b16 %v4138
    %v6641 = vunpack.c.l.b16 %v4139
    %v6642 = vunpack.c.h.b16 %v4139
    %v6643 = vunpack.c.l.b16 %v4140
    %v6644 = vunpack.c.l.b16 %v4141
    %v6645 = vunpack.c.h.b16 %v4141
    %v6646 = vunpack.c.l.b16 %v4142
    %v6647 = vunpack.c.l.b16 %v4143
    %v6648 = vunpack.c.h.b16 %v4143
    %v6649 = vunpack.c.l.b16 %v4144
    %v6650 = vunpack.c.l.b16 %v4145
    %v6651 = vunpack.c.h.b16 %v4145
    %v6652 = vunpack.c.l.b16 %v4146
    %v6653 = vunpack.c.l.b16 %v4147
    %v6654 = vunpack.c.h.b16 %v4147
    %v6655 = vunpack.c.l.b16 %v4148
    %v6656 = vunpack.c.l.b16 %v4149
    %v6657 = vunpack.c.h.b16 %v4149
    %v6658 = vunpack.c.l.b16 %v4150
    %v6659 = vunpack.c.l.b16 %v4151
    %v6660 = vunpack.c.h.b16 %v4151
    %v6661 = vunpack.c.l.b16 %v4152
    %v6662 = vunpack.c.l.b16 %v4153
    %v6663 = vunpack.c.h.b16 %v4153
    %v6664 = vunpack.c.l.b16 %v4154
    %v6665 = vunpack.c.l.b16 %v4155
    %v6666 = vunpack.c.h.b16 %v4155
    %v6667 = vunpack.c.l.b16 %v4156
    %v6668 = vunpack.c.l.b16 %v4157
    %v6669 = vunpack.c.h.b16 %v4157
    %v6670 = vunpack.c.l.b16 %v4158
    %v6671 = vunpack.c.l.b16 %v4159
    %v6672 = vunpack.c.h.b16 %v4159
    %v6673 = vunpack.c.l.b16 %v4160
    %v6674 = vunpack.c.l.b16 %v4161
    %v6675 = vunpack.c.h.b16 %v4161
    %v6676 = vunpack.c.l.b16 %v4162
    %v6677 = vunpack.c.l.b16 %v4163
    %v6678 = vunpack.c.h.b16 %v4163
    %v6679 = vunpack.c.l.b16 %v4164
    %v6680 = vunpack.c.l.b16 %v4165
    %v6681 = vunpack.c.h.b16 %v4165
    %v6682 = vunpack.c.l.b16 %v4166
    %v6683 = vunpack.c.l.b16 %v4167
    %v6684 = vunpack.c.h.b16 %v4167
    %v6685 = vunpack.c.l.b16 %v4168
    %v6686 = vunpack.c.l.b16 %v4169
    %v6687 = vunpack.c.h.b16 %v4169
    %v6688 = vunpack.c.l.b16 %v4170
    %v6689 = vunpack.c.l.b16 %v4171
    %v6690 = vunpack.c.h.b16 %v4171
    %v6691 = vunpack.c.l.b16 %v4172
    %v6692 = vunpack.c.l.b16 %v4173
    %v6693 = vunpack.c.h.b16 %v4173
    %v6694 = vunpack.c.l.b16 %v4174
    %v6695 = vunpack.c.l.b16 %v4175
    %v6696 = vunpack.c.h.b16 %v4175
    %v6697 = vunpack.c.l.b16 %v4176
    %v6698 = vunpack.c.l.b16 %v4177
    %v6699 = vunpack.c.h.b16 %v4177
    %v6700 = vunpack.c.l.b16 %v4178
    %v6701 = vunpack.c.l.b16 %v4179
    %v6702 = vunpack.c.h.b16 %v4179
    %v6703 = vunpack.c.l.b16 %v4180
    %v6704 = vunpack.c.l.b16 %v4181
    %v6705 = vunpack.c.h.b16 %v4181
    %v6706 = vunpack.c.l.b16 %v4182
    %v6707 = vunpack.c.l.b16 %v4183
    %v6708 = vunpack.c.h.b16 %v4183
    %v6709 = vunpack.c.l.b16 %v4184
    %v6710 = vunpack.c.l.b16 %v4185
    %v6711 = vunpack.c.h.b16 %v4185
    %v6712 = vunpack.c.l.b16 %v4186
    %v6713 = vunpack.c.l.b16 %v4187
    %v6714 = vunpack.c.h.b16 %v4187
    %v6715 = vunpack.c.l.b16 %v4188
    %v6716 = vunpack.c.l.b16 %v4189
    %v6717 = vunpack.c.h.b16 %v4189
    %v6718 = vunpack.c.l.b16 %v4190
    %v6719 = vunpack.c.l.b16 %v4191
    %v6720 = vunpack.c.h.b16 %v4191
    %v6721 = vunpack.c.l.b16 %v4192
    %v6722 = vunpack.c.l.b16 %v4193
    %v6723 = vunpack.c.h.b16 %v4193
    %v6724 = vunpack.c.l.b16 %v4194
    %v6725 = vunpack.c.l.b16 %v4195
    %v6726 = vunpack.c.h.b16 %v4195
    %v6727 = vunpack.c.l.b16 %v4196
    %v6728 = vunpack.c.l.b16 %v4197
    %v6729 = vunpack.c.h.b16 %v4197
    %v6730 = vunpack.c.l.b16 %v4198
    %v6731 = vunpack.c.l.b16 %v4199
    %v6732 = vunpack.c.h.b16 %v4199
    %v6733 = vunpack.c.l.b16 %v4200
    %v6734 = vunpack.c.l.b16 %v4201
    %v6735 = vunpack.c.h.b16 %v4201
    %v6736 = vunpack.c.l.b16 %v4202
    %v6737 = vunpack.c.l.b16 %v4203
    %v6738 = vunpack.c.h.b16 %v4203
    %v6739 = vunpack.c.l.b16 %v4204
    %v6740 = vunpack.c.l.b16 %v4205
    %v6741 = vunpack.c.h.b16 %v4205
    %v6742 = vunpack.c.l.b16 %v4206
    %v6743 = vunpack.c.l.b16 %v4207
    %v6744 = vunpack.c.h.b16 %v4207
    %v6745 = vunpack.c.l.b16 %v4208
    %v6746 = vunpack.c.l.b16 %v4209
    %v6747 = vunpack.c.h.b16 %v4209
    %v6748 = vunpack.c.l.b16 %v4210
    %v6749 = vunpack.c.l.b16 %v4211
    %v6750 = vunpack.c.h.b16 %v4211
    %v6751 = vunpack.c.l.b16 %v4212
    %v6752 = vunpack.c.l.b16 %v4213
    %v6753 = vunpack.c.h.b16 %v4213
    %v6754 = vunpack.c.l.b16 %v4214
    %v6755 = vunpack.c.l.b16 %v4215
    %v6756 = vunpack.c.h.b16 %v4215
    %v6757 = vunpack.c.l.b16 %v4216
    %v6758 = vunpack.c.l.b16 %v4217
    %v6759 = vunpack.c.h.b16 %v4217
    %v6760 = vunpack.c.l.b16 %v4218
    %v6761 = vunpack.c.l.b16 %v4219
    %v6762 = vunpack.c.h.b16 %v4219
    %v6763 = vunpack.c.l.b16 %v4220
    %v6764 = vunpack.c.l.b16 %v4221
    %v6765 = vunpack.c.h.b16 %v4221
    %v6766 = vunpack.c.l.b16 %v4222
    %v6767 = vunpack.c.l.b16 %v4223
    %v6768 = vunpack.c.h.b16 %v4223
    %v6769 = vunpack.c.l.b16 %v4224
    %v6770 = vunpack.c.l.b16 %v4225
    %v6771 = vunpack.c.h.b16 %v4225
    %v6772 = vunpack.c.l.b16 %v4226
    %v6773 = vunpack.c.l.b16 %v4227
    %v6774 = vunpack.c.h.b16 %v4227
    %v6775 = vunpack.c.l.b16 %v4228
    %v6776 = vunpack.c.l.b16 %v4229
    %v6777 = vunpack.c.h.b16 %v4229
    %v6778 = vunpack.c.l.b16 %v4230
    %v6779 = vunpack.c.l.b16 %v4231
    %v6780 = vunpack.c.h.b16 %v4231
    %v6781 = vunpack.c.l.b16 %v4232
    %v6782 = vunpack.c.l.b16 %v4233
    %v6783 = vunpack.c.h.b16 %v4233
    %v6784 = vunpack.c.l.b16 %v4234
    %v6785 = vunpack.c.l.b16 %v4235
    %v6786 = vunpack.c.h.b16 %v4235
    %v6787 = vunpack.c.l.b16 %v4236
    %v6788 = vunpack.c.l.b16 %v4237
    %v6789 = vunpack.c.h.b16 %v4237
    %v6790 = vunpack.c.l.b16 %v4238
    %v6791 = vunpack.c.l.b16 %v4239
    %v6792 = vunpack.c.h.b16 %v4239
    %v6793 = vunpack.c.l.b16 %v4240
    %v6794 = vunpack.c.l.b16 %v4241
    %v6795 = vunpack.c.h.b16 %v4241
    %v6796 = vunpack.c.l.b16 %v4242
    %v6797 = vunpack.c.l.b16 %v4243
    %v6798 = vunpack.c.h.b16 %v4243
    %v6799 = vunpack.c.l.b16 %v4244
    %v6800 = vunpack.c.l.b16 %v4245
    %v6801 = vunpack.c.h.b16 %v4245
    %v6802 = vunpack.c.l.b16 %v4246
    %v6803 = vunpack.c.l.b16 %v4247
    %v6804 = vunpack.c.h.b16 %v4247
    %v6805 = vunpack.c.l.b16 %v4248
    %v6806 = vunpack.c.l.b16 %v4249
    %v6807 = vunpack.c.h.b16 %v4249
    %v6808 = vunpack.c.l.b16 %v4250
    %v6809 = vunpack.c.l.b16 %v4251
    %v6810 = vunpack.c.h.b16 %v4251
    %v6811 = vunpack.c.l.b16 %v4252
    %v6812 = vunpack.c.l.b16 %v4253
    %v6813 = vunpack.c.h.b16 %v4253
    %v6814 = vunpack.c.l.b16 %v4254
    %v6815 = vunpack.c.l.b16 %v4255
    %v6816 = vunpack.c.h.b16 %v4255
    %v6817 = vunpack.c.l.b16 %v4256
    %v6818 = vunpack.c.l.b16 %v4257
    %v6819 = vunpack.c.h.b16 %v4257
    %v6820 = vunpack.c.l.b16 %v4258
    %v6821 = vunpack.c.l.b16 %v4259
    %v6822 = vunpack.c.h.b16 %v4259
    %v6823 = vunpack.c.l.b16 %v4260
    %v6824 = vunpack.c.l.b16 %v4261
    %v6825 = vunpack.c.h.b16 %v4261
    %v6826 = vunpack.c.l.b16 %v4262
    %v6827 = vunpack.c.l.b16 %v4263
    %v6828 = vunpack.c.h.b16 %v4263
    %v6829 = vunpack.c.l.b16 %v4264
    %v6830 = vunpack.c.l.b16 %v4265
    %v6831 = vunpack.c.h.b16 %v4265
    %v6832 = vunpack.c.l.b16 %v4266
    %v6833 = vunpack.c.l.b16 %v4267
    %v6834 = vunpack.c.h.b16 %v4267
    %v6835 = vunpack.c.l.b16 %v4268
    %v6836 = vunpack.c.l.b16 %v4269
    %v6837 = vunpack.c.h.b16 %v4269
    %v6838 = vunpack.c.l.b16 %v4270
    %v6839 = vunpack.c.l.b16 %v4271
    %v6840 = vunpack.c.h.b16 %v4271
    %v6841 = vunpack.c.l.b16 %v4272
    %v6842 = vunpack.c.l.b16 %v4273
    %v6843 = vunpack.c.h.b16 %v4273
    %v6844 = vunpack.c.l.b16 %v4274
    %v6845 = vunpack.c.l.b16 %v4275
    %v6846 = vunpack.c.h.b16 %v4275
    %v6847 = vunpack.c.l.b16 %v4276
    %v6848 = vunpack.c.l.b16 %v4277
    %v6849 = vunpack.c.h.b16 %v4277
    %v6850 = vunpack.c.l.b16 %v4278
    %v6851 = vunpack.c.l.b16 %v4279
    %v6852 = vunpack.c.h.b16 %v4279
    %v6853 = vunpack.c.l.b16 %v4280
    %v6854 = vunpack.c.l.b16 %v4281
    %v6855 = vunpack.c.h.b16 %v4281
    %v6856 = vunpack.c.l.b16 %v4282
    %v6857 = vunpack.c.l.b16 %v4283
    %v6858 = vunpack.c.h.b16 %v4283
    %v6859 = vunpack.c.l.b16 %v4284
    %v6860 = vunpack.c.l.b16 %v4285
    %v6861 = vunpack.c.h.b16 %v4285
    %v6862 = vunpack.c.l.b16 %v4286
    %v6863 = vunpack.c.l.b16 %v4287
    %v6864 = vunpack.c.h.b16 %v4287
    %v6865 = vunpack.c.l.b16 %v4288
    %v6866 = vunpack.c.l.b16 %v4289
    %v6867 = vunpack.c.h.b16 %v4289
    %v6868 = vunpack.c.l.b16 %v4290
    %v6869 = vunpack.c.l.b16 %v4291
    %v6870 = vunpack.c.h.b16 %v4291
    %v6871 = vunpack.c.l.b16 %v4292
    %v6872 = vunpack.c.l.b16 %v4293
    %v6873 = vunpack.c.h.b16 %v4293
    %v6874 = vunpack.c.l.b16 %v4294
    %v6875 = vunpack.c.l.b16 %v4295
    %v6876 = vunpack.c.h.b16 %v4295
    %v6877 = vunpack.c.l.b16 %v4296
    %v6878 = vunpack.c.l.b16 %v4297
    %v6879 = vunpack.c.h.b16 %v4297
    %v6880 = vunpack.c.l.b16 %v4298
    %v6881 = vunpack.c.l.b16 %v4299
    %v6882 = vunpack.c.h.b16 %v4299
    %v6883 = vunpack.c.l.b16 %v4300
    %v6884 = vunpack.c.l.b16 %v4301
    %v6885 = vunpack.c.h.b16 %v4301
    %v6886 = vunpack.c.l.b16 %v4302
    %v6887 = vunpack.c.l.b16 %v4303
    %v6888 = vunpack.c.h.b16 %v4303
    %v6889 = vunpack.c.l.b16 %v4304
    %v6890 = vunpack.c.l.b16 %v4305
    %v6891 = vunpack.c.h.b16 %v4305
    %v6892 = vunpack.c.l.b16 %v4306
    %v6893 = vunpack.c.l.b16 %v4307
    %v6894 = vunpack.c.h.b16 %v4307
    %v6895 = vunpack.c.l.b16 %v4308
    %v6896 = vunpack.c.l.b16 %v4309
    %v6897 = vunpack.c.h.b16 %v4309
    %v6898 = vunpack.c.l.b16 %v4310
    %v6899 = vunpack.c.l.b16 %v4311
    %v6900 = vunpack.c.h.b16 %v4311
    %v6901 = vunpack.c.l.b16 %v4312
    %v6902 = vunpack.c.l.b16 %v4313
    %v6903 = vunpack.c.h.b16 %v4313
    %v6904 = vunpack.c.l.b16 %v4314
    %v6905 = vunpack.c.l.b16 %v4315
    %v6906 = vunpack.c.h.b16 %v4315
    %v6907 = vunpack.c.l.b16 %v4316
    %v6908 = vunpack.c.l.b16 %v4317
    %v6909 = vunpack.c.h.b16 %v4317
    %v6910 = vunpack.c.l.b16 %v4318
    %v6911 = vunpack.c.l.b16 %v4319
    %v6912 = vunpack.c.h.b16 %v4319
    %v6913 = vunpack.c.l.b16 %v4320
    %v6914 = vunpack.c.l.b16 %v4321
    %v6915 = vunpack.c.h.b16 %v4321
    %v6916 = vunpack.c.l.b16 %v4322
    %v6917 = vunpack.c.l.b16 %v4323
    %v6918 = vunpack.c.h.b16 %v4323
    %v6919 = vunpack.c.l.b16 %v4324
    %v6920 = vunpack.c.l.b16 %v4325
    %v6921 = vunpack.c.h.b16 %v4325
    %v6922 = vunpack.c.l.b16 %v4326
    %v6923 = vunpack.c.l.b16 %v4327
    %v6924 = vunpack.c.h.b16 %v4327
    %v6925 = vunpack.c.l.b16 %v4328
    %v6926 = vunpack.c.l.b16 %v4329
    %v6927 = vunpack.c.h.b16 %v4329
    %v6928 = vunpack.c.l.b16 %v4330
    %v6929 = vunpack.c.l.b16 %v4331
    %v6930 = vunpack.c.h.b16 %v4331
    %v6931 = vunpack.c.l.b16 %v4332
    %v6932 = vunpack.c.l.b16 %v4333
    %v6933 = vunpack.c.h.b16 %v4333
    %v6934 = vunpack.c.l.b16 %v4334
    %v6935 = vunpack.c.l.b16 %v4335
    %v6936 = vunpack.c.h.b16 %v4335
    %v6937 = vunpack.c.l.b16 %v4336
    %v6938 = vunpack.c.l.b16 %v4337
    %v6939 = vunpack.c.h.b16 %v4337
    %v6940 = vunpack.c.l.b16 %v4338
    %v6941 = vunpack.c.l.b16 %v4339
    %v6942 = vunpack.c.h.b16 %v4339
    %v6943 = vunpack.c.l.b16 %v4340
    %v6944 = vunpack.c.l.b16 %v4341
    %v6945 = vunpack.c.h.b16 %v4341
    %v6946 = vunpack.c.l.b16 %v4342
    %v6947 = vunpack.c.l.b16 %v4343
    %v6948 = vunpack.c.h.b16 %v4343
    %v6949 = vunpack.c.l.b16 %v4344
    %v6950 = vunpack.c.l.b16 %v4345
    %v6951 = vunpack.c.h.b16 %v4345
    %v6952 = vunpack.c.l.b16 %v4346
    %v6953 = vunpack.c.l.b16 %v4347
    %v6954 = vunpack.c.h.b16 %v4347
    %v6955 = vunpack.c.l.b16 %v4348
    %v6956 = vunpack.c.l.b16 %v4349
    %v6957 = vunpack.c.h.b16 %v4349
    %v6958 = vunpack.c.l.b16 %v4350
    %v6959 = vunpack.c.l.b16 %v4351
    %v6960 = vunpack.c.h.b16 %v4351
    %v6961 = vunpack.c.l.b16 %v4352
    %v6962 = vunpack.c.l.b16 %v4353
    %v6963 = vunpack.c.h.b16 %v4353
    %v6964 = vunpack.c.l.b16 %v4354
    %v6965 = vunpack.c.l.b16 %v4355
    %v6966 = vunpack.c.h.b16 %v4355
    %v6967 = vunpack.c.l.b16 %v4356
    %v6968 = vunpack.c.l.b16 %v4357
    %v6969 = vunpack.c.h.b16 %v4357
    %v6970 = vunpack.c.l.b16 %v4358
    %v6971 = vunpack.c.l.b16 %v4359
    %v6972 = vunpack.c.h.b16 %v4359
    %v6973 = vunpack.c.l.b16 %v4360
    %v6974 = vunpack.c.l.b16 %v4361
    %v6975 = vunpack.c.h.b16 %v4361
    %v6976 = vunpack.c.l.b16 %v4362
    %v6977 = vunpack.c.l.b16 %v4363
    %v6978 = vunpack.c.h.b16 %v4363
    %v6979 = vunpack.c.l.b16 %v4364
    %v6980 = vunpack.c.l.b16 %v4365
    %v6981 = vunpack.c.h.b16 %v4365
    %v6982 = vunpack.c.l.b16 %v4366
    %v6983 = vunpack.c.l.b16 %v4367
    %v6984 = vunpack.c.h.b16 %v4367
    %v6985 = vunpack.c.l.b16 %v4368
    %v6986 = vunpack.c.l.b16 %v4369
    %v6987 = vunpack.c.h.b16 %v4369
    %v6988 = vunpack.c.l.b16 %v4370
    %v6989 = vunpack.c.l.b16 %v4371
    %v6990 = vunpack.c.h.b16 %v4371
    %v6991 = vunpack.c.l.b16 %v4372
    %v6992 = vunpack.c.l.b16 %v4373
    %v6993 = vunpack.c.h.b16 %v4373
    %v6994 = vunpack.c.l.b16 %v4374
    %v6995 = vunpack.c.l.b16 %v4375
    %v6996 = vunpack.c.h.b16 %v4375
    %v6997 = vunpack.c.l.b16 %v4376
    %v6998 = vunpack.c.l.b16 %v4377
    %v6999 = vunpack.c.h.b16 %v4377
    %v7000 = vunpack.c.l.b16 %v4378
    %v7001 = vunpack.c.l.b16 %v4379
    %v7002 = vunpack.c.h.b16 %v4379
    %v7003 = vunpack.c.l.b16 %v4380
    %v7004 = vunpack.c.l.b16 %v4381
    %v7005 = vunpack.c.h.b16 %v4381
    %v7006 = vunpack.c.l.b16 %v4382
    %v7007 = vunpack.c.l.b16 %v4383
    %v7008 = vunpack.c.h.b16 %v4383
    %v7009 = vunpack.c.l.b16 %v4384
    %v7010 = vunpack.c.l.b16 %v4385
    %v7011 = vunpack.c.h.b16 %v4385
    %v7012 = vunpack.c.l.b16 %v4386
    %v7013 = vunpack.c.l.b16 %v4387
    %v7014 = vunpack.c.h.b16 %v4387
    %v7015 = vunpack.c.l.b16 %v4388
    %v7016 = vunpack.c.l.b16 %v4389
    %v7017 = vunpack.c.h.b16 %v4389
    %v7018 = vunpack.c.l.b16 %v4390
    %v7019 = vunpack.c.l.b16 %v4391
    %v7020 = vunpack.c.h.b16 %v4391
    %v7021 = vunpack.c.l.b16 %v4392
    %v7022 = vunpack.c.l.b16 %v4393
    %v7023 = vunpack.c.h.b16 %v4393
    %v7024 = vunpack.c.l.b16 %v4394
    %v7025 = vunpack.c.l.b16 %v4395
    %v7026 = vunpack.c.h.b16 %v4395
    %v7027 = vunpack.c.l.b16 %v4396
    %v7028 = vunpack.c.l.b16 %v4397
    %v7029 = vunpack.c.h.b16 %v4397
    %v7030 = vunpack.c.l.b16 %v4398
    %v7031 = vunpack.c.l.b16 %v4399
    %v7032 = vunpack.c.h.b16 %v4399
    %v7033 = vunpack.c.l.b16 %v4400
    %v7034 = vunpack.c.l.b16 %v4401
    %v7035 = vunpack.c.h.b16 %v4401
    %v7036 = vunpack.c.l.b16 %v4402
    %v7037 = vunpack.c.l.b16 %v4403
    %v7038 = vunpack.c.h.b16 %v4403
    %v7039 = vunpack.c.l.b16 %v4404
    %v7040 = vunpack.c.l.b16 %v4405
    %v7041 = vunpack.c.h.b16 %v4405
    %v7042 = vunpack.c.l.b16 %v4406
    %v7043 = vunpack.c.l.b16 %v4407
    %v7044 = vunpack.c.h.b16 %v4407
    %v7045 = vunpack.c.l.b16 %v4408
    %v7046 = vunpack.c.l.b16 %v4409
    %v7047 = vunpack.c.h.b16 %v4409
    %v7048 = vunpack.c.l.b16 %v4410
    %v7049 = vunpack.c.l.b16 %v4411
    %v7050 = vunpack.c.h.b16 %v4411
    %v7051 = vunpack.c.l.b16 %v4412
    %v7052 = vunpack.c.l.b16 %v4413
    %v7053 = vunpack.c.h.b16 %v4413
    %v7054 = vunpack.c.l.b16 %v4414
    %v7055 = vpack.c.b16 %v5474, %v5471
    %v7056 = vpack.c.b16 %v5475, %v5472
    %v7057 = vpack.c.b16 %v5476, %v5473
    %v7058 = vpack.c.b16 %v5480, %v5477
    %v7059 = vpack.c.b16 %v5481, %v5478
    %v7060 = vpack.c.b16 %v5482, %v5479
    %v7061 = vpack.c.b16 %v5486, %v5483
    %v7062 = vpack.c.b16 %v5487, %v5484
    %v7063 = vpack.c.b16 %v5488, %v5485
    %v7064 = vpack.c.b16 %v5492, %v5489
    %v7065 = vpack.c.b16 %v5493, %v5490
    %v7066 = vpack.c.b16 %v5494, %v5491
    %v7067 = vpack.c.b16 %v5498, %v5495
    %v7068 = vpack.c.b16 %v5499, %v5496
    %v7069 = vpack.c.b16 %v5500, %v5497
    %v7070 = vpack.c.b16 %v5504, %v5501
    %v7071 = vpack.c.b16 %v5505, %v5502
    %v7072 = vpack.c.b16 %v5506, %v5503
    %v7073 = vpack.c.b16 %v5510, %v5507
    %v7074 = vpack.c.b16 %v5511, %v5508
    %v7075 = vpack.c.b16 %v5512, %v5509
    %v7076 = vpack.c.b16 %v5516, %v5513
    %v7077 = vpack.c.b16 %v5517, %v5514
    %v7078 = vpack.c.b16 %v5518, %v5515
    %v7079 = vpack.c.b16 %v5522, %v5519
    %v7080 = vpack.c.b16 %v5523, %v5520
    %v7081 = vpack.c.b16 %v5524, %v5521
    %v7082 = vpack.c.b16 %v5528, %v5525
    %v7083 = vpack.c.b16 %v5529, %v5526
    %v7084 = vpack.c.b16 %v5530, %v5527
    %v7085 = vpack.c.b16 %v5534, %v5531
    %v7086 = vpack.c.b16 %v5535, %v5532
    %v7087 = vpack.c.b16 %v5536, %v5533
    %v7088 = vpack.c.b16 %v5540, %v5537
    %v7089 = vpack.c.b16 %v5541, %v5538
    %v7090 = vpack.c.b16 %v5542, %v5539
    %v7091 = vpack.c.b16 %v5546, %v5543
    %v7092 = vpack.c.b16 %v5547, %v5544
    %v7093 = vpack.c.b16 %v5548, %v5545
    %v7094 = vpack.c.b16 %v5552, %v5549
    %v7095 = vpack.c.b16 %v5553, %v5550
    %v7096 = vpack.c.b16 %v5554, %v5551
    %v7097 = vpack.c.b16 %v5558, %v5555
    %v7098 = vpack.c.b16 %v5559, %v5556
    %v7099 = vpack.c.b16 %v5560, %v5557
    %v7100 = vpack.c.b16 %v5564, %v5561
    %v7101 = vpack.c.b16 %v5565, %v5562
    %v7102 = vpack.c.b16 %v5566, %v5563
    %v7103 = vpack.c.b16 %v5570, %v5567
    %v7104 = vpack.c.b16 %v5571, %v5568
    %v7105 = vpack.c.b16 %v5572, %v5569
    %v7106 = vpack.c.b16 %v5576, %v5573
    %v7107 = vpack.c.b16 %v5577, %v5574
    %v7108 = vpack.c.b16 %v5578, %v5575
    %v7109 = vpack.c.b16 %v5582, %v5579
    %v7110 = vpack.c.b16 %v5583, %v5580
    %v7111 = vpack.c.b16 %v5584, %v5581
    %v7112 = vpack.c.b16 %v5588, %v5585
    %v7113 = vpack.c.b16 %v5589, %v5586
    %v7114 = vpack.c.b16 %v5590, %v5587
    %v7115 = vpack.c.b16 %v5594, %v5591
    %v7116 = vpack.c.b16 %v5595, %v5592
    %v7117 = vpack.c.b16 %v5596, %v5593
    %v7118 = vpack.c.b16 %v5600, %v5597
    %v7119 = vpack.c.b16 %v5601, %v5598
    %v7120 = vpack.c.b16 %v5602, %v5599
    %v7121 = vpack.c.b16 %v5606, %v5603
    %v7122 = vpack.c.b16 %v5607, %v5604
    %v7123 = vpack.c.b16 %v5608, %v5605
    %v7124 = vpack.c.b16 %v5612, %v5609
    %v7125 = vpack.c.b16 %v5613, %v5610
    %v7126 = vpack.c.b16 %v5614, %v5611
    %v7127 = vpack.c.b16 %v5618, %v5615
    %v7128 = vpack.c.b16 %v5619, %v5616
    %v7129 = vpack.c.b16 %v5620, %v5617
    %v7130 = vpack.c.b16 %v5624, %v5621
    %v7131 = vpack.c.b16 %v5625, %v5622
    %v7132 = vpack.c.b16 %v5626, %v5623
    %v7133 = vpack.c.b16 %v5630, %v5627
    %v7134 = vpack.c.b16 %v5631, %v5628
    %v7135 = vpack.c.b16 %v5632, %v5629
    %v7136 = vpack.c.b16 %v5636, %v5633
    %v7137 = vpack.c.b16 %v5637, %v5634
    %v7138 = vpack.c.b16 %v5638, %v5635
    %v7139 = vpack.c.b16 %v5642, %v5639
    %v7140 = vpack.c.b16 %v5643, %v5640
    %v7141 = vpack.c.b16 %v5644, %v5641
    %v7142 = vpack.c.b16 %v5648, %v5645
    %v7143 = vpack.c.b16 %v5649, %v5646
    %v7144 = vpack.c.b16 %v5650, %v5647
    %v7145 = vpack.c.b16 %v5654, %v5651
    %v7146 = vpack.c.b16 %v5655, %v5652
    %v7147 = vpack.c.b16 %v5656, %v5653
    %v7148 = vpack.c.b16 %v5660, %v5657
    %v7149 = vpack.c.b16 %v5661, %v5658
    %v7150 = vpack.c.b16 %v5662, %v5659
    %v7151 = vpack.c.b16 %v5666, %v5663
    %v7152 = vpack.c.b16 %v5667, %v5664
    %v7153 = vpack.c.b16 %v5668, %v5665
    %v7154 = vpack.c.b16 %v5672, %v5669
    %v7155 = vpack.c.b16 %v5673, %v5670
    %v7156 = vpack.c.b16 %v5674, %v5671
    %v7157 = vpack.c.b16 %v5678, %v5675
    %v7158 = vpack.c.b16 %v5679, %v5676
    %v7159 = vpack.c.b16 %v5680, %v5677
    %v7160 = vpack.c.b16 %v5684, %v5681
    %v7161 = vpack.c.b16 %v5685, %v5682
    %v7162 = vpack.c.b16 %v5686, %v5683
    %v7163 = vpack.c.b16 %v5690, %v5687
    %v7164 = vpack.c.b16 %v5691, %v5688
    %v7165 = vpack.c.b16 %v5692, %v5689
    %v7166 = vpack.c.b16 %v5696, %v5693
    %v7167 = vpack.c.b16 %v5697, %v5694
    %v7168 = vpack.c.b16 %v5698, %v5695
    %v7169 = vpack.c.b16 %v5702, %v5699
    %v7170 = vpack.c.b16 %v5703, %v5700
    %v7171 = vpack.c.b16 %v5704, %v5701
    %v7172 = vpack.c.b16 %v5708, %v5705
    %v7173 = vpack.c.b16 %v5709, %v5706
    %v7174 = vpack.c.b16 %v5710, %v5707
    %v7175 = vpack.c.b16 %v5714, %v5711
    %v7176 = vpack.c.b16 %v5715, %v5712
    %v7177 = vpack.c.b16 %v5716, %v5713
    %v7178 = vpack.c.b16 %v5720, %v5717
    %v7179 = vpack.c.b16 %v5721, %v5718
    %v7180 = vpack.c.b16 %v5722, %v5719
    %v7181 = vpack.c.b16 %v5726, %v5723
    %v7182 = vpack.c.b16 %v5727, %v5724
    %v7183 = vpack.c.b16 %v5728, %v5725
    %v7184 = vpack.c.b16 %v5732, %v5729
    %v7185 = vpack.c.b16 %v5733, %v5730
    %v7186 = vpack.c.b16 %v5734, %v5731
    %v7187 = vpack.c.b16 %v5738, %v5735
    %v7188 = vpack.c.b16 %v5739, %v5736
    %v7189 = vpack.c.b16 %v5740, %v5737
    %v7190 = vpack.c.b16 %v5744, %v5741
    %v7191 = vpack.c.b16 %v5745, %v5742
    %v7192 = vpack.c.b16 %v5746, %v5743
    %v7193 = vpack.c.b16 %v5750, %v5747
    %v7194 = vpack.c.b16 %v5751, %v5748
    %v7195 = vpack.c.b16 %v5752, %v5749
    %v7196 = vpack.c.b16 %v5756, %v5753
    %v7197 = vpack.c.b16 %v5757, %v5754
    %v7198 = vpack.c.b16 %v5758, %v5755
    %v7199 = vpack.c.b16 %v5762, %v5759
    %v7200 = vpack.c.b16 %v5763, %v5760
    %v7201 = vpack.c.b16 %v5764, %v5761
    %v7202 = vpack.c.b16 %v5768, %v5765
    %v7203 = vpack.c.b16 %v5769, %v5766
    %v7204 = vpack.c.b16 %v5770, %v5767
    %v7205 = vpack.c.b16 %v5774, %v5771
    %v7206 = vpack.c.b16 %v5775, %v5772
    %v7207 = vpack.c.b16 %v5776, %v5773
    %v7208 = vpack.c.b16 %v5780, %v5777
    %v7209 = vpack.c.b16 %v5781, %v5778
    %v7210 = vpack.c.b16 %v5782, %v5779
    %v7211 = vpack.c.b16 %v5786, %v5783
    %v7212 = vpack.c.b16 %v5787, %v5784
    %v7213 = vpack.c.b16 %v5788, %v5785
    %v7214 = vpack.c.b16 %v5792, %v5789
    %v7215 = vpack.c.b16 %v5793, %v5790
    %v7216 = vpack.c.b16 %v5794, %v5791
    %v7217 = vpack.c.b16 %v5798, %v5795
    %v7218 = vpack.c.b16 %v5799, %v5796
    %v7219 = vpack.c.b16 %v5800, %v5797
    %v7220 = vpack.c.b16 %v5804, %v5801
    %v7221 = vpack.c.b16 %v5805, %v5802
    %v7222 = vpack.c.b16 %v5806, %v5803
    %v7223 = vpack.c.b16 %v5810, %v5807
    %v7224 = vpack.c.b16 %v5811, %v5808
    %v7225 = vpack.c.b16 %v5812, %v5809
    %v7226 = vpack.c.b16 %v5816, %v5813
    %v7227 = vpack.c.b16 %v5817, %v5814
    %v7228 = vpack.c.b16 %v5818, %v5815
    %v7229 = vpack.c.b16 %v5822, %v5819
    %v7230 = vpack.c.b16 %v5823, %v5820
    %v7231 = vpack.c.b16 %v5824, %v5821
    %v7232 = vpack.c.b16 %v5828, %v5825
    %v7233 = vpack.c.b16 %v5829, %v5826
    %v7234 = vpack.c.b16 %v5830, %v5827
    %v7235 = vpack.c.b16 %v5834, %v5831
    %v7236 = vpack.c.b16 %v5835, %v5832
    %v7237 = vpack.c.b16 %v5836, %v5833
    %v7238 = vpack.c.b16 %v5840, %v5837
    %v7239 = vpack.c.b16 %v5841, %v5838
    %v7240 = vpack.c.b16 %v5842, %v5839
    %v7241 = vpack.c.b16 %v5846, %v5843
    %v7242 = vpack.c.b16 %v5847, %v5844
    %v7243 = vpack.c.b16 %v5848, %v5845
    %v7244 = vpack.c.b16 %v5852, %v5849
    %v7245 = vpack.c.b16 %v5853, %v5850
    %v7246 = vpack.c.b16 %v5854, %v5851
    %v7247 = vpack.c.b16 %v5858, %v5855
    %v7248 = vpack.c.b16 %v5859, %v5856
    %v7249 = vpack.c.b16 %v5860, %v5857
    %v7250 = vpack.c.b16 %v5864, %v5861
    %v7251 = vpack.c.b16 %v5865, %v5862
    %v7252 = vpack.c.b16 %v5866, %v5863
    %v7253 = vpack.c.b16 %v5870, %v5867
    %v7254 = vpack.c.b16 %v5871, %v5868
    %v7255 = vpack.c.b16 %v5872, %v5869
    %v7256 = vpack.c.b16 %v5876, %v5873
    %v7257 = vpack.c.b16 %v5877, %v5874
    %v7258 = vpack.c.b16 %v5878, %v5875
    %v7259 = vpack.c.b16 %v5882, %v5879
    %v7260 = vpack.c.b16 %v5883, %v5880
    %v7261 = vpack.c.b16 %v5884, %v5881
    %v7262 = vpack.c.b16 %v5888, %v5885
    %v7263 = vpack.c.b16 %v5889, %v5886
    %v7264 = vpack.c.b16 %v5890, %v5887
    %v7265 = vpack.c.b16 %v5894, %v5891
    %v7266 = vpack.c.b16 %v5895, %v5892
    %v7267 = vpack.c.b16 %v5896, %v5893
    %v7268 = vpack.c.b16 %v5900, %v5897
    %v7269 = vpack.c.b16 %v5901, %v5898
    %v7270 = vpack.c.b16 %v5902, %v5899
    %v7271 = vpack.c.b16 %v5906, %v5903
    %v7272 = vpack.c.b16 %v5907, %v5904
    %v7273 = vpack.c.b16 %v5908, %v5905
    %v7274 = vpack.c.b16 %v5912, %v5909
    %v7275 = vpack.c.b16 %v5913, %v5910
    %v7276 = vpack.c.b16 %v5914, %v5911
    %v7277 = vpack.c.b16 %v5918, %v5915
    %v7278 = vpack.c.b16 %v5919, %v5916
    %v7279 = vpack.c.b16 %v5920, %v5917
    %v7280 = vpack.c.b16 %v5924, %v5921
    %v7281 = vpack.c.b16 %v5925, %v5922
    %v7282 = vpack.c.b16 %v5926, %v5923
    %v7283 = vpack.c.b16 %v5930, %v5927
    %v7284 = vpack.c.b16 %v5931, %v5928
    %v7285 = vpack.c.b16 %v5932, %v5929
    %v7286 = vpack.c.b16 %v5936, %v5933
    %v7287 = vpack.c.b16 %v5937, %v5934
    %v7288 = vpack.c.b16 %v5938, %v5935
    %v7289 = vpack.c.b16 %v5942, %v5939
    %v7290 = vpack.c.b16 %v5943, %v5940
    %v7291 = vpack.c.b16 %v5944, %v5941
    %v7292 = vpack.c.b16 %v5948, %v5945
    %v7293 = vpack.c.b16 %v5949, %v5946
    %v7294 = vpack.c.b16 %v5950, %v5947
    %v7295 = vpack.c.b16 %v5954, %v5951
    %v7296 = vpack.c.b16 %v5955, %v5952
    %v7297 = vpack.c.b16 %v5956, %v5953
    %v7298 = vpack.c.b16 %v5960, %v5957
    %v7299 = vpack.c.b16 %v5961, %v5958
    %v7300 = vpack.c.b16 %v5962, %v5959
    %v7301 = vpack.c.b16 %v5966, %v5963
    %v7302 = vpack.c.b16 %v5967, %v5964
    %v7303 = vpack.c.b16 %v5968, %v5965
    %v7304 = vpack.c.b16 %v5972, %v5969
    %v7305 = vpack.c.b16 %v5973, %v5970
    %v7306 = vpack.c.b16 %v5974, %v5971
    %v7307 = vpack.c.b16 %v5978, %v5975
    %v7308 = vpack.c.b16 %v5979, %v5976
    %v7309 = vpack.c.b16 %v5980, %v5977
    %v7310 = vpack.c.b16 %v5984, %v5981
    %v7311 = vpack.c.b16 %v5985, %v5982
    %v7312 = vpack.c.b16 %v5986, %v5983
    %v7313 = vpack.c.b16 %v5990, %v5987
    %v7314 = vpack.c.b16 %v5991, %v5988
    %v7315 = vpack.c.b16 %v5992, %v5989
    %v7316 = vpack.c.b16 %v5996, %v5993
    %v7317 = vpack.c.b16 %v5997, %v5994
    %v7318 = vpack.c.b16 %v5998, %v5995
    %v7319 = vpack.c.b16 %v6002, %v5999
    %v7320 = vpack.c.b16 %v6003, %v6000
    %v7321 = vpack.c.b16 %v6004, %v6001
    %v7322 = vpack.c.b16 %v6008, %v6005
    %v7323 = vpack.c.b16 %v6009, %v6006
    %v7324 = vpack.c.b16 %v6010, %v6007
    %v7325 = vpack.c.b16 %v6014, %v6011
    %v7326 = vpack.c.b16 %v6015, %v6012
    %v7327 = vpack.c.b16 %v6016, %v6013
    %v7328 = vpack.c.b16 %v6020, %v6017
    %v7329 = vpack.c.b16 %v6021, %v6018
    %v7330 = vpack.c.b16 %v6022, %v6019
    %v7331 = vpack.c.b16 %v6026, %v6023
    %v7332 = vpack.c.b16 %v6027, %v6024
    %v7333 = vpack.c.b16 %v6028, %v6025
    %v7334 = vpack.c.b16 %v6032, %v6029
    %v7335 = vpack.c.b16 %v6033, %v6030
    %v7336 = vpack.c.b16 %v6034, %v6031
    %v7337 = vpack.c.b16 %v6038, %v6035
    %v7338 = vpack.c.b16 %v6039, %v6036
    %v7339 = vpack.c.b16 %v6040, %v6037
    %v7340 = vpack.c.b16 %v6044, %v6041
    %v7341 = vpack.c.b16 %v6045, %v6042
    %v7342 = vpack.c.b16 %v6046, %v6043
    %v7343 = vpack.c.b16 %v6050, %v6047
    %v7344 = vpack.c.b16 %v6051, %v6048
    %v7345 = vpack.c.b16 %v6052, %v6049
    %v7346 = vpack.c.b16 %v6056, %v6053
    %v7347 = vpack.c.b16 %v6057, %v6054
    %v7348 = vpack.c.b16 %v6058, %v6055
    %v7349 = vpack.c.b16 %v6062, %v6059
    %v7350 = vpack.c.b16 %v6063, %v6060
    %v7351 = vpack.c.b16 %v6064, %v6061
    %v7352 = vpack.c.b16 %v6068, %v6065
    %v7353 = vpack.c.b16 %v6069, %v6066
    %v7354 = vpack.c.b16 %v6070, %v6067
    %v7355 = vpack.c.b16 %v6074, %v6071
    %v7356 = vpack.c.b16 %v6075, %v6072
    %v7357 = vpack.c.b16 %v6076, %v6073
    %v7358 = vpack.c.b16 %v6080, %v6077
    %v7359 = vpack.c.b16 %v6081, %v6078
    %v7360 = vpack.c.b16 %v6082, %v6079
    %v7361 = vpack.c.b16 %v6086, %v6083
    %v7362 = vpack.c.b16 %v6087, %v6084
    %v7363 = vpack.c.b16 %v6088, %v6085
    %v7364 = vpack.c.b16 %v6092, %v6089
    %v7365 = vpack.c.b16 %v6093, %v6090
    %v7366 = vpack.c.b16 %v6094, %v6091
    %v7367 = vpack.c.b16 %v6098, %v6095
    %v7368 = vpack.c.b16 %v6099, %v6096
    %v7369 = vpack.c.b16 %v6100, %v6097
    %v7370 = vpack.c.b16 %v6104, %v6101
    %v7371 = vpack.c.b16 %v6105, %v6102
    %v7372 = vpack.c.b16 %v6106, %v6103
    %v7373 = vpack.c.b16 %v6110, %v6107
    %v7374 = vpack.c.b16 %v6111, %v6108
    %v7375 = vpack.c.b16 %v6112, %v6109
    %v7376 = vpack.c.b16 %v6116, %v6113
    %v7377 = vpack.c.b16 %v6117, %v6114
    %v7378 = vpack.c.b16 %v6118, %v6115
    %v7379 = vpack.c.b16 %v6122, %v6119
    %v7380 = vpack.c.b16 %v6123, %v6120
    %v7381 = vpack.c.b16 %v6124, %v6121
    %v7382 = vpack.c.b16 %v6128, %v6125
    %v7383 = vpack.c.b16 %v6129, %v6126
    %v7384 = vpack.c.b16 %v6130, %v6127
    %v7385 = vpack.c.b16 %v6134, %v6131
    %v7386 = vpack.c.b16 %v6135, %v6132
    %v7387 = vpack.c.b16 %v6136, %v6133
    %v7388 = vpack.c.b16 %v6140, %v6137
    %v7389 = vpack.c.b16 %v6141, %v6138
    %v7390 = vpack.c.b16 %v6142, %v6139
    %v7391 = vpack.c.b16 %v6146, %v6143
    %v7392 = vpack.c.b16 %v6147, %v6144
    %v7393 = vpack.c.b16 %v6148, %v6145
    %v7394 = vpack.c.b16 %v6152, %v6149
    %v7395 = vpack.c.b16 %v6153, %v6150
    %v7396 = vpack.c.b16 %v6154, %v6151
    %v7397 = vpack.c.b16 %v6158, %v6155
    %v7398 = vpack.c.b16 %v6159, %v6156
    %v7399 = vpack.c.b16 %v6160, %v6157
    %v7400 = vpack.c.b16 %v6164, %v6161
    %v7401 = vpack.c.b16 %v6165, %v6162
    %v7402 = vpack.c.b16 %v6166, %v6163
    %v7403 = vpack.c.b16 %v6170, %v6167
    %v7404 = vpack.c.b16 %v6171, %v6168
    %v7405 = vpack.c.b16 %v6172, %v6169
    %v7406 = vpack.c.b16 %v6176, %v6173
    %v7407 = vpack.c.b16 %v6177, %v6174
    %v7408 = vpack.c.b16 %v6178, %v6175
    %v7409 = vpack.c.b16 %v6182, %v6179
    %v7410 = vpack.c.b16 %v6183, %v6180
    %v7411 = vpack.c.b16 %v6184, %v6181
    %v7412 = vpack.c.b16 %v6188, %v6185
    %v7413 = vpack.c.b16 %v6189, %v6186
    %v7414 = vpack.c.b16 %v6190, %v6187
    %v7415 = vpack.c.b16 %v6194, %v6191
    %v7416 = vpack.c.b16 %v6195, %v6192
    %v7417 = vpack.c.b16 %v6196, %v6193
    %v7418 = vpack.c.b16 %v6200, %v6197
    %v7419 = vpack.c.b16 %v6201, %v6198
    %v7420 = vpack.c.b16 %v6202, %v6199
    %v7421 = vpack.c.b16 %v6206, %v6203
    %v7422 = vpack.c.b16 %v6207, %v6204
    %v7423 = vpack.c.b16 %v6208, %v6205
    %v7424 = vpack.c.b16 %v6212, %v6209
    %v7425 = vpack.c.b16 %v6213, %v6210
    %v7426 = vpack.c.b16 %v6214, %v6211
    %v7427 = vpack.c.b16 %v6218, %v6215
    %v7428 = vpack.c.b16 %v6219, %v6216
    %v7429 = vpack.c.b16 %v6220, %v6217
    %v7430 = vpack.c.b16 %v6224, %v6221
    %v7431 = vpack.c.b16 %v6225, %v6222
    %v7432 = vpack.c.b16 %v6226, %v6223
    %v7433 = vpack.c.b16 %v6230, %v6227
    %v7434 = vpack.c.b16 %v6231, %v6228
    %v7435 = vpack.c.b16 %v6232, %v6229
    %v7436 = vpack.c.b16 %v6236, %v6233
    %v7437 = vpack.c.b16 %v6237, %v6234
    %v7438 = vpack.c.b16 %v6238, %v6235
    %v7439 = vpack.c.b16 %v6242, %v6239
    %v7440 = vpack.c.b16 %v6243, %v6240
    %v7441 = vpack.c.b16 %v6244, %v6241
    %v7442 = vpack.c.b16 %v6248, %v6245
    %v7443 = vpack.c.b16 %v6249, %v6246
    %v7444 = vpack.c.b16 %v6250, %v6247
    %v7445 = vpack.c.b16 %v6254, %v6251
    %v7446 = vpack.c.b16 %v6255, %v6252
    %v7447 = vpack.c.b16 %v6256, %v6253
    %v7448 = vpack.c.b16 %v6260, %v6257
    %v7449 = vpack.c.b16 %v6261, %v6258
    %v7450 = vpack.c.b16 %v6262, %v6259
    %v7451 = vpack.c.b16 %v6266, %v6263
    %v7452 = vpack.c.b16 %v6267, %v6264
    %v7453 = vpack.c.b16 %v6268, %v6265
    %v7454 = vpack.c.b16 %v6272, %v6269
    %v7455 = vpack.c.b16 %v6273, %v6270
    %v7456 = vpack.c.b16 %v6274, %v6271
    %v7457 = vpack.c.b16 %v6278, %v6275
    %v7458 = vpack.c.b16 %v6279, %v6276
    %v7459 = vpack.c.b16 %v6280, %v6277
    %v7460 = vpack.c.b16 %v6284, %v6281
    %v7461 = vpack.c.b16 %v6285, %v6282
    %v7462 = vpack.c.b16 %v6286, %v6283
    %v7463 = vpack.c.b16 %v6290, %v6287
    %v7464 = vpack.c.b16 %v6291, %v6288
    %v7465 = vpack.c.b16 %v6292, %v6289
    %v7466 = vpack.c.b16 %v6296, %v6293
    %v7467 = vpack.c.b16 %v6297, %v6294
    %v7468 = vpack.c.b16 %v6298, %v6295
    %v7469 = vpack.c.b16 %v6302, %v6299
    %v7470 = vpack.c.b16 %v6303, %v6300
    %v7471 = vpack.c.b16 %v6304, %v6301
    %v7472 = vpack.c.b16 %v6308, %v6305
    %v7473 = vpack.c.b16 %v6309, %v6306
    %v7474 = vpack.c.b16 %v6310, %v6307
    %v7475 = vpack.c.b16 %v6314, %v6311
    %v7476 = vpack.c.b16 %v6315, %v6312
    %v7477 = vpack.c.b16 %v6316, %v6313
    %v7478 = vpack.c.b16 %v6320, %v6317
    %v7479 = vpack.c.b16 %v6321, %v6318
    %v7480 = vpack.c.b16 %v6322, %v6319
    %v7481 = vpack.c.b16 %v6326, %v6323
    %v7482 = vpack.c.b16 %v6327, %v6324
    %v7483 = vpack.c.b16 %v6328, %v6325
    %v7484 = vpack.c.b16 %v6332, %v6329
    %v7485 = vpack.c.b16 %v6333, %v6330
    %v7486 = vpack.c.b16 %v6334, %v6331
    %v7487 = vpack.c.b16 %v6338, %v6335
    %v7488 = vpack.c.b16 %v6339, %v6336
    %v7489 = vpack.c.b16 %v6340, %v6337
    %v7490 = vpack.c.b16 %v6344, %v6341
    %v7491 = vpack.c.b16 %v6345, %v6342
    %v7492 = vpack.c.b16 %v6346, %v6343
    %v7493 = vpack.c.b16 %v6350, %v6347
    %v7494 = vpack.c.b16 %v6351, %v6348
    %v7495 = vpack.c.b16 %v6352, %v6349
    %v7496 = vpack.c.b16 %v6356, %v6353
    %v7497 = vpack.c.b16 %v6357, %v6354
    %v7498 = vpack.c.b16 %v6358, %v6355
    %v7499 = vpack.c.b16 %v6362, %v6359
    %v7500 = vpack.c.b16 %v6363, %v6360
    %v7501 = vpack.c.b16 %v6364, %v6361
    %v7502 = vpack.c.b16 %v6368, %v6365
    %v7503 = vpack.c.b16 %v6369, %v6366
    %v7504 = vpack.c.b16 %v6370, %v6367
    %v7505 = vpack.c.b16 %v6374, %v6371
    %v7506 = vpack.c.b16 %v6375, %v6372
    %v7507 = vpack.c.b16 %v6376, %v6373
    %v7508 = vpack.c.b16 %v6380, %v6377
    %v7509 = vpack.c.b16 %v6381, %v6378
    %v7510 = vpack.c.b16 %v6382, %v6379
    %v7511 = vpack.c.b16 %v6386, %v6383
    %v7512 = vpack.c.b16 %v6387, %v6384
    %v7513 = vpack.c.b16 %v6388, %v6385
    %v7514 = vpack.c.b16 %v6392, %v6389
    %v7515 = vpack.c.b16 %v6393, %v6390
    %v7516 = vpack.c.b16 %v6394, %v6391
    %v7517 = vpack.c.b16 %v6398, %v6395
    %v7518 = vpack.c.b16 %v6399, %v6396
    %v7519 = vpack.c.b16 %v6400, %v6397
    %v7520 = vpack.c.b16 %v6404, %v6401
    %v7521 = vpack.c.b16 %v6405, %v6402
    %v7522 = vpack.c.b16 %v6406, %v6403
    %v7523 = vpack.c.b16 %v6410, %v6407
    %v7524 = vpack.c.b16 %v6411, %v6408
    %v7525 = vpack.c.b16 %v6412, %v6409
    %v7526 = vpack.c.b16 %v6416, %v6413
    %v7527 = vpack.c.b16 %v6417, %v6414
    %v7528 = vpack.c.b16 %v6418, %v6415
    %v7529 = vpack.c.b16 %v6422, %v6419
    %v7530 = vpack.c.b16 %v6423, %v6420
    %v7531 = vpack.c.b16 %v6424, %v6421
    %v7532 = vpack.c.b16 %v6428, %v6425
    %v7533 = vpack.c.b16 %v6429, %v6426
    %v7534 = vpack.c.b16 %v6430, %v6427
    %v7535 = vpack.c.b16 %v6434, %v6431
    %v7536 = vpack.c.b16 %v6435, %v6432
    %v7537 = vpack.c.b16 %v6436, %v6433
    %v7538 = vpack.c.b16 %v6440, %v6437
    %v7539 = vpack.c.b16 %v6441, %v6438
    %v7540 = vpack.c.b16 %v6442, %v6439
    %v7541 = vpack.c.b16 %v6446, %v6443
    %v7542 = vpack.c.b16 %v6447, %v6444
    %v7543 = vpack.c.b16 %v6448, %v6445
    %v7544 = vpack.c.b16 %v6452, %v6449
    %v7545 = vpack.c.b16 %v6453, %v6450
    %v7546 = vpack.c.b16 %v6454, %v6451
    %v7547 = vpack.c.b16 %v6458, %v6455
    %v7548 = vpack.c.b16 %v6459, %v6456
    %v7549 = vpack.c.b16 %v6460, %v6457
    %v7550 = vpack.c.b16 %v6464, %v6461
    %v7551 = vpack.c.b16 %v6465, %v6462
    %v7552 = vpack.c.b16 %v6466, %v6463
    %v7553 = vpack.c.b16 %v6470, %v6467
    %v7554 = vpack.c.b16 %v6471, %v6468
    %v7555 = vpack.c.b16 %v6472, %v6469
    %v7556 = vpack.c.b16 %v6476, %v6473
    %v7557 = vpack.c.b16 %v6477, %v6474
    %v7558 = vpack.c.b16 %v6478, %v6475
    %v7559 = vpack.c.b16 %v6482, %v6479
    %v7560 = vpack.c.b16 %v6483, %v6480
    %v7561 = vpack.c.b16 %v6484, %v6481
    %v7562 = vpack.c.b16 %v6488, %v6485
    %v7563 = vpack.c.b16 %v6489, %v6486
    %v7564 = vpack.c.b16 %v6490, %v6487
    %v7565 = vpack.c.b16 %v6494, %v6491
    %v7566 = vpack.c.b16 %v6495, %v6492
    %v7567 = vpack.c.b16 %v6496, %v6493
    %v7568 = vpack.c.b16 %v6500, %v6497
    %v7569 = vpack.c.b16 %v6501, %v6498
    %v7570 = vpack.c.b16 %v6502, %v6499
    %v7571 = vpack.c.b16 %v6506, %v6503
    %v7572 = vpack.c.b16 %v6507, %v6504
    %v7573 = vpack.c.b16 %v6508, %v6505
    %v7574 = vpack.c.b16 %v6512, %v6509
    %v7575 = vpack.c.b16 %v6513, %v6510
    %v7576 = vpack.c.b16 %v6514, %v6511
    %v7577 = vpack.c.b16 %v6518, %v6515
    %v7578 = vpack.c.b16 %v6519, %v6516
    %v7579 = vpack.c.b16 %v6520, %v6517
    %v7580 = vpack.c.b16 %v6524, %v6521
    %v7581 = vpack.c.b16 %v6525, %v6522
    %v7582 = vpack.c.b16 %v6526, %v6523
    %v7583 = vpack.c.b16 %v6530, %v6527
    %v7584 = vpack.c.b16 %v6531, %v6528
    %v7585 = vpack.c.b16 %v6532, %v6529
    %v7586 = vpack.c.b16 %v6536, %v6533
    %v7587 = vpack.c.b16 %v6537, %v6534
    %v7588 = vpack.c.b16 %v6538, %v6535
    %v7589 = vpack.c.b16 %v6542, %v6539
    %v7590 = vpack.c.b16 %v6543, %v6540
    %v7591 = vpack.c.b16 %v6544, %v6541
    %v7592 = vpack.c.b16 %v6548, %v6545
    %v7593 = vpack.c.b16 %v6549, %v6546
    %v7594 = vpack.c.b16 %v6550, %v6547
    %v7595 = vpack.c.b16 %v6554, %v6551
    %v7596 = vpack.c.b16 %v6555, %v6552
    %v7597 = vpack.c.b16 %v6556, %v6553
    %v7598 = vpack.c.b16 %v6560, %v6557
    %v7599 = vpack.c.b16 %v6561, %v6558
    %v7600 = vpack.c.b16 %v6562, %v6559
    %v7601 = vpack.c.b16 %v6566, %v6563
    %v7602 = vpack.c.b16 %v6567, %v6564
    %v7603 = vpack.c.b16 %v6568, %v6565
    %v7604 = vpack.c.b16 %v6572, %v6569
    %v7605 = vpack.c.b16 %v6573, %v6570
    %v7606 = vpack.c.b16 %v6574, %v6571
    %v7607 = vpack.c.b16 %v6578, %v6575
    %v7608 = vpack.c.b16 %v6579, %v6576
    %v7609 = vpack.c.b16 %v6580, %v6577
    %v7610 = vpack.c.b16 %v6584, %v6581
    %v7611 = vpack.c.b16 %v6585, %v6582
    %v7612 = vpack.c.b16 %v6586, %v6583
    %v7613 = vpack.c.b16 %v6590, %v6587
    %v7614 = vpack.c.b16 %v6591, %v6588
    %v7615 = vpack.c.b16 %v6592, %v6589
    %v7616 = vpack.c.b16 %v6596, %v6593
    %v7617 = vpack.c.b16 %v6597, %v6594
    %v7618 = vpack.c.b16 %v6598, %v6595
    %v7619 = vpack.c.b16 %v6602, %v6599
    %v7620 = vpack.c.b16 %v6603, %v6600
    %v7621 = vpack.c.b16 %v6604, %v6601
    %v7622 = vpack.c.b16 %v6608, %v6605
    %v7623 = vpack.c.b16 %v6609, %v6606
    %v7624 = vpack.c.b16 %v6610, %v6607
    %v7625 = vpack.c.b16 %v6614, %v6611
    %v7626 = vpack.c.b16 %v6615, %v6612
    %v7627 = vpack.c.b16 %v6616, %v6613
    %v7628 = vpack.c.b16 %v6620, %v6617
    %v7629 = vpack.c.b16 %v6621, %v6618
    %v7630 = vpack.c.b16 %v6622, %v6619
    %v7631 = vpack.c.b16 %v6626, %v6623
    %v7632 = vpack.c.b16 %v6627, %v6624
    %v7633 = vpack.c.b16 %v6628, %v6625
    %v7634 = vpack.c.b16 %v6632, %v6629
    %v7635 = vpack.c.b16 %v6633, %v6630
    %v7636 = vpack.c.b16 %v6634, %v6631
    %v7637 = vpack.c.b16 %v6638, %v6635
    %v7638 = vpack.c.b16 %v6639, %v6636
    %v7639 = vpack.c.b16 %v6640, %v6637
    %v7640 = vpack.c.b16 %v6644, %v6641
    %v7641 = vpack.c.b16 %v6645, %v6642
    %v7642 = vpack.c.b16 %v6646, %v6643
    %v7643 = vpack.c.b16 %v6650, %v6647
    %v7644 = vpack.c.b16 %v6651, %v6648
    %v7645 = vpack.c.b16 %v6652, %v6649
    %v7646 = vpack.c.b16 %v6656, %v6653
    %v7647 = vpack.c.b16 %v6657, %v6654
    %v7648 = vpack.c.b16 %v6658, %v6655
    %v7649 = vpack.c.b16 %v6662, %v6659
    %v7650 = vpack.c.b16 %v6663, %v6660
    %v7651 = vpack.c.b16 %v6664, %v6661
    %v7652 = vpack.c.b16 %v6668, %v6665
    %v7653 = vpack.c.b16 %v6669, %v6666
    %v7654 = vpack.c.b16 %v6670, %v6667
    %v7655 = vpack.c.b16 %v6674, %v6671
    %v7656 = vpack.c.b16 %v6675, %v6672
    %v7657 = vpack.c.b16 %v6676, %v6673
    %v7658 = vpack.c.b16 %v6680, %v6677
    %v7659 = vpack.c.b16 %v6681, %v6678
    %v7660 = vpack.c.b16 %v6682, %v6679
    %v7661 = vpack.c.b16 %v6686, %v6683
    %v7662 = vpack.c.b16 %v6687, %v6684
    %v7663 = vpack.c.b16 %v6688, %v6685
    %v7664 = vpack.c.b16 %v6692, %v6689
    %v7665 = vpack.c.b16 %v6693, %v6690
    %v7666 = vpack.c.b16 %v6694, %v6691
    %v7667 = vpack.c.b16 %v6698, %v6695
    %v7668 = vpack.c.b16 %v6699, %v6696
    %v7669 = vpack.c.b16 %v6700, %v6697
    %v7670 = vpack.c.b16 %v6704, %v6701
    %v7671 = vpack.c.b16 %v6705, %v6702
    %v7672 = vpack.c.b16 %v6706, %v6703
    %v7673 = vpack.c.b16 %v6710, %v6707
    %v7674 = vpack.c.b16 %v6711, %v6708
    %v7675 = vpack.c.b16 %v6712, %v6709
    %v7676 = vpack.c.b16 %v6716, %v6713
    %v7677 = vpack.c.b16 %v6717, %v6714
    %v7678 = vpack.c.b16 %v6718, %v6715
    %v7679 = vpack.c.b16 %v6722, %v6719
    %v7680 = vpack.c.b16 %v6723, %v6720
    %v7681 = vpack.c.b16 %v6724, %v6721
    %v7682 = vpack.c.b16 %v6728, %v6725
    %v7683 = vpack.c.b16 %v6729, %v6726
    %v7684 = vpack.c.b16 %v6730, %v6727
    %v7685 = vpack.c.b16 %v6734, %v6731
    %v7686 = vpack.c.b16 %v6735, %v6732
    %v7687 = vpack.c.b16 %v6736, %v6733
    %v7688 = vpack.c.b16 %v6740, %v6737
    %v7689 = vpack.c.b16 %v6741, %v6738
    %v7690 = vpack.c.b16 %v6742, %v6739
    %v7691 = vpack.c.b16 %v6746, %v6743
    %v7692 = vpack.c.b16 %v6747, %v6744
    %v7693 = vpack.c.b16 %v6748, %v6745
    %v7694 = vpack.c.b16 %v6752, %v6749
    %v7695 = vpack.c.b16 %v6753, %v6750
    %v7696 = vpack.c.b16 %v6754, %v6751
    %v7697 = vpack.c.b16 %v6758, %v6755
    %v7698 = vpack.c.b16 %v6759, %v6756
    %v7699 = vpack.c.b16 %v6760, %v6757
    %v7700 = vpack.c.b16 %v6764, %v6761
    %v7701 = vpack.c.b16 %v6765, %v6762
    %v7702 = vpack.c.b16 %v6766, %v6763
    %v7703 = vpack.c.b16 %v6770, %v6767
    %v7704 = vpack.c.b16 %v6771, %v6768
    %v7705 = vpack.c.b16 %v6772, %v6769
    %v7706 = vpack.c.b16 %v6776, %v6773
    %v7707 = vpack.c.b16 %v6777, %v6774
    %v7708 = vpack.c.b16 %v6778, %v6775
    %v7709 = vpack.c.b16 %v6782, %v6779
    %v7710 = vpack.c.b16 %v6783, %v6780
    %v7711 = vpack.c.b16 %v6784, %v6781
    %v7712 = vpack.c.b16 %v6788, %v6785
    %v7713 = vpack.c.b16 %v6789, %v6786
    %v7714 = vpack.c.b16 %v6790, %v6787
    %v7715 = vpack.c.b16 %v6794, %v6791
    %v7716 = vpack.c.b16 %v6795, %v6792
    %v7717 = vpack.c.b16 %v6796, %v6793
    %v7718 = vpack.c.b16 %v6800, %v6797
    %v7719 = vpack.c.b16 %v6801, %v6798
    %v7720 = vpack.c.b16 %v6802, %v6799
    %v7721 = vpack.c.b16 %v6806, %v6803
    %v7722 = vpack.c.b16 %v6807, %v6804
    %v7723 = vpack.c.b16 %v6808, %v6805
    %v7724 = vpack.c.b16 %v6812, %v6809
    %v7725 = vpack.c.b16 %v6813, %v6810
    %v7726 = vpack.c.b16 %v6814, %v6811
    %v7727 = vpack.c.b16 %v6818, %v6815
    %v7728 = vpack.c.b16 %v6819, %v6816
    %v7729 = vpack.c.b16 %v6820, %v6817
    %v7730 = vpack.c.b16 %v6824, %v6821
    %v7731 = vpack.c.b16 %v6825, %v6822
    %v7732 = vpack.c.b16 %v6826, %v6823
    %v7733 = vpack.c.b16 %v6830, %v6827
    %v7734 = vpack.c.b16 %v6831, %v6828
    %v7735 = vpack.c.b16 %v6832, %v6829
    %v7736 = vpack.c.b16 %v6836, %v6833
    %v7737 = vpack.c.b16 %v6837, %v6834
    %v7738 = vpack.c.b16 %v6838, %v6835
    %v7739 = vpack.c.b16 %v6842, %v6839
    %v7740 = vpack.c.b16 %v6843, %v6840
    %v7741 = vpack.c.b16 %v6844, %v6841
    %v7742 = vpack.c.b16 %v6848, %v6845
    %v7743 = vpack.c.b16 %v6849, %v6846
    %v7744 = vpack.c.b16 %v6850, %v6847
    %v7745 = vpack.c.b16 %v6854, %v6851
    %v7746 = vpack.c.b16 %v6855, %v6852
    %v7747 = vpack.c.b16 %v6856, %v6853
    %v7748 = vpack.c.b16 %v6860, %v6857
    %v7749 = vpack.c.b16 %v6861, %v6858
    %v7750 = vpack.c.b16 %v6862, %v6859
    %v7751 = vpack.c.b16 %v6866, %v6863
    %v7752 = vpack.c.b16 %v6867, %v6864
    %v7753 = vpack.c.b16 %v6868, %v6865
    %v7754 = vpack.c.b16 %v6872, %v6869
    %v7755 = vpack.c.b16 %v6873, %v6870
    %v7756 = vpack.c.b16 %v6874, %v6871
    %v7757 = vpack.c.b16 %v6878, %v6875
    %v7758 = vpack.c.b16 %v6879, %v6876
    %v7759 = vpack.c.b16 %v6880, %v6877
    %v7760 = vpack.c.b16 %v6884, %v6881
    %v7761 = vpack.c.b16 %v6885, %v6882
    %v7762 = vpack.c.b16 %v6886, %v6883
    %v7763 = vpack.c.b16 %v6890, %v6887
    %v7764 = vpack.c.b16 %v6891, %v6888
    %v7765 = vpack.c.b16 %v6892, %v6889
    %v7766 = vpack.c.b16 %v6896, %v6893
    %v7767 = vpack.c.b16 %v6897, %v6894
    %v7768 = vpack.c.b16 %v6898, %v6895
    %v7769 = vpack.c.b16 %v6902, %v6899
    %v7770 = vpack.c.b16 %v6903, %v6900
    %v7771 = vpack.c.b16 %v6904, %v6901
    %v7772 = vpack.c.b16 %v6908, %v6905
    %v7773 = vpack.c.b16 %v6909, %v6906
    %v7774 = vpack.c.b16 %v6910, %v6907
    %v7775 = vpack.c.b16 %v6914, %v6911
    %v7776 = vpack.c.b16 %v6915, %v6912
    %v7777 = vpack.c.b16 %v6916, %v6913
    %v7778 = vpack.c.b16 %v6920, %v6917
    %v7779 = vpack.c.b16 %v6921, %v6918
    %v7780 = vpack.c.b16 %v6922, %v6919
    %v7781 = vpack.c.b16 %v6926, %v6923
    %v7782 = vpack.c.b16 %v6927, %v6924
    %v7783 = vpack.c.b16 %v6928, %v6925
    %v7784 = vpack.c.b16 %v6932, %v6929
    %v7785 = vpack.c.b16 %v6933, %v6930
    %v7786 = vpack.c.b16 %v6934, %v6931
    %v7787 = vpack.c.b16 %v6938, %v6935
    %v7788 = vpack.c.b16 %v6939, %v6936
    %v7789 = vpack.c.b16 %v6940, %v6937
    %v7790 = vpack.c.b16 %v6944, %v6941
    %v7791 = vpack.c.b16 %v6945, %v6942
    %v7792 = vpack.c.b16 %v6946, %v6943
    %v7793 = vpack.c.b16 %v6950, %v6947
    %v7794 = vpack.c.b16 %v6951, %v6948
    %v7795 = vpack.c.b16 %v6952, %v6949
    %v7796 = vpack.c.b16 %v6956, %v6953
    %v7797 = vpack.c.b16 %v6957, %v6954
    %v7798 = vpack.c.b16 %v6958, %v6955
    %v7799 = vpack.c.b16 %v6962, %v6959
    %v7800 = vpack.c.b16 %v6963, %v6960
    %v7801 = vpack.c.b16 %v6964, %v6961
    %v7802 = vpack.c.b16 %v6968, %v6965
    %v7803 = vpack.c.b16 %v6969, %v6966
    %v7804 = vpack.c.b16 %v6970, %v6967
    %v7805 = vpack.c.b16 %v6974, %v6971
    %v7806 = vpack.c.b16 %v6975, %v6972
    %v7807 = vpack.c.b16 %v6976, %v6973
    %v7808 = vpack.c.b16 %v6980, %v6977
    %v7809 = vpack.c.b16 %v6981, %v6978
    %v7810 = vpack.c.b16 %v6982, %v6979
    %v7811 = vpack.c.b16 %v6986, %v6983
    %v7812 = vpack.c.b16 %v6987, %v6984
    %v7813 = vpack.c.b16 %v6988, %v6985
    %v7814 = vpack.c.b16 %v6992, %v6989
    %v7815 = vpack.c.b16 %v6993, %v6990
    %v7816 = vpack.c.b16 %v6994, %v6991
    %v7817 = vpack.c.b16 %v6998, %v6995
    %v7818 = vpack.c.b16 %v6999, %v6996
    %v7819 = vpack.c.b16 %v7000, %v6997
    %v7820 = vpack.c.b16 %v7004, %v7001
    %v7821 = vpack.c.b16 %v7005, %v7002
    %v7822 = vpack.c.b16 %v7006, %v7003
    %v7823 = vpack.c.b16 %v7010, %v7007
    %v7824 = vpack.c.b16 %v7011, %v7008
    %v7825 = vpack.c.b16 %v7012, %v7009
    %v7826 = vpack.c.b16 %v7016, %v7013
    %v7827 = vpack.c.b16 %v7017, %v7014
    %v7828 = vpack.c.b16 %v7018, %v7015
    %v7829 = vpack.c.b16 %v7022, %v7019
    %v7830 = vpack.c.b16 %v7023, %v7020
    %v7831 = vpack.c.b16 %v7024, %v7021
    %v7832 = vpack.c.b16 %v7028, %v7025
    %v7833 = vpack.c.b16 %v7029, %v7026
    %v7834 = vpack.c.b16 %v7030, %v7027
    %v7835 = vpack.c.b16 %v7034, %v7031
    %v7836 = vpack.c.b16 %v7035, %v7032
    %v7837 = vpack.c.b16 %v7036, %v7033
    %v7838 = vpack.c.b16 %v7040, %v7037
    %v7839 = vpack.c.b16 %v7041, %v7038
    %v7840 = vpack.c.b16 %v7042, %v7039
    %v7841 = vpack.c.b16 %v7046, %v7043
    %v7842 = vpack.c.b16 %v7047, %v7044
    %v7843 = vpack.c.b16 %v7048, %v7045
    %v7844 = vpack.c.b16 %v7052, %v7049
    %v7845 = vpack.c.b16 %v7053, %v7050
    %v7846 = vpack.c.b16 %v7054, %v7051
    %8639 = vmatprep.subr.bf16.mxu0 %v7077
    %8640 = vmatpush1.bf16.msra.mxu0 %v7076
    %8641 = vmatprep.subr.bf16.mxu0 %v7074
    %8642 = vmatpush1.bf16.msra.mxu0 %v7073
    %8643 = vmatprep.subr.bf16.mxu0 %v7071
    %8644 = vmatpush1.bf16.msra.mxu0 %v7070
    %8645 = vmatprep.subr.bf16.mxu0 %v7068
    %8646 = vmatpush1.bf16.msra.mxu0 %v7067
    %8647 = vmatprep.subr.bf16.mxu0 %v7065
    %8648 = vmatpush1.bf16.msra.mxu0 %v7064
    %8649 = vmatprep.subr.bf16.mxu0 %v7062
    %8650 = vmatpush1.bf16.msra.mxu0 %v7061
    %8651 = vmatprep.subr.bf16.mxu0 %v7059
    %8652 = vmatpush1.bf16.msra.mxu0 %v7058
    %8653 = vmatprep.subr.bf16.mxu0 %v7056
    %8654 = vmatpush1.bf16.msra.mxu0 %v7055
    %8655 = vmatprep.subr.bf16.mxu0 %v7101
    %8656 = vmatpush2.bf16.msra.mxu0 %v7100
    %8657 = vmatprep.subr.bf16.mxu0 %v7098
    %8658 = vmatpush2.bf16.msra.mxu0 %v7097
    %8659 = vmatprep.subr.bf16.mxu0 %v7095
    %8660 = vmatpush2.bf16.msra.mxu0 %v7094
    %8661 = vmatprep.subr.bf16.mxu0 %v7092
    %8662 = vmatpush2.bf16.msra.mxu0 %v7091
    %8663 = vmatprep.subr.bf16.mxu0 %v7089
    %8664 = vmatpush2.bf16.msra.mxu0 %v7088
    %8665 = vmatprep.subr.bf16.mxu0 %v7086
    %8666 = vmatpush2.bf16.msra.mxu0 %v7085
    %8667 = vmatprep.subr.bf16.mxu0 %v7083
    %8668 = vmatpush2.bf16.msra.mxu0 %v7082
    %8669 = vmatprep.subr.bf16.mxu0 %v7080
    %8670 = vmatpush2.bf16.msra.mxu0 %v7079
    %8671 = vmatprep.mubr.bf16.mxu0 %v377
    %8672 = vmatmul.mubr.bf16.gmra.mxu0 %v376
    %v8673 = vpop.f32.mrf.mxu0
    %v8674 = vadd.f32 0.0, %v8673
    %v8675 = vpop.f32.mrf.mxu0
    %v8676 = vadd.f32 0.0, %v8675
    %v8677 = vpop.f32.mrf.mxu0
    %v8678 = vadd.f32 0.0, %v8677
    %v8679 = vpop.f32.mrf.mxu0
    %v8680 = vadd.f32 0.0, %v8679
    %8681 = vmatprep.mubr.bf16.mxu0 %v380
    %8682 = vmatmul.mubr.bf16.gmra.mxu0 %v379
    %v8683 = vpop.f32.mrf.mxu0
    %v8684 = vadd.f32 0.0, %v8683
    %v8685 = vpop.f32.mrf.mxu0
    %v8686 = vadd.f32 0.0, %v8685
    %v8687 = vpop.f32.mrf.mxu0
    %v8688 = vadd.f32 0.0, %v8687
    %v8689 = vpop.f32.mrf.mxu0
    %v8690 = vadd.f32 0.0, %v8689
    %8691 = vmatprep.mubr.bf16.mxu0 %v383
    %8692 = vmatmul.mubr.bf16.gmra.mxu0 %v382
    %v8693 = vpop.f32.mrf.mxu0
    %v8694 = vadd.f32 0.0, %v8693
    %v8695 = vpop.f32.mrf.mxu0
    %v8696 = vadd.f32 0.0, %v8695
    %v8697 = vpop.f32.mrf.mxu0
    %v8698 = vadd.f32 0.0, %v8697
    %v8699 = vpop.f32.mrf.mxu0
    %v8700 = vadd.f32 0.0, %v8699
    %8701 = vmatprep.mubr.bf16.mxu0 %v386
    %8702 = vmatmul.mubr.bf16.gmra.mxu0 %v385
    %v8703 = vpop.f32.mrf.mxu0
    %v8704 = vadd.f32 0.0, %v8703
    %v8705 = vpop.f32.mrf.mxu0
    %v8706 = vadd.f32 0.0, %v8705
    %v8707 = vpop.f32.mrf.mxu0
    %v8708 = vadd.f32 0.0, %v8707
    %v8709 = vpop.f32.mrf.mxu0
    %v8710 = vadd.f32 0.0, %v8709
    %8711 = vmatprep.mubr.bf16.mxu0 %v389
    %8712 = vmatmul.mubr.bf16.gmra.mxu0 %v388
    %v8713 = vpop.f32.mrf.mxu0
    %v8714 = vadd.f32 0.0, %v8713
    %v8715 = vpop.f32.mrf.mxu0
    %v8716 = vadd.f32 0.0, %v8715
    %v8717 = vpop.f32.mrf.mxu0
    %v8718 = vadd.f32 0.0, %v8717
    %v8719 = vpop.f32.mrf.mxu0
    %v8720 = vadd.f32 0.0, %v8719
    %8721 = vmatprep.mubr.bf16.mxu0 %v392
    %8722 = vmatmul.mubr.bf16.gmra.mxu0 %v391
    %v8723 = vpop.f32.mrf.mxu0
    %v8724 = vadd.f32 0.0, %v8723
    %v8725 = vpop.f32.mrf.mxu0
    %v8726 = vadd.f32 0.0, %v8725
    %v8727 = vpop.f32.mrf.mxu0
    %v8728 = vadd.f32 0.0, %v8727
    %v8729 = vpop.f32.mrf.mxu0
    %v8730 = vadd.f32 0.0, %v8729
    %8731 = vmatprep.mubr.bf16.mxu0 %v395
    %8732 = vmatmul.mubr.bf16.gmra.mxu0 %v394
    %v8733 = vpop.f32.mrf.mxu0
    %v8734 = vadd.f32 0.0, %v8733
    %v8735 = vpop.f32.mrf.mxu0
    %v8736 = vadd.f32 0.0, %v8735
    %v8737 = vpop.f32.mrf.mxu0
    %v8738 = vadd.f32 0.0, %v8737
    %v8739 = vpop.f32.mrf.mxu0
    %v8740 = vadd.f32 0.0, %v8739
    %8741 = vmatprep.mubr.bf16.mxu0 %v398
    %8742 = vmatmul.mubr.bf16.gmra.mxu0 %v397
    %v8743 = vpop.f32.mrf.mxu0
    %v8744 = vadd.f32 0.0, %v8743
    %v8745 = vpop.f32.mrf.mxu0
    %v8746 = vadd.f32 0.0, %v8745
    %v8747 = vpop.f32.mrf.mxu0
    %v8748 = vadd.f32 0.0, %v8747
    %v8749 = vpop.f32.mrf.mxu0
    %v8750 = vadd.f32 0.0, %v8749
    %8751 = vdwg.mxu0
    %8752 = vmatprep.subr.bf16.mxu0 %v7125
    %8753 = vmatpush1.bf16.msra.mxu0 %v7124
    %8754 = vmatprep.subr.bf16.mxu0 %v7122
    %8755 = vmatpush1.bf16.msra.mxu0 %v7121
    %8756 = vmatprep.subr.bf16.mxu0 %v7119
    %8757 = vmatpush1.bf16.msra.mxu0 %v7118
    %8758 = vmatprep.subr.bf16.mxu0 %v7116
    %8759 = vmatpush1.bf16.msra.mxu0 %v7115
    %8760 = vmatprep.subr.bf16.mxu0 %v7113
    %8761 = vmatpush1.bf16.msra.mxu0 %v7112
    %8762 = vmatprep.subr.bf16.mxu0 %v7110
    %8763 = vmatpush1.bf16.msra.mxu0 %v7109
    %8764 = vmatprep.subr.bf16.mxu0 %v7107
    %8765 = vmatpush1.bf16.msra.mxu0 %v7106
    %8766 = vmatprep.subr.bf16.mxu0 %v7104
    %8767 = vmatpush1.bf16.msra.mxu0 %v7103
    %8768 = vmatprep.subr.bf16.mxu0 %v7149
    %8769 = vmatpush2.bf16.msra.mxu0 %v7148
    %8770 = vmatprep.subr.bf16.mxu0 %v7146
    %8771 = vmatpush2.bf16.msra.mxu0 %v7145
    %8772 = vmatprep.subr.bf16.mxu0 %v7143
    %8773 = vmatpush2.bf16.msra.mxu0 %v7142
    %8774 = vmatprep.subr.bf16.mxu0 %v7140
    %8775 = vmatpush2.bf16.msra.mxu0 %v7139
    %8776 = vmatprep.subr.bf16.mxu0 %v7137
    %8777 = vmatpush2.bf16.msra.mxu0 %v7136
    %8778 = vmatprep.subr.bf16.mxu0 %v7134
    %8779 = vmatpush2.bf16.msra.mxu0 %v7133
    %8780 = vmatprep.subr.bf16.mxu0 %v7131
    %8781 = vmatpush2.bf16.msra.mxu0 %v7130
    %8782 = vmatprep.subr.bf16.mxu0 %v7128
    %8783 = vmatpush2.bf16.msra.mxu0 %v7127
    %8784 = vmatprep.mubr.bf16.mxu0 %v500
    %8785 = vmatmul.mubr.bf16.gmra.mxu0 %v378
    %v8786 = vpop.f32.mrf.mxu0
    %v8787 = vadd.f32 %v8674, %v8786
    %v8788 = vpop.f32.mrf.mxu0
    %v8789 = vadd.f32 %v8676, %v8788
    %v8790 = vpop.f32.mrf.mxu0
    %v8791 = vadd.f32 %v8678, %v8790
    %v8792 = vpop.f32.mrf.mxu0
    %v8793 = vadd.f32 %v8680, %v8792
    %8794 = vmatprep.mubr.bf16.mxu0 %v536
    %8795 = vmatmul.mubr.bf16.gmra.mxu0 %v381
    %v8796 = vpop.f32.mrf.mxu0
    %v8797 = vadd.f32 %v8684, %v8796
    %v8798 = vpop.f32.mrf.mxu0
    %v8799 = vadd.f32 %v8686, %v8798
    %v8800 = vpop.f32.mrf.mxu0
    %v8801 = vadd.f32 %v8688, %v8800
    %v8802 = vpop.f32.mrf.mxu0
    %v8803 = vadd.f32 %v8690, %v8802
    %8804 = vmatprep.mubr.bf16.mxu0 %v572
    %8805 = vmatmul.mubr.bf16.gmra.mxu0 %v384
    %v8806 = vpop.f32.mrf.mxu0
    %v8807 = vadd.f32 %v8694, %v8806
    %v8808 = vpop.f32.mrf.mxu0
    %v8809 = vadd.f32 %v8696, %v8808
    %v8810 = vpop.f32.mrf.mxu0
    %v8811 = vadd.f32 %v8698, %v8810
    %v8812 = vpop.f32.mrf.mxu0
    %v8813 = vadd.f32 %v8700, %v8812
    %8814 = vmatprep.mubr.bf16.mxu0 %v608
    %8815 = vmatmul.mubr.bf16.gmra.mxu0 %v387
    %v8816 = vpop.f32.mrf.mxu0
    %v8817 = vadd.f32 %v8704, %v8816
    %v8818 = vpop.f32.mrf.mxu0
    %v8819 = vadd.f32 %v8706, %v8818
    %v8820 = vpop.f32.mrf.mxu0
    %v8821 = vadd.f32 %v8708, %v8820
    %v8822 = vpop.f32.mrf.mxu0
    %v8823 = vadd.f32 %v8710, %v8822
    %8824 = vmatprep.mubr.bf16.mxu0 %v644
    %8825 = vmatmul.mubr.bf16.gmra.mxu0 %v390
    %v8826 = vpop.f32.mrf.mxu0
    %v8827 = vadd.f32 %v8714, %v8826
    %v8828 = vpop.f32.mrf.mxu0
    %v8829 = vadd.f32 %v8716, %v8828
    %v8830 = vpop.f32.mrf.mxu0
    %v8831 = vadd.f32 %v8718, %v8830
    %v8832 = vpop.f32.mrf.mxu0
    %v8833 = vadd.f32 %v8720, %v8832
    %8834 = vmatprep.mubr.bf16.mxu0 %v680
    %8835 = vmatmul.mubr.bf16.gmra.mxu0 %v393
    %v8836 = vpop.f32.mrf.mxu0
    %v8837 = vadd.f32 %v8724, %v8836
    %v8838 = vpop.f32.mrf.mxu0
    %v8839 = vadd.f32 %v8726, %v8838
    %v8840 = vpop.f32.mrf.mxu0
    %v8841 = vadd.f32 %v8728, %v8840
    %v8842 = vpop.f32.mrf.mxu0
    %v8843 = vadd.f32 %v8730, %v8842
    %8844 = vmatprep.mubr.bf16.mxu0 %v716
    %8845 = vmatmul.mubr.bf16.gmra.mxu0 %v396
    %v8846 = vpop.f32.mrf.mxu0
    %v8847 = vadd.f32 %v8734, %v8846
    %v8848 = vpop.f32.mrf.mxu0
    %v8849 = vadd.f32 %v8736, %v8848
    %v8850 = vpop.f32.mrf.mxu0
    %v8851 = vadd.f32 %v8738, %v8850
    %v8852 = vpop.f32.mrf.mxu0
    %v8853 = vadd.f32 %v8740, %v8852
    %8854 = vmatprep.mubr.bf16.mxu0 %v752
    %8855 = vmatmul.mubr.bf16.gmra.mxu0 %v399
    %v8856 = vpop.f32.mrf.mxu0
    %v8857 = vadd.f32 %v8744, %v8856
    %v8858 = vpop.f32.mrf.mxu0
    %v8859 = vadd.f32 %v8746, %v8858
    %v8860 = vpop.f32.mrf.mxu0
    %v8861 = vadd.f32 %v8748, %v8860
    %v8862 = vpop.f32.mrf.mxu0
    %v8863 = vadd.f32 %v8750, %v8862
    %8864 = vdwg.mxu0
    %8865 = vmatprep.subr.bf16.mxu0 %v7173
    %8866 = vmatpush1.bf16.msra.mxu0 %v7172
    %8867 = vmatprep.subr.bf16.mxu0 %v7170
    %8868 = vmatpush1.bf16.msra.mxu0 %v7169
    %8869 = vmatprep.subr.bf16.mxu0 %v7167
    %8870 = vmatpush1.bf16.msra.mxu0 %v7166
    %8871 = vmatprep.subr.bf16.mxu0 %v7164
    %8872 = vmatpush1.bf16.msra.mxu0 %v7163
    %8873 = vmatprep.subr.bf16.mxu0 %v7161
    %8874 = vmatpush1.bf16.msra.mxu0 %v7160
    %8875 = vmatprep.subr.bf16.mxu0 %v7158
    %8876 = vmatpush1.bf16.msra.mxu0 %v7157
    %8877 = vmatprep.subr.bf16.mxu0 %v7155
    %8878 = vmatpush1.bf16.msra.mxu0 %v7154
    %8879 = vmatprep.subr.bf16.mxu0 %v7152
    %8880 = vmatpush1.bf16.msra.mxu0 %v7151
    %8881 = vmatprep.subr.bf16.mxu0 %v7197
    %8882 = vmatpush2.bf16.msra.mxu0 %v7196
    %8883 = vmatprep.subr.bf16.mxu0 %v7194
    %8884 = vmatpush2.bf16.msra.mxu0 %v7193
    %8885 = vmatprep.subr.bf16.mxu0 %v7191
    %8886 = vmatpush2.bf16.msra.mxu0 %v7190
    %8887 = vmatprep.subr.bf16.mxu0 %v7188
    %8888 = vmatpush2.bf16.msra.mxu0 %v7187
    %8889 = vmatprep.subr.bf16.mxu0 %v7185
    %8890 = vmatpush2.bf16.msra.mxu0 %v7184
    %8891 = vmatprep.subr.bf16.mxu0 %v7182
    %8892 = vmatpush2.bf16.msra.mxu0 %v7181
    %8893 = vmatprep.subr.bf16.mxu0 %v7179
    %8894 = vmatpush2.bf16.msra.mxu0 %v7178
    %8895 = vmatprep.subr.bf16.mxu0 %v7176
    %8896 = vmatpush2.bf16.msra.mxu0 %v7175
    %8897 = vmatprep.mubr.bf16.mxu0 %v524
    %8898 = vmatmul.mubr.bf16.gmra.mxu0 %v512
    %v8899 = vpop.f32.mrf.mxu0
    %v8900 = vadd.f32 %v8787, %v8899
    %v8901 = vpop.f32.mrf.mxu0
    %v8902 = vadd.f32 %v8789, %v8901
    %v8903 = vpop.f32.mrf.mxu0
    %v8904 = vadd.f32 %v8791, %v8903
    %v8905 = vpop.f32.mrf.mxu0
    %v8906 = vadd.f32 %v8793, %v8905
    %8907 = vmatprep.mubr.bf16.mxu0 %v560
    %8908 = vmatmul.mubr.bf16.gmra.mxu0 %v548
    %v8909 = vpop.f32.mrf.mxu0
    %v8910 = vadd.f32 %v8797, %v8909
    %v8911 = vpop.f32.mrf.mxu0
    %v8912 = vadd.f32 %v8799, %v8911
    %v8913 = vpop.f32.mrf.mxu0
    %v8914 = vadd.f32 %v8801, %v8913
    %v8915 = vpop.f32.mrf.mxu0
    %v8916 = vadd.f32 %v8803, %v8915
    %8917 = vmatprep.mubr.bf16.mxu0 %v596
    %8918 = vmatmul.mubr.bf16.gmra.mxu0 %v584
    %v8919 = vpop.f32.mrf.mxu0
    %v8920 = vadd.f32 %v8807, %v8919
    %v8921 = vpop.f32.mrf.mxu0
    %v8922 = vadd.f32 %v8809, %v8921
    %v8923 = vpop.f32.mrf.mxu0
    %v8924 = vadd.f32 %v8811, %v8923
    %v8925 = vpop.f32.mrf.mxu0
    %v8926 = vadd.f32 %v8813, %v8925
    %8927 = vmatprep.mubr.bf16.mxu0 %v632
    %8928 = vmatmul.mubr.bf16.gmra.mxu0 %v620
    %v8929 = vpop.f32.mrf.mxu0
    %v8930 = vadd.f32 %v8817, %v8929
    %v8931 = vpop.f32.mrf.mxu0
    %v8932 = vadd.f32 %v8819, %v8931
    %v8933 = vpop.f32.mrf.mxu0
    %v8934 = vadd.f32 %v8821, %v8933
    %v8935 = vpop.f32.mrf.mxu0
    %v8936 = vadd.f32 %v8823, %v8935
    %8937 = vmatprep.mubr.bf16.mxu0 %v668
    %8938 = vmatmul.mubr.bf16.gmra.mxu0 %v656
    %v8939 = vpop.f32.mrf.mxu0
    %v8940 = vadd.f32 %v8827, %v8939
    %v8941 = vpop.f32.mrf.mxu0
    %v8942 = vadd.f32 %v8829, %v8941
    %v8943 = vpop.f32.mrf.mxu0
    %v8944 = vadd.f32 %v8831, %v8943
    %v8945 = vpop.f32.mrf.mxu0
    %v8946 = vadd.f32 %v8833, %v8945
    %8947 = vmatprep.mubr.bf16.mxu0 %v704
    %8948 = vmatmul.mubr.bf16.gmra.mxu0 %v692
    %v8949 = vpop.f32.mrf.mxu0
    %v8950 = vadd.f32 %v8837, %v8949
    %v8951 = vpop.f32.mrf.mxu0
    %v8952 = vadd.f32 %v8839, %v8951
    %v8953 = vpop.f32.mrf.mxu0
    %v8954 = vadd.f32 %v8841, %v8953
    %v8955 = vpop.f32.mrf.mxu0
    %v8956 = vadd.f32 %v8843, %v8955
    %8957 = vmatprep.mubr.bf16.mxu0 %v740
    %8958 = vmatmul.mubr.bf16.gmra.mxu0 %v728
    %v8959 = vpop.f32.mrf.mxu0
    %v8960 = vadd.f32 %v8847, %v8959
    %v8961 = vpop.f32.mrf.mxu0
    %v8962 = vadd.f32 %v8849, %v8961
    %v8963 = vpop.f32.mrf.mxu0
    %v8964 = vadd.f32 %v8851, %v8963
    %v8965 = vpop.f32.mrf.mxu0
    %v8966 = vadd.f32 %v8853, %v8965
    %8967 = vmatprep.mubr.bf16.mxu0 %v776
    %8968 = vmatmul.mubr.bf16.gmra.mxu0 %v764
    %v8969 = vpop.f32.mrf.mxu0
    %v8970 = vadd.f32 %v8857, %v8969
    %v8971 = vpop.f32.mrf.mxu0
    %v8972 = vadd.f32 %v8859, %v8971
    %v8973 = vpop.f32.mrf.mxu0
    %v8974 = vadd.f32 %v8861, %v8973
    %v8975 = vpop.f32.mrf.mxu0
    %v8976 = vadd.f32 %v8863, %v8975
    %8977 = vdwg.mxu0
    %8978 = vmatprep.subr.bf16.mxu0 %v7221
    %8979 = vmatpush1.bf16.msra.mxu0 %v7220
    %8980 = vmatprep.subr.bf16.mxu0 %v7218
    %8981 = vmatpush1.bf16.msra.mxu0 %v7217
    %8982 = vmatprep.subr.bf16.mxu0 %v7215
    %8983 = vmatpush1.bf16.msra.mxu0 %v7214
    %8984 = vmatprep.subr.bf16.mxu0 %v7212
    %8985 = vmatpush1.bf16.msra.mxu0 %v7211
    %8986 = vmatprep.subr.bf16.mxu0 %v7209
    %8987 = vmatpush1.bf16.msra.mxu0 %v7208
    %8988 = vmatprep.subr.bf16.mxu0 %v7206
    %8989 = vmatpush1.bf16.msra.mxu0 %v7205
    %8990 = vmatprep.subr.bf16.mxu0 %v7203
    %8991 = vmatpush1.bf16.msra.mxu0 %v7202
    %8992 = vmatprep.subr.bf16.mxu0 %v7200
    %8993 = vmatpush1.bf16.msra.mxu0 %v7199
    %8994 = vmatprep.subr.bf16.mxu0 %v7245
    %8995 = vmatpush2.bf16.msra.mxu0 %v7244
    %8996 = vmatprep.subr.bf16.mxu0 %v7242
    %8997 = vmatpush2.bf16.msra.mxu0 %v7241
    %8998 = vmatprep.subr.bf16.mxu0 %v7239
    %8999 = vmatpush2.bf16.msra.mxu0 %v7238
    %9000 = vmatprep.subr.bf16.mxu0 %v7236
    %9001 = vmatpush2.bf16.msra.mxu0 %v7235
    %9002 = vmatprep.subr.bf16.mxu0 %v7233
    %9003 = vmatpush2.bf16.msra.mxu0 %v7232
    %9004 = vmatprep.subr.bf16.mxu0 %v7230
    %9005 = vmatpush2.bf16.msra.mxu0 %v7229
    %9006 = vmatprep.subr.bf16.mxu0 %v7227
    %9007 = vmatpush2.bf16.msra.mxu0 %v7226
    %9008 = vmatprep.subr.bf16.mxu0 %v7224
    %9009 = vmatpush2.bf16.msra.mxu0 %v7223
    %9010 = vmatprep.mubr.bf16.mxu0 %v871
    %9011 = vmatmul.mubr.bf16.gmra.mxu0 %v868
    %v9012 = vpop.f32.mrf.mxu0
    %v9013 = vadd.f32 %v8900, %v9012
    %v9014 = vpop.f32.mrf.mxu0
    %v9015 = vadd.f32 %v8902, %v9014
    %v9016 = vpop.f32.mrf.mxu0
    %v9017 = vadd.f32 %v8904, %v9016
    %v9018 = vpop.f32.mrf.mxu0
    %v9019 = vadd.f32 %v8906, %v9018
    %9020 = vmatprep.mubr.bf16.mxu0 %v880
    %9021 = vmatmul.mubr.bf16.gmra.mxu0 %v877
    %v9022 = vpop.f32.mrf.mxu0
    %v9023 = vadd.f32 %v8910, %v9022
    %v9024 = vpop.f32.mrf.mxu0
    %v9025 = vadd.f32 %v8912, %v9024
    %v9026 = vpop.f32.mrf.mxu0
    %v9027 = vadd.f32 %v8914, %v9026
    %v9028 = vpop.f32.mrf.mxu0
    %v9029 = vadd.f32 %v8916, %v9028
    %9030 = vmatprep.mubr.bf16.mxu0 %v889
    %9031 = vmatmul.mubr.bf16.gmra.mxu0 %v886
    %v9032 = vpop.f32.mrf.mxu0
    %v9033 = vadd.f32 %v8920, %v9032
    %v9034 = vpop.f32.mrf.mxu0
    %v9035 = vadd.f32 %v8922, %v9034
    %v9036 = vpop.f32.mrf.mxu0
    %v9037 = vadd.f32 %v8924, %v9036
    %v9038 = vpop.f32.mrf.mxu0
    %v9039 = vadd.f32 %v8926, %v9038
    %9040 = vmatprep.mubr.bf16.mxu0 %v898
    %9041 = vmatmul.mubr.bf16.gmra.mxu0 %v895
    %v9042 = vpop.f32.mrf.mxu0
    %v9043 = vadd.f32 %v8930, %v9042
    %v9044 = vpop.f32.mrf.mxu0
    %v9045 = vadd.f32 %v8932, %v9044
    %v9046 = vpop.f32.mrf.mxu0
    %v9047 = vadd.f32 %v8934, %v9046
    %v9048 = vpop.f32.mrf.mxu0
    %v9049 = vadd.f32 %v8936, %v9048
    %9050 = vmatprep.mubr.bf16.mxu0 %v907
    %9051 = vmatmul.mubr.bf16.gmra.mxu0 %v904
    %v9052 = vpop.f32.mrf.mxu0
    %v9053 = vadd.f32 %v8940, %v9052
    %v9054 = vpop.f32.mrf.mxu0
    %v9055 = vadd.f32 %v8942, %v9054
    %v9056 = vpop.f32.mrf.mxu0
    %v9057 = vadd.f32 %v8944, %v9056
    %v9058 = vpop.f32.mrf.mxu0
    %v9059 = vadd.f32 %v8946, %v9058
    %9060 = vmatprep.mubr.bf16.mxu0 %v916
    %9061 = vmatmul.mubr.bf16.gmra.mxu0 %v913
    %v9062 = vpop.f32.mrf.mxu0
    %v9063 = vadd.f32 %v8950, %v9062
    %v9064 = vpop.f32.mrf.mxu0
    %v9065 = vadd.f32 %v8952, %v9064
    %v9066 = vpop.f32.mrf.mxu0
    %v9067 = vadd.f32 %v8954, %v9066
    %v9068 = vpop.f32.mrf.mxu0
    %v9069 = vadd.f32 %v8956, %v9068
    %9070 = vmatprep.mubr.bf16.mxu0 %v925
    %9071 = vmatmul.mubr.bf16.gmra.mxu0 %v922
    %v9072 = vpop.f32.mrf.mxu0
    %v9073 = vadd.f32 %v8960, %v9072
    %v9074 = vpop.f32.mrf.mxu0
    %v9075 = vadd.f32 %v8962, %v9074
    %v9076 = vpop.f32.mrf.mxu0
    %v9077 = vadd.f32 %v8964, %v9076
    %v9078 = vpop.f32.mrf.mxu0
    %v9079 = vadd.f32 %v8966, %v9078
    %9080 = vmatprep.mubr.bf16.mxu0 %v934
    %9081 = vmatmul.mubr.bf16.gmra.mxu0 %v931
    %v9082 = vpop.f32.mrf.mxu0
    %v9083 = vadd.f32 %v8970, %v9082
    %v9084 = vpop.f32.mrf.mxu0
    %v9085 = vadd.f32 %v8972, %v9084
    %v9086 = vpop.f32.mrf.mxu0
    %v9087 = vadd.f32 %v8974, %v9086
    %v9088 = vpop.f32.mrf.mxu0
    %v9089 = vadd.f32 %v8976, %v9088
    %9090 = vdwg.mxu0
    %9091 = vmatprep.subr.bf16.mxu0 %v7269
    %9092 = vmatpush1.bf16.msra.mxu0 %v7268
    %9093 = vmatprep.subr.bf16.mxu0 %v7266
    %9094 = vmatpush1.bf16.msra.mxu0 %v7265
    %9095 = vmatprep.subr.bf16.mxu0 %v7263
    %9096 = vmatpush1.bf16.msra.mxu0 %v7262
    %9097 = vmatprep.subr.bf16.mxu0 %v7260
    %9098 = vmatpush1.bf16.msra.mxu0 %v7259
    %9099 = vmatprep.subr.bf16.mxu0 %v7257
    %9100 = vmatpush1.bf16.msra.mxu0 %v7256
    %9101 = vmatprep.subr.bf16.mxu0 %v7254
    %9102 = vmatpush1.bf16.msra.mxu0 %v7253
    %9103 = vmatprep.subr.bf16.mxu0 %v7251
    %9104 = vmatpush1.bf16.msra.mxu0 %v7250
    %9105 = vmatprep.subr.bf16.mxu0 %v7248
    %9106 = vmatpush1.bf16.msra.mxu0 %v7247
    %9107 = vmatprep.subr.bf16.mxu0 %v7293
    %9108 = vmatpush2.bf16.msra.mxu0 %v7292
    %9109 = vmatprep.subr.bf16.mxu0 %v7290
    %9110 = vmatpush2.bf16.msra.mxu0 %v7289
    %9111 = vmatprep.subr.bf16.mxu0 %v7287
    %9112 = vmatpush2.bf16.msra.mxu0 %v7286
    %9113 = vmatprep.subr.bf16.mxu0 %v7284
    %9114 = vmatpush2.bf16.msra.mxu0 %v7283
    %9115 = vmatprep.subr.bf16.mxu0 %v7281
    %9116 = vmatpush2.bf16.msra.mxu0 %v7280
    %9117 = vmatprep.subr.bf16.mxu0 %v7278
    %9118 = vmatpush2.bf16.msra.mxu0 %v7277
    %9119 = vmatprep.subr.bf16.mxu0 %v7275
    %9120 = vmatpush2.bf16.msra.mxu0 %v7274
    %9121 = vmatprep.subr.bf16.mxu0 %v7272
    %9122 = vmatpush2.bf16.msra.mxu0 %v7271
    %9123 = vmatprep.mubr.bf16.mxu0 %v1043
    %9124 = vmatmul.mubr.bf16.gmra.mxu0 %v874
    %v9125 = vpop.f32.mrf.mxu0
    %v9126 = vadd.f32 %v9013, %v9125
    %v9127 = vpop.f32.mrf.mxu0
    %v9128 = vadd.f32 %v9015, %v9127
    %v9129 = vpop.f32.mrf.mxu0
    %v9130 = vadd.f32 %v9017, %v9129
    %v9131 = vpop.f32.mrf.mxu0
    %v9132 = vadd.f32 %v9019, %v9131
    %9133 = vmatprep.mubr.bf16.mxu0 %v1094
    %9134 = vmatmul.mubr.bf16.gmra.mxu0 %v883
    %v9135 = vpop.f32.mrf.mxu0
    %v9136 = vadd.f32 %v9023, %v9135
    %v9137 = vpop.f32.mrf.mxu0
    %v9138 = vadd.f32 %v9025, %v9137
    %v9139 = vpop.f32.mrf.mxu0
    %v9140 = vadd.f32 %v9027, %v9139
    %v9141 = vpop.f32.mrf.mxu0
    %v9142 = vadd.f32 %v9029, %v9141
    %9143 = vmatprep.mubr.bf16.mxu0 %v1145
    %9144 = vmatmul.mubr.bf16.gmra.mxu0 %v892
    %v9145 = vpop.f32.mrf.mxu0
    %v9146 = vadd.f32 %v9033, %v9145
    %v9147 = vpop.f32.mrf.mxu0
    %v9148 = vadd.f32 %v9035, %v9147
    %v9149 = vpop.f32.mrf.mxu0
    %v9150 = vadd.f32 %v9037, %v9149
    %v9151 = vpop.f32.mrf.mxu0
    %v9152 = vadd.f32 %v9039, %v9151
    %9153 = vmatprep.mubr.bf16.mxu0 %v1196
    %9154 = vmatmul.mubr.bf16.gmra.mxu0 %v901
    %v9155 = vpop.f32.mrf.mxu0
    %v9156 = vadd.f32 %v9043, %v9155
    %v9157 = vpop.f32.mrf.mxu0
    %v9158 = vadd.f32 %v9045, %v9157
    %v9159 = vpop.f32.mrf.mxu0
    %v9160 = vadd.f32 %v9047, %v9159
    %v9161 = vpop.f32.mrf.mxu0
    %v9162 = vadd.f32 %v9049, %v9161
    %9163 = vmatprep.mubr.bf16.mxu0 %v1247
    %9164 = vmatmul.mubr.bf16.gmra.mxu0 %v910
    %v9165 = vpop.f32.mrf.mxu0
    %v9166 = vadd.f32 %v9053, %v9165
    %v9167 = vpop.f32.mrf.mxu0
    %v9168 = vadd.f32 %v9055, %v9167
    %v9169 = vpop.f32.mrf.mxu0
    %v9170 = vadd.f32 %v9057, %v9169
    %v9171 = vpop.f32.mrf.mxu0
    %v9172 = vadd.f32 %v9059, %v9171
    %9173 = vmatprep.mubr.bf16.mxu0 %v1298
    %9174 = vmatmul.mubr.bf16.gmra.mxu0 %v919
    %v9175 = vpop.f32.mrf.mxu0
    %v9176 = vadd.f32 %v9063, %v9175
    %v9177 = vpop.f32.mrf.mxu0
    %v9178 = vadd.f32 %v9065, %v9177
    %v9179 = vpop.f32.mrf.mxu0
    %v9180 = vadd.f32 %v9067, %v9179
    %v9181 = vpop.f32.mrf.mxu0
    %v9182 = vadd.f32 %v9069, %v9181
    %9183 = vmatprep.mubr.bf16.mxu0 %v1349
    %9184 = vmatmul.mubr.bf16.gmra.mxu0 %v928
    %v9185 = vpop.f32.mrf.mxu0
    %v9186 = vadd.f32 %v9073, %v9185
    %v9187 = vpop.f32.mrf.mxu0
    %v9188 = vadd.f32 %v9075, %v9187
    %v9189 = vpop.f32.mrf.mxu0
    %v9190 = vadd.f32 %v9077, %v9189
    %v9191 = vpop.f32.mrf.mxu0
    %v9192 = vadd.f32 %v9079, %v9191
    %9193 = vmatprep.mubr.bf16.mxu0 %v1400
    %9194 = vmatmul.mubr.bf16.gmra.mxu0 %v937
    %v9195 = vpop.f32.mrf.mxu0
    %v9196 = vadd.f32 %v9083, %v9195
    %v9197 = vpop.f32.mrf.mxu0
    %v9198 = vadd.f32 %v9085, %v9197
    %v9199 = vpop.f32.mrf.mxu0
    %v9200 = vadd.f32 %v9087, %v9199
    %v9201 = vpop.f32.mrf.mxu0
    %v9202 = vadd.f32 %v9089, %v9201
    %9203 = vdwg.mxu0
    %9204 = vmatprep.subr.bf16.mxu0 %v7317
    %9205 = vmatpush1.bf16.msra.mxu0 %v7316
    %9206 = vmatprep.subr.bf16.mxu0 %v7314
    %9207 = vmatpush1.bf16.msra.mxu0 %v7313
    %9208 = vmatprep.subr.bf16.mxu0 %v7311
    %9209 = vmatpush1.bf16.msra.mxu0 %v7310
    %9210 = vmatprep.subr.bf16.mxu0 %v7308
    %9211 = vmatpush1.bf16.msra.mxu0 %v7307
    %9212 = vmatprep.subr.bf16.mxu0 %v7305
    %9213 = vmatpush1.bf16.msra.mxu0 %v7304
    %9214 = vmatprep.subr.bf16.mxu0 %v7302
    %9215 = vmatpush1.bf16.msra.mxu0 %v7301
    %9216 = vmatprep.subr.bf16.mxu0 %v7299
    %9217 = vmatpush1.bf16.msra.mxu0 %v7298
    %9218 = vmatprep.subr.bf16.mxu0 %v7296
    %9219 = vmatpush1.bf16.msra.mxu0 %v7295
    %9220 = vmatprep.subr.bf16.mxu0 %v7341
    %9221 = vmatpush2.bf16.msra.mxu0 %v7340
    %9222 = vmatprep.subr.bf16.mxu0 %v7338
    %9223 = vmatpush2.bf16.msra.mxu0 %v7337
    %9224 = vmatprep.subr.bf16.mxu0 %v7335
    %9225 = vmatpush2.bf16.msra.mxu0 %v7334
    %9226 = vmatprep.subr.bf16.mxu0 %v7332
    %9227 = vmatpush2.bf16.msra.mxu0 %v7331
    %9228 = vmatprep.subr.bf16.mxu0 %v7329
    %9229 = vmatpush2.bf16.msra.mxu0 %v7328
    %9230 = vmatprep.subr.bf16.mxu0 %v7326
    %9231 = vmatpush2.bf16.msra.mxu0 %v7325
    %9232 = vmatprep.subr.bf16.mxu0 %v7323
    %9233 = vmatpush2.bf16.msra.mxu0 %v7322
    %9234 = vmatprep.subr.bf16.mxu0 %v7320
    %9235 = vmatpush2.bf16.msra.mxu0 %v7319
    %9236 = vmatprep.mubr.bf16.mxu0 %v1077
    %9237 = vmatmul.mubr.bf16.gmra.mxu0 %v1060
    %v9238 = vpop.f32.mrf.mxu0
    %v9239 = vadd.f32 %v9126, %v9238
    %v9240 = vpop.f32.mrf.mxu0
    %v9241 = vadd.f32 %v9128, %v9240
    %v9242 = vpop.f32.mrf.mxu0
    %v9243 = vadd.f32 %v9130, %v9242
    %v9244 = vpop.f32.mrf.mxu0
    %v9245 = vadd.f32 %v9132, %v9244
    %9246 = vmatprep.mubr.bf16.mxu0 %v1128
    %9247 = vmatmul.mubr.bf16.gmra.mxu0 %v1111
    %v9248 = vpop.f32.mrf.mxu0
    %v9249 = vadd.f32 %v9136, %v9248
    %v9250 = vpop.f32.mrf.mxu0
    %v9251 = vadd.f32 %v9138, %v9250
    %v9252 = vpop.f32.mrf.mxu0
    %v9253 = vadd.f32 %v9140, %v9252
    %v9254 = vpop.f32.mrf.mxu0
    %v9255 = vadd.f32 %v9142, %v9254
    %9256 = vmatprep.mubr.bf16.mxu0 %v1179
    %9257 = vmatmul.mubr.bf16.gmra.mxu0 %v1162
    %v9258 = vpop.f32.mrf.mxu0
    %v9259 = vadd.f32 %v9146, %v9258
    %v9260 = vpop.f32.mrf.mxu0
    %v9261 = vadd.f32 %v9148, %v9260
    %v9262 = vpop.f32.mrf.mxu0
    %v9263 = vadd.f32 %v9150, %v9262
    %v9264 = vpop.f32.mrf.mxu0
    %v9265 = vadd.f32 %v9152, %v9264
    %9266 = vmatprep.mubr.bf16.mxu0 %v1230
    %9267 = vmatmul.mubr.bf16.gmra.mxu0 %v1213
    %v9268 = vpop.f32.mrf.mxu0
    %v9269 = vadd.f32 %v9156, %v9268
    %v9270 = vpop.f32.mrf.mxu0
    %v9271 = vadd.f32 %v9158, %v9270
    %v9272 = vpop.f32.mrf.mxu0
    %v9273 = vadd.f32 %v9160, %v9272
    %v9274 = vpop.f32.mrf.mxu0
    %v9275 = vadd.f32 %v9162, %v9274
    %9276 = vmatprep.mubr.bf16.mxu0 %v1281
    %9277 = vmatmul.mubr.bf16.gmra.mxu0 %v1264
    %v9278 = vpop.f32.mrf.mxu0
    %v9279 = vadd.f32 %v9166, %v9278
    %v9280 = vpop.f32.mrf.mxu0
    %v9281 = vadd.f32 %v9168, %v9280
    %v9282 = vpop.f32.mrf.mxu0
    %v9283 = vadd.f32 %v9170, %v9282
    %v9284 = vpop.f32.mrf.mxu0
    %v9285 = vadd.f32 %v9172, %v9284
    %9286 = vmatprep.mubr.bf16.mxu0 %v1332
    %9287 = vmatmul.mubr.bf16.gmra.mxu0 %v1315
    %v9288 = vpop.f32.mrf.mxu0
    %v9289 = vadd.f32 %v9176, %v9288
    %v9290 = vpop.f32.mrf.mxu0
    %v9291 = vadd.f32 %v9178, %v9290
    %v9292 = vpop.f32.mrf.mxu0
    %v9293 = vadd.f32 %v9180, %v9292
    %v9294 = vpop.f32.mrf.mxu0
    %v9295 = vadd.f32 %v9182, %v9294
    %9296 = vmatprep.mubr.bf16.mxu0 %v1383
    %9297 = vmatmul.mubr.bf16.gmra.mxu0 %v1366
    %v9298 = vpop.f32.mrf.mxu0
    %v9299 = vadd.f32 %v9186, %v9298
    %v9300 = vpop.f32.mrf.mxu0
    %v9301 = vadd.f32 %v9188, %v9300
    %v9302 = vpop.f32.mrf.mxu0
    %v9303 = vadd.f32 %v9190, %v9302
    %v9304 = vpop.f32.mrf.mxu0
    %v9305 = vadd.f32 %v9192, %v9304
    %9306 = vmatprep.mubr.bf16.mxu0 %v1434
    %9307 = vmatmul.mubr.bf16.gmra.mxu0 %v1417
    %v9308 = vpop.f32.mrf.mxu0
    %v9309 = vadd.f32 %v9196, %v9308
    %v9310 = vpop.f32.mrf.mxu0
    %v9311 = vadd.f32 %v9198, %v9310
    %v9312 = vpop.f32.mrf.mxu0
    %v9313 = vadd.f32 %v9200, %v9312
    %v9314 = vpop.f32.mrf.mxu0
    %v9315 = vadd.f32 %v9202, %v9314
    %9316 = vdwg.mxu0
    %9317 = vmatprep.subr.bf16.mxu0 %v7365
    %9318 = vmatpush1.bf16.msra.mxu0 %v7364
    %9319 = vmatprep.subr.bf16.mxu0 %v7362
    %9320 = vmatpush1.bf16.msra.mxu0 %v7361
    %9321 = vmatprep.subr.bf16.mxu0 %v7359
    %9322 = vmatpush1.bf16.msra.mxu0 %v7358
    %9323 = vmatprep.subr.bf16.mxu0 %v7356
    %9324 = vmatpush1.bf16.msra.mxu0 %v7355
    %9325 = vmatprep.subr.bf16.mxu0 %v7353
    %9326 = vmatpush1.bf16.msra.mxu0 %v7352
    %9327 = vmatprep.subr.bf16.mxu0 %v7350
    %9328 = vmatpush1.bf16.msra.mxu0 %v7349
    %9329 = vmatprep.subr.bf16.mxu0 %v7347
    %9330 = vmatpush1.bf16.msra.mxu0 %v7346
    %9331 = vmatprep.subr.bf16.mxu0 %v7344
    %9332 = vmatpush1.bf16.msra.mxu0 %v7343
    %9333 = vmatprep.subr.bf16.mxu0 %v7389
    %9334 = vmatpush2.bf16.msra.mxu0 %v7388
    %9335 = vmatprep.subr.bf16.mxu0 %v7386
    %9336 = vmatpush2.bf16.msra.mxu0 %v7385
    %9337 = vmatprep.subr.bf16.mxu0 %v7383
    %9338 = vmatpush2.bf16.msra.mxu0 %v7382
    %9339 = vmatprep.subr.bf16.mxu0 %v7380
    %9340 = vmatpush2.bf16.msra.mxu0 %v7379
    %9341 = vmatprep.subr.bf16.mxu0 %v7377
    %9342 = vmatpush2.bf16.msra.mxu0 %v7376
    %9343 = vmatprep.subr.bf16.mxu0 %v7374
    %9344 = vmatpush2.bf16.msra.mxu0 %v7373
    %9345 = vmatprep.subr.bf16.mxu0 %v7371
    %9346 = vmatpush2.bf16.msra.mxu0 %v7370
    %9347 = vmatprep.subr.bf16.mxu0 %v7368
    %9348 = vmatpush2.bf16.msra.mxu0 %v7367
    %9349 = vmatprep.mubr.bf16.mxu0 %v1529
    %9350 = vmatmul.mubr.bf16.gmra.mxu0 %v1526
    %v9351 = vpop.f32.mrf.mxu0
    %v9352 = vadd.f32 %v9239, %v9351
    %v9353 = vpop.f32.mrf.mxu0
    %v9354 = vadd.f32 %v9241, %v9353
    %v9355 = vpop.f32.mrf.mxu0
    %v9356 = vadd.f32 %v9243, %v9355
    %v9357 = vpop.f32.mrf.mxu0
    %v9358 = vadd.f32 %v9245, %v9357
    %9359 = vmatprep.mubr.bf16.mxu0 %v1538
    %9360 = vmatmul.mubr.bf16.gmra.mxu0 %v1535
    %v9361 = vpop.f32.mrf.mxu0
    %v9362 = vadd.f32 %v9249, %v9361
    %v9363 = vpop.f32.mrf.mxu0
    %v9364 = vadd.f32 %v9251, %v9363
    %v9365 = vpop.f32.mrf.mxu0
    %v9366 = vadd.f32 %v9253, %v9365
    %v9367 = vpop.f32.mrf.mxu0
    %v9368 = vadd.f32 %v9255, %v9367
    %9369 = vmatprep.mubr.bf16.mxu0 %v1547
    %9370 = vmatmul.mubr.bf16.gmra.mxu0 %v1544
    %v9371 = vpop.f32.mrf.mxu0
    %v9372 = vadd.f32 %v9259, %v9371
    %v9373 = vpop.f32.mrf.mxu0
    %v9374 = vadd.f32 %v9261, %v9373
    %v9375 = vpop.f32.mrf.mxu0
    %v9376 = vadd.f32 %v9263, %v9375
    %v9377 = vpop.f32.mrf.mxu0
    %v9378 = vadd.f32 %v9265, %v9377
    %9379 = vmatprep.mubr.bf16.mxu0 %v1556
    %9380 = vmatmul.mubr.bf16.gmra.mxu0 %v1553
    %v9381 = vpop.f32.mrf.mxu0
    %v9382 = vadd.f32 %v9269, %v9381
    %v9383 = vpop.f32.mrf.mxu0
    %v9384 = vadd.f32 %v9271, %v9383
    %v9385 = vpop.f32.mrf.mxu0
    %v9386 = vadd.f32 %v9273, %v9385
    %v9387 = vpop.f32.mrf.mxu0
    %v9388 = vadd.f32 %v9275, %v9387
    %9389 = vmatprep.mubr.bf16.mxu0 %v1565
    %9390 = vmatmul.mubr.bf16.gmra.mxu0 %v1562
    %v9391 = vpop.f32.mrf.mxu0
    %v9392 = vadd.f32 %v9279, %v9391
    %v9393 = vpop.f32.mrf.mxu0
    %v9394 = vadd.f32 %v9281, %v9393
    %v9395 = vpop.f32.mrf.mxu0
    %v9396 = vadd.f32 %v9283, %v9395
    %v9397 = vpop.f32.mrf.mxu0
    %v9398 = vadd.f32 %v9285, %v9397
    %9399 = vmatprep.mubr.bf16.mxu0 %v1574
    %9400 = vmatmul.mubr.bf16.gmra.mxu0 %v1571
    %v9401 = vpop.f32.mrf.mxu0
    %v9402 = vadd.f32 %v9289, %v9401
    %v9403 = vpop.f32.mrf.mxu0
    %v9404 = vadd.f32 %v9291, %v9403
    %v9405 = vpop.f32.mrf.mxu0
    %v9406 = vadd.f32 %v9293, %v9405
    %v9407 = vpop.f32.mrf.mxu0
    %v9408 = vadd.f32 %v9295, %v9407
    %9409 = vmatprep.mubr.bf16.mxu0 %v1583
    %9410 = vmatmul.mubr.bf16.gmra.mxu0 %v1580
    %v9411 = vpop.f32.mrf.mxu0
    %v9412 = vadd.f32 %v9299, %v9411
    %v9413 = vpop.f32.mrf.mxu0
    %v9414 = vadd.f32 %v9301, %v9413
    %v9415 = vpop.f32.mrf.mxu0
    %v9416 = vadd.f32 %v9303, %v9415
    %v9417 = vpop.f32.mrf.mxu0
    %v9418 = vadd.f32 %v9305, %v9417
    %9419 = vmatprep.mubr.bf16.mxu0 %v1592
    %9420 = vmatmul.mubr.bf16.gmra.mxu0 %v1589
    %v9421 = vpop.f32.mrf.mxu0
    %v9422 = vadd.f32 %v9309, %v9421
    %v9423 = vpop.f32.mrf.mxu0
    %v9424 = vadd.f32 %v9311, %v9423
    %v9425 = vpop.f32.mrf.mxu0
    %v9426 = vadd.f32 %v9313, %v9425
    %v9427 = vpop.f32.mrf.mxu0
    %v9428 = vadd.f32 %v9315, %v9427
    %9429 = vdwg.mxu0
    %9430 = vmatprep.subr.bf16.mxu0 %v7413
    %9431 = vmatpush1.bf16.msra.mxu0 %v7412
    %9432 = vmatprep.subr.bf16.mxu0 %v7410
    %9433 = vmatpush1.bf16.msra.mxu0 %v7409
    %9434 = vmatprep.subr.bf16.mxu0 %v7407
    %9435 = vmatpush1.bf16.msra.mxu0 %v7406
    %9436 = vmatprep.subr.bf16.mxu0 %v7404
    %9437 = vmatpush1.bf16.msra.mxu0 %v7403
    %9438 = vmatprep.subr.bf16.mxu0 %v7401
    %9439 = vmatpush1.bf16.msra.mxu0 %v7400
    %9440 = vmatprep.subr.bf16.mxu0 %v7398
    %9441 = vmatpush1.bf16.msra.mxu0 %v7397
    %9442 = vmatprep.subr.bf16.mxu0 %v7395
    %9443 = vmatpush1.bf16.msra.mxu0 %v7394
    %9444 = vmatprep.subr.bf16.mxu0 %v7392
    %9445 = vmatpush1.bf16.msra.mxu0 %v7391
    %9446 = vmatprep.subr.bf16.mxu0 %v7437
    %9447 = vmatpush2.bf16.msra.mxu0 %v7436
    %9448 = vmatprep.subr.bf16.mxu0 %v7434
    %9449 = vmatpush2.bf16.msra.mxu0 %v7433
    %9450 = vmatprep.subr.bf16.mxu0 %v7431
    %9451 = vmatpush2.bf16.msra.mxu0 %v7430
    %9452 = vmatprep.subr.bf16.mxu0 %v7428
    %9453 = vmatpush2.bf16.msra.mxu0 %v7427
    %9454 = vmatprep.subr.bf16.mxu0 %v7425
    %9455 = vmatpush2.bf16.msra.mxu0 %v7424
    %9456 = vmatprep.subr.bf16.mxu0 %v7422
    %9457 = vmatpush2.bf16.msra.mxu0 %v7421
    %9458 = vmatprep.subr.bf16.mxu0 %v7419
    %9459 = vmatpush2.bf16.msra.mxu0 %v7418
    %9460 = vmatprep.subr.bf16.mxu0 %v7416
    %9461 = vmatpush2.bf16.msra.mxu0 %v7415
    %9462 = vmatprep.mubr.bf16.mxu0 %v1701
    %9463 = vmatmul.mubr.bf16.gmra.mxu0 %v1532
    %v9464 = vpop.f32.mrf.mxu0
    %v9465 = vadd.f32 %v9352, %v9464
    %v9466 = vpop.f32.mrf.mxu0
    %v9467 = vadd.f32 %v9354, %v9466
    %v9468 = vpop.f32.mrf.mxu0
    %v9469 = vadd.f32 %v9356, %v9468
    %v9470 = vpop.f32.mrf.mxu0
    %v9471 = vadd.f32 %v9358, %v9470
    %9472 = vmatprep.mubr.bf16.mxu0 %v1752
    %9473 = vmatmul.mubr.bf16.gmra.mxu0 %v1541
    %v9474 = vpop.f32.mrf.mxu0
    %v9475 = vadd.f32 %v9362, %v9474
    %v9476 = vpop.f32.mrf.mxu0
    %v9477 = vadd.f32 %v9364, %v9476
    %v9478 = vpop.f32.mrf.mxu0
    %v9479 = vadd.f32 %v9366, %v9478
    %v9480 = vpop.f32.mrf.mxu0
    %v9481 = vadd.f32 %v9368, %v9480
    %9482 = vmatprep.mubr.bf16.mxu0 %v1803
    %9483 = vmatmul.mubr.bf16.gmra.mxu0 %v1550
    %v9484 = vpop.f32.mrf.mxu0
    %v9485 = vadd.f32 %v9372, %v9484
    %v9486 = vpop.f32.mrf.mxu0
    %v9487 = vadd.f32 %v9374, %v9486
    %v9488 = vpop.f32.mrf.mxu0
    %v9489 = vadd.f32 %v9376, %v9488
    %v9490 = vpop.f32.mrf.mxu0
    %v9491 = vadd.f32 %v9378, %v9490
    %9492 = vmatprep.mubr.bf16.mxu0 %v1854
    %9493 = vmatmul.mubr.bf16.gmra.mxu0 %v1559
    %v9494 = vpop.f32.mrf.mxu0
    %v9495 = vadd.f32 %v9382, %v9494
    %v9496 = vpop.f32.mrf.mxu0
    %v9497 = vadd.f32 %v9384, %v9496
    %v9498 = vpop.f32.mrf.mxu0
    %v9499 = vadd.f32 %v9386, %v9498
    %v9500 = vpop.f32.mrf.mxu0
    %v9501 = vadd.f32 %v9388, %v9500
    %9502 = vmatprep.mubr.bf16.mxu0 %v1905
    %9503 = vmatmul.mubr.bf16.gmra.mxu0 %v1568
    %v9504 = vpop.f32.mrf.mxu0
    %v9505 = vadd.f32 %v9392, %v9504
    %v9506 = vpop.f32.mrf.mxu0
    %v9507 = vadd.f32 %v9394, %v9506
    %v9508 = vpop.f32.mrf.mxu0
    %v9509 = vadd.f32 %v9396, %v9508
    %v9510 = vpop.f32.mrf.mxu0
    %v9511 = vadd.f32 %v9398, %v9510
    %9512 = vmatprep.mubr.bf16.mxu0 %v1956
    %9513 = vmatmul.mubr.bf16.gmra.mxu0 %v1577
    %v9514 = vpop.f32.mrf.mxu0
    %v9515 = vadd.f32 %v9402, %v9514
    %v9516 = vpop.f32.mrf.mxu0
    %v9517 = vadd.f32 %v9404, %v9516
    %v9518 = vpop.f32.mrf.mxu0
    %v9519 = vadd.f32 %v9406, %v9518
    %v9520 = vpop.f32.mrf.mxu0
    %v9521 = vadd.f32 %v9408, %v9520
    %9522 = vmatprep.mubr.bf16.mxu0 %v2007
    %9523 = vmatmul.mubr.bf16.gmra.mxu0 %v1586
    %v9524 = vpop.f32.mrf.mxu0
    %v9525 = vadd.f32 %v9412, %v9524
    %v9526 = vpop.f32.mrf.mxu0
    %v9527 = vadd.f32 %v9414, %v9526
    %v9528 = vpop.f32.mrf.mxu0
    %v9529 = vadd.f32 %v9416, %v9528
    %v9530 = vpop.f32.mrf.mxu0
    %v9531 = vadd.f32 %v9418, %v9530
    %9532 = vmatprep.mubr.bf16.mxu0 %v2058
    %9533 = vmatmul.mubr.bf16.gmra.mxu0 %v1595
    %v9534 = vpop.f32.mrf.mxu0
    %v9535 = vadd.f32 %v9422, %v9534
    %v9536 = vpop.f32.mrf.mxu0
    %v9537 = vadd.f32 %v9424, %v9536
    %v9538 = vpop.f32.mrf.mxu0
    %v9539 = vadd.f32 %v9426, %v9538
    %v9540 = vpop.f32.mrf.mxu0
    %v9541 = vadd.f32 %v9428, %v9540
    %9542 = vdwg.mxu0
    %9543 = vmatprep.subr.bf16.mxu0 %v7461
    %9544 = vmatpush1.bf16.msra.mxu0 %v7460
    %9545 = vmatprep.subr.bf16.mxu0 %v7458
    %9546 = vmatpush1.bf16.msra.mxu0 %v7457
    %9547 = vmatprep.subr.bf16.mxu0 %v7455
    %9548 = vmatpush1.bf16.msra.mxu0 %v7454
    %9549 = vmatprep.subr.bf16.mxu0 %v7452
    %9550 = vmatpush1.bf16.msra.mxu0 %v7451
    %9551 = vmatprep.subr.bf16.mxu0 %v7449
    %9552 = vmatpush1.bf16.msra.mxu0 %v7448
    %9553 = vmatprep.subr.bf16.mxu0 %v7446
    %9554 = vmatpush1.bf16.msra.mxu0 %v7445
    %9555 = vmatprep.subr.bf16.mxu0 %v7443
    %9556 = vmatpush1.bf16.msra.mxu0 %v7442
    %9557 = vmatprep.subr.bf16.mxu0 %v7440
    %9558 = vmatpush1.bf16.msra.mxu0 %v7439
    %9559 = vmatprep.subr.bf16.mxu0 %v7485
    %9560 = vmatpush2.bf16.msra.mxu0 %v7484
    %9561 = vmatprep.subr.bf16.mxu0 %v7482
    %9562 = vmatpush2.bf16.msra.mxu0 %v7481
    %9563 = vmatprep.subr.bf16.mxu0 %v7479
    %9564 = vmatpush2.bf16.msra.mxu0 %v7478
    %9565 = vmatprep.subr.bf16.mxu0 %v7476
    %9566 = vmatpush2.bf16.msra.mxu0 %v7475
    %9567 = vmatprep.subr.bf16.mxu0 %v7473
    %9568 = vmatpush2.bf16.msra.mxu0 %v7472
    %9569 = vmatprep.subr.bf16.mxu0 %v7470
    %9570 = vmatpush2.bf16.msra.mxu0 %v7469
    %9571 = vmatprep.subr.bf16.mxu0 %v7467
    %9572 = vmatpush2.bf16.msra.mxu0 %v7466
    %9573 = vmatprep.subr.bf16.mxu0 %v7464
    %9574 = vmatpush2.bf16.msra.mxu0 %v7463
    %9575 = vmatprep.mubr.bf16.mxu0 %v1735
    %9576 = vmatmul.mubr.bf16.gmra.mxu0 %v1718
    %v9577 = vpop.f32.mrf.mxu0
    %v9578 = vadd.f32 %v9465, %v9577
    %v9579 = vpop.f32.mrf.mxu0
    %v9580 = vadd.f32 %v9467, %v9579
    %v9581 = vpop.f32.mrf.mxu0
    %v9582 = vadd.f32 %v9469, %v9581
    %v9583 = vpop.f32.mrf.mxu0
    %v9584 = vadd.f32 %v9471, %v9583
    %9585 = vmatprep.mubr.bf16.mxu0 %v1786
    %9586 = vmatmul.mubr.bf16.gmra.mxu0 %v1769
    %v9587 = vpop.f32.mrf.mxu0
    %v9588 = vadd.f32 %v9475, %v9587
    %v9589 = vpop.f32.mrf.mxu0
    %v9590 = vadd.f32 %v9477, %v9589
    %v9591 = vpop.f32.mrf.mxu0
    %v9592 = vadd.f32 %v9479, %v9591
    %v9593 = vpop.f32.mrf.mxu0
    %v9594 = vadd.f32 %v9481, %v9593
    %9595 = vmatprep.mubr.bf16.mxu0 %v1837
    %9596 = vmatmul.mubr.bf16.gmra.mxu0 %v1820
    %v9597 = vpop.f32.mrf.mxu0
    %v9598 = vadd.f32 %v9485, %v9597
    %v9599 = vpop.f32.mrf.mxu0
    %v9600 = vadd.f32 %v9487, %v9599
    %v9601 = vpop.f32.mrf.mxu0
    %v9602 = vadd.f32 %v9489, %v9601
    %v9603 = vpop.f32.mrf.mxu0
    %v9604 = vadd.f32 %v9491, %v9603
    %9605 = vmatprep.mubr.bf16.mxu0 %v1888
    %9606 = vmatmul.mubr.bf16.gmra.mxu0 %v1871
    %v9607 = vpop.f32.mrf.mxu0
    %v9608 = vadd.f32 %v9495, %v9607
    %v9609 = vpop.f32.mrf.mxu0
    %v9610 = vadd.f32 %v9497, %v9609
    %v9611 = vpop.f32.mrf.mxu0
    %v9612 = vadd.f32 %v9499, %v9611
    %v9613 = vpop.f32.mrf.mxu0
    %v9614 = vadd.f32 %v9501, %v9613
    %9615 = vmatprep.mubr.bf16.mxu0 %v1939
    %9616 = vmatmul.mubr.bf16.gmra.mxu0 %v1922
    %v9617 = vpop.f32.mrf.mxu0
    %v9618 = vadd.f32 %v9505, %v9617
    %v9619 = vpop.f32.mrf.mxu0
    %v9620 = vadd.f32 %v9507, %v9619
    %v9621 = vpop.f32.mrf.mxu0
    %v9622 = vadd.f32 %v9509, %v9621
    %v9623 = vpop.f32.mrf.mxu0
    %v9624 = vadd.f32 %v9511, %v9623
    %9625 = vmatprep.mubr.bf16.mxu0 %v1990
    %9626 = vmatmul.mubr.bf16.gmra.mxu0 %v1973
    %v9627 = vpop.f32.mrf.mxu0
    %v9628 = vadd.f32 %v9515, %v9627
    %v9629 = vpop.f32.mrf.mxu0
    %v9630 = vadd.f32 %v9517, %v9629
    %v9631 = vpop.f32.mrf.mxu0
    %v9632 = vadd.f32 %v9519, %v9631
    %v9633 = vpop.f32.mrf.mxu0
    %v9634 = vadd.f32 %v9521, %v9633
    %9635 = vmatprep.mubr.bf16.mxu0 %v2041
    %9636 = vmatmul.mubr.bf16.gmra.mxu0 %v2024
    %v9637 = vpop.f32.mrf.mxu0
    %v9638 = vadd.f32 %v9525, %v9637
    %v9639 = vpop.f32.mrf.mxu0
    %v9640 = vadd.f32 %v9527, %v9639
    %v9641 = vpop.f32.mrf.mxu0
    %v9642 = vadd.f32 %v9529, %v9641
    %v9643 = vpop.f32.mrf.mxu0
    %v9644 = vadd.f32 %v9531, %v9643
    %9645 = vmatprep.mubr.bf16.mxu0 %v2092
    %9646 = vmatmul.mubr.bf16.gmra.mxu0 %v2075
    %v9647 = vpop.f32.mrf.mxu0
    %v9648 = vadd.f32 %v9535, %v9647
    %v9649 = vpop.f32.mrf.mxu0
    %v9650 = vadd.f32 %v9537, %v9649
    %v9651 = vpop.f32.mrf.mxu0
    %v9652 = vadd.f32 %v9539, %v9651
    %v9653 = vpop.f32.mrf.mxu0
    %v9654 = vadd.f32 %v9541, %v9653
    %9655 = vdwg.mxu0
    %9656 = vmatprep.subr.bf16.mxu0 %v7509
    %9657 = vmatpush1.bf16.msra.mxu0 %v7508
    %9658 = vmatprep.subr.bf16.mxu0 %v7506
    %9659 = vmatpush1.bf16.msra.mxu0 %v7505
    %9660 = vmatprep.subr.bf16.mxu0 %v7503
    %9661 = vmatpush1.bf16.msra.mxu0 %v7502
    %9662 = vmatprep.subr.bf16.mxu0 %v7500
    %9663 = vmatpush1.bf16.msra.mxu0 %v7499
    %9664 = vmatprep.subr.bf16.mxu0 %v7497
    %9665 = vmatpush1.bf16.msra.mxu0 %v7496
    %9666 = vmatprep.subr.bf16.mxu0 %v7494
    %9667 = vmatpush1.bf16.msra.mxu0 %v7493
    %9668 = vmatprep.subr.bf16.mxu0 %v7491
    %9669 = vmatpush1.bf16.msra.mxu0 %v7490
    %9670 = vmatprep.subr.bf16.mxu0 %v7488
    %9671 = vmatpush1.bf16.msra.mxu0 %v7487
    %9672 = vmatprep.subr.bf16.mxu0 %v7533
    %9673 = vmatpush2.bf16.msra.mxu0 %v7532
    %9674 = vmatprep.subr.bf16.mxu0 %v7530
    %9675 = vmatpush2.bf16.msra.mxu0 %v7529
    %9676 = vmatprep.subr.bf16.mxu0 %v7527
    %9677 = vmatpush2.bf16.msra.mxu0 %v7526
    %9678 = vmatprep.subr.bf16.mxu0 %v7524
    %9679 = vmatpush2.bf16.msra.mxu0 %v7523
    %9680 = vmatprep.subr.bf16.mxu0 %v7521
    %9681 = vmatpush2.bf16.msra.mxu0 %v7520
    %9682 = vmatprep.subr.bf16.mxu0 %v7518
    %9683 = vmatpush2.bf16.msra.mxu0 %v7517
    %9684 = vmatprep.subr.bf16.mxu0 %v7515
    %9685 = vmatpush2.bf16.msra.mxu0 %v7514
    %9686 = vmatprep.subr.bf16.mxu0 %v7512
    %9687 = vmatpush2.bf16.msra.mxu0 %v7511
    %9688 = vmatprep.mubr.bf16.mxu0 %v2187
    %9689 = vmatmul.mubr.bf16.gmra.mxu0 %v2184
    %v9690 = vpop.f32.mrf.mxu0
    %v9691 = vadd.f32 %v9578, %v9690
    %v9692 = vpop.f32.mrf.mxu0
    %v9693 = vadd.f32 %v9580, %v9692
    %v9694 = vpop.f32.mrf.mxu0
    %v9695 = vadd.f32 %v9582, %v9694
    %v9696 = vpop.f32.mrf.mxu0
    %v9697 = vadd.f32 %v9584, %v9696
    %9698 = vmatprep.mubr.bf16.mxu0 %v2196
    %9699 = vmatmul.mubr.bf16.gmra.mxu0 %v2193
    %v9700 = vpop.f32.mrf.mxu0
    %v9701 = vadd.f32 %v9588, %v9700
    %v9702 = vpop.f32.mrf.mxu0
    %v9703 = vadd.f32 %v9590, %v9702
    %v9704 = vpop.f32.mrf.mxu0
    %v9705 = vadd.f32 %v9592, %v9704
    %v9706 = vpop.f32.mrf.mxu0
    %v9707 = vadd.f32 %v9594, %v9706
    %9708 = vmatprep.mubr.bf16.mxu0 %v2205
    %9709 = vmatmul.mubr.bf16.gmra.mxu0 %v2202
    %v9710 = vpop.f32.mrf.mxu0
    %v9711 = vadd.f32 %v9598, %v9710
    %v9712 = vpop.f32.mrf.mxu0
    %v9713 = vadd.f32 %v9600, %v9712
    %v9714 = vpop.f32.mrf.mxu0
    %v9715 = vadd.f32 %v9602, %v9714
    %v9716 = vpop.f32.mrf.mxu0
    %v9717 = vadd.f32 %v9604, %v9716
    %9718 = vmatprep.mubr.bf16.mxu0 %v2214
    %9719 = vmatmul.mubr.bf16.gmra.mxu0 %v2211
    %v9720 = vpop.f32.mrf.mxu0
    %v9721 = vadd.f32 %v9608, %v9720
    %v9722 = vpop.f32.mrf.mxu0
    %v9723 = vadd.f32 %v9610, %v9722
    %v9724 = vpop.f32.mrf.mxu0
    %v9725 = vadd.f32 %v9612, %v9724
    %v9726 = vpop.f32.mrf.mxu0
    %v9727 = vadd.f32 %v9614, %v9726
    %9728 = vmatprep.mubr.bf16.mxu0 %v2223
    %9729 = vmatmul.mubr.bf16.gmra.mxu0 %v2220
    %v9730 = vpop.f32.mrf.mxu0
    %v9731 = vadd.f32 %v9618, %v9730
    %v9732 = vpop.f32.mrf.mxu0
    %v9733 = vadd.f32 %v9620, %v9732
    %v9734 = vpop.f32.mrf.mxu0
    %v9735 = vadd.f32 %v9622, %v9734
    %v9736 = vpop.f32.mrf.mxu0
    %v9737 = vadd.f32 %v9624, %v9736
    %9738 = vmatprep.mubr.bf16.mxu0 %v2232
    %9739 = vmatmul.mubr.bf16.gmra.mxu0 %v2229
    %v9740 = vpop.f32.mrf.mxu0
    %v9741 = vadd.f32 %v9628, %v9740
    %v9742 = vpop.f32.mrf.mxu0
    %v9743 = vadd.f32 %v9630, %v9742
    %v9744 = vpop.f32.mrf.mxu0
    %v9745 = vadd.f32 %v9632, %v9744
    %v9746 = vpop.f32.mrf.mxu0
    %v9747 = vadd.f32 %v9634, %v9746
    %9748 = vmatprep.mubr.bf16.mxu0 %v2241
    %9749 = vmatmul.mubr.bf16.gmra.mxu0 %v2238
    %v9750 = vpop.f32.mrf.mxu0
    %v9751 = vadd.f32 %v9638, %v9750
    %v9752 = vpop.f32.mrf.mxu0
    %v9753 = vadd.f32 %v9640, %v9752
    %v9754 = vpop.f32.mrf.mxu0
    %v9755 = vadd.f32 %v9642, %v9754
    %v9756 = vpop.f32.mrf.mxu0
    %v9757 = vadd.f32 %v9644, %v9756
    %9758 = vmatprep.mubr.bf16.mxu0 %v2250
    %9759 = vmatmul.mubr.bf16.gmra.mxu0 %v2247
    %v9760 = vpop.f32.mrf.mxu0
    %v9761 = vadd.f32 %v9648, %v9760
    %v9762 = vpop.f32.mrf.mxu0
    %v9763 = vadd.f32 %v9650, %v9762
    %v9764 = vpop.f32.mrf.mxu0
    %v9765 = vadd.f32 %v9652, %v9764
    %v9766 = vpop.f32.mrf.mxu0
    %v9767 = vadd.f32 %v9654, %v9766
    %9768 = vdwg.mxu0
    %9769 = vmatprep.subr.bf16.mxu0 %v7557
    %9770 = vmatpush1.bf16.msra.mxu0 %v7556
    %9771 = vmatprep.subr.bf16.mxu0 %v7554
    %9772 = vmatpush1.bf16.msra.mxu0 %v7553
    %9773 = vmatprep.subr.bf16.mxu0 %v7551
    %9774 = vmatpush1.bf16.msra.mxu0 %v7550
    %9775 = vmatprep.subr.bf16.mxu0 %v7548
    %9776 = vmatpush1.bf16.msra.mxu0 %v7547
    %9777 = vmatprep.subr.bf16.mxu0 %v7545
    %9778 = vmatpush1.bf16.msra.mxu0 %v7544
    %9779 = vmatprep.subr.bf16.mxu0 %v7542
    %9780 = vmatpush1.bf16.msra.mxu0 %v7541
    %9781 = vmatprep.subr.bf16.mxu0 %v7539
    %9782 = vmatpush1.bf16.msra.mxu0 %v7538
    %9783 = vmatprep.subr.bf16.mxu0 %v7536
    %9784 = vmatpush1.bf16.msra.mxu0 %v7535
    %9785 = vmatprep.subr.bf16.mxu0 %v7581
    %9786 = vmatpush2.bf16.msra.mxu0 %v7580
    %9787 = vmatprep.subr.bf16.mxu0 %v7578
    %9788 = vmatpush2.bf16.msra.mxu0 %v7577
    %9789 = vmatprep.subr.bf16.mxu0 %v7575
    %9790 = vmatpush2.bf16.msra.mxu0 %v7574
    %9791 = vmatprep.subr.bf16.mxu0 %v7572
    %9792 = vmatpush2.bf16.msra.mxu0 %v7571
    %9793 = vmatprep.subr.bf16.mxu0 %v7569
    %9794 = vmatpush2.bf16.msra.mxu0 %v7568
    %9795 = vmatprep.subr.bf16.mxu0 %v7566
    %9796 = vmatpush2.bf16.msra.mxu0 %v7565
    %9797 = vmatprep.subr.bf16.mxu0 %v7563
    %9798 = vmatpush2.bf16.msra.mxu0 %v7562
    %9799 = vmatprep.subr.bf16.mxu0 %v7560
    %9800 = vmatpush2.bf16.msra.mxu0 %v7559
    %9801 = vmatprep.mubr.bf16.mxu0 %v2359
    %9802 = vmatmul.mubr.bf16.gmra.mxu0 %v2190
    %v9803 = vpop.f32.mrf.mxu0
    %v9804 = vadd.f32 %v9691, %v9803
    %v9805 = vpop.f32.mrf.mxu0
    %v9806 = vadd.f32 %v9693, %v9805
    %v9807 = vpop.f32.mrf.mxu0
    %v9808 = vadd.f32 %v9695, %v9807
    %v9809 = vpop.f32.mrf.mxu0
    %v9810 = vadd.f32 %v9697, %v9809
    %9811 = vmatprep.mubr.bf16.mxu0 %v2410
    %9812 = vmatmul.mubr.bf16.gmra.mxu0 %v2199
    %v9813 = vpop.f32.mrf.mxu0
    %v9814 = vadd.f32 %v9701, %v9813
    %v9815 = vpop.f32.mrf.mxu0
    %v9816 = vadd.f32 %v9703, %v9815
    %v9817 = vpop.f32.mrf.mxu0
    %v9818 = vadd.f32 %v9705, %v9817
    %v9819 = vpop.f32.mrf.mxu0
    %v9820 = vadd.f32 %v9707, %v9819
    %9821 = vmatprep.mubr.bf16.mxu0 %v2461
    %9822 = vmatmul.mubr.bf16.gmra.mxu0 %v2208
    %v9823 = vpop.f32.mrf.mxu0
    %v9824 = vadd.f32 %v9711, %v9823
    %v9825 = vpop.f32.mrf.mxu0
    %v9826 = vadd.f32 %v9713, %v9825
    %v9827 = vpop.f32.mrf.mxu0
    %v9828 = vadd.f32 %v9715, %v9827
    %v9829 = vpop.f32.mrf.mxu0
    %v9830 = vadd.f32 %v9717, %v9829
    %9831 = vmatprep.mubr.bf16.mxu0 %v2512
    %9832 = vmatmul.mubr.bf16.gmra.mxu0 %v2217
    %v9833 = vpop.f32.mrf.mxu0
    %v9834 = vadd.f32 %v9721, %v9833
    %v9835 = vpop.f32.mrf.mxu0
    %v9836 = vadd.f32 %v9723, %v9835
    %v9837 = vpop.f32.mrf.mxu0
    %v9838 = vadd.f32 %v9725, %v9837
    %v9839 = vpop.f32.mrf.mxu0
    %v9840 = vadd.f32 %v9727, %v9839
    %9841 = vmatprep.mubr.bf16.mxu0 %v2563
    %9842 = vmatmul.mubr.bf16.gmra.mxu0 %v2226
    %v9843 = vpop.f32.mrf.mxu0
    %v9844 = vadd.f32 %v9731, %v9843
    %v9845 = vpop.f32.mrf.mxu0
    %v9846 = vadd.f32 %v9733, %v9845
    %v9847 = vpop.f32.mrf.mxu0
    %v9848 = vadd.f32 %v9735, %v9847
    %v9849 = vpop.f32.mrf.mxu0
    %v9850 = vadd.f32 %v9737, %v9849
    %9851 = vmatprep.mubr.bf16.mxu0 %v2614
    %9852 = vmatmul.mubr.bf16.gmra.mxu0 %v2235
    %v9853 = vpop.f32.mrf.mxu0
    %v9854 = vadd.f32 %v9741, %v9853
    %v9855 = vpop.f32.mrf.mxu0
    %v9856 = vadd.f32 %v9743, %v9855
    %v9857 = vpop.f32.mrf.mxu0
    %v9858 = vadd.f32 %v9745, %v9857
    %v9859 = vpop.f32.mrf.mxu0
    %v9860 = vadd.f32 %v9747, %v9859
    %9861 = vmatprep.mubr.bf16.mxu0 %v2665
    %9862 = vmatmul.mubr.bf16.gmra.mxu0 %v2244
    %v9863 = vpop.f32.mrf.mxu0
    %v9864 = vadd.f32 %v9751, %v9863
    %v9865 = vpop.f32.mrf.mxu0
    %v9866 = vadd.f32 %v9753, %v9865
    %v9867 = vpop.f32.mrf.mxu0
    %v9868 = vadd.f32 %v9755, %v9867
    %v9869 = vpop.f32.mrf.mxu0
    %v9870 = vadd.f32 %v9757, %v9869
    %9871 = vmatprep.mubr.bf16.mxu0 %v2716
    %9872 = vmatmul.mubr.bf16.gmra.mxu0 %v2253
    %v9873 = vpop.f32.mrf.mxu0
    %v9874 = vadd.f32 %v9761, %v9873
    %v9875 = vpop.f32.mrf.mxu0
    %v9876 = vadd.f32 %v9763, %v9875
    %v9877 = vpop.f32.mrf.mxu0
    %v9878 = vadd.f32 %v9765, %v9877
    %v9879 = vpop.f32.mrf.mxu0
    %v9880 = vadd.f32 %v9767, %v9879
    %9881 = vdwg.mxu0
    %9882 = vmatprep.subr.bf16.mxu0 %v7605
    %9883 = vmatpush1.bf16.msra.mxu0 %v7604
    %9884 = vmatprep.subr.bf16.mxu0 %v7602
    %9885 = vmatpush1.bf16.msra.mxu0 %v7601
    %9886 = vmatprep.subr.bf16.mxu0 %v7599
    %9887 = vmatpush1.bf16.msra.mxu0 %v7598
    %9888 = vmatprep.subr.bf16.mxu0 %v7596
    %9889 = vmatpush1.bf16.msra.mxu0 %v7595
    %9890 = vmatprep.subr.bf16.mxu0 %v7593
    %9891 = vmatpush1.bf16.msra.mxu0 %v7592
    %9892 = vmatprep.subr.bf16.mxu0 %v7590
    %9893 = vmatpush1.bf16.msra.mxu0 %v7589
    %9894 = vmatprep.subr.bf16.mxu0 %v7587
    %9895 = vmatpush1.bf16.msra.mxu0 %v7586
    %9896 = vmatprep.subr.bf16.mxu0 %v7584
    %9897 = vmatpush1.bf16.msra.mxu0 %v7583
    %9898 = vmatprep.subr.bf16.mxu0 %v7629
    %9899 = vmatpush2.bf16.msra.mxu0 %v7628
    %9900 = vmatprep.subr.bf16.mxu0 %v7626
    %9901 = vmatpush2.bf16.msra.mxu0 %v7625
    %9902 = vmatprep.subr.bf16.mxu0 %v7623
    %9903 = vmatpush2.bf16.msra.mxu0 %v7622
    %9904 = vmatprep.subr.bf16.mxu0 %v7620
    %9905 = vmatpush2.bf16.msra.mxu0 %v7619
    %9906 = vmatprep.subr.bf16.mxu0 %v7617
    %9907 = vmatpush2.bf16.msra.mxu0 %v7616
    %9908 = vmatprep.subr.bf16.mxu0 %v7614
    %9909 = vmatpush2.bf16.msra.mxu0 %v7613
    %9910 = vmatprep.subr.bf16.mxu0 %v7611
    %9911 = vmatpush2.bf16.msra.mxu0 %v7610
    %9912 = vmatprep.subr.bf16.mxu0 %v7608
    %9913 = vmatpush2.bf16.msra.mxu0 %v7607
    %9914 = vmatprep.mubr.bf16.mxu0 %v2393
    %9915 = vmatmul.mubr.bf16.gmra.mxu0 %v2376
    %v9916 = vpop.f32.mrf.mxu0
    %v9917 = vadd.f32 %v9804, %v9916
    %v9918 = vpop.f32.mrf.mxu0
    %v9919 = vadd.f32 %v9806, %v9918
    %v9920 = vpop.f32.mrf.mxu0
    %v9921 = vadd.f32 %v9808, %v9920
    %v9922 = vpop.f32.mrf.mxu0
    %v9923 = vadd.f32 %v9810, %v9922
    %9924 = vmatprep.mubr.bf16.mxu0 %v2444
    %9925 = vmatmul.mubr.bf16.gmra.mxu0 %v2427
    %v9926 = vpop.f32.mrf.mxu0
    %v9927 = vadd.f32 %v9814, %v9926
    %v9928 = vpop.f32.mrf.mxu0
    %v9929 = vadd.f32 %v9816, %v9928
    %v9930 = vpop.f32.mrf.mxu0
    %v9931 = vadd.f32 %v9818, %v9930
    %v9932 = vpop.f32.mrf.mxu0
    %v9933 = vadd.f32 %v9820, %v9932
    %9934 = vmatprep.mubr.bf16.mxu0 %v2495
    %9935 = vmatmul.mubr.bf16.gmra.mxu0 %v2478
    %v9936 = vpop.f32.mrf.mxu0
    %v9937 = vadd.f32 %v9824, %v9936
    %v9938 = vpop.f32.mrf.mxu0
    %v9939 = vadd.f32 %v9826, %v9938
    %v9940 = vpop.f32.mrf.mxu0
    %v9941 = vadd.f32 %v9828, %v9940
    %v9942 = vpop.f32.mrf.mxu0
    %v9943 = vadd.f32 %v9830, %v9942
    %9944 = vmatprep.mubr.bf16.mxu0 %v2546
    %9945 = vmatmul.mubr.bf16.gmra.mxu0 %v2529
    %v9946 = vpop.f32.mrf.mxu0
    %v9947 = vadd.f32 %v9834, %v9946
    %v9948 = vpop.f32.mrf.mxu0
    %v9949 = vadd.f32 %v9836, %v9948
    %v9950 = vpop.f32.mrf.mxu0
    %v9951 = vadd.f32 %v9838, %v9950
    %v9952 = vpop.f32.mrf.mxu0
    %v9953 = vadd.f32 %v9840, %v9952
    %9954 = vmatprep.mubr.bf16.mxu0 %v2597
    %9955 = vmatmul.mubr.bf16.gmra.mxu0 %v2580
    %v9956 = vpop.f32.mrf.mxu0
    %v9957 = vadd.f32 %v9844, %v9956
    %v9958 = vpop.f32.mrf.mxu0
    %v9959 = vadd.f32 %v9846, %v9958
    %v9960 = vpop.f32.mrf.mxu0
    %v9961 = vadd.f32 %v9848, %v9960
    %v9962 = vpop.f32.mrf.mxu0
    %v9963 = vadd.f32 %v9850, %v9962
    %9964 = vmatprep.mubr.bf16.mxu0 %v2648
    %9965 = vmatmul.mubr.bf16.gmra.mxu0 %v2631
    %v9966 = vpop.f32.mrf.mxu0
    %v9967 = vadd.f32 %v9854, %v9966
    %v9968 = vpop.f32.mrf.mxu0
    %v9969 = vadd.f32 %v9856, %v9968
    %v9970 = vpop.f32.mrf.mxu0
    %v9971 = vadd.f32 %v9858, %v9970
    %v9972 = vpop.f32.mrf.mxu0
    %v9973 = vadd.f32 %v9860, %v9972
    %9974 = vmatprep.mubr.bf16.mxu0 %v2699
    %9975 = vmatmul.mubr.bf16.gmra.mxu0 %v2682
    %v9976 = vpop.f32.mrf.mxu0
    %v9977 = vadd.f32 %v9864, %v9976
    %v9978 = vpop.f32.mrf.mxu0
    %v9979 = vadd.f32 %v9866, %v9978
    %v9980 = vpop.f32.mrf.mxu0
    %v9981 = vadd.f32 %v9868, %v9980
    %v9982 = vpop.f32.mrf.mxu0
    %v9983 = vadd.f32 %v9870, %v9982
    %9984 = vmatprep.mubr.bf16.mxu0 %v2750
    %9985 = vmatmul.mubr.bf16.gmra.mxu0 %v2733
    %v9986 = vpop.f32.mrf.mxu0
    %v9987 = vadd.f32 %v9874, %v9986
    %v9988 = vpop.f32.mrf.mxu0
    %v9989 = vadd.f32 %v9876, %v9988
    %v9990 = vpop.f32.mrf.mxu0
    %v9991 = vadd.f32 %v9878, %v9990
    %v9992 = vpop.f32.mrf.mxu0
    %v9993 = vadd.f32 %v9880, %v9992
    %9994 = vdwg.mxu0
    %9995 = vmatprep.subr.bf16.mxu0 %v7653
    %9996 = vmatpush1.bf16.msra.mxu0 %v7652
    %9997 = vmatprep.subr.bf16.mxu0 %v7650
    %9998 = vmatpush1.bf16.msra.mxu0 %v7649
    %9999 = vmatprep.subr.bf16.mxu0 %v7647
    %10000 = vmatpush1.bf16.msra.mxu0 %v7646
    %10001 = vmatprep.subr.bf16.mxu0 %v7644
    %10002 = vmatpush1.bf16.msra.mxu0 %v7643
    %10003 = vmatprep.subr.bf16.mxu0 %v7641
    %10004 = vmatpush1.bf16.msra.mxu0 %v7640
    %10005 = vmatprep.subr.bf16.mxu0 %v7638
    %10006 = vmatpush1.bf16.msra.mxu0 %v7637
    %10007 = vmatprep.subr.bf16.mxu0 %v7635
    %10008 = vmatpush1.bf16.msra.mxu0 %v7634
    %10009 = vmatprep.subr.bf16.mxu0 %v7632
    %10010 = vmatpush1.bf16.msra.mxu0 %v7631
    %10011 = vmatprep.subr.bf16.mxu0 %v7677
    %10012 = vmatpush2.bf16.msra.mxu0 %v7676
    %10013 = vmatprep.subr.bf16.mxu0 %v7674
    %10014 = vmatpush2.bf16.msra.mxu0 %v7673
    %10015 = vmatprep.subr.bf16.mxu0 %v7671
    %10016 = vmatpush2.bf16.msra.mxu0 %v7670
    %10017 = vmatprep.subr.bf16.mxu0 %v7668
    %10018 = vmatpush2.bf16.msra.mxu0 %v7667
    %10019 = vmatprep.subr.bf16.mxu0 %v7665
    %10020 = vmatpush2.bf16.msra.mxu0 %v7664
    %10021 = vmatprep.subr.bf16.mxu0 %v7662
    %10022 = vmatpush2.bf16.msra.mxu0 %v7661
    %10023 = vmatprep.subr.bf16.mxu0 %v7659
    %10024 = vmatpush2.bf16.msra.mxu0 %v7658
    %10025 = vmatprep.subr.bf16.mxu0 %v7656
    %10026 = vmatpush2.bf16.msra.mxu0 %v7655
    %10027 = vmatprep.mubr.bf16.mxu0 %v2776
    %10028 = vmatmul.mubr.bf16.gmra.mxu0 %v2775
    %v10029 = vpop.f32.mrf.mxu0
    %v10030 = vadd.f32 %v9917, %v10029
    %v10031 = vpop.f32.mrf.mxu0
    %v10032 = vadd.f32 %v9919, %v10031
    %v10033 = vpop.f32.mrf.mxu0
    %v10034 = vadd.f32 %v9921, %v10033
    %v10035 = vpop.f32.mrf.mxu0
    %v10036 = vadd.f32 %v9923, %v10035
    %10037 = vmatprep.mubr.bf16.mxu0 %v2779
    %10038 = vmatmul.mubr.bf16.gmra.mxu0 %v2778
    %v10039 = vpop.f32.mrf.mxu0
    %v10040 = vadd.f32 %v9927, %v10039
    %v10041 = vpop.f32.mrf.mxu0
    %v10042 = vadd.f32 %v9929, %v10041
    %v10043 = vpop.f32.mrf.mxu0
    %v10044 = vadd.f32 %v9931, %v10043
    %v10045 = vpop.f32.mrf.mxu0
    %v10046 = vadd.f32 %v9933, %v10045
    %10047 = vmatprep.mubr.bf16.mxu0 %v2782
    %10048 = vmatmul.mubr.bf16.gmra.mxu0 %v2781
    %v10049 = vpop.f32.mrf.mxu0
    %v10050 = vadd.f32 %v9937, %v10049
    %v10051 = vpop.f32.mrf.mxu0
    %v10052 = vadd.f32 %v9939, %v10051
    %v10053 = vpop.f32.mrf.mxu0
    %v10054 = vadd.f32 %v9941, %v10053
    %v10055 = vpop.f32.mrf.mxu0
    %v10056 = vadd.f32 %v9943, %v10055
    %10057 = vmatprep.mubr.bf16.mxu0 %v2785
    %10058 = vmatmul.mubr.bf16.gmra.mxu0 %v2784
    %v10059 = vpop.f32.mrf.mxu0
    %v10060 = vadd.f32 %v9947, %v10059
    %v10061 = vpop.f32.mrf.mxu0
    %v10062 = vadd.f32 %v9949, %v10061
    %v10063 = vpop.f32.mrf.mxu0
    %v10064 = vadd.f32 %v9951, %v10063
    %v10065 = vpop.f32.mrf.mxu0
    %v10066 = vadd.f32 %v9953, %v10065
    %10067 = vmatprep.mubr.bf16.mxu0 %v2788
    %10068 = vmatmul.mubr.bf16.gmra.mxu0 %v2787
    %v10069 = vpop.f32.mrf.mxu0
    %v10070 = vadd.f32 %v9957, %v10069
    %v10071 = vpop.f32.mrf.mxu0
    %v10072 = vadd.f32 %v9959, %v10071
    %v10073 = vpop.f32.mrf.mxu0
    %v10074 = vadd.f32 %v9961, %v10073
    %v10075 = vpop.f32.mrf.mxu0
    %v10076 = vadd.f32 %v9963, %v10075
    %10077 = vmatprep.mubr.bf16.mxu0 %v2791
    %10078 = vmatmul.mubr.bf16.gmra.mxu0 %v2790
    %v10079 = vpop.f32.mrf.mxu0
    %v10080 = vadd.f32 %v9967, %v10079
    %v10081 = vpop.f32.mrf.mxu0
    %v10082 = vadd.f32 %v9969, %v10081
    %v10083 = vpop.f32.mrf.mxu0
    %v10084 = vadd.f32 %v9971, %v10083
    %v10085 = vpop.f32.mrf.mxu0
    %v10086 = vadd.f32 %v9973, %v10085
    %10087 = vmatprep.mubr.bf16.mxu0 %v2794
    %10088 = vmatmul.mubr.bf16.gmra.mxu0 %v2793
    %v10089 = vpop.f32.mrf.mxu0
    %v10090 = vadd.f32 %v9977, %v10089
    %v10091 = vpop.f32.mrf.mxu0
    %v10092 = vadd.f32 %v9979, %v10091
    %v10093 = vpop.f32.mrf.mxu0
    %v10094 = vadd.f32 %v9981, %v10093
    %v10095 = vpop.f32.mrf.mxu0
    %v10096 = vadd.f32 %v9983, %v10095
    %10097 = vmatprep.mubr.bf16.mxu0 %v2797
    %10098 = vmatmul.mubr.bf16.gmra.mxu0 %v2796
    %v10099 = vpop.f32.mrf.mxu0
    %v10100 = vadd.f32 %v9987, %v10099
    %v10101 = vpop.f32.mrf.mxu0
    %v10102 = vadd.f32 %v9989, %v10101
    %v10103 = vpop.f32.mrf.mxu0
    %v10104 = vadd.f32 %v9991, %v10103
    %v10105 = vpop.f32.mrf.mxu0
    %v10106 = vadd.f32 %v9993, %v10105
    %10107 = vdwg.mxu0
    %10108 = vmatprep.subr.bf16.mxu0 %v7701
    %10109 = vmatpush1.bf16.msra.mxu0 %v7700
    %10110 = vmatprep.subr.bf16.mxu0 %v7698
    %10111 = vmatpush1.bf16.msra.mxu0 %v7697
    %10112 = vmatprep.subr.bf16.mxu0 %v7695
    %10113 = vmatpush1.bf16.msra.mxu0 %v7694
    %10114 = vmatprep.subr.bf16.mxu0 %v7692
    %10115 = vmatpush1.bf16.msra.mxu0 %v7691
    %10116 = vmatprep.subr.bf16.mxu0 %v7689
    %10117 = vmatpush1.bf16.msra.mxu0 %v7688
    %10118 = vmatprep.subr.bf16.mxu0 %v7686
    %10119 = vmatpush1.bf16.msra.mxu0 %v7685
    %10120 = vmatprep.subr.bf16.mxu0 %v7683
    %10121 = vmatpush1.bf16.msra.mxu0 %v7682
    %10122 = vmatprep.subr.bf16.mxu0 %v7680
    %10123 = vmatpush1.bf16.msra.mxu0 %v7679
    %10124 = vmatprep.subr.bf16.mxu0 %v7725
    %10125 = vmatpush2.bf16.msra.mxu0 %v7724
    %10126 = vmatprep.subr.bf16.mxu0 %v7722
    %10127 = vmatpush2.bf16.msra.mxu0 %v7721
    %10128 = vmatprep.subr.bf16.mxu0 %v7719
    %10129 = vmatpush2.bf16.msra.mxu0 %v7718
    %10130 = vmatprep.subr.bf16.mxu0 %v7716
    %10131 = vmatpush2.bf16.msra.mxu0 %v7715
    %10132 = vmatprep.subr.bf16.mxu0 %v7713
    %10133 = vmatpush2.bf16.msra.mxu0 %v7712
    %10134 = vmatprep.subr.bf16.mxu0 %v7710
    %10135 = vmatpush2.bf16.msra.mxu0 %v7709
    %10136 = vmatprep.subr.bf16.mxu0 %v7707
    %10137 = vmatpush2.bf16.msra.mxu0 %v7706
    %10138 = vmatprep.subr.bf16.mxu0 %v7704
    %10139 = vmatpush2.bf16.msra.mxu0 %v7703
    %10140 = vmatprep.mubr.bf16.mxu0 %v2898
    %10141 = vmatmul.mubr.bf16.gmra.mxu0 %v2777
    %v10142 = vpop.f32.mrf.mxu0
    %v10143 = vadd.f32 %v10030, %v10142
    %v10144 = vpop.f32.mrf.mxu0
    %v10145 = vadd.f32 %v10032, %v10144
    %v10146 = vpop.f32.mrf.mxu0
    %v10147 = vadd.f32 %v10034, %v10146
    %v10148 = vpop.f32.mrf.mxu0
    %v10149 = vadd.f32 %v10036, %v10148
    %10150 = vmatprep.mubr.bf16.mxu0 %v2934
    %10151 = vmatmul.mubr.bf16.gmra.mxu0 %v2780
    %v10152 = vpop.f32.mrf.mxu0
    %v10153 = vadd.f32 %v10040, %v10152
    %v10154 = vpop.f32.mrf.mxu0
    %v10155 = vadd.f32 %v10042, %v10154
    %v10156 = vpop.f32.mrf.mxu0
    %v10157 = vadd.f32 %v10044, %v10156
    %v10158 = vpop.f32.mrf.mxu0
    %v10159 = vadd.f32 %v10046, %v10158
    %10160 = vmatprep.mubr.bf16.mxu0 %v2970
    %10161 = vmatmul.mubr.bf16.gmra.mxu0 %v2783
    %v10162 = vpop.f32.mrf.mxu0
    %v10163 = vadd.f32 %v10050, %v10162
    %v10164 = vpop.f32.mrf.mxu0
    %v10165 = vadd.f32 %v10052, %v10164
    %v10166 = vpop.f32.mrf.mxu0
    %v10167 = vadd.f32 %v10054, %v10166
    %v10168 = vpop.f32.mrf.mxu0
    %v10169 = vadd.f32 %v10056, %v10168
    %10170 = vmatprep.mubr.bf16.mxu0 %v3006
    %10171 = vmatmul.mubr.bf16.gmra.mxu0 %v2786
    %v10172 = vpop.f32.mrf.mxu0
    %v10173 = vadd.f32 %v10060, %v10172
    %v10174 = vpop.f32.mrf.mxu0
    %v10175 = vadd.f32 %v10062, %v10174
    %v10176 = vpop.f32.mrf.mxu0
    %v10177 = vadd.f32 %v10064, %v10176
    %v10178 = vpop.f32.mrf.mxu0
    %v10179 = vadd.f32 %v10066, %v10178
    %10180 = vmatprep.mubr.bf16.mxu0 %v3042
    %10181 = vmatmul.mubr.bf16.gmra.mxu0 %v2789
    %v10182 = vpop.f32.mrf.mxu0
    %v10183 = vadd.f32 %v10070, %v10182
    %v10184 = vpop.f32.mrf.mxu0
    %v10185 = vadd.f32 %v10072, %v10184
    %v10186 = vpop.f32.mrf.mxu0
    %v10187 = vadd.f32 %v10074, %v10186
    %v10188 = vpop.f32.mrf.mxu0
    %v10189 = vadd.f32 %v10076, %v10188
    %10190 = vmatprep.mubr.bf16.mxu0 %v3078
    %10191 = vmatmul.mubr.bf16.gmra.mxu0 %v2792
    %v10192 = vpop.f32.mrf.mxu0
    %v10193 = vadd.f32 %v10080, %v10192
    %v10194 = vpop.f32.mrf.mxu0
    %v10195 = vadd.f32 %v10082, %v10194
    %v10196 = vpop.f32.mrf.mxu0
    %v10197 = vadd.f32 %v10084, %v10196
    %v10198 = vpop.f32.mrf.mxu0
    %v10199 = vadd.f32 %v10086, %v10198
    %10200 = vmatprep.mubr.bf16.mxu0 %v3114
    %10201 = vmatmul.mubr.bf16.gmra.mxu0 %v2795
    %v10202 = vpop.f32.mrf.mxu0
    %v10203 = vadd.f32 %v10090, %v10202
    %v10204 = vpop.f32.mrf.mxu0
    %v10205 = vadd.f32 %v10092, %v10204
    %v10206 = vpop.f32.mrf.mxu0
    %v10207 = vadd.f32 %v10094, %v10206
    %v10208 = vpop.f32.mrf.mxu0
    %v10209 = vadd.f32 %v10096, %v10208
    %10210 = vmatprep.mubr.bf16.mxu0 %v3150
    %10211 = vmatmul.mubr.bf16.gmra.mxu0 %v2798
    %v10212 = vpop.f32.mrf.mxu0
    %v10213 = vadd.f32 %v10100, %v10212
    %v10214 = vpop.f32.mrf.mxu0
    %v10215 = vadd.f32 %v10102, %v10214
    %v10216 = vpop.f32.mrf.mxu0
    %v10217 = vadd.f32 %v10104, %v10216
    %v10218 = vpop.f32.mrf.mxu0
    %v10219 = vadd.f32 %v10106, %v10218
    %10220 = vdwg.mxu0
    %10221 = vmatprep.subr.bf16.mxu0 %v7749
    %10222 = vmatpush1.bf16.msra.mxu0 %v7748
    %10223 = vmatprep.subr.bf16.mxu0 %v7746
    %10224 = vmatpush1.bf16.msra.mxu0 %v7745
    %10225 = vmatprep.subr.bf16.mxu0 %v7743
    %10226 = vmatpush1.bf16.msra.mxu0 %v7742
    %10227 = vmatprep.subr.bf16.mxu0 %v7740
    %10228 = vmatpush1.bf16.msra.mxu0 %v7739
    %10229 = vmatprep.subr.bf16.mxu0 %v7737
    %10230 = vmatpush1.bf16.msra.mxu0 %v7736
    %10231 = vmatprep.subr.bf16.mxu0 %v7734
    %10232 = vmatpush1.bf16.msra.mxu0 %v7733
    %10233 = vmatprep.subr.bf16.mxu0 %v7731
    %10234 = vmatpush1.bf16.msra.mxu0 %v7730
    %10235 = vmatprep.subr.bf16.mxu0 %v7728
    %10236 = vmatpush1.bf16.msra.mxu0 %v7727
    %10237 = vmatprep.subr.bf16.mxu0 %v7773
    %10238 = vmatpush2.bf16.msra.mxu0 %v7772
    %10239 = vmatprep.subr.bf16.mxu0 %v7770
    %10240 = vmatpush2.bf16.msra.mxu0 %v7769
    %10241 = vmatprep.subr.bf16.mxu0 %v7767
    %10242 = vmatpush2.bf16.msra.mxu0 %v7766
    %10243 = vmatprep.subr.bf16.mxu0 %v7764
    %10244 = vmatpush2.bf16.msra.mxu0 %v7763
    %10245 = vmatprep.subr.bf16.mxu0 %v7761
    %10246 = vmatpush2.bf16.msra.mxu0 %v7760
    %10247 = vmatprep.subr.bf16.mxu0 %v7758
    %10248 = vmatpush2.bf16.msra.mxu0 %v7757
    %10249 = vmatprep.subr.bf16.mxu0 %v7755
    %10250 = vmatpush2.bf16.msra.mxu0 %v7754
    %10251 = vmatprep.subr.bf16.mxu0 %v7752
    %10252 = vmatpush2.bf16.msra.mxu0 %v7751
    %10253 = vmatprep.mubr.bf16.mxu0 %v2922
    %10254 = vmatmul.mubr.bf16.gmra.mxu0 %v2910
    %v10255 = vpop.f32.mrf.mxu0
    %v10256 = vadd.f32 %v10143, %v10255
    %v10257 = vpop.f32.mrf.mxu0
    %v10258 = vadd.f32 %v10145, %v10257
    %v10259 = vpop.f32.mrf.mxu0
    %v10260 = vadd.f32 %v10147, %v10259
    %v10261 = vpop.f32.mrf.mxu0
    %v10262 = vadd.f32 %v10149, %v10261
    %10263 = vmatprep.mubr.bf16.mxu0 %v2958
    %10264 = vmatmul.mubr.bf16.gmra.mxu0 %v2946
    %v10265 = vpop.f32.mrf.mxu0
    %v10266 = vadd.f32 %v10153, %v10265
    %v10267 = vpop.f32.mrf.mxu0
    %v10268 = vadd.f32 %v10155, %v10267
    %v10269 = vpop.f32.mrf.mxu0
    %v10270 = vadd.f32 %v10157, %v10269
    %v10271 = vpop.f32.mrf.mxu0
    %v10272 = vadd.f32 %v10159, %v10271
    %10273 = vmatprep.mubr.bf16.mxu0 %v2994
    %10274 = vmatmul.mubr.bf16.gmra.mxu0 %v2982
    %v10275 = vpop.f32.mrf.mxu0
    %v10276 = vadd.f32 %v10163, %v10275
    %v10277 = vpop.f32.mrf.mxu0
    %v10278 = vadd.f32 %v10165, %v10277
    %v10279 = vpop.f32.mrf.mxu0
    %v10280 = vadd.f32 %v10167, %v10279
    %v10281 = vpop.f32.mrf.mxu0
    %v10282 = vadd.f32 %v10169, %v10281
    %10283 = vmatprep.mubr.bf16.mxu0 %v3030
    %10284 = vmatmul.mubr.bf16.gmra.mxu0 %v3018
    %v10285 = vpop.f32.mrf.mxu0
    %v10286 = vadd.f32 %v10173, %v10285
    %v10287 = vpop.f32.mrf.mxu0
    %v10288 = vadd.f32 %v10175, %v10287
    %v10289 = vpop.f32.mrf.mxu0
    %v10290 = vadd.f32 %v10177, %v10289
    %v10291 = vpop.f32.mrf.mxu0
    %v10292 = vadd.f32 %v10179, %v10291
    %10293 = vmatprep.mubr.bf16.mxu0 %v3066
    %10294 = vmatmul.mubr.bf16.gmra.mxu0 %v3054
    %v10295 = vpop.f32.mrf.mxu0
    %v10296 = vadd.f32 %v10183, %v10295
    %v10297 = vpop.f32.mrf.mxu0
    %v10298 = vadd.f32 %v10185, %v10297
    %v10299 = vpop.f32.mrf.mxu0
    %v10300 = vadd.f32 %v10187, %v10299
    %v10301 = vpop.f32.mrf.mxu0
    %v10302 = vadd.f32 %v10189, %v10301
    %10303 = vmatprep.mubr.bf16.mxu0 %v3102
    %10304 = vmatmul.mubr.bf16.gmra.mxu0 %v3090
    %v10305 = vpop.f32.mrf.mxu0
    %v10306 = vadd.f32 %v10193, %v10305
    %v10307 = vpop.f32.mrf.mxu0
    %v10308 = vadd.f32 %v10195, %v10307
    %v10309 = vpop.f32.mrf.mxu0
    %v10310 = vadd.f32 %v10197, %v10309
    %v10311 = vpop.f32.mrf.mxu0
    %v10312 = vadd.f32 %v10199, %v10311
    %10313 = vmatprep.mubr.bf16.mxu0 %v3138
    %10314 = vmatmul.mubr.bf16.gmra.mxu0 %v3126
    %v10315 = vpop.f32.mrf.mxu0
    %v10316 = vadd.f32 %v10203, %v10315
    %v10317 = vpop.f32.mrf.mxu0
    %v10318 = vadd.f32 %v10205, %v10317
    %v10319 = vpop.f32.mrf.mxu0
    %v10320 = vadd.f32 %v10207, %v10319
    %v10321 = vpop.f32.mrf.mxu0
    %v10322 = vadd.f32 %v10209, %v10321
    %10323 = vmatprep.mubr.bf16.mxu0 %v3174
    %10324 = vmatmul.mubr.bf16.gmra.mxu0 %v3162
    %v10325 = vpop.f32.mrf.mxu0
    %v10326 = vadd.f32 %v10213, %v10325
    %v10327 = vpop.f32.mrf.mxu0
    %v10328 = vadd.f32 %v10215, %v10327
    %v10329 = vpop.f32.mrf.mxu0
    %v10330 = vadd.f32 %v10217, %v10329
    %v10331 = vpop.f32.mrf.mxu0
    %v10332 = vadd.f32 %v10219, %v10331
    %10333 = vdwg.mxu0
    %10334 = vmatprep.subr.bf16.mxu0 %v7797
    %10335 = vmatpush1.bf16.msra.mxu0 %v7796
    %10336 = vmatprep.subr.bf16.mxu0 %v7794
    %10337 = vmatpush1.bf16.msra.mxu0 %v7793
    %10338 = vmatprep.subr.bf16.mxu0 %v7791
    %10339 = vmatpush1.bf16.msra.mxu0 %v7790
    %10340 = vmatprep.subr.bf16.mxu0 %v7788
    %10341 = vmatpush1.bf16.msra.mxu0 %v7787
    %10342 = vmatprep.subr.bf16.mxu0 %v7785
    %10343 = vmatpush1.bf16.msra.mxu0 %v7784
    %10344 = vmatprep.subr.bf16.mxu0 %v7782
    %10345 = vmatpush1.bf16.msra.mxu0 %v7781
    %10346 = vmatprep.subr.bf16.mxu0 %v7779
    %10347 = vmatpush1.bf16.msra.mxu0 %v7778
    %10348 = vmatprep.subr.bf16.mxu0 %v7776
    %10349 = vmatpush1.bf16.msra.mxu0 %v7775
    %10350 = vmatprep.subr.bf16.mxu0 %v7821
    %10351 = vmatpush2.bf16.msra.mxu0 %v7820
    %10352 = vmatprep.subr.bf16.mxu0 %v7818
    %10353 = vmatpush2.bf16.msra.mxu0 %v7817
    %10354 = vmatprep.subr.bf16.mxu0 %v7815
    %10355 = vmatpush2.bf16.msra.mxu0 %v7814
    %10356 = vmatprep.subr.bf16.mxu0 %v7812
    %10357 = vmatpush2.bf16.msra.mxu0 %v7811
    %10358 = vmatprep.subr.bf16.mxu0 %v7809
    %10359 = vmatpush2.bf16.msra.mxu0 %v7808
    %10360 = vmatprep.subr.bf16.mxu0 %v7806
    %10361 = vmatpush2.bf16.msra.mxu0 %v7805
    %10362 = vmatprep.subr.bf16.mxu0 %v7803
    %10363 = vmatpush2.bf16.msra.mxu0 %v7802
    %10364 = vmatprep.subr.bf16.mxu0 %v7800
    %10365 = vmatpush2.bf16.msra.mxu0 %v7799
    %10366 = vmatprep.mubr.bf16.mxu0 %v3268
    %10367 = vmatmul.mubr.bf16.gmra.mxu0 %v3265
    %v10368 = vpop.f32.mrf.mxu0
    %v10369 = vadd.f32 %v10256, %v10368
    %v10370 = vpop.f32.mrf.mxu0
    %v10371 = vadd.f32 %v10258, %v10370
    %v10372 = vpop.f32.mrf.mxu0
    %v10373 = vadd.f32 %v10260, %v10372
    %v10374 = vpop.f32.mrf.mxu0
    %v10375 = vadd.f32 %v10262, %v10374
    %10376 = vmatprep.mubr.bf16.mxu0 %v3277
    %10377 = vmatmul.mubr.bf16.gmra.mxu0 %v3274
    %v10378 = vpop.f32.mrf.mxu0
    %v10379 = vadd.f32 %v10266, %v10378
    %v10380 = vpop.f32.mrf.mxu0
    %v10381 = vadd.f32 %v10268, %v10380
    %v10382 = vpop.f32.mrf.mxu0
    %v10383 = vadd.f32 %v10270, %v10382
    %v10384 = vpop.f32.mrf.mxu0
    %v10385 = vadd.f32 %v10272, %v10384
    %10386 = vmatprep.mubr.bf16.mxu0 %v3286
    %10387 = vmatmul.mubr.bf16.gmra.mxu0 %v3283
    %v10388 = vpop.f32.mrf.mxu0
    %v10389 = vadd.f32 %v10276, %v10388
    %v10390 = vpop.f32.mrf.mxu0
    %v10391 = vadd.f32 %v10278, %v10390
    %v10392 = vpop.f32.mrf.mxu0
    %v10393 = vadd.f32 %v10280, %v10392
    %v10394 = vpop.f32.mrf.mxu0
    %v10395 = vadd.f32 %v10282, %v10394
    %10396 = vmatprep.mubr.bf16.mxu0 %v3295
    %10397 = vmatmul.mubr.bf16.gmra.mxu0 %v3292
    %v10398 = vpop.f32.mrf.mxu0
    %v10399 = vadd.f32 %v10286, %v10398
    %v10400 = vpop.f32.mrf.mxu0
    %v10401 = vadd.f32 %v10288, %v10400
    %v10402 = vpop.f32.mrf.mxu0
    %v10403 = vadd.f32 %v10290, %v10402
    %v10404 = vpop.f32.mrf.mxu0
    %v10405 = vadd.f32 %v10292, %v10404
    %10406 = vmatprep.mubr.bf16.mxu0 %v3304
    %10407 = vmatmul.mubr.bf16.gmra.mxu0 %v3301
    %v10408 = vpop.f32.mrf.mxu0
    %v10409 = vadd.f32 %v10296, %v10408
    %v10410 = vpop.f32.mrf.mxu0
    %v10411 = vadd.f32 %v10298, %v10410
    %v10412 = vpop.f32.mrf.mxu0
    %v10413 = vadd.f32 %v10300, %v10412
    %v10414 = vpop.f32.mrf.mxu0
    %v10415 = vadd.f32 %v10302, %v10414
    %10416 = vmatprep.mubr.bf16.mxu0 %v3313
    %10417 = vmatmul.mubr.bf16.gmra.mxu0 %v3310
    %v10418 = vpop.f32.mrf.mxu0
    %v10419 = vadd.f32 %v10306, %v10418
    %v10420 = vpop.f32.mrf.mxu0
    %v10421 = vadd.f32 %v10308, %v10420
    %v10422 = vpop.f32.mrf.mxu0
    %v10423 = vadd.f32 %v10310, %v10422
    %v10424 = vpop.f32.mrf.mxu0
    %v10425 = vadd.f32 %v10312, %v10424
    %10426 = vmatprep.mubr.bf16.mxu0 %v3322
    %10427 = vmatmul.mubr.bf16.gmra.mxu0 %v3319
    %v10428 = vpop.f32.mrf.mxu0
    %v10429 = vadd.f32 %v10316, %v10428
    %v10430 = vpop.f32.mrf.mxu0
    %v10431 = vadd.f32 %v10318, %v10430
    %v10432 = vpop.f32.mrf.mxu0
    %v10433 = vadd.f32 %v10320, %v10432
    %v10434 = vpop.f32.mrf.mxu0
    %v10435 = vadd.f32 %v10322, %v10434
    %10436 = vmatprep.mubr.bf16.mxu0 %v3331
    %10437 = vmatmul.mubr.bf16.gmra.mxu0 %v3328
    %v10438 = vpop.f32.mrf.mxu0
    %v10439 = vadd.f32 %v10326, %v10438
    %v10440 = vpop.f32.mrf.mxu0
    %v10441 = vadd.f32 %v10328, %v10440
    %v10442 = vpop.f32.mrf.mxu0
    %v10443 = vadd.f32 %v10330, %v10442
    %v10444 = vpop.f32.mrf.mxu0
    %v10445 = vadd.f32 %v10332, %v10444
    %10446 = vdwg.mxu0
    %10447 = vmatprep.subr.bf16.mxu0 %v7845
    %10448 = vmatpush1.bf16.msra.mxu0 %v7844
    %10449 = vmatprep.subr.bf16.mxu0 %v7842
    %10450 = vmatpush1.bf16.msra.mxu0 %v7841
    %10451 = vmatprep.subr.bf16.mxu0 %v7839
    %10452 = vmatpush1.bf16.msra.mxu0 %v7838
    %10453 = vmatprep.subr.bf16.mxu0 %v7836
    %10454 = vmatpush1.bf16.msra.mxu0 %v7835
    %10455 = vmatprep.subr.bf16.mxu0 %v7833
    %10456 = vmatpush1.bf16.msra.mxu0 %v7832
    %10457 = vmatprep.subr.bf16.mxu0 %v7830
    %10458 = vmatpush1.bf16.msra.mxu0 %v7829
    %10459 = vmatprep.subr.bf16.mxu0 %v7827
    %10460 = vmatpush1.bf16.msra.mxu0 %v7826
    %10461 = vmatprep.subr.bf16.mxu0 %v7824
    %10462 = vmatpush1.bf16.msra.mxu0 %v7823
    %10463 = vmatprep.subr.bf16.mxu0 0
    %10464 = vmatpush2.bf16.msra.mxu0 0
    %10465 = vmatprep.subr.bf16.mxu0 0
    %10466 = vmatpush2.bf16.msra.mxu0 0
    %10467 = vmatprep.subr.bf16.mxu0 0
    %10468 = vmatpush2.bf16.msra.mxu0 0
    %10469 = vmatprep.subr.bf16.mxu0 0
    %10470 = vmatpush2.bf16.msra.mxu0 0
    %10471 = vmatprep.subr.bf16.mxu0 0
    %10472 = vmatpush2.bf16.msra.mxu0 0
    %10473 = vmatprep.subr.bf16.mxu0 0
    %10474 = vmatpush2.bf16.msra.mxu0 0
    %10475 = vmatprep.subr.bf16.mxu0 0
    %10476 = vmatpush2.bf16.msra.mxu0 0
    %10477 = vmatprep.subr.bf16.mxu0 0
    %10478 = vmatpush2.bf16.msra.mxu0 0
    %10479 = vmatprep.mubr.bf16.mxu0 0
    %10480 = vmatmul.mubr.bf16.gmra.mxu0 %v3271
    %v10481 = vpop.f32.mrf.mxu0
    %v10482 = vadd.f32 %v10369, %v10481
    %v10483 = vpop.f32.mrf.mxu0
    %v10484 = vadd.f32 %v10371, %v10483
    %v10485 = vpop.f32.mrf.mxu0
    %v10486 = vadd.f32 %v10373, %v10485
    %v10487 = vpop.f32.mrf.mxu0
    %v10488 = vadd.f32 %v10375, %v10487
    %10489 = vmatprep.mubr.bf16.mxu0 0
    %10490 = vmatmul.mubr.bf16.gmra.mxu0 %v3280
    %v10491 = vpop.f32.mrf.mxu0
    %v10492 = vadd.f32 %v10379, %v10491
    %v10493 = vpop.f32.mrf.mxu0
    %v10494 = vadd.f32 %v10381, %v10493
    %v10495 = vpop.f32.mrf.mxu0
    %v10496 = vadd.f32 %v10383, %v10495
    %v10497 = vpop.f32.mrf.mxu0
    %v10498 = vadd.f32 %v10385, %v10497
    %10499 = vmatprep.mubr.bf16.mxu0 0
    %10500 = vmatmul.mubr.bf16.gmra.mxu0 %v3289
    %v10501 = vpop.f32.mrf.mxu0
    %v10502 = vadd.f32 %v10389, %v10501
    %v10503 = vpop.f32.mrf.mxu0
    %v10504 = vadd.f32 %v10391, %v10503
    %v10505 = vpop.f32.mrf.mxu0
    %v10506 = vadd.f32 %v10393, %v10505
    %v10507 = vpop.f32.mrf.mxu0
    %v10508 = vadd.f32 %v10395, %v10507
    %10509 = vmatprep.mubr.bf16.mxu0 0
    %10510 = vmatmul.mubr.bf16.gmra.mxu0 %v3298
    %v10511 = vpop.f32.mrf.mxu0
    %v10512 = vadd.f32 %v10399, %v10511
    %v10513 = vpop.f32.mrf.mxu0
    %v10514 = vadd.f32 %v10401, %v10513
    %v10515 = vpop.f32.mrf.mxu0
    %v10516 = vadd.f32 %v10403, %v10515
    %v10517 = vpop.f32.mrf.mxu0
    %v10518 = vadd.f32 %v10405, %v10517
    %10519 = vmatprep.mubr.bf16.mxu0 0
    %10520 = vmatmul.mubr.bf16.gmra.mxu0 %v3307
    %v10521 = vpop.f32.mrf.mxu0
    %v10522 = vadd.f32 %v10409, %v10521
    %v10523 = vpop.f32.mrf.mxu0
    %v10524 = vadd.f32 %v10411, %v10523
    %v10525 = vpop.f32.mrf.mxu0
    %v10526 = vadd.f32 %v10413, %v10525
    %v10527 = vpop.f32.mrf.mxu0
    %v10528 = vadd.f32 %v10415, %v10527
    %10529 = vmatprep.mubr.bf16.mxu0 0
    %10530 = vmatmul.mubr.bf16.gmra.mxu0 %v3316
    %v10531 = vpop.f32.mrf.mxu0
    %v10532 = vadd.f32 %v10419, %v10531
    %v10533 = vpop.f32.mrf.mxu0
    %v10534 = vadd.f32 %v10421, %v10533
    %v10535 = vpop.f32.mrf.mxu0
    %v10536 = vadd.f32 %v10423, %v10535
    %v10537 = vpop.f32.mrf.mxu0
    %v10538 = vadd.f32 %v10425, %v10537
    %10539 = vmatprep.mubr.bf16.mxu0 0
    %10540 = vmatmul.mubr.bf16.gmra.mxu0 %v3325
    %v10541 = vpop.f32.mrf.mxu0
    %v10542 = vadd.f32 %v10429, %v10541
    %v10543 = vpop.f32.mrf.mxu0
    %v10544 = vadd.f32 %v10431, %v10543
    %v10545 = vpop.f32.mrf.mxu0
    %v10546 = vadd.f32 %v10433, %v10545
    %v10547 = vpop.f32.mrf.mxu0
    %v10548 = vadd.f32 %v10435, %v10547
    %10549 = vmatprep.mubr.bf16.mxu0 0
    %10550 = vmatmul.mubr.bf16.gmra.mxu0 %v3334
    %v10551 = vpop.f32.mrf.mxu0
    %v10552 = vadd.f32 %v10439, %v10551
    %v10553 = vpop.f32.mrf.mxu0
    %v10554 = vadd.f32 %v10441, %v10553
    %v10555 = vpop.f32.mrf.mxu0
    %v10556 = vadd.f32 %v10443, %v10555
    %v10557 = vpop.f32.mrf.mxu0
    %v10558 = vadd.f32 %v10445, %v10557
    %10559 = vdwg.mxu0
    %10560 = vmatprep.subr.bf16.mxu0 0
    %10561 = vmatpush1.bf16.msra.mxu0 %v7078
    %10562 = vmatprep.subr.bf16.mxu0 0
    %10563 = vmatpush1.bf16.msra.mxu0 %v7075
    %10564 = vmatprep.subr.bf16.mxu0 0
    %10565 = vmatpush1.bf16.msra.mxu0 %v7072
    %10566 = vmatprep.subr.bf16.mxu0 0
    %10567 = vmatpush1.bf16.msra.mxu0 %v7069
    %10568 = vmatprep.subr.bf16.mxu0 0
    %10569 = vmatpush1.bf16.msra.mxu0 %v7066
    %10570 = vmatprep.subr.bf16.mxu0 0
    %10571 = vmatpush1.bf16.msra.mxu0 %v7063
    %10572 = vmatprep.subr.bf16.mxu0 0
    %10573 = vmatpush1.bf16.msra.mxu0 %v7060
    %10574 = vmatprep.subr.bf16.mxu0 0
    %10575 = vmatpush1.bf16.msra.mxu0 %v7057
    %10576 = vmatprep.subr.bf16.mxu0 0
    %10577 = vmatpush2.bf16.msra.mxu0 %v7102
    %10578 = vmatprep.subr.bf16.mxu0 0
    %10579 = vmatpush2.bf16.msra.mxu0 %v7099
    %10580 = vmatprep.subr.bf16.mxu0 0
    %10581 = vmatpush2.bf16.msra.mxu0 %v7096
    %10582 = vmatprep.subr.bf16.mxu0 0
    %10583 = vmatpush2.bf16.msra.mxu0 %v7093
    %10584 = vmatprep.subr.bf16.mxu0 0
    %10585 = vmatpush2.bf16.msra.mxu0 %v7090
    %10586 = vmatprep.subr.bf16.mxu0 0
    %10587 = vmatpush2.bf16.msra.mxu0 %v7087
    %10588 = vmatprep.subr.bf16.mxu0 0
    %10589 = vmatpush2.bf16.msra.mxu0 %v7084
    %10590 = vmatprep.subr.bf16.mxu0 0
    %10591 = vmatpush2.bf16.msra.mxu0 %v7081
    %10592 = vmatprep.mubr.bf16.mxu0 %v377
    %10593 = vmatmul.mubr.bf16.gmra.mxu0 %v376
    %v10594 = vpop.f32.mrf.mxu0
    %v10595 = vadd.f32 0.0, %v10594
    %v10596 = vpop.f32.mrf.mxu0
    %v10597 = vpop.f32.mrf.mxu0
    %v10598 = vadd.f32 0.0, %v10597
    %v10599 = vpop.f32.mrf.mxu0
    %10600 = vmatprep.mubr.bf16.mxu0 %v380
    %10601 = vmatmul.mubr.bf16.gmra.mxu0 %v379
    %v10602 = vpop.f32.mrf.mxu0
    %v10603 = vadd.f32 0.0, %v10602
    %v10604 = vpop.f32.mrf.mxu0
    %v10605 = vpop.f32.mrf.mxu0
    %v10606 = vadd.f32 0.0, %v10605
    %v10607 = vpop.f32.mrf.mxu0
    %10608 = vmatprep.mubr.bf16.mxu0 %v383
    %10609 = vmatmul.mubr.bf16.gmra.mxu0 %v382
    %v10610 = vpop.f32.mrf.mxu0
    %v10611 = vadd.f32 0.0, %v10610
    %v10612 = vpop.f32.mrf.mxu0
    %v10613 = vpop.f32.mrf.mxu0
    %v10614 = vadd.f32 0.0, %v10613
    %v10615 = vpop.f32.mrf.mxu0
    %10616 = vmatprep.mubr.bf16.mxu0 %v386
    %10617 = vmatmul.mubr.bf16.gmra.mxu0 %v385
    %v10618 = vpop.f32.mrf.mxu0
    %v10619 = vadd.f32 0.0, %v10618
    %v10620 = vpop.f32.mrf.mxu0
    %v10621 = vpop.f32.mrf.mxu0
    %v10622 = vadd.f32 0.0, %v10621
    %v10623 = vpop.f32.mrf.mxu0
    %10624 = vmatprep.mubr.bf16.mxu0 %v389
    %10625 = vmatmul.mubr.bf16.gmra.mxu0 %v388
    %v10626 = vpop.f32.mrf.mxu0
    %v10627 = vadd.f32 0.0, %v10626
    %v10628 = vpop.f32.mrf.mxu0
    %v10629 = vpop.f32.mrf.mxu0
    %v10630 = vadd.f32 0.0, %v10629
    %v10631 = vpop.f32.mrf.mxu0
    %10632 = vmatprep.mubr.bf16.mxu0 %v392
    %10633 = vmatmul.mubr.bf16.gmra.mxu0 %v391
    %v10634 = vpop.f32.mrf.mxu0
    %v10635 = vadd.f32 0.0, %v10634
    %v10636 = vpop.f32.mrf.mxu0
    %v10637 = vpop.f32.mrf.mxu0
    %v10638 = vadd.f32 0.0, %v10637
    %v10639 = vpop.f32.mrf.mxu0
    %10640 = vmatprep.mubr.bf16.mxu0 %v395
    %10641 = vmatmul.mubr.bf16.gmra.mxu0 %v394
    %v10642 = vpop.f32.mrf.mxu0
    %v10643 = vadd.f32 0.0, %v10642
    %v10644 = vpop.f32.mrf.mxu0
    %v10645 = vpop.f32.mrf.mxu0
    %v10646 = vadd.f32 0.0, %v10645
    %v10647 = vpop.f32.mrf.mxu0
    %10648 = vmatprep.mubr.bf16.mxu0 %v398
    %10649 = vmatmul.mubr.bf16.gmra.mxu0 %v397
    %v10650 = vpop.f32.mrf.mxu0
    %v10651 = vadd.f32 0.0, %v10650
    %v10652 = vpop.f32.mrf.mxu0
    %v10653 = vpop.f32.mrf.mxu0
    %v10654 = vadd.f32 0.0, %v10653
    %v10655 = vpop.f32.mrf.mxu0
    %10656 = vdwg.mxu0
    %10657 = vmatprep.subr.bf16.mxu0 0
    %10658 = vmatpush1.bf16.msra.mxu0 %v7126
    %10659 = vmatprep.subr.bf16.mxu0 0
    %10660 = vmatpush1.bf16.msra.mxu0 %v7123
    %10661 = vmatprep.subr.bf16.mxu0 0
    %10662 = vmatpush1.bf16.msra.mxu0 %v7120
    %10663 = vmatprep.subr.bf16.mxu0 0
    %10664 = vmatpush1.bf16.msra.mxu0 %v7117
    %10665 = vmatprep.subr.bf16.mxu0 0
    %10666 = vmatpush1.bf16.msra.mxu0 %v7114
    %10667 = vmatprep.subr.bf16.mxu0 0
    %10668 = vmatpush1.bf16.msra.mxu0 %v7111
    %10669 = vmatprep.subr.bf16.mxu0 0
    %10670 = vmatpush1.bf16.msra.mxu0 %v7108
    %10671 = vmatprep.subr.bf16.mxu0 0
    %10672 = vmatpush1.bf16.msra.mxu0 %v7105
    %10673 = vmatprep.subr.bf16.mxu0 0
    %10674 = vmatpush2.bf16.msra.mxu0 %v7150
    %10675 = vmatprep.subr.bf16.mxu0 0
    %10676 = vmatpush2.bf16.msra.mxu0 %v7147
    %10677 = vmatprep.subr.bf16.mxu0 0
    %10678 = vmatpush2.bf16.msra.mxu0 %v7144
    %10679 = vmatprep.subr.bf16.mxu0 0
    %10680 = vmatpush2.bf16.msra.mxu0 %v7141
    %10681 = vmatprep.subr.bf16.mxu0 0
    %10682 = vmatpush2.bf16.msra.mxu0 %v7138
    %10683 = vmatprep.subr.bf16.mxu0 0
    %10684 = vmatpush2.bf16.msra.mxu0 %v7135
    %10685 = vmatprep.subr.bf16.mxu0 0
    %10686 = vmatpush2.bf16.msra.mxu0 %v7132
    %10687 = vmatprep.subr.bf16.mxu0 0
    %10688 = vmatpush2.bf16.msra.mxu0 %v7129
    %10689 = vmatprep.mubr.bf16.mxu0 %v500
    %10690 = vmatmul.mubr.bf16.gmra.mxu0 %v378
    %v10691 = vpop.f32.mrf.mxu0
    %v10692 = vadd.f32 %v10595, %v10691
    %v10693 = vpop.f32.mrf.mxu0
    %v10694 = vpop.f32.mrf.mxu0
    %v10695 = vadd.f32 %v10598, %v10694
    %v10696 = vpop.f32.mrf.mxu0
    %10697 = vmatprep.mubr.bf16.mxu0 %v536
    %10698 = vmatmul.mubr.bf16.gmra.mxu0 %v381
    %v10699 = vpop.f32.mrf.mxu0
    %v10700 = vadd.f32 %v10603, %v10699
    %v10701 = vpop.f32.mrf.mxu0
    %v10702 = vpop.f32.mrf.mxu0
    %v10703 = vadd.f32 %v10606, %v10702
    %v10704 = vpop.f32.mrf.mxu0
    %10705 = vmatprep.mubr.bf16.mxu0 %v572
    %10706 = vmatmul.mubr.bf16.gmra.mxu0 %v384
    %v10707 = vpop.f32.mrf.mxu0
    %v10708 = vadd.f32 %v10611, %v10707
    %v10709 = vpop.f32.mrf.mxu0
    %v10710 = vpop.f32.mrf.mxu0
    %v10711 = vadd.f32 %v10614, %v10710
    %v10712 = vpop.f32.mrf.mxu0
    %10713 = vmatprep.mubr.bf16.mxu0 %v608
    %10714 = vmatmul.mubr.bf16.gmra.mxu0 %v387
    %v10715 = vpop.f32.mrf.mxu0
    %v10716 = vadd.f32 %v10619, %v10715
    %v10717 = vpop.f32.mrf.mxu0
    %v10718 = vpop.f32.mrf.mxu0
    %v10719 = vadd.f32 %v10622, %v10718
    %v10720 = vpop.f32.mrf.mxu0
    %10721 = vmatprep.mubr.bf16.mxu0 %v644
    %10722 = vmatmul.mubr.bf16.gmra.mxu0 %v390
    %v10723 = vpop.f32.mrf.mxu0
    %v10724 = vadd.f32 %v10627, %v10723
    %v10725 = vpop.f32.mrf.mxu0
    %v10726 = vpop.f32.mrf.mxu0
    %v10727 = vadd.f32 %v10630, %v10726
    %v10728 = vpop.f32.mrf.mxu0
    %10729 = vmatprep.mubr.bf16.mxu0 %v680
    %10730 = vmatmul.mubr.bf16.gmra.mxu0 %v393
    %v10731 = vpop.f32.mrf.mxu0
    %v10732 = vadd.f32 %v10635, %v10731
    %v10733 = vpop.f32.mrf.mxu0
    %v10734 = vpop.f32.mrf.mxu0
    %v10735 = vadd.f32 %v10638, %v10734
    %v10736 = vpop.f32.mrf.mxu0
    %10737 = vmatprep.mubr.bf16.mxu0 %v716
    %10738 = vmatmul.mubr.bf16.gmra.mxu0 %v396
    %v10739 = vpop.f32.mrf.mxu0
    %v10740 = vadd.f32 %v10643, %v10739
    %v10741 = vpop.f32.mrf.mxu0
    %v10742 = vpop.f32.mrf.mxu0
    %v10743 = vadd.f32 %v10646, %v10742
    %v10744 = vpop.f32.mrf.mxu0
    %10745 = vmatprep.mubr.bf16.mxu0 %v752
    %10746 = vmatmul.mubr.bf16.gmra.mxu0 %v399
    %v10747 = vpop.f32.mrf.mxu0
    %v10748 = vadd.f32 %v10651, %v10747
    %v10749 = vpop.f32.mrf.mxu0
    %v10750 = vpop.f32.mrf.mxu0
    %v10751 = vadd.f32 %v10654, %v10750
    %v10752 = vpop.f32.mrf.mxu0
    %10753 = vdwg.mxu0
    %10754 = vmatprep.subr.bf16.mxu0 0
    %10755 = vmatpush1.bf16.msra.mxu0 %v7174
    %10756 = vmatprep.subr.bf16.mxu0 0
    %10757 = vmatpush1.bf16.msra.mxu0 %v7171
    %10758 = vmatprep.subr.bf16.mxu0 0
    %10759 = vmatpush1.bf16.msra.mxu0 %v7168
    %10760 = vmatprep.subr.bf16.mxu0 0
    %10761 = vmatpush1.bf16.msra.mxu0 %v7165
    %10762 = vmatprep.subr.bf16.mxu0 0
    %10763 = vmatpush1.bf16.msra.mxu0 %v7162
    %10764 = vmatprep.subr.bf16.mxu0 0
    %10765 = vmatpush1.bf16.msra.mxu0 %v7159
    %10766 = vmatprep.subr.bf16.mxu0 0
    %10767 = vmatpush1.bf16.msra.mxu0 %v7156
    %10768 = vmatprep.subr.bf16.mxu0 0
    %10769 = vmatpush1.bf16.msra.mxu0 %v7153
    %10770 = vmatprep.subr.bf16.mxu0 0
    %10771 = vmatpush2.bf16.msra.mxu0 %v7198
    %10772 = vmatprep.subr.bf16.mxu0 0
    %10773 = vmatpush2.bf16.msra.mxu0 %v7195
    %10774 = vmatprep.subr.bf16.mxu0 0
    %10775 = vmatpush2.bf16.msra.mxu0 %v7192
    %10776 = vmatprep.subr.bf16.mxu0 0
    %10777 = vmatpush2.bf16.msra.mxu0 %v7189
    %10778 = vmatprep.subr.bf16.mxu0 0
    %10779 = vmatpush2.bf16.msra.mxu0 %v7186
    %10780 = vmatprep.subr.bf16.mxu0 0
    %10781 = vmatpush2.bf16.msra.mxu0 %v7183
    %10782 = vmatprep.subr.bf16.mxu0 0
    %10783 = vmatpush2.bf16.msra.mxu0 %v7180
    %10784 = vmatprep.subr.bf16.mxu0 0
    %10785 = vmatpush2.bf16.msra.mxu0 %v7177
    %10786 = vmatprep.mubr.bf16.mxu0 %v524
    %10787 = vmatmul.mubr.bf16.gmra.mxu0 %v512
    %v10788 = vpop.f32.mrf.mxu0
    %v10789 = vadd.f32 %v10692, %v10788
    %v10790 = vpop.f32.mrf.mxu0
    %v10791 = vpop.f32.mrf.mxu0
    %v10792 = vadd.f32 %v10695, %v10791
    %v10793 = vpop.f32.mrf.mxu0
    %10794 = vmatprep.mubr.bf16.mxu0 %v560
    %10795 = vmatmul.mubr.bf16.gmra.mxu0 %v548
    %v10796 = vpop.f32.mrf.mxu0
    %v10797 = vadd.f32 %v10700, %v10796
    %v10798 = vpop.f32.mrf.mxu0
    %v10799 = vpop.f32.mrf.mxu0
    %v10800 = vadd.f32 %v10703, %v10799
    %v10801 = vpop.f32.mrf.mxu0
    %10802 = vmatprep.mubr.bf16.mxu0 %v596
    %10803 = vmatmul.mubr.bf16.gmra.mxu0 %v584
    %v10804 = vpop.f32.mrf.mxu0
    %v10805 = vadd.f32 %v10708, %v10804
    %v10806 = vpop.f32.mrf.mxu0
    %v10807 = vpop.f32.mrf.mxu0
    %v10808 = vadd.f32 %v10711, %v10807
    %v10809 = vpop.f32.mrf.mxu0
    %10810 = vmatprep.mubr.bf16.mxu0 %v632
    %10811 = vmatmul.mubr.bf16.gmra.mxu0 %v620
    %v10812 = vpop.f32.mrf.mxu0
    %v10813 = vadd.f32 %v10716, %v10812
    %v10814 = vpop.f32.mrf.mxu0
    %v10815 = vpop.f32.mrf.mxu0
    %v10816 = vadd.f32 %v10719, %v10815
    %v10817 = vpop.f32.mrf.mxu0
    %10818 = vmatprep.mubr.bf16.mxu0 %v668
    %10819 = vmatmul.mubr.bf16.gmra.mxu0 %v656
    %v10820 = vpop.f32.mrf.mxu0
    %v10821 = vadd.f32 %v10724, %v10820
    %v10822 = vpop.f32.mrf.mxu0
    %v10823 = vpop.f32.mrf.mxu0
    %v10824 = vadd.f32 %v10727, %v10823
    %v10825 = vpop.f32.mrf.mxu0
    %10826 = vmatprep.mubr.bf16.mxu0 %v704
    %10827 = vmatmul.mubr.bf16.gmra.mxu0 %v692
    %v10828 = vpop.f32.mrf.mxu0
    %v10829 = vadd.f32 %v10732, %v10828
    %v10830 = vpop.f32.mrf.mxu0
    %v10831 = vpop.f32.mrf.mxu0
    %v10832 = vadd.f32 %v10735, %v10831
    %v10833 = vpop.f32.mrf.mxu0
    %10834 = vmatprep.mubr.bf16.mxu0 %v740
    %10835 = vmatmul.mubr.bf16.gmra.mxu0 %v728
    %v10836 = vpop.f32.mrf.mxu0
    %v10837 = vadd.f32 %v10740, %v10836
    %v10838 = vpop.f32.mrf.mxu0
    %v10839 = vpop.f32.mrf.mxu0
    %v10840 = vadd.f32 %v10743, %v10839
    %v10841 = vpop.f32.mrf.mxu0
    %10842 = vmatprep.mubr.bf16.mxu0 %v776
    %10843 = vmatmul.mubr.bf16.gmra.mxu0 %v764
    %v10844 = vpop.f32.mrf.mxu0
    %v10845 = vadd.f32 %v10748, %v10844
    %v10846 = vpop.f32.mrf.mxu0
    %v10847 = vpop.f32.mrf.mxu0
    %v10848 = vadd.f32 %v10751, %v10847
    %v10849 = vpop.f32.mrf.mxu0
    %10850 = vdwg.mxu0
    %10851 = vmatprep.subr.bf16.mxu0 0
    %10852 = vmatpush1.bf16.msra.mxu0 %v7222
    %10853 = vmatprep.subr.bf16.mxu0 0
    %10854 = vmatpush1.bf16.msra.mxu0 %v7219
    %10855 = vmatprep.subr.bf16.mxu0 0
    %10856 = vmatpush1.bf16.msra.mxu0 %v7216
    %10857 = vmatprep.subr.bf16.mxu0 0
    %10858 = vmatpush1.bf16.msra.mxu0 %v7213
    %10859 = vmatprep.subr.bf16.mxu0 0
    %10860 = vmatpush1.bf16.msra.mxu0 %v7210
    %10861 = vmatprep.subr.bf16.mxu0 0
    %10862 = vmatpush1.bf16.msra.mxu0 %v7207
    %10863 = vmatprep.subr.bf16.mxu0 0
    %10864 = vmatpush1.bf16.msra.mxu0 %v7204
    %10865 = vmatprep.subr.bf16.mxu0 0
    %10866 = vmatpush1.bf16.msra.mxu0 %v7201
    %10867 = vmatprep.subr.bf16.mxu0 0
    %10868 = vmatpush2.bf16.msra.mxu0 %v7246
    %10869 = vmatprep.subr.bf16.mxu0 0
    %10870 = vmatpush2.bf16.msra.mxu0 %v7243
    %10871 = vmatprep.subr.bf16.mxu0 0
    %10872 = vmatpush2.bf16.msra.mxu0 %v7240
    %10873 = vmatprep.subr.bf16.mxu0 0
    %10874 = vmatpush2.bf16.msra.mxu0 %v7237
    %10875 = vmatprep.subr.bf16.mxu0 0
    %10876 = vmatpush2.bf16.msra.mxu0 %v7234
    %10877 = vmatprep.subr.bf16.mxu0 0
    %10878 = vmatpush2.bf16.msra.mxu0 %v7231
    %10879 = vmatprep.subr.bf16.mxu0 0
    %10880 = vmatpush2.bf16.msra.mxu0 %v7228
    %10881 = vmatprep.subr.bf16.mxu0 0
    %10882 = vmatpush2.bf16.msra.mxu0 %v7225
    %10883 = vmatprep.mubr.bf16.mxu0 %v871
    %10884 = vmatmul.mubr.bf16.gmra.mxu0 %v868
    %v10885 = vpop.f32.mrf.mxu0
    %v10886 = vadd.f32 %v10789, %v10885
    %v10887 = vpop.f32.mrf.mxu0
    %v10888 = vpop.f32.mrf.mxu0
    %v10889 = vadd.f32 %v10792, %v10888
    %v10890 = vpop.f32.mrf.mxu0
    %10891 = vmatprep.mubr.bf16.mxu0 %v880
    %10892 = vmatmul.mubr.bf16.gmra.mxu0 %v877
    %v10893 = vpop.f32.mrf.mxu0
    %v10894 = vadd.f32 %v10797, %v10893
    %v10895 = vpop.f32.mrf.mxu0
    %v10896 = vpop.f32.mrf.mxu0
    %v10897 = vadd.f32 %v10800, %v10896
    %v10898 = vpop.f32.mrf.mxu0
    %10899 = vmatprep.mubr.bf16.mxu0 %v889
    %10900 = vmatmul.mubr.bf16.gmra.mxu0 %v886
    %v10901 = vpop.f32.mrf.mxu0
    %v10902 = vadd.f32 %v10805, %v10901
    %v10903 = vpop.f32.mrf.mxu0
    %v10904 = vpop.f32.mrf.mxu0
    %v10905 = vadd.f32 %v10808, %v10904
    %v10906 = vpop.f32.mrf.mxu0
    %10907 = vmatprep.mubr.bf16.mxu0 %v898
    %10908 = vmatmul.mubr.bf16.gmra.mxu0 %v895
    %v10909 = vpop.f32.mrf.mxu0
    %v10910 = vadd.f32 %v10813, %v10909
    %v10911 = vpop.f32.mrf.mxu0
    %v10912 = vpop.f32.mrf.mxu0
    %v10913 = vadd.f32 %v10816, %v10912
    %v10914 = vpop.f32.mrf.mxu0
    %10915 = vmatprep.mubr.bf16.mxu0 %v907
    %10916 = vmatmul.mubr.bf16.gmra.mxu0 %v904
    %v10917 = vpop.f32.mrf.mxu0
    %v10918 = vadd.f32 %v10821, %v10917
    %v10919 = vpop.f32.mrf.mxu0
    %v10920 = vpop.f32.mrf.mxu0
    %v10921 = vadd.f32 %v10824, %v10920
    %v10922 = vpop.f32.mrf.mxu0
    %10923 = vmatprep.mubr.bf16.mxu0 %v916
    %10924 = vmatmul.mubr.bf16.gmra.mxu0 %v913
    %v10925 = vpop.f32.mrf.mxu0
    %v10926 = vadd.f32 %v10829, %v10925
    %v10927 = vpop.f32.mrf.mxu0
    %v10928 = vpop.f32.mrf.mxu0
    %v10929 = vadd.f32 %v10832, %v10928
    %v10930 = vpop.f32.mrf.mxu0
    %10931 = vmatprep.mubr.bf16.mxu0 %v925
    %10932 = vmatmul.mubr.bf16.gmra.mxu0 %v922
    %v10933 = vpop.f32.mrf.mxu0
    %v10934 = vadd.f32 %v10837, %v10933
    %v10935 = vpop.f32.mrf.mxu0
    %v10936 = vpop.f32.mrf.mxu0
    %v10937 = vadd.f32 %v10840, %v10936
    %v10938 = vpop.f32.mrf.mxu0
    %10939 = vmatprep.mubr.bf16.mxu0 %v934
    %10940 = vmatmul.mubr.bf16.gmra.mxu0 %v931
    %v10941 = vpop.f32.mrf.mxu0
    %v10942 = vadd.f32 %v10845, %v10941
    %v10943 = vpop.f32.mrf.mxu0
    %v10944 = vpop.f32.mrf.mxu0
    %v10945 = vadd.f32 %v10848, %v10944
    %v10946 = vpop.f32.mrf.mxu0
    %10947 = vdwg.mxu0
    %10948 = vmatprep.subr.bf16.mxu0 0
    %10949 = vmatpush1.bf16.msra.mxu0 %v7270
    %10950 = vmatprep.subr.bf16.mxu0 0
    %10951 = vmatpush1.bf16.msra.mxu0 %v7267
    %10952 = vmatprep.subr.bf16.mxu0 0
    %10953 = vmatpush1.bf16.msra.mxu0 %v7264
    %10954 = vmatprep.subr.bf16.mxu0 0
    %10955 = vmatpush1.bf16.msra.mxu0 %v7261
    %10956 = vmatprep.subr.bf16.mxu0 0
    %10957 = vmatpush1.bf16.msra.mxu0 %v7258
    %10958 = vmatprep.subr.bf16.mxu0 0
    %10959 = vmatpush1.bf16.msra.mxu0 %v7255
    %10960 = vmatprep.subr.bf16.mxu0 0
    %10961 = vmatpush1.bf16.msra.mxu0 %v7252
    %10962 = vmatprep.subr.bf16.mxu0 0
    %10963 = vmatpush1.bf16.msra.mxu0 %v7249
    %10964 = vmatprep.subr.bf16.mxu0 0
    %10965 = vmatpush2.bf16.msra.mxu0 %v7294
    %10966 = vmatprep.subr.bf16.mxu0 0
    %10967 = vmatpush2.bf16.msra.mxu0 %v7291
    %10968 = vmatprep.subr.bf16.mxu0 0
    %10969 = vmatpush2.bf16.msra.mxu0 %v7288
    %10970 = vmatprep.subr.bf16.mxu0 0
    %10971 = vmatpush2.bf16.msra.mxu0 %v7285
    %10972 = vmatprep.subr.bf16.mxu0 0
    %10973 = vmatpush2.bf16.msra.mxu0 %v7282
    %10974 = vmatprep.subr.bf16.mxu0 0
    %10975 = vmatpush2.bf16.msra.mxu0 %v7279
    %10976 = vmatprep.subr.bf16.mxu0 0
    %10977 = vmatpush2.bf16.msra.mxu0 %v7276
    %10978 = vmatprep.subr.bf16.mxu0 0
    %10979 = vmatpush2.bf16.msra.mxu0 %v7273
    %10980 = vmatprep.mubr.bf16.mxu0 %v1043
    %10981 = vmatmul.mubr.bf16.gmra.mxu0 %v874
    %v10982 = vpop.f32.mrf.mxu0
    %v10983 = vadd.f32 %v10886, %v10982
    %v10984 = vpop.f32.mrf.mxu0
    %v10985 = vpop.f32.mrf.mxu0
    %v10986 = vadd.f32 %v10889, %v10985
    %v10987 = vpop.f32.mrf.mxu0
    %10988 = vmatprep.mubr.bf16.mxu0 %v1094
    %10989 = vmatmul.mubr.bf16.gmra.mxu0 %v883
    %v10990 = vpop.f32.mrf.mxu0
    %v10991 = vadd.f32 %v10894, %v10990
    %v10992 = vpop.f32.mrf.mxu0
    %v10993 = vpop.f32.mrf.mxu0
    %v10994 = vadd.f32 %v10897, %v10993
    %v10995 = vpop.f32.mrf.mxu0
    %10996 = vmatprep.mubr.bf16.mxu0 %v1145
    %10997 = vmatmul.mubr.bf16.gmra.mxu0 %v892
    %v10998 = vpop.f32.mrf.mxu0
    %v10999 = vadd.f32 %v10902, %v10998
    %v11000 = vpop.f32.mrf.mxu0
    %v11001 = vpop.f32.mrf.mxu0
    %v11002 = vadd.f32 %v10905, %v11001
    %v11003 = vpop.f32.mrf.mxu0
    %11004 = vmatprep.mubr.bf16.mxu0 %v1196
    %11005 = vmatmul.mubr.bf16.gmra.mxu0 %v901
    %v11006 = vpop.f32.mrf.mxu0
    %v11007 = vadd.f32 %v10910, %v11006
    %v11008 = vpop.f32.mrf.mxu0
    %v11009 = vpop.f32.mrf.mxu0
    %v11010 = vadd.f32 %v10913, %v11009
    %v11011 = vpop.f32.mrf.mxu0
    %11012 = vmatprep.mubr.bf16.mxu0 %v1247
    %11013 = vmatmul.mubr.bf16.gmra.mxu0 %v910
    %v11014 = vpop.f32.mrf.mxu0
    %v11015 = vadd.f32 %v10918, %v11014
    %v11016 = vpop.f32.mrf.mxu0
    %v11017 = vpop.f32.mrf.mxu0
    %v11018 = vadd.f32 %v10921, %v11017
    %v11019 = vpop.f32.mrf.mxu0
    %11020 = vmatprep.mubr.bf16.mxu0 %v1298
    %11021 = vmatmul.mubr.bf16.gmra.mxu0 %v919
    %v11022 = vpop.f32.mrf.mxu0
    %v11023 = vadd.f32 %v10926, %v11022
    %v11024 = vpop.f32.mrf.mxu0
    %v11025 = vpop.f32.mrf.mxu0
    %v11026 = vadd.f32 %v10929, %v11025
    %v11027 = vpop.f32.mrf.mxu0
    %11028 = vmatprep.mubr.bf16.mxu0 %v1349
    %11029 = vmatmul.mubr.bf16.gmra.mxu0 %v928
    %v11030 = vpop.f32.mrf.mxu0
    %v11031 = vadd.f32 %v10934, %v11030
    %v11032 = vpop.f32.mrf.mxu0
    %v11033 = vpop.f32.mrf.mxu0
    %v11034 = vadd.f32 %v10937, %v11033
    %v11035 = vpop.f32.mrf.mxu0
    %11036 = vmatprep.mubr.bf16.mxu0 %v1400
    %11037 = vmatmul.mubr.bf16.gmra.mxu0 %v937
    %v11038 = vpop.f32.mrf.mxu0
    %v11039 = vadd.f32 %v10942, %v11038
    %v11040 = vpop.f32.mrf.mxu0
    %v11041 = vpop.f32.mrf.mxu0
    %v11042 = vadd.f32 %v10945, %v11041
    %v11043 = vpop.f32.mrf.mxu0
    %11044 = vdwg.mxu0
    %11045 = vmatprep.subr.bf16.mxu0 0
    %11046 = vmatpush1.bf16.msra.mxu0 %v7318
    %11047 = vmatprep.subr.bf16.mxu0 0
    %11048 = vmatpush1.bf16.msra.mxu0 %v7315
    %11049 = vmatprep.subr.bf16.mxu0 0
    %11050 = vmatpush1.bf16.msra.mxu0 %v7312
    %11051 = vmatprep.subr.bf16.mxu0 0
    %11052 = vmatpush1.bf16.msra.mxu0 %v7309
    %11053 = vmatprep.subr.bf16.mxu0 0
    %11054 = vmatpush1.bf16.msra.mxu0 %v7306
    %11055 = vmatprep.subr.bf16.mxu0 0
    %11056 = vmatpush1.bf16.msra.mxu0 %v7303
    %11057 = vmatprep.subr.bf16.mxu0 0
    %11058 = vmatpush1.bf16.msra.mxu0 %v7300
    %11059 = vmatprep.subr.bf16.mxu0 0
    %11060 = vmatpush1.bf16.msra.mxu0 %v7297
    %11061 = vmatprep.subr.bf16.mxu0 0
    %11062 = vmatpush2.bf16.msra.mxu0 %v7342
    %11063 = vmatprep.subr.bf16.mxu0 0
    %11064 = vmatpush2.bf16.msra.mxu0 %v7339
    %11065 = vmatprep.subr.bf16.mxu0 0
    %11066 = vmatpush2.bf16.msra.mxu0 %v7336
    %11067 = vmatprep.subr.bf16.mxu0 0
    %11068 = vmatpush2.bf16.msra.mxu0 %v7333
    %11069 = vmatprep.subr.bf16.mxu0 0
    %11070 = vmatpush2.bf16.msra.mxu0 %v7330
    %11071 = vmatprep.subr.bf16.mxu0 0
    %11072 = vmatpush2.bf16.msra.mxu0 %v7327
    %11073 = vmatprep.subr.bf16.mxu0 0
    %11074 = vmatpush2.bf16.msra.mxu0 %v7324
    %11075 = vmatprep.subr.bf16.mxu0 0
    %11076 = vmatpush2.bf16.msra.mxu0 %v7321
    %11077 = vmatprep.mubr.bf16.mxu0 %v1077
    %11078 = vmatmul.mubr.bf16.gmra.mxu0 %v1060
    %v11079 = vpop.f32.mrf.mxu0
    %v11080 = vadd.f32 %v10983, %v11079
    %v11081 = vpop.f32.mrf.mxu0
    %v11082 = vpop.f32.mrf.mxu0
    %v11083 = vadd.f32 %v10986, %v11082
    %v11084 = vpop.f32.mrf.mxu0
    %11085 = vmatprep.mubr.bf16.mxu0 %v1128
    %11086 = vmatmul.mubr.bf16.gmra.mxu0 %v1111
    %v11087 = vpop.f32.mrf.mxu0
    %v11088 = vadd.f32 %v10991, %v11087
    %v11089 = vpop.f32.mrf.mxu0
    %v11090 = vpop.f32.mrf.mxu0
    %v11091 = vadd.f32 %v10994, %v11090
    %v11092 = vpop.f32.mrf.mxu0
    %11093 = vmatprep.mubr.bf16.mxu0 %v1179
    %11094 = vmatmul.mubr.bf16.gmra.mxu0 %v1162
    %v11095 = vpop.f32.mrf.mxu0
    %v11096 = vadd.f32 %v10999, %v11095
    %v11097 = vpop.f32.mrf.mxu0
    %v11098 = vpop.f32.mrf.mxu0
    %v11099 = vadd.f32 %v11002, %v11098
    %v11100 = vpop.f32.mrf.mxu0
    %11101 = vmatprep.mubr.bf16.mxu0 %v1230
    %11102 = vmatmul.mubr.bf16.gmra.mxu0 %v1213
    %v11103 = vpop.f32.mrf.mxu0
    %v11104 = vadd.f32 %v11007, %v11103
    %v11105 = vpop.f32.mrf.mxu0
    %v11106 = vpop.f32.mrf.mxu0
    %v11107 = vadd.f32 %v11010, %v11106
    %v11108 = vpop.f32.mrf.mxu0
    %11109 = vmatprep.mubr.bf16.mxu0 %v1281
    %11110 = vmatmul.mubr.bf16.gmra.mxu0 %v1264
    %v11111 = vpop.f32.mrf.mxu0
    %v11112 = vadd.f32 %v11015, %v11111
    %v11113 = vpop.f32.mrf.mxu0
    %v11114 = vpop.f32.mrf.mxu0
    %v11115 = vadd.f32 %v11018, %v11114
    %v11116 = vpop.f32.mrf.mxu0
    %11117 = vmatprep.mubr.bf16.mxu0 %v1332
    %11118 = vmatmul.mubr.bf16.gmra.mxu0 %v1315
    %v11119 = vpop.f32.mrf.mxu0
    %v11120 = vadd.f32 %v11023, %v11119
    %v11121 = vpop.f32.mrf.mxu0
    %v11122 = vpop.f32.mrf.mxu0
    %v11123 = vadd.f32 %v11026, %v11122
    %v11124 = vpop.f32.mrf.mxu0
    %11125 = vmatprep.mubr.bf16.mxu0 %v1383
    %11126 = vmatmul.mubr.bf16.gmra.mxu0 %v1366
    %v11127 = vpop.f32.mrf.mxu0
    %v11128 = vadd.f32 %v11031, %v11127
    %v11129 = vpop.f32.mrf.mxu0
    %v11130 = vpop.f32.mrf.mxu0
    %v11131 = vadd.f32 %v11034, %v11130
    %v11132 = vpop.f32.mrf.mxu0
    %11133 = vmatprep.mubr.bf16.mxu0 %v1434
    %11134 = vmatmul.mubr.bf16.gmra.mxu0 %v1417
    %v11135 = vpop.f32.mrf.mxu0
    %v11136 = vadd.f32 %v11039, %v11135
    %v11137 = vpop.f32.mrf.mxu0
    %v11138 = vpop.f32.mrf.mxu0
    %v11139 = vadd.f32 %v11042, %v11138
    %v11140 = vpop.f32.mrf.mxu0
    %11141 = vdwg.mxu0
    %11142 = vmatprep.subr.bf16.mxu0 0
    %11143 = vmatpush1.bf16.msra.mxu0 %v7366
    %11144 = vmatprep.subr.bf16.mxu0 0
    %11145 = vmatpush1.bf16.msra.mxu0 %v7363
    %11146 = vmatprep.subr.bf16.mxu0 0
    %11147 = vmatpush1.bf16.msra.mxu0 %v7360
    %11148 = vmatprep.subr.bf16.mxu0 0
    %11149 = vmatpush1.bf16.msra.mxu0 %v7357
    %11150 = vmatprep.subr.bf16.mxu0 0
    %11151 = vmatpush1.bf16.msra.mxu0 %v7354
    %11152 = vmatprep.subr.bf16.mxu0 0
    %11153 = vmatpush1.bf16.msra.mxu0 %v7351
    %11154 = vmatprep.subr.bf16.mxu0 0
    %11155 = vmatpush1.bf16.msra.mxu0 %v7348
    %11156 = vmatprep.subr.bf16.mxu0 0
    %11157 = vmatpush1.bf16.msra.mxu0 %v7345
    %11158 = vmatprep.subr.bf16.mxu0 0
    %11159 = vmatpush2.bf16.msra.mxu0 %v7390
    %11160 = vmatprep.subr.bf16.mxu0 0
    %11161 = vmatpush2.bf16.msra.mxu0 %v7387
    %11162 = vmatprep.subr.bf16.mxu0 0
    %11163 = vmatpush2.bf16.msra.mxu0 %v7384
    %11164 = vmatprep.subr.bf16.mxu0 0
    %11165 = vmatpush2.bf16.msra.mxu0 %v7381
    %11166 = vmatprep.subr.bf16.mxu0 0
    %11167 = vmatpush2.bf16.msra.mxu0 %v7378
    %11168 = vmatprep.subr.bf16.mxu0 0
    %11169 = vmatpush2.bf16.msra.mxu0 %v7375
    %11170 = vmatprep.subr.bf16.mxu0 0
    %11171 = vmatpush2.bf16.msra.mxu0 %v7372
    %11172 = vmatprep.subr.bf16.mxu0 0
    %11173 = vmatpush2.bf16.msra.mxu0 %v7369
    %11174 = vmatprep.mubr.bf16.mxu0 %v1529
    %11175 = vmatmul.mubr.bf16.gmra.mxu0 %v1526
    %v11176 = vpop.f32.mrf.mxu0
    %v11177 = vadd.f32 %v11080, %v11176
    %v11178 = vpop.f32.mrf.mxu0
    %v11179 = vpop.f32.mrf.mxu0
    %v11180 = vadd.f32 %v11083, %v11179
    %v11181 = vpop.f32.mrf.mxu0
    %11182 = vmatprep.mubr.bf16.mxu0 %v1538
    %11183 = vmatmul.mubr.bf16.gmra.mxu0 %v1535
    %v11184 = vpop.f32.mrf.mxu0
    %v11185 = vadd.f32 %v11088, %v11184
    %v11186 = vpop.f32.mrf.mxu0
    %v11187 = vpop.f32.mrf.mxu0
    %v11188 = vadd.f32 %v11091, %v11187
    %v11189 = vpop.f32.mrf.mxu0
    %11190 = vmatprep.mubr.bf16.mxu0 %v1547
    %11191 = vmatmul.mubr.bf16.gmra.mxu0 %v1544
    %v11192 = vpop.f32.mrf.mxu0
    %v11193 = vadd.f32 %v11096, %v11192
    %v11194 = vpop.f32.mrf.mxu0
    %v11195 = vpop.f32.mrf.mxu0
    %v11196 = vadd.f32 %v11099, %v11195
    %v11197 = vpop.f32.mrf.mxu0
    %11198 = vmatprep.mubr.bf16.mxu0 %v1556
    %11199 = vmatmul.mubr.bf16.gmra.mxu0 %v1553
    %v11200 = vpop.f32.mrf.mxu0
    %v11201 = vadd.f32 %v11104, %v11200
    %v11202 = vpop.f32.mrf.mxu0
    %v11203 = vpop.f32.mrf.mxu0
    %v11204 = vadd.f32 %v11107, %v11203
    %v11205 = vpop.f32.mrf.mxu0
    %11206 = vmatprep.mubr.bf16.mxu0 %v1565
    %11207 = vmatmul.mubr.bf16.gmra.mxu0 %v1562
    %v11208 = vpop.f32.mrf.mxu0
    %v11209 = vadd.f32 %v11112, %v11208
    %v11210 = vpop.f32.mrf.mxu0
    %v11211 = vpop.f32.mrf.mxu0
    %v11212 = vadd.f32 %v11115, %v11211
    %v11213 = vpop.f32.mrf.mxu0
    %11214 = vmatprep.mubr.bf16.mxu0 %v1574
    %11215 = vmatmul.mubr.bf16.gmra.mxu0 %v1571
    %v11216 = vpop.f32.mrf.mxu0
    %v11217 = vadd.f32 %v11120, %v11216
    %v11218 = vpop.f32.mrf.mxu0
    %v11219 = vpop.f32.mrf.mxu0
    %v11220 = vadd.f32 %v11123, %v11219
    %v11221 = vpop.f32.mrf.mxu0
    %11222 = vmatprep.mubr.bf16.mxu0 %v1583
    %11223 = vmatmul.mubr.bf16.gmra.mxu0 %v1580
    %v11224 = vpop.f32.mrf.mxu0
    %v11225 = vadd.f32 %v11128, %v11224
    %v11226 = vpop.f32.mrf.mxu0
    %v11227 = vpop.f32.mrf.mxu0
    %v11228 = vadd.f32 %v11131, %v11227
    %v11229 = vpop.f32.mrf.mxu0
    %11230 = vmatprep.mubr.bf16.mxu0 %v1592
    %11231 = vmatmul.mubr.bf16.gmra.mxu0 %v1589
    %v11232 = vpop.f32.mrf.mxu0
    %v11233 = vadd.f32 %v11136, %v11232
    %v11234 = vpop.f32.mrf.mxu0
    %v11235 = vpop.f32.mrf.mxu0
    %v11236 = vadd.f32 %v11139, %v11235
    %v11237 = vpop.f32.mrf.mxu0
    %11238 = vdwg.mxu0
    %11239 = vmatprep.subr.bf16.mxu0 0
    %11240 = vmatpush1.bf16.msra.mxu0 %v7414
    %11241 = vmatprep.subr.bf16.mxu0 0
    %11242 = vmatpush1.bf16.msra.mxu0 %v7411
    %11243 = vmatprep.subr.bf16.mxu0 0
    %11244 = vmatpush1.bf16.msra.mxu0 %v7408
    %11245 = vmatprep.subr.bf16.mxu0 0
    %11246 = vmatpush1.bf16.msra.mxu0 %v7405
    %11247 = vmatprep.subr.bf16.mxu0 0
    %11248 = vmatpush1.bf16.msra.mxu0 %v7402
    %11249 = vmatprep.subr.bf16.mxu0 0
    %11250 = vmatpush1.bf16.msra.mxu0 %v7399
    %11251 = vmatprep.subr.bf16.mxu0 0
    %11252 = vmatpush1.bf16.msra.mxu0 %v7396
    %11253 = vmatprep.subr.bf16.mxu0 0
    %11254 = vmatpush1.bf16.msra.mxu0 %v7393
    %11255 = vmatprep.subr.bf16.mxu0 0
    %11256 = vmatpush2.bf16.msra.mxu0 %v7438
    %11257 = vmatprep.subr.bf16.mxu0 0
    %11258 = vmatpush2.bf16.msra.mxu0 %v7435
    %11259 = vmatprep.subr.bf16.mxu0 0
    %11260 = vmatpush2.bf16.msra.mxu0 %v7432
    %11261 = vmatprep.subr.bf16.mxu0 0
    %11262 = vmatpush2.bf16.msra.mxu0 %v7429
    %11263 = vmatprep.subr.bf16.mxu0 0
    %11264 = vmatpush2.bf16.msra.mxu0 %v7426
    %11265 = vmatprep.subr.bf16.mxu0 0
    %11266 = vmatpush2.bf16.msra.mxu0 %v7423
    %11267 = vmatprep.subr.bf16.mxu0 0
    %11268 = vmatpush2.bf16.msra.mxu0 %v7420
    %11269 = vmatprep.subr.bf16.mxu0 0
    %11270 = vmatpush2.bf16.msra.mxu0 %v7417
    %11271 = vmatprep.mubr.bf16.mxu0 %v1701
    %11272 = vmatmul.mubr.bf16.gmra.mxu0 %v1532
    %v11273 = vpop.f32.mrf.mxu0
    %v11274 = vadd.f32 %v11177, %v11273
    %v11275 = vpop.f32.mrf.mxu0
    %v11276 = vpop.f32.mrf.mxu0
    %v11277 = vadd.f32 %v11180, %v11276
    %v11278 = vpop.f32.mrf.mxu0
    %11279 = vmatprep.mubr.bf16.mxu0 %v1752
    %11280 = vmatmul.mubr.bf16.gmra.mxu0 %v1541
    %v11281 = vpop.f32.mrf.mxu0
    %v11282 = vadd.f32 %v11185, %v11281
    %v11283 = vpop.f32.mrf.mxu0
    %v11284 = vpop.f32.mrf.mxu0
    %v11285 = vadd.f32 %v11188, %v11284
    %v11286 = vpop.f32.mrf.mxu0
    %11287 = vmatprep.mubr.bf16.mxu0 %v1803
    %11288 = vmatmul.mubr.bf16.gmra.mxu0 %v1550
    %v11289 = vpop.f32.mrf.mxu0
    %v11290 = vadd.f32 %v11193, %v11289
    %v11291 = vpop.f32.mrf.mxu0
    %v11292 = vpop.f32.mrf.mxu0
    %v11293 = vadd.f32 %v11196, %v11292
    %v11294 = vpop.f32.mrf.mxu0
    %11295 = vmatprep.mubr.bf16.mxu0 %v1854
    %11296 = vmatmul.mubr.bf16.gmra.mxu0 %v1559
    %v11297 = vpop.f32.mrf.mxu0
    %v11298 = vadd.f32 %v11201, %v11297
    %v11299 = vpop.f32.mrf.mxu0
    %v11300 = vpop.f32.mrf.mxu0
    %v11301 = vadd.f32 %v11204, %v11300
    %v11302 = vpop.f32.mrf.mxu0
    %11303 = vmatprep.mubr.bf16.mxu0 %v1905
    %11304 = vmatmul.mubr.bf16.gmra.mxu0 %v1568
    %v11305 = vpop.f32.mrf.mxu0
    %v11306 = vadd.f32 %v11209, %v11305
    %v11307 = vpop.f32.mrf.mxu0
    %v11308 = vpop.f32.mrf.mxu0
    %v11309 = vadd.f32 %v11212, %v11308
    %v11310 = vpop.f32.mrf.mxu0
    %11311 = vmatprep.mubr.bf16.mxu0 %v1956
    %11312 = vmatmul.mubr.bf16.gmra.mxu0 %v1577
    %v11313 = vpop.f32.mrf.mxu0
    %v11314 = vadd.f32 %v11217, %v11313
    %v11315 = vpop.f32.mrf.mxu0
    %v11316 = vpop.f32.mrf.mxu0
    %v11317 = vadd.f32 %v11220, %v11316
    %v11318 = vpop.f32.mrf.mxu0
    %11319 = vmatprep.mubr.bf16.mxu0 %v2007
    %11320 = vmatmul.mubr.bf16.gmra.mxu0 %v1586
    %v11321 = vpop.f32.mrf.mxu0
    %v11322 = vadd.f32 %v11225, %v11321
    %v11323 = vpop.f32.mrf.mxu0
    %v11324 = vpop.f32.mrf.mxu0
    %v11325 = vadd.f32 %v11228, %v11324
    %v11326 = vpop.f32.mrf.mxu0
    %11327 = vmatprep.mubr.bf16.mxu0 %v2058
    %11328 = vmatmul.mubr.bf16.gmra.mxu0 %v1595
    %v11329 = vpop.f32.mrf.mxu0
    %v11330 = vadd.f32 %v11233, %v11329
    %v11331 = vpop.f32.mrf.mxu0
    %v11332 = vpop.f32.mrf.mxu0
    %v11333 = vadd.f32 %v11236, %v11332
    %v11334 = vpop.f32.mrf.mxu0
    %11335 = vdwg.mxu0
    %11336 = vmatprep.subr.bf16.mxu0 0
    %11337 = vmatpush1.bf16.msra.mxu0 %v7462
    %11338 = vmatprep.subr.bf16.mxu0 0
    %11339 = vmatpush1.bf16.msra.mxu0 %v7459
    %11340 = vmatprep.subr.bf16.mxu0 0
    %11341 = vmatpush1.bf16.msra.mxu0 %v7456
    %11342 = vmatprep.subr.bf16.mxu0 0
    %11343 = vmatpush1.bf16.msra.mxu0 %v7453
    %11344 = vmatprep.subr.bf16.mxu0 0
    %11345 = vmatpush1.bf16.msra.mxu0 %v7450
    %11346 = vmatprep.subr.bf16.mxu0 0
    %11347 = vmatpush1.bf16.msra.mxu0 %v7447
    %11348 = vmatprep.subr.bf16.mxu0 0
    %11349 = vmatpush1.bf16.msra.mxu0 %v7444
    %11350 = vmatprep.subr.bf16.mxu0 0
    %11351 = vmatpush1.bf16.msra.mxu0 %v7441
    %11352 = vmatprep.subr.bf16.mxu0 0
    %11353 = vmatpush2.bf16.msra.mxu0 %v7486
    %11354 = vmatprep.subr.bf16.mxu0 0
    %11355 = vmatpush2.bf16.msra.mxu0 %v7483
    %11356 = vmatprep.subr.bf16.mxu0 0
    %11357 = vmatpush2.bf16.msra.mxu0 %v7480
    %11358 = vmatprep.subr.bf16.mxu0 0
    %11359 = vmatpush2.bf16.msra.mxu0 %v7477
    %11360 = vmatprep.subr.bf16.mxu0 0
    %11361 = vmatpush2.bf16.msra.mxu0 %v7474
    %11362 = vmatprep.subr.bf16.mxu0 0
    %11363 = vmatpush2.bf16.msra.mxu0 %v7471
    %11364 = vmatprep.subr.bf16.mxu0 0
    %11365 = vmatpush2.bf16.msra.mxu0 %v7468
    %11366 = vmatprep.subr.bf16.mxu0 0
    %11367 = vmatpush2.bf16.msra.mxu0 %v7465
    %11368 = vmatprep.mubr.bf16.mxu0 %v1735
    %11369 = vmatmul.mubr.bf16.gmra.mxu0 %v1718
    %v11370 = vpop.f32.mrf.mxu0
    %v11371 = vadd.f32 %v11274, %v11370
    %v11372 = vpop.f32.mrf.mxu0
    %v11373 = vpop.f32.mrf.mxu0
    %v11374 = vadd.f32 %v11277, %v11373
    %v11375 = vpop.f32.mrf.mxu0
    %11376 = vmatprep.mubr.bf16.mxu0 %v1786
    %11377 = vmatmul.mubr.bf16.gmra.mxu0 %v1769
    %v11378 = vpop.f32.mrf.mxu0
    %v11379 = vadd.f32 %v11282, %v11378
    %v11380 = vpop.f32.mrf.mxu0
    %v11381 = vpop.f32.mrf.mxu0
    %v11382 = vadd.f32 %v11285, %v11381
    %v11383 = vpop.f32.mrf.mxu0
    %11384 = vmatprep.mubr.bf16.mxu0 %v1837
    %11385 = vmatmul.mubr.bf16.gmra.mxu0 %v1820
    %v11386 = vpop.f32.mrf.mxu0
    %v11387 = vadd.f32 %v11290, %v11386
    %v11388 = vpop.f32.mrf.mxu0
    %v11389 = vpop.f32.mrf.mxu0
    %v11390 = vadd.f32 %v11293, %v11389
    %v11391 = vpop.f32.mrf.mxu0
    %11392 = vmatprep.mubr.bf16.mxu0 %v1888
    %11393 = vmatmul.mubr.bf16.gmra.mxu0 %v1871
    %v11394 = vpop.f32.mrf.mxu0
    %v11395 = vadd.f32 %v11298, %v11394
    %v11396 = vpop.f32.mrf.mxu0
    %v11397 = vpop.f32.mrf.mxu0
    %v11398 = vadd.f32 %v11301, %v11397
    %v11399 = vpop.f32.mrf.mxu0
    %11400 = vmatprep.mubr.bf16.mxu0 %v1939
    %11401 = vmatmul.mubr.bf16.gmra.mxu0 %v1922
    %v11402 = vpop.f32.mrf.mxu0
    %v11403 = vadd.f32 %v11306, %v11402
    %v11404 = vpop.f32.mrf.mxu0
    %v11405 = vpop.f32.mrf.mxu0
    %v11406 = vadd.f32 %v11309, %v11405
    %v11407 = vpop.f32.mrf.mxu0
    %11408 = vmatprep.mubr.bf16.mxu0 %v1990
    %11409 = vmatmul.mubr.bf16.gmra.mxu0 %v1973
    %v11410 = vpop.f32.mrf.mxu0
    %v11411 = vadd.f32 %v11314, %v11410
    %v11412 = vpop.f32.mrf.mxu0
    %v11413 = vpop.f32.mrf.mxu0
    %v11414 = vadd.f32 %v11317, %v11413
    %v11415 = vpop.f32.mrf.mxu0
    %11416 = vmatprep.mubr.bf16.mxu0 %v2041
    %11417 = vmatmul.mubr.bf16.gmra.mxu0 %v2024
    %v11418 = vpop.f32.mrf.mxu0
    %v11419 = vadd.f32 %v11322, %v11418
    %v11420 = vpop.f32.mrf.mxu0
    %v11421 = vpop.f32.mrf.mxu0
    %v11422 = vadd.f32 %v11325, %v11421
    %v11423 = vpop.f32.mrf.mxu0
    %11424 = vmatprep.mubr.bf16.mxu0 %v2092
    %11425 = vmatmul.mubr.bf16.gmra.mxu0 %v2075
    %v11426 = vpop.f32.mrf.mxu0
    %v11427 = vadd.f32 %v11330, %v11426
    %v11428 = vpop.f32.mrf.mxu0
    %v11429 = vpop.f32.mrf.mxu0
    %v11430 = vadd.f32 %v11333, %v11429
    %v11431 = vpop.f32.mrf.mxu0
    %11432 = vdwg.mxu0
    %11433 = vmatprep.subr.bf16.mxu0 0
    %11434 = vmatpush1.bf16.msra.mxu0 %v7510
    %11435 = vmatprep.subr.bf16.mxu0 0
    %11436 = vmatpush1.bf16.msra.mxu0 %v7507
    %11437 = vmatprep.subr.bf16.mxu0 0
    %11438 = vmatpush1.bf16.msra.mxu0 %v7504
    %11439 = vmatprep.subr.bf16.mxu0 0
    %11440 = vmatpush1.bf16.msra.mxu0 %v7501
    %11441 = vmatprep.subr.bf16.mxu0 0
    %11442 = vmatpush1.bf16.msra.mxu0 %v7498
    %11443 = vmatprep.subr.bf16.mxu0 0
    %11444 = vmatpush1.bf16.msra.mxu0 %v7495
    %11445 = vmatprep.subr.bf16.mxu0 0
    %11446 = vmatpush1.bf16.msra.mxu0 %v7492
    %11447 = vmatprep.subr.bf16.mxu0 0
    %11448 = vmatpush1.bf16.msra.mxu0 %v7489
    %11449 = vmatprep.subr.bf16.mxu0 0
    %11450 = vmatpush2.bf16.msra.mxu0 %v7534
    %11451 = vmatprep.subr.bf16.mxu0 0
    %11452 = vmatpush2.bf16.msra.mxu0 %v7531
    %11453 = vmatprep.subr.bf16.mxu0 0
    %11454 = vmatpush2.bf16.msra.mxu0 %v7528
    %11455 = vmatprep.subr.bf16.mxu0 0
    %11456 = vmatpush2.bf16.msra.mxu0 %v7525
    %11457 = vmatprep.subr.bf16.mxu0 0
    %11458 = vmatpush2.bf16.msra.mxu0 %v7522
    %11459 = vmatprep.subr.bf16.mxu0 0
    %11460 = vmatpush2.bf16.msra.mxu0 %v7519
    %11461 = vmatprep.subr.bf16.mxu0 0
    %11462 = vmatpush2.bf16.msra.mxu0 %v7516
    %11463 = vmatprep.subr.bf16.mxu0 0
    %11464 = vmatpush2.bf16.msra.mxu0 %v7513
    %11465 = vmatprep.mubr.bf16.mxu0 %v2187
    %11466 = vmatmul.mubr.bf16.gmra.mxu0 %v2184
    %v11467 = vpop.f32.mrf.mxu0
    %v11468 = vadd.f32 %v11371, %v11467
    %v11469 = vpop.f32.mrf.mxu0
    %v11470 = vpop.f32.mrf.mxu0
    %v11471 = vadd.f32 %v11374, %v11470
    %v11472 = vpop.f32.mrf.mxu0
    %11473 = vmatprep.mubr.bf16.mxu0 %v2196
    %11474 = vmatmul.mubr.bf16.gmra.mxu0 %v2193
    %v11475 = vpop.f32.mrf.mxu0
    %v11476 = vadd.f32 %v11379, %v11475
    %v11477 = vpop.f32.mrf.mxu0
    %v11478 = vpop.f32.mrf.mxu0
    %v11479 = vadd.f32 %v11382, %v11478
    %v11480 = vpop.f32.mrf.mxu0
    %11481 = vmatprep.mubr.bf16.mxu0 %v2205
    %11482 = vmatmul.mubr.bf16.gmra.mxu0 %v2202
    %v11483 = vpop.f32.mrf.mxu0
    %v11484 = vadd.f32 %v11387, %v11483
    %v11485 = vpop.f32.mrf.mxu0
    %v11486 = vpop.f32.mrf.mxu0
    %v11487 = vadd.f32 %v11390, %v11486
    %v11488 = vpop.f32.mrf.mxu0
    %11489 = vmatprep.mubr.bf16.mxu0 %v2214
    %11490 = vmatmul.mubr.bf16.gmra.mxu0 %v2211
    %v11491 = vpop.f32.mrf.mxu0
    %v11492 = vadd.f32 %v11395, %v11491
    %v11493 = vpop.f32.mrf.mxu0
    %v11494 = vpop.f32.mrf.mxu0
    %v11495 = vadd.f32 %v11398, %v11494
    %v11496 = vpop.f32.mrf.mxu0
    %11497 = vmatprep.mubr.bf16.mxu0 %v2223
    %11498 = vmatmul.mubr.bf16.gmra.mxu0 %v2220
    %v11499 = vpop.f32.mrf.mxu0
    %v11500 = vadd.f32 %v11403, %v11499
    %v11501 = vpop.f32.mrf.mxu0
    %v11502 = vpop.f32.mrf.mxu0
    %v11503 = vadd.f32 %v11406, %v11502
    %v11504 = vpop.f32.mrf.mxu0
    %11505 = vmatprep.mubr.bf16.mxu0 %v2232
    %11506 = vmatmul.mubr.bf16.gmra.mxu0 %v2229
    %v11507 = vpop.f32.mrf.mxu0
    %v11508 = vadd.f32 %v11411, %v11507
    %v11509 = vpop.f32.mrf.mxu0
    %v11510 = vpop.f32.mrf.mxu0
    %v11511 = vadd.f32 %v11414, %v11510
    %v11512 = vpop.f32.mrf.mxu0
    %11513 = vmatprep.mubr.bf16.mxu0 %v2241
    %11514 = vmatmul.mubr.bf16.gmra.mxu0 %v2238
    %v11515 = vpop.f32.mrf.mxu0
    %v11516 = vadd.f32 %v11419, %v11515
    %v11517 = vpop.f32.mrf.mxu0
    %v11518 = vpop.f32.mrf.mxu0
    %v11519 = vadd.f32 %v11422, %v11518
    %v11520 = vpop.f32.mrf.mxu0
    %11521 = vmatprep.mubr.bf16.mxu0 %v2250
    %11522 = vmatmul.mubr.bf16.gmra.mxu0 %v2247
    %v11523 = vpop.f32.mrf.mxu0
    %v11524 = vadd.f32 %v11427, %v11523
    %v11525 = vpop.f32.mrf.mxu0
    %v11526 = vpop.f32.mrf.mxu0
    %v11527 = vadd.f32 %v11430, %v11526
    %v11528 = vpop.f32.mrf.mxu0
    %11529 = vdwg.mxu0
    %11530 = vmatprep.subr.bf16.mxu0 0
    %11531 = vmatpush1.bf16.msra.mxu0 %v7558
    %11532 = vmatprep.subr.bf16.mxu0 0
    %11533 = vmatpush1.bf16.msra.mxu0 %v7555
    %11534 = vmatprep.subr.bf16.mxu0 0
    %11535 = vmatpush1.bf16.msra.mxu0 %v7552
    %11536 = vmatprep.subr.bf16.mxu0 0
    %11537 = vmatpush1.bf16.msra.mxu0 %v7549
    %11538 = vmatprep.subr.bf16.mxu0 0
    %11539 = vmatpush1.bf16.msra.mxu0 %v7546
    %11540 = vmatprep.subr.bf16.mxu0 0
    %11541 = vmatpush1.bf16.msra.mxu0 %v7543
    %11542 = vmatprep.subr.bf16.mxu0 0
    %11543 = vmatpush1.bf16.msra.mxu0 %v7540
    %11544 = vmatprep.subr.bf16.mxu0 0
    %11545 = vmatpush1.bf16.msra.mxu0 %v7537
    %11546 = vmatprep.subr.bf16.mxu0 0
    %11547 = vmatpush2.bf16.msra.mxu0 %v7582
    %11548 = vmatprep.subr.bf16.mxu0 0
    %11549 = vmatpush2.bf16.msra.mxu0 %v7579
    %11550 = vmatprep.subr.bf16.mxu0 0
    %11551 = vmatpush2.bf16.msra.mxu0 %v7576
    %11552 = vmatprep.subr.bf16.mxu0 0
    %11553 = vmatpush2.bf16.msra.mxu0 %v7573
    %11554 = vmatprep.subr.bf16.mxu0 0
    %11555 = vmatpush2.bf16.msra.mxu0 %v7570
    %11556 = vmatprep.subr.bf16.mxu0 0
    %11557 = vmatpush2.bf16.msra.mxu0 %v7567
    %11558 = vmatprep.subr.bf16.mxu0 0
    %11559 = vmatpush2.bf16.msra.mxu0 %v7564
    %11560 = vmatprep.subr.bf16.mxu0 0
    %11561 = vmatpush2.bf16.msra.mxu0 %v7561
    %11562 = vmatprep.mubr.bf16.mxu0 %v2359
    %11563 = vmatmul.mubr.bf16.gmra.mxu0 %v2190
    %v11564 = vpop.f32.mrf.mxu0
    %v11565 = vadd.f32 %v11468, %v11564
    %v11566 = vpop.f32.mrf.mxu0
    %v11567 = vpop.f32.mrf.mxu0
    %v11568 = vadd.f32 %v11471, %v11567
    %v11569 = vpop.f32.mrf.mxu0
    %11570 = vmatprep.mubr.bf16.mxu0 %v2410
    %11571 = vmatmul.mubr.bf16.gmra.mxu0 %v2199
    %v11572 = vpop.f32.mrf.mxu0
    %v11573 = vadd.f32 %v11476, %v11572
    %v11574 = vpop.f32.mrf.mxu0
    %v11575 = vpop.f32.mrf.mxu0
    %v11576 = vadd.f32 %v11479, %v11575
    %v11577 = vpop.f32.mrf.mxu0
    %11578 = vmatprep.mubr.bf16.mxu0 %v2461
    %11579 = vmatmul.mubr.bf16.gmra.mxu0 %v2208
    %v11580 = vpop.f32.mrf.mxu0
    %v11581 = vadd.f32 %v11484, %v11580
    %v11582 = vpop.f32.mrf.mxu0
    %v11583 = vpop.f32.mrf.mxu0
    %v11584 = vadd.f32 %v11487, %v11583
    %v11585 = vpop.f32.mrf.mxu0
    %11586 = vmatprep.mubr.bf16.mxu0 %v2512
    %11587 = vmatmul.mubr.bf16.gmra.mxu0 %v2217
    %v11588 = vpop.f32.mrf.mxu0
    %v11589 = vadd.f32 %v11492, %v11588
    %v11590 = vpop.f32.mrf.mxu0
    %v11591 = vpop.f32.mrf.mxu0
    %v11592 = vadd.f32 %v11495, %v11591
    %v11593 = vpop.f32.mrf.mxu0
    %11594 = vmatprep.mubr.bf16.mxu0 %v2563
    %11595 = vmatmul.mubr.bf16.gmra.mxu0 %v2226
    %v11596 = vpop.f32.mrf.mxu0
    %v11597 = vadd.f32 %v11500, %v11596
    %v11598 = vpop.f32.mrf.mxu0
    %v11599 = vpop.f32.mrf.mxu0
    %v11600 = vadd.f32 %v11503, %v11599
    %v11601 = vpop.f32.mrf.mxu0
    %11602 = vmatprep.mubr.bf16.mxu0 %v2614
    %11603 = vmatmul.mubr.bf16.gmra.mxu0 %v2235
    %v11604 = vpop.f32.mrf.mxu0
    %v11605 = vadd.f32 %v11508, %v11604
    %v11606 = vpop.f32.mrf.mxu0
    %v11607 = vpop.f32.mrf.mxu0
    %v11608 = vadd.f32 %v11511, %v11607
    %v11609 = vpop.f32.mrf.mxu0
    %11610 = vmatprep.mubr.bf16.mxu0 %v2665
    %11611 = vmatmul.mubr.bf16.gmra.mxu0 %v2244
    %v11612 = vpop.f32.mrf.mxu0
    %v11613 = vadd.f32 %v11516, %v11612
    %v11614 = vpop.f32.mrf.mxu0
    %v11615 = vpop.f32.mrf.mxu0
    %v11616 = vadd.f32 %v11519, %v11615
    %v11617 = vpop.f32.mrf.mxu0
    %11618 = vmatprep.mubr.bf16.mxu0 %v2716
    %11619 = vmatmul.mubr.bf16.gmra.mxu0 %v2253
    %v11620 = vpop.f32.mrf.mxu0
    %v11621 = vadd.f32 %v11524, %v11620
    %v11622 = vpop.f32.mrf.mxu0
    %v11623 = vpop.f32.mrf.mxu0
    %v11624 = vadd.f32 %v11527, %v11623
    %v11625 = vpop.f32.mrf.mxu0
    %11626 = vdwg.mxu0
    %11627 = vmatprep.subr.bf16.mxu0 0
    %11628 = vmatpush1.bf16.msra.mxu0 %v7606
    %11629 = vmatprep.subr.bf16.mxu0 0
    %11630 = vmatpush1.bf16.msra.mxu0 %v7603
    %11631 = vmatprep.subr.bf16.mxu0 0
    %11632 = vmatpush1.bf16.msra.mxu0 %v7600
    %11633 = vmatprep.subr.bf16.mxu0 0
    %11634 = vmatpush1.bf16.msra.mxu0 %v7597
    %11635 = vmatprep.subr.bf16.mxu0 0
    %11636 = vmatpush1.bf16.msra.mxu0 %v7594
    %11637 = vmatprep.subr.bf16.mxu0 0
    %11638 = vmatpush1.bf16.msra.mxu0 %v7591
    %11639 = vmatprep.subr.bf16.mxu0 0
    %11640 = vmatpush1.bf16.msra.mxu0 %v7588
    %11641 = vmatprep.subr.bf16.mxu0 0
    %11642 = vmatpush1.bf16.msra.mxu0 %v7585
    %11643 = vmatprep.subr.bf16.mxu0 0
    %11644 = vmatpush2.bf16.msra.mxu0 %v7630
    %11645 = vmatprep.subr.bf16.mxu0 0
    %11646 = vmatpush2.bf16.msra.mxu0 %v7627
    %11647 = vmatprep.subr.bf16.mxu0 0
    %11648 = vmatpush2.bf16.msra.mxu0 %v7624
    %11649 = vmatprep.subr.bf16.mxu0 0
    %11650 = vmatpush2.bf16.msra.mxu0 %v7621
    %11651 = vmatprep.subr.bf16.mxu0 0
    %11652 = vmatpush2.bf16.msra.mxu0 %v7618
    %11653 = vmatprep.subr.bf16.mxu0 0
    %11654 = vmatpush2.bf16.msra.mxu0 %v7615
    %11655 = vmatprep.subr.bf16.mxu0 0
    %11656 = vmatpush2.bf16.msra.mxu0 %v7612
    %11657 = vmatprep.subr.bf16.mxu0 0
    %11658 = vmatpush2.bf16.msra.mxu0 %v7609
    %11659 = vmatprep.mubr.bf16.mxu0 %v2393
    %11660 = vmatmul.mubr.bf16.gmra.mxu0 %v2376
    %v11661 = vpop.f32.mrf.mxu0
    %v11662 = vadd.f32 %v11565, %v11661
    %v11663 = vpop.f32.mrf.mxu0
    %v11664 = vpop.f32.mrf.mxu0
    %v11665 = vadd.f32 %v11568, %v11664
    %v11666 = vpop.f32.mrf.mxu0
    %11667 = vmatprep.mubr.bf16.mxu0 %v2444
    %11668 = vmatmul.mubr.bf16.gmra.mxu0 %v2427
    %v11669 = vpop.f32.mrf.mxu0
    %v11670 = vadd.f32 %v11573, %v11669
    %v11671 = vpop.f32.mrf.mxu0
    %v11672 = vpop.f32.mrf.mxu0
    %v11673 = vadd.f32 %v11576, %v11672
    %v11674 = vpop.f32.mrf.mxu0
    %11675 = vmatprep.mubr.bf16.mxu0 %v2495
    %11676 = vmatmul.mubr.bf16.gmra.mxu0 %v2478
    %v11677 = vpop.f32.mrf.mxu0
    %v11678 = vadd.f32 %v11581, %v11677
    %v11679 = vpop.f32.mrf.mxu0
    %v11680 = vpop.f32.mrf.mxu0
    %v11681 = vadd.f32 %v11584, %v11680
    %v11682 = vpop.f32.mrf.mxu0
    %11683 = vmatprep.mubr.bf16.mxu0 %v2546
    %11684 = vmatmul.mubr.bf16.gmra.mxu0 %v2529
    %v11685 = vpop.f32.mrf.mxu0
    %v11686 = vadd.f32 %v11589, %v11685
    %v11687 = vpop.f32.mrf.mxu0
    %v11688 = vpop.f32.mrf.mxu0
    %v11689 = vadd.f32 %v11592, %v11688
    %v11690 = vpop.f32.mrf.mxu0
    %11691 = vmatprep.mubr.bf16.mxu0 %v2597
    %11692 = vmatmul.mubr.bf16.gmra.mxu0 %v2580
    %v11693 = vpop.f32.mrf.mxu0
    %v11694 = vadd.f32 %v11597, %v11693
    %v11695 = vpop.f32.mrf.mxu0
    %v11696 = vpop.f32.mrf.mxu0
    %v11697 = vadd.f32 %v11600, %v11696
    %v11698 = vpop.f32.mrf.mxu0
    %11699 = vmatprep.mubr.bf16.mxu0 %v2648
    %11700 = vmatmul.mubr.bf16.gmra.mxu0 %v2631
    %v11701 = vpop.f32.mrf.mxu0
    %v11702 = vadd.f32 %v11605, %v11701
    %v11703 = vpop.f32.mrf.mxu0
    %v11704 = vpop.f32.mrf.mxu0
    %v11705 = vadd.f32 %v11608, %v11704
    %v11706 = vpop.f32.mrf.mxu0
    %11707 = vmatprep.mubr.bf16.mxu0 %v2699
    %11708 = vmatmul.mubr.bf16.gmra.mxu0 %v2682
    %v11709 = vpop.f32.mrf.mxu0
    %v11710 = vadd.f32 %v11613, %v11709
    %v11711 = vpop.f32.mrf.mxu0
    %v11712 = vpop.f32.mrf.mxu0
    %v11713 = vadd.f32 %v11616, %v11712
    %v11714 = vpop.f32.mrf.mxu0
    %11715 = vmatprep.mubr.bf16.mxu0 %v2750
    %11716 = vmatmul.mubr.bf16.gmra.mxu0 %v2733
    %v11717 = vpop.f32.mrf.mxu0
    %v11718 = vadd.f32 %v11621, %v11717
    %v11719 = vpop.f32.mrf.mxu0
    %v11720 = vpop.f32.mrf.mxu0
    %v11721 = vadd.f32 %v11624, %v11720
    %v11722 = vpop.f32.mrf.mxu0
    %11723 = vdwg.mxu0
    %11724 = vmatprep.subr.bf16.mxu0 0
    %11725 = vmatpush1.bf16.msra.mxu0 %v7654
    %11726 = vmatprep.subr.bf16.mxu0 0
    %11727 = vmatpush1.bf16.msra.mxu0 %v7651
    %11728 = vmatprep.subr.bf16.mxu0 0
    %11729 = vmatpush1.bf16.msra.mxu0 %v7648
    %11730 = vmatprep.subr.bf16.mxu0 0
    %11731 = vmatpush1.bf16.msra.mxu0 %v7645
    %11732 = vmatprep.subr.bf16.mxu0 0
    %11733 = vmatpush1.bf16.msra.mxu0 %v7642
    %11734 = vmatprep.subr.bf16.mxu0 0
    %11735 = vmatpush1.bf16.msra.mxu0 %v7639
    %11736 = vmatprep.subr.bf16.mxu0 0
    %11737 = vmatpush1.bf16.msra.mxu0 %v7636
    %11738 = vmatprep.subr.bf16.mxu0 0
    %11739 = vmatpush1.bf16.msra.mxu0 %v7633
    %11740 = vmatprep.subr.bf16.mxu0 0
    %11741 = vmatpush2.bf16.msra.mxu0 %v7678
    %11742 = vmatprep.subr.bf16.mxu0 0
    %11743 = vmatpush2.bf16.msra.mxu0 %v7675
    %11744 = vmatprep.subr.bf16.mxu0 0
    %11745 = vmatpush2.bf16.msra.mxu0 %v7672
    %11746 = vmatprep.subr.bf16.mxu0 0
    %11747 = vmatpush2.bf16.msra.mxu0 %v7669
    %11748 = vmatprep.subr.bf16.mxu0 0
    %11749 = vmatpush2.bf16.msra.mxu0 %v7666
    %11750 = vmatprep.subr.bf16.mxu0 0
    %11751 = vmatpush2.bf16.msra.mxu0 %v7663
    %11752 = vmatprep.subr.bf16.mxu0 0
    %11753 = vmatpush2.bf16.msra.mxu0 %v7660
    %11754 = vmatprep.subr.bf16.mxu0 0
    %11755 = vmatpush2.bf16.msra.mxu0 %v7657
    %11756 = vmatprep.mubr.bf16.mxu0 %v2776
    %11757 = vmatmul.mubr.bf16.gmra.mxu0 %v2775
    %v11758 = vpop.f32.mrf.mxu0
    %v11759 = vadd.f32 %v11662, %v11758
    %v11760 = vpop.f32.mrf.mxu0
    %v11761 = vpop.f32.mrf.mxu0
    %v11762 = vadd.f32 %v11665, %v11761
    %v11763 = vpop.f32.mrf.mxu0
    %11764 = vmatprep.mubr.bf16.mxu0 %v2779
    %11765 = vmatmul.mubr.bf16.gmra.mxu0 %v2778
    %v11766 = vpop.f32.mrf.mxu0
    %v11767 = vadd.f32 %v11670, %v11766
    %v11768 = vpop.f32.mrf.mxu0
    %v11769 = vpop.f32.mrf.mxu0
    %v11770 = vadd.f32 %v11673, %v11769
    %v11771 = vpop.f32.mrf.mxu0
    %11772 = vmatprep.mubr.bf16.mxu0 %v2782
    %11773 = vmatmul.mubr.bf16.gmra.mxu0 %v2781
    %v11774 = vpop.f32.mrf.mxu0
    %v11775 = vadd.f32 %v11678, %v11774
    %v11776 = vpop.f32.mrf.mxu0
    %v11777 = vpop.f32.mrf.mxu0
    %v11778 = vadd.f32 %v11681, %v11777
    %v11779 = vpop.f32.mrf.mxu0
    %11780 = vmatprep.mubr.bf16.mxu0 %v2785
    %11781 = vmatmul.mubr.bf16.gmra.mxu0 %v2784
    %v11782 = vpop.f32.mrf.mxu0
    %v11783 = vadd.f32 %v11686, %v11782
    %v11784 = vpop.f32.mrf.mxu0
    %v11785 = vpop.f32.mrf.mxu0
    %v11786 = vadd.f32 %v11689, %v11785
    %v11787 = vpop.f32.mrf.mxu0
    %11788 = vmatprep.mubr.bf16.mxu0 %v2788
    %11789 = vmatmul.mubr.bf16.gmra.mxu0 %v2787
    %v11790 = vpop.f32.mrf.mxu0
    %v11791 = vadd.f32 %v11694, %v11790
    %v11792 = vpop.f32.mrf.mxu0
    %v11793 = vpop.f32.mrf.mxu0
    %v11794 = vadd.f32 %v11697, %v11793
    %v11795 = vpop.f32.mrf.mxu0
    %11796 = vmatprep.mubr.bf16.mxu0 %v2791
    %11797 = vmatmul.mubr.bf16.gmra.mxu0 %v2790
    %v11798 = vpop.f32.mrf.mxu0
    %v11799 = vadd.f32 %v11702, %v11798
    %v11800 = vpop.f32.mrf.mxu0
    %v11801 = vpop.f32.mrf.mxu0
    %v11802 = vadd.f32 %v11705, %v11801
    %v11803 = vpop.f32.mrf.mxu0
    %11804 = vmatprep.mubr.bf16.mxu0 %v2794
    %11805 = vmatmul.mubr.bf16.gmra.mxu0 %v2793
    %v11806 = vpop.f32.mrf.mxu0
    %v11807 = vadd.f32 %v11710, %v11806
    %v11808 = vpop.f32.mrf.mxu0
    %v11809 = vpop.f32.mrf.mxu0
    %v11810 = vadd.f32 %v11713, %v11809
    %v11811 = vpop.f32.mrf.mxu0
    %11812 = vmatprep.mubr.bf16.mxu0 %v2797
    %11813 = vmatmul.mubr.bf16.gmra.mxu0 %v2796
    %v11814 = vpop.f32.mrf.mxu0
    %v11815 = vadd.f32 %v11718, %v11814
    %v11816 = vpop.f32.mrf.mxu0
    %v11817 = vpop.f32.mrf.mxu0
    %v11818 = vadd.f32 %v11721, %v11817
    %v11819 = vpop.f32.mrf.mxu0
    %11820 = vdwg.mxu0
    %11821 = vmatprep.subr.bf16.mxu0 0
    %11822 = vmatpush1.bf16.msra.mxu0 %v7702
    %11823 = vmatprep.subr.bf16.mxu0 0
    %11824 = vmatpush1.bf16.msra.mxu0 %v7699
    %11825 = vmatprep.subr.bf16.mxu0 0
    %11826 = vmatpush1.bf16.msra.mxu0 %v7696
    %11827 = vmatprep.subr.bf16.mxu0 0
    %11828 = vmatpush1.bf16.msra.mxu0 %v7693
    %11829 = vmatprep.subr.bf16.mxu0 0
    %11830 = vmatpush1.bf16.msra.mxu0 %v7690
    %11831 = vmatprep.subr.bf16.mxu0 0
    %11832 = vmatpush1.bf16.msra.mxu0 %v7687
    %11833 = vmatprep.subr.bf16.mxu0 0
    %11834 = vmatpush1.bf16.msra.mxu0 %v7684
    %11835 = vmatprep.subr.bf16.mxu0 0
    %11836 = vmatpush1.bf16.msra.mxu0 %v7681
    %11837 = vmatprep.subr.bf16.mxu0 0
    %11838 = vmatpush2.bf16.msra.mxu0 %v7726
    %11839 = vmatprep.subr.bf16.mxu0 0
    %11840 = vmatpush2.bf16.msra.mxu0 %v7723
    %11841 = vmatprep.subr.bf16.mxu0 0
    %11842 = vmatpush2.bf16.msra.mxu0 %v7720
    %11843 = vmatprep.subr.bf16.mxu0 0
    %11844 = vmatpush2.bf16.msra.mxu0 %v7717
    %11845 = vmatprep.subr.bf16.mxu0 0
    %11846 = vmatpush2.bf16.msra.mxu0 %v7714
    %11847 = vmatprep.subr.bf16.mxu0 0
    %11848 = vmatpush2.bf16.msra.mxu0 %v7711
    %11849 = vmatprep.subr.bf16.mxu0 0
    %11850 = vmatpush2.bf16.msra.mxu0 %v7708
    %11851 = vmatprep.subr.bf16.mxu0 0
    %11852 = vmatpush2.bf16.msra.mxu0 %v7705
    %11853 = vmatprep.mubr.bf16.mxu0 %v2898
    %11854 = vmatmul.mubr.bf16.gmra.mxu0 %v2777
    %v11855 = vpop.f32.mrf.mxu0
    %v11856 = vadd.f32 %v11759, %v11855
    %v11857 = vpop.f32.mrf.mxu0
    %v11858 = vpop.f32.mrf.mxu0
    %v11859 = vadd.f32 %v11762, %v11858
    %v11860 = vpop.f32.mrf.mxu0
    %11861 = vmatprep.mubr.bf16.mxu0 %v2934
    %11862 = vmatmul.mubr.bf16.gmra.mxu0 %v2780
    %v11863 = vpop.f32.mrf.mxu0
    %v11864 = vadd.f32 %v11767, %v11863
    %v11865 = vpop.f32.mrf.mxu0
    %v11866 = vpop.f32.mrf.mxu0
    %v11867 = vadd.f32 %v11770, %v11866
    %v11868 = vpop.f32.mrf.mxu0
    %11869 = vmatprep.mubr.bf16.mxu0 %v2970
    %11870 = vmatmul.mubr.bf16.gmra.mxu0 %v2783
    %v11871 = vpop.f32.mrf.mxu0
    %v11872 = vadd.f32 %v11775, %v11871
    %v11873 = vpop.f32.mrf.mxu0
    %v11874 = vpop.f32.mrf.mxu0
    %v11875 = vadd.f32 %v11778, %v11874
    %v11876 = vpop.f32.mrf.mxu0
    %11877 = vmatprep.mubr.bf16.mxu0 %v3006
    %11878 = vmatmul.mubr.bf16.gmra.mxu0 %v2786
    %v11879 = vpop.f32.mrf.mxu0
    %v11880 = vadd.f32 %v11783, %v11879
    %v11881 = vpop.f32.mrf.mxu0
    %v11882 = vpop.f32.mrf.mxu0
    %v11883 = vadd.f32 %v11786, %v11882
    %v11884 = vpop.f32.mrf.mxu0
    %11885 = vmatprep.mubr.bf16.mxu0 %v3042
    %11886 = vmatmul.mubr.bf16.gmra.mxu0 %v2789
    %v11887 = vpop.f32.mrf.mxu0
    %v11888 = vadd.f32 %v11791, %v11887
    %v11889 = vpop.f32.mrf.mxu0
    %v11890 = vpop.f32.mrf.mxu0
    %v11891 = vadd.f32 %v11794, %v11890
    %v11892 = vpop.f32.mrf.mxu0
    %11893 = vmatprep.mubr.bf16.mxu0 %v3078
    %11894 = vmatmul.mubr.bf16.gmra.mxu0 %v2792
    %v11895 = vpop.f32.mrf.mxu0
    %v11896 = vadd.f32 %v11799, %v11895
    %v11897 = vpop.f32.mrf.mxu0
    %v11898 = vpop.f32.mrf.mxu0
    %v11899 = vadd.f32 %v11802, %v11898
    %v11900 = vpop.f32.mrf.mxu0
    %11901 = vmatprep.mubr.bf16.mxu0 %v3114
    %11902 = vmatmul.mubr.bf16.gmra.mxu0 %v2795
    %v11903 = vpop.f32.mrf.mxu0
    %v11904 = vadd.f32 %v11807, %v11903
    %v11905 = vpop.f32.mrf.mxu0
    %v11906 = vpop.f32.mrf.mxu0
    %v11907 = vadd.f32 %v11810, %v11906
    %v11908 = vpop.f32.mrf.mxu0
    %11909 = vmatprep.mubr.bf16.mxu0 %v3150
    %11910 = vmatmul.mubr.bf16.gmra.mxu0 %v2798
    %v11911 = vpop.f32.mrf.mxu0
    %v11912 = vadd.f32 %v11815, %v11911
    %v11913 = vpop.f32.mrf.mxu0
    %v11914 = vpop.f32.mrf.mxu0
    %v11915 = vadd.f32 %v11818, %v11914
    %v11916 = vpop.f32.mrf.mxu0
    %11917 = vdwg.mxu0
    %11918 = vmatprep.subr.bf16.mxu0 0
    %11919 = vmatpush1.bf16.msra.mxu0 %v7750
    %11920 = vmatprep.subr.bf16.mxu0 0
    %11921 = vmatpush1.bf16.msra.mxu0 %v7747
    %11922 = vmatprep.subr.bf16.mxu0 0
    %11923 = vmatpush1.bf16.msra.mxu0 %v7744
    %11924 = vmatprep.subr.bf16.mxu0 0
    %11925 = vmatpush1.bf16.msra.mxu0 %v7741
    %11926 = vmatprep.subr.bf16.mxu0 0
    %11927 = vmatpush1.bf16.msra.mxu0 %v7738
    %11928 = vmatprep.subr.bf16.mxu0 0
    %11929 = vmatpush1.bf16.msra.mxu0 %v7735
    %11930 = vmatprep.subr.bf16.mxu0 0
    %11931 = vmatpush1.bf16.msra.mxu0 %v7732
    %11932 = vmatprep.subr.bf16.mxu0 0
    %11933 = vmatpush1.bf16.msra.mxu0 %v7729
    %11934 = vmatprep.subr.bf16.mxu0 0
    %11935 = vmatpush2.bf16.msra.mxu0 %v7774
    %11936 = vmatprep.subr.bf16.mxu0 0
    %11937 = vmatpush2.bf16.msra.mxu0 %v7771
    %11938 = vmatprep.subr.bf16.mxu0 0
    %11939 = vmatpush2.bf16.msra.mxu0 %v7768
    %11940 = vmatprep.subr.bf16.mxu0 0
    %11941 = vmatpush2.bf16.msra.mxu0 %v7765
    %11942 = vmatprep.subr.bf16.mxu0 0
    %11943 = vmatpush2.bf16.msra.mxu0 %v7762
    %11944 = vmatprep.subr.bf16.mxu0 0
    %11945 = vmatpush2.bf16.msra.mxu0 %v7759
    %11946 = vmatprep.subr.bf16.mxu0 0
    %11947 = vmatpush2.bf16.msra.mxu0 %v7756
    %11948 = vmatprep.subr.bf16.mxu0 0
    %11949 = vmatpush2.bf16.msra.mxu0 %v7753
    %11950 = vmatprep.mubr.bf16.mxu0 %v2922
    %11951 = vmatmul.mubr.bf16.gmra.mxu0 %v2910
    %v11952 = vpop.f32.mrf.mxu0
    %v11953 = vadd.f32 %v11856, %v11952
    %v11954 = vpop.f32.mrf.mxu0
    %v11955 = vpop.f32.mrf.mxu0
    %v11956 = vadd.f32 %v11859, %v11955
    %v11957 = vpop.f32.mrf.mxu0
    %11958 = vmatprep.mubr.bf16.mxu0 %v2958
    %11959 = vmatmul.mubr.bf16.gmra.mxu0 %v2946
    %v11960 = vpop.f32.mrf.mxu0
    %v11961 = vadd.f32 %v11864, %v11960
    %v11962 = vpop.f32.mrf.mxu0
    %v11963 = vpop.f32.mrf.mxu0
    %v11964 = vadd.f32 %v11867, %v11963
    %v11965 = vpop.f32.mrf.mxu0
    %11966 = vmatprep.mubr.bf16.mxu0 %v2994
    %11967 = vmatmul.mubr.bf16.gmra.mxu0 %v2982
    %v11968 = vpop.f32.mrf.mxu0
    %v11969 = vadd.f32 %v11872, %v11968
    %v11970 = vpop.f32.mrf.mxu0
    %v11971 = vpop.f32.mrf.mxu0
    %v11972 = vadd.f32 %v11875, %v11971
    %v11973 = vpop.f32.mrf.mxu0
    %11974 = vmatprep.mubr.bf16.mxu0 %v3030
    %11975 = vmatmul.mubr.bf16.gmra.mxu0 %v3018
    %v11976 = vpop.f32.mrf.mxu0
    %v11977 = vadd.f32 %v11880, %v11976
    %v11978 = vpop.f32.mrf.mxu0
    %v11979 = vpop.f32.mrf.mxu0
    %v11980 = vadd.f32 %v11883, %v11979
    %v11981 = vpop.f32.mrf.mxu0
    %11982 = vmatprep.mubr.bf16.mxu0 %v3066
    %11983 = vmatmul.mubr.bf16.gmra.mxu0 %v3054
    %v11984 = vpop.f32.mrf.mxu0
    %v11985 = vadd.f32 %v11888, %v11984
    %v11986 = vpop.f32.mrf.mxu0
    %v11987 = vpop.f32.mrf.mxu0
    %v11988 = vadd.f32 %v11891, %v11987
    %v11989 = vpop.f32.mrf.mxu0
    %11990 = vmatprep.mubr.bf16.mxu0 %v3102
    %11991 = vmatmul.mubr.bf16.gmra.mxu0 %v3090
    %v11992 = vpop.f32.mrf.mxu0
    %v11993 = vadd.f32 %v11896, %v11992
    %v11994 = vpop.f32.mrf.mxu0
    %v11995 = vpop.f32.mrf.mxu0
    %v11996 = vadd.f32 %v11899, %v11995
    %v11997 = vpop.f32.mrf.mxu0
    %11998 = vmatprep.mubr.bf16.mxu0 %v3138
    %11999 = vmatmul.mubr.bf16.gmra.mxu0 %v3126
    %v12000 = vpop.f32.mrf.mxu0
    %v12001 = vadd.f32 %v11904, %v12000
    %v12002 = vpop.f32.mrf.mxu0
    %v12003 = vpop.f32.mrf.mxu0
    %v12004 = vadd.f32 %v11907, %v12003
    %v12005 = vpop.f32.mrf.mxu0
    %12006 = vmatprep.mubr.bf16.mxu0 %v3174
    %12007 = vmatmul.mubr.bf16.gmra.mxu0 %v3162
    %v12008 = vpop.f32.mrf.mxu0
    %v12009 = vadd.f32 %v11912, %v12008
    %v12010 = vpop.f32.mrf.mxu0
    %v12011 = vpop.f32.mrf.mxu0
    %v12012 = vadd.f32 %v11915, %v12011
    %v12013 = vpop.f32.mrf.mxu0
    %12014 = vdwg.mxu0
    %12015 = vmatprep.subr.bf16.mxu0 0
    %12016 = vmatpush1.bf16.msra.mxu0 %v7798
    %12017 = vmatprep.subr.bf16.mxu0 0
    %12018 = vmatpush1.bf16.msra.mxu0 %v7795
    %12019 = vmatprep.subr.bf16.mxu0 0
    %12020 = vmatpush1.bf16.msra.mxu0 %v7792
    %12021 = vmatprep.subr.bf16.mxu0 0
    %12022 = vmatpush1.bf16.msra.mxu0 %v7789
    %12023 = vmatprep.subr.bf16.mxu0 0
    %12024 = vmatpush1.bf16.msra.mxu0 %v7786
    %12025 = vmatprep.subr.bf16.mxu0 0
    %12026 = vmatpush1.bf16.msra.mxu0 %v7783
    %12027 = vmatprep.subr.bf16.mxu0 0
    %12028 = vmatpush1.bf16.msra.mxu0 %v7780
    %12029 = vmatprep.subr.bf16.mxu0 0
    %12030 = vmatpush1.bf16.msra.mxu0 %v7777
    %12031 = vmatprep.subr.bf16.mxu0 0
    %12032 = vmatpush2.bf16.msra.mxu0 %v7822
    %12033 = vmatprep.subr.bf16.mxu0 0
    %12034 = vmatpush2.bf16.msra.mxu0 %v7819
    %12035 = vmatprep.subr.bf16.mxu0 0
    %12036 = vmatpush2.bf16.msra.mxu0 %v7816
    %12037 = vmatprep.subr.bf16.mxu0 0
    %12038 = vmatpush2.bf16.msra.mxu0 %v7813
    %12039 = vmatprep.subr.bf16.mxu0 0
    %12040 = vmatpush2.bf16.msra.mxu0 %v7810
    %12041 = vmatprep.subr.bf16.mxu0 0
    %12042 = vmatpush2.bf16.msra.mxu0 %v7807
    %12043 = vmatprep.subr.bf16.mxu0 0
    %12044 = vmatpush2.bf16.msra.mxu0 %v7804
    %12045 = vmatprep.subr.bf16.mxu0 0
    %12046 = vmatpush2.bf16.msra.mxu0 %v7801
    %12047 = vmatprep.mubr.bf16.mxu0 %v3268
    %12048 = vmatmul.mubr.bf16.gmra.mxu0 %v3265
    %v12049 = vpop.f32.mrf.mxu0
    %v12050 = vadd.f32 %v11953, %v12049
    %v12051 = vpop.f32.mrf.mxu0
    %v12052 = vpop.f32.mrf.mxu0
    %v12053 = vadd.f32 %v11956, %v12052
    %v12054 = vpop.f32.mrf.mxu0
    %12055 = vmatprep.mubr.bf16.mxu0 %v3277
    %12056 = vmatmul.mubr.bf16.gmra.mxu0 %v3274
    %v12057 = vpop.f32.mrf.mxu0
    %v12058 = vadd.f32 %v11961, %v12057
    %v12059 = vpop.f32.mrf.mxu0
    %v12060 = vpop.f32.mrf.mxu0
    %v12061 = vadd.f32 %v11964, %v12060
    %v12062 = vpop.f32.mrf.mxu0
    %12063 = vmatprep.mubr.bf16.mxu0 %v3286
    %12064 = vmatmul.mubr.bf16.gmra.mxu0 %v3283
    %v12065 = vpop.f32.mrf.mxu0
    %v12066 = vadd.f32 %v11969, %v12065
    %v12067 = vpop.f32.mrf.mxu0
    %v12068 = vpop.f32.mrf.mxu0
    %v12069 = vadd.f32 %v11972, %v12068
    %v12070 = vpop.f32.mrf.mxu0
    %12071 = vmatprep.mubr.bf16.mxu0 %v3295
    %12072 = vmatmul.mubr.bf16.gmra.mxu0 %v3292
    %v12073 = vpop.f32.mrf.mxu0
    %v12074 = vadd.f32 %v11977, %v12073
    %v12075 = vpop.f32.mrf.mxu0
    %v12076 = vpop.f32.mrf.mxu0
    %v12077 = vadd.f32 %v11980, %v12076
    %v12078 = vpop.f32.mrf.mxu0
    %12079 = vmatprep.mubr.bf16.mxu0 %v3304
    %12080 = vmatmul.mubr.bf16.gmra.mxu0 %v3301
    %v12081 = vpop.f32.mrf.mxu0
    %v12082 = vadd.f32 %v11985, %v12081
    %v12083 = vpop.f32.mrf.mxu0
    %v12084 = vpop.f32.mrf.mxu0
    %v12085 = vadd.f32 %v11988, %v12084
    %v12086 = vpop.f32.mrf.mxu0
    %12087 = vmatprep.mubr.bf16.mxu0 %v3313
    %12088 = vmatmul.mubr.bf16.gmra.mxu0 %v3310
    %v12089 = vpop.f32.mrf.mxu0
    %v12090 = vadd.f32 %v11993, %v12089
    %v12091 = vpop.f32.mrf.mxu0
    %v12092 = vpop.f32.mrf.mxu0
    %v12093 = vadd.f32 %v11996, %v12092
    %v12094 = vpop.f32.mrf.mxu0
    %12095 = vmatprep.mubr.bf16.mxu0 %v3322
    %12096 = vmatmul.mubr.bf16.gmra.mxu0 %v3319
    %v12097 = vpop.f32.mrf.mxu0
    %v12098 = vadd.f32 %v12001, %v12097
    %v12099 = vpop.f32.mrf.mxu0
    %v12100 = vpop.f32.mrf.mxu0
    %v12101 = vadd.f32 %v12004, %v12100
    %v12102 = vpop.f32.mrf.mxu0
    %12103 = vmatprep.mubr.bf16.mxu0 %v3331
    %12104 = vmatmul.mubr.bf16.gmra.mxu0 %v3328
    %v12105 = vpop.f32.mrf.mxu0
    %v12106 = vadd.f32 %v12009, %v12105
    %v12107 = vpop.f32.mrf.mxu0
    %v12108 = vpop.f32.mrf.mxu0
    %v12109 = vadd.f32 %v12012, %v12108
    %v12110 = vpop.f32.mrf.mxu0
    %12111 = vdwg.mxu0
    %12112 = vmatprep.subr.bf16.mxu0 0
    %12113 = vmatpush1.bf16.msra.mxu0 %v7846
    %12114 = vmatprep.subr.bf16.mxu0 0
    %12115 = vmatpush1.bf16.msra.mxu0 %v7843
    %12116 = vmatprep.subr.bf16.mxu0 0
    %12117 = vmatpush1.bf16.msra.mxu0 %v7840
    %12118 = vmatprep.subr.bf16.mxu0 0
    %12119 = vmatpush1.bf16.msra.mxu0 %v7837
    %12120 = vmatprep.subr.bf16.mxu0 0
    %12121 = vmatpush1.bf16.msra.mxu0 %v7834
    %12122 = vmatprep.subr.bf16.mxu0 0
    %12123 = vmatpush1.bf16.msra.mxu0 %v7831
    %12124 = vmatprep.subr.bf16.mxu0 0
    %12125 = vmatpush1.bf16.msra.mxu0 %v7828
    %12126 = vmatprep.subr.bf16.mxu0 0
    %12127 = vmatpush1.bf16.msra.mxu0 %v7825
    %12128 = vmatprep.subr.bf16.mxu0 0
    %12129 = vmatpush2.bf16.msra.mxu0 0
    %12130 = vmatprep.subr.bf16.mxu0 0
    %12131 = vmatpush2.bf16.msra.mxu0 0
    %12132 = vmatprep.subr.bf16.mxu0 0
    %12133 = vmatpush2.bf16.msra.mxu0 0
    %12134 = vmatprep.subr.bf16.mxu0 0
    %12135 = vmatpush2.bf16.msra.mxu0 0
    %12136 = vmatprep.subr.bf16.mxu0 0
    %12137 = vmatpush2.bf16.msra.mxu0 0
    %12138 = vmatprep.subr.bf16.mxu0 0
    %12139 = vmatpush2.bf16.msra.mxu0 0
    %12140 = vmatprep.subr.bf16.mxu0 0
    %12141 = vmatpush2.bf16.msra.mxu0 0
    %12142 = vmatprep.subr.bf16.mxu0 0
    %12143 = vmatpush2.bf16.msra.mxu0 0
    %12144 = vmatprep.mubr.bf16.mxu0 0
    %12145 = vmatmul.mubr.bf16.gmra.mxu0 %v3271
    %v12146 = vpop.f32.mrf.mxu0
    %v12147 = vadd.f32 %v12050, %v12146
    %v12148 = vpop.f32.mrf.mxu0
    %v12149 = vpop.f32.mrf.mxu0
    %v12150 = vadd.f32 %v12053, %v12149
    %v12151 = vpop.f32.mrf.mxu0
    %12152 = vmatprep.mubr.bf16.mxu0 0
    %12153 = vmatmul.mubr.bf16.gmra.mxu0 %v3280
    %v12154 = vpop.f32.mrf.mxu0
    %v12155 = vadd.f32 %v12058, %v12154
    %v12156 = vpop.f32.mrf.mxu0
    %v12157 = vpop.f32.mrf.mxu0
    %v12158 = vadd.f32 %v12061, %v12157
    %v12159 = vpop.f32.mrf.mxu0
    %12160 = vmatprep.mubr.bf16.mxu0 0
    %12161 = vmatmul.mubr.bf16.gmra.mxu0 %v3289
    %v12162 = vpop.f32.mrf.mxu0
    %v12163 = vadd.f32 %v12066, %v12162
    %v12164 = vpop.f32.mrf.mxu0
    %v12165 = vpop.f32.mrf.mxu0
    %v12166 = vadd.f32 %v12069, %v12165
    %v12167 = vpop.f32.mrf.mxu0
    %12168 = vmatprep.mubr.bf16.mxu0 0
    %12169 = vmatmul.mubr.bf16.gmra.mxu0 %v3298
    %v12170 = vpop.f32.mrf.mxu0
    %v12171 = vadd.f32 %v12074, %v12170
    %v12172 = vpop.f32.mrf.mxu0
    %v12173 = vpop.f32.mrf.mxu0
    %v12174 = vadd.f32 %v12077, %v12173
    %v12175 = vpop.f32.mrf.mxu0
    %12176 = vmatprep.mubr.bf16.mxu0 0
    %12177 = vmatmul.mubr.bf16.gmra.mxu0 %v3307
    %v12178 = vpop.f32.mrf.mxu0
    %v12179 = vadd.f32 %v12082, %v12178
    %v12180 = vpop.f32.mrf.mxu0
    %v12181 = vpop.f32.mrf.mxu0
    %v12182 = vadd.f32 %v12085, %v12181
    %v12183 = vpop.f32.mrf.mxu0
    %12184 = vmatprep.mubr.bf16.mxu0 0
    %12185 = vmatmul.mubr.bf16.gmra.mxu0 %v3316
    %v12186 = vpop.f32.mrf.mxu0
    %v12187 = vadd.f32 %v12090, %v12186
    %v12188 = vpop.f32.mrf.mxu0
    %v12189 = vpop.f32.mrf.mxu0
    %v12190 = vadd.f32 %v12093, %v12189
    %v12191 = vpop.f32.mrf.mxu0
    %12192 = vmatprep.mubr.bf16.mxu0 0
    %12193 = vmatmul.mubr.bf16.gmra.mxu0 %v3325
    %v12194 = vpop.f32.mrf.mxu0
    %v12195 = vadd.f32 %v12098, %v12194
    %v12196 = vpop.f32.mrf.mxu0
    %v12197 = vpop.f32.mrf.mxu0
    %v12198 = vadd.f32 %v12101, %v12197
    %v12199 = vpop.f32.mrf.mxu0
    %12200 = vmatprep.mubr.bf16.mxu0 0
    %12201 = vmatmul.mubr.bf16.gmra.mxu0 %v3334
    %v12202 = vpop.f32.mrf.mxu0
    %v12203 = vadd.f32 %v12106, %v12202
    %v12204 = vpop.f32.mrf.mxu0
    %v12205 = vpop.f32.mrf.mxu0
    %v12206 = vadd.f32 %v12109, %v12205
    %v12207 = vpop.f32.mrf.mxu0
    %12208 = vdwg.mxu0
    %v12209 = vld [vmem:[#allocation2] sm:$0xff]
    %v12210 = vld [vmem:[#allocation2 + $0x8] sm:$0xff]
    %v12211 = vld [vmem:[#allocation2 + $0x10] sm:$0xff]
    %v12212 = vld [vmem:[#allocation2 + $0x18] sm:$0xff]
    %v12213 = vld [vmem:[#allocation2 + $0x20] sm:$0xff]
    %v12214 = vld [vmem:[#allocation2 + $0x28] sm:$0xff]
    %v12215 = vadd.f32 %v10482, %v12209
    %v12216 = vadd.f32 %v10484, %v12210
    %v12217 = vadd.f32 %v12147, %v12211
    %v12218 = vadd.f32 %v10486, %v12212
    %v12219 = vadd.f32 %v10488, %v12213
    %v12220 = vadd.f32 %v12150, %v12214
    %v12221 = vadd.f32 %v10492, %v12209
    %v12222 = vadd.f32 %v10494, %v12210
    %v12223 = vadd.f32 %v12155, %v12211
    %v12224 = vadd.f32 %v10496, %v12212
    %v12225 = vadd.f32 %v10498, %v12213
    %v12226 = vadd.f32 %v12158, %v12214
    %v12227 = vadd.f32 %v10502, %v12209
    %v12228 = vadd.f32 %v10504, %v12210
    %v12229 = vadd.f32 %v12163, %v12211
    %v12230 = vadd.f32 %v10506, %v12212
    %v12231 = vadd.f32 %v10508, %v12213
    %v12232 = vadd.f32 %v12166, %v12214
    %v12233 = vadd.f32 %v10512, %v12209
    %v12234 = vadd.f32 %v10514, %v12210
    %v12235 = vadd.f32 %v12171, %v12211
    %v12236 = vadd.f32 %v10516, %v12212
    %v12237 = vadd.f32 %v10518, %v12213
    %v12238 = vadd.f32 %v12174, %v12214
    %v12239 = vadd.f32 %v10522, %v12209
    %v12240 = vadd.f32 %v10524, %v12210
    %v12241 = vadd.f32 %v12179, %v12211
    %v12242 = vadd.f32 %v10526, %v12212
    %v12243 = vadd.f32 %v10528, %v12213
    %v12244 = vadd.f32 %v12182, %v12214
    %v12245 = vadd.f32 %v10532, %v12209
    %v12246 = vadd.f32 %v10534, %v12210
    %v12247 = vadd.f32 %v12187, %v12211
    %v12248 = vadd.f32 %v10536, %v12212
    %v12249 = vadd.f32 %v10538, %v12213
    %v12250 = vadd.f32 %v12190, %v12214
    %v12251 = vadd.f32 %v10542, %v12209
    %v12252 = vadd.f32 %v10544, %v12210
    %v12253 = vadd.f32 %v12195, %v12211
    %v12254 = vadd.f32 %v10546, %v12212
    %v12255 = vadd.f32 %v10548, %v12213
    %v12256 = vadd.f32 %v12198, %v12214
    %v12257 = vadd.f32 %v10552, %v12209
    %v12258 = vadd.f32 %v10554, %v12210
    %v12259 = vadd.f32 %v12203, %v12211
    %v12260 = vadd.f32 %v10556, %v12212
    %v12261 = vadd.f32 %v10558, %v12213
    %v12262 = vadd.f32 %v12206, %v12214
    %v12263 = vmax.f32 %v12215, %v12218
    %v12264 = vrot.slane %v12263, 4
    %v12265 = vmax.f32 %v12263, %v12264
    %v12266 = vrot.slane %v12265, 2
    %v12267 = vmax.f32 %v12265, %v12266
    %v12268 = vrot.slane %v12267, 1
    %v12269 = vmax.f32 %v12267, %v12268
    %v12270 = vmax.f32 %v12216, %v12219
    %v12271 = vrot.slane %v12270, 4
    %v12272 = vmax.f32 %v12270, %v12271
    %v12273 = vrot.slane %v12272, 2
    %v12274 = vmax.f32 %v12272, %v12273
    %v12275 = vrot.slane %v12274, 1
    %v12276 = vmax.f32 %v12274, %v12275
    %v12277 = vmax.f32 %v12217, %v12220
    %v12278 = vrot.slane %v12277, 4
    %v12279 = vmax.f32 %v12277, %v12278
    %v12280 = vrot.slane %v12279, 2
    %v12281 = vmax.f32 %v12279, %v12280
    %v12282 = vrot.slane %v12281, 1
    %v12283 = vmax.f32 %v12281, %v12282
    %v12284 = vmax.f32 %v12221, %v12224
    %v12285 = vrot.slane %v12284, 4
    %v12286 = vmax.f32 %v12284, %v12285
    %v12287 = vrot.slane %v12286, 2
    %v12288 = vmax.f32 %v12286, %v12287
    %v12289 = vrot.slane %v12288, 1
    %v12290 = vmax.f32 %v12288, %v12289
    %v12291 = vmax.f32 %v12222, %v12225
    %v12292 = vrot.slane %v12291, 4
    %v12293 = vmax.f32 %v12291, %v12292
    %v12294 = vrot.slane %v12293, 2
    %v12295 = vmax.f32 %v12293, %v12294
    %v12296 = vrot.slane %v12295, 1
    %v12297 = vmax.f32 %v12295, %v12296
    %v12298 = vmax.f32 %v12223, %v12226
    %v12299 = vrot.slane %v12298, 4
    %v12300 = vmax.f32 %v12298, %v12299
    %v12301 = vrot.slane %v12300, 2
    %v12302 = vmax.f32 %v12300, %v12301
    %v12303 = vrot.slane %v12302, 1
    %v12304 = vmax.f32 %v12302, %v12303
    %v12305 = vmax.f32 %v12227, %v12230
    %v12306 = vrot.slane %v12305, 4
    %v12307 = vmax.f32 %v12305, %v12306
    %v12308 = vrot.slane %v12307, 2
    %v12309 = vmax.f32 %v12307, %v12308
    %v12310 = vrot.slane %v12309, 1
    %v12311 = vmax.f32 %v12309, %v12310
    %v12312 = vmax.f32 %v12228, %v12231
    %v12313 = vrot.slane %v12312, 4
    %v12314 = vmax.f32 %v12312, %v12313
    %v12315 = vrot.slane %v12314, 2
    %v12316 = vmax.f32 %v12314, %v12315
    %v12317 = vrot.slane %v12316, 1
    %v12318 = vmax.f32 %v12316, %v12317
    %v12319 = vmax.f32 %v12229, %v12232
    %v12320 = vrot.slane %v12319, 4
    %v12321 = vmax.f32 %v12319, %v12320
    %v12322 = vrot.slane %v12321, 2
    %v12323 = vmax.f32 %v12321, %v12322
    %v12324 = vrot.slane %v12323, 1
    %v12325 = vmax.f32 %v12323, %v12324
    %v12326 = vmax.f32 %v12233, %v12236
    %v12327 = vrot.slane %v12326, 4
    %v12328 = vmax.f32 %v12326, %v12327
    %v12329 = vrot.slane %v12328, 2
    %v12330 = vmax.f32 %v12328, %v12329
    %v12331 = vrot.slane %v12330, 1
    %v12332 = vmax.f32 %v12330, %v12331
    %v12333 = vmax.f32 %v12234, %v12237
    %v12334 = vrot.slane %v12333, 4
    %v12335 = vmax.f32 %v12333, %v12334
    %v12336 = vrot.slane %v12335, 2
    %v12337 = vmax.f32 %v12335, %v12336
    %v12338 = vrot.slane %v12337, 1
    %v12339 = vmax.f32 %v12337, %v12338
    %v12340 = vmax.f32 %v12235, %v12238
    %v12341 = vrot.slane %v12340, 4
    %v12342 = vmax.f32 %v12340, %v12341
    %v12343 = vrot.slane %v12342, 2
    %v12344 = vmax.f32 %v12342, %v12343
    %v12345 = vrot.slane %v12344, 1
    %v12346 = vmax.f32 %v12344, %v12345
    %v12347 = vmax.f32 %v12239, %v12242
    %v12348 = vrot.slane %v12347, 4
    %v12349 = vmax.f32 %v12347, %v12348
    %v12350 = vrot.slane %v12349, 2
    %v12351 = vmax.f32 %v12349, %v12350
    %v12352 = vrot.slane %v12351, 1
    %v12353 = vmax.f32 %v12351, %v12352
    %v12354 = vmax.f32 %v12240, %v12243
    %v12355 = vrot.slane %v12354, 4
    %v12356 = vmax.f32 %v12354, %v12355
    %v12357 = vrot.slane %v12356, 2
    %v12358 = vmax.f32 %v12356, %v12357
    %v12359 = vrot.slane %v12358, 1
    %v12360 = vmax.f32 %v12358, %v12359
    %v12361 = vmax.f32 %v12241, %v12244
    %v12362 = vrot.slane %v12361, 4
    %v12363 = vmax.f32 %v12361, %v12362
    %v12364 = vrot.slane %v12363, 2
    %v12365 = vmax.f32 %v12363, %v12364
    %v12366 = vrot.slane %v12365, 1
    %v12367 = vmax.f32 %v12365, %v12366
    %v12368 = vmax.f32 %v12245, %v12248
    %v12369 = vrot.slane %v12368, 4
    %v12370 = vmax.f32 %v12368, %v12369
    %v12371 = vrot.slane %v12370, 2
    %v12372 = vmax.f32 %v12370, %v12371
    %v12373 = vrot.slane %v12372, 1
    %v12374 = vmax.f32 %v12372, %v12373
    %v12375 = vmax.f32 %v12246, %v12249
    %v12376 = vrot.slane %v12375, 4
    %v12377 = vmax.f32 %v12375, %v12376
    %v12378 = vrot.slane %v12377, 2
    %v12379 = vmax.f32 %v12377, %v12378
    %v12380 = vrot.slane %v12379, 1
    %v12381 = vmax.f32 %v12379, %v12380
    %v12382 = vmax.f32 %v12247, %v12250
    %v12383 = vrot.slane %v12382, 4
    %v12384 = vmax.f32 %v12382, %v12383
    %v12385 = vrot.slane %v12384, 2
    %v12386 = vmax.f32 %v12384, %v12385
    %v12387 = vrot.slane %v12386, 1
    %v12388 = vmax.f32 %v12386, %v12387
    %v12389 = vmax.f32 %v12251, %v12254
    %v12390 = vrot.slane %v12389, 4
    %v12391 = vmax.f32 %v12389, %v12390
    %v12392 = vrot.slane %v12391, 2
    %v12393 = vmax.f32 %v12391, %v12392
    %v12394 = vrot.slane %v12393, 1
    %v12395 = vmax.f32 %v12393, %v12394
    %v12396 = vmax.f32 %v12252, %v12255
    %v12397 = vrot.slane %v12396, 4
    %v12398 = vmax.f32 %v12396, %v12397
    %v12399 = vrot.slane %v12398, 2
    %v12400 = vmax.f32 %v12398, %v12399
    %v12401 = vrot.slane %v12400, 1
    %v12402 = vmax.f32 %v12400, %v12401
    %v12403 = vmax.f32 %v12253, %v12256
    %v12404 = vrot.slane %v12403, 4
    %v12405 = vmax.f32 %v12403, %v12404
    %v12406 = vrot.slane %v12405, 2
    %v12407 = vmax.f32 %v12405, %v12406
    %v12408 = vrot.slane %v12407, 1
    %v12409 = vmax.f32 %v12407, %v12408
    %v12410 = vmax.f32 %v12257, %v12260
    %v12411 = vrot.slane %v12410, 4
    %v12412 = vmax.f32 %v12410, %v12411
    %v12413 = vrot.slane %v12412, 2
    %v12414 = vmax.f32 %v12412, %v12413
    %v12415 = vrot.slane %v12414, 1
    %v12416 = vmax.f32 %v12414, %v12415
    %v12417 = vmax.f32 %v12258, %v12261
    %v12418 = vrot.slane %v12417, 4
    %v12419 = vmax.f32 %v12417, %v12418
    %v12420 = vrot.slane %v12419, 2
    %v12421 = vmax.f32 %v12419, %v12420
    %v12422 = vrot.slane %v12421, 1
    %v12423 = vmax.f32 %v12421, %v12422
    %v12424 = vmax.f32 %v12259, %v12262
    %v12425 = vrot.slane %v12424, 4
    %v12426 = vmax.f32 %v12424, %v12425
    %v12427 = vrot.slane %v12426, 2
    %v12428 = vmax.f32 %v12426, %v12427
    %v12429 = vrot.slane %v12428, 1
    %v12430 = vmax.f32 %v12428, %v12429
    %v12431 = vld [vmem:[#allocation7] sm:$0x7]
    %v12433 = vlaneseq
    %v12434 = vshrl.u32 %v12433, 7
    %v12435 = vsub.s32 0, %v12434
    %v12436 = vrot.slane %v12431, %v12435
    %v12437 = vlaneseq
    %v12438 = vshrl.u32 %v12437, 7
    %v12439 = vsub.s32 1, %v12438
    %v12440 = vrot.slane %v12431, %v12439
    %v12441 = vlaneseq
    %v12442 = vshrl.u32 %v12441, 7
    %v12443 = vsub.s32 2, %v12442
    %v12444 = vrot.slane %v12431, %v12443
    %v12448 = vadd.f32 %v12269, %v12436
    %v12449 = vadd.f32 %v12276, %v12440
    %v12450 = vadd.f32 %v12283, %v12444
    %v12451 = vadd.f32 %v12290, %v12436
    %v12452 = vadd.f32 %v12297, %v12440
    %v12453 = vadd.f32 %v12304, %v12444
    %v12454 = vadd.f32 %v12311, %v12436
    %v12455 = vadd.f32 %v12318, %v12440
    %v12456 = vadd.f32 %v12325, %v12444
    %v12457 = vadd.f32 %v12332, %v12436
    %v12458 = vadd.f32 %v12339, %v12440
    %v12459 = vadd.f32 %v12346, %v12444
    %v12460 = vadd.f32 %v12353, %v12436
    %v12461 = vadd.f32 %v12360, %v12440
    %v12462 = vadd.f32 %v12367, %v12444
    %v12463 = vadd.f32 %v12374, %v12436
    %v12464 = vadd.f32 %v12381, %v12440
    %v12465 = vadd.f32 %v12388, %v12444
    %v12466 = vadd.f32 %v12395, %v12436
    %v12467 = vadd.f32 %v12402, %v12440
    %v12468 = vadd.f32 %v12409, %v12444
    %v12469 = vadd.f32 %v12416, %v12436
    %v12470 = vadd.f32 %v12423, %v12440
    %v12471 = vadd.f32 %v12430, %v12444
    %v12472 = vpack.c.bf16 %v12448, %v12448
    %v12473 = vpack.c.bf16 %v12449, %v12449
    %v12474 = vpack.c.bf16 %v12450, %v12450
    %v12475 = vpack.c.bf16 %v12451, %v12451
    %v12476 = vpack.c.bf16 %v12452, %v12452
    %v12477 = vpack.c.bf16 %v12453, %v12453
    %v12478 = vpack.c.bf16 %v12454, %v12454
    %v12479 = vpack.c.bf16 %v12455, %v12455
    %v12480 = vpack.c.bf16 %v12456, %v12456
    %v12481 = vpack.c.bf16 %v12457, %v12457
    %v12482 = vpack.c.bf16 %v12458, %v12458
    %v12483 = vpack.c.bf16 %v12459, %v12459
    %v12484 = vpack.c.bf16 %v12460, %v12460
    %v12485 = vpack.c.bf16 %v12461, %v12461
    %v12486 = vpack.c.bf16 %v12462, %v12462
    %v12487 = vpack.c.bf16 %v12463, %v12463
    %v12488 = vpack.c.bf16 %v12464, %v12464
    %v12489 = vpack.c.bf16 %v12465, %v12465
    %v12490 = vpack.c.bf16 %v12466, %v12466
    %v12491 = vpack.c.bf16 %v12467, %v12467
    %v12492 = vpack.c.bf16 %v12468, %v12468
    %v12493 = vpack.c.bf16 %v12469, %v12469
    %v12494 = vpack.c.bf16 %v12470, %v12470
    %v12495 = vpack.c.bf16 %v12471, %v12471
    %v12496 = vld [vmem:[#allocation8] sm:$0xf]
    %v12497 = vld [vmem:[#allocation8 + $0x4] sm:$0xf]
    %v12498 = vld [vmem:[#allocation8 + $0x8] sm:$0xf]
    %v12499 = vld [vmem:[#allocation8 + $0xc] sm:$0xf]
    %v12500 = vld [vmem:[#allocation8 + $0x10] sm:$0xf]
    %v12501 = vld [vmem:[#allocation8 + $0x14] sm:$0xf]
    %v12502 = vld [vmem:[#allocation8 + $0x18] sm:$0xf]
    %v12503 = vld [vmem:[#allocation8 + $0x1c] sm:$0xf]
    %v12504 = vld [vmem:[#allocation8 + $0x20] sm:$0xf]
    %v12505 = vld [vmem:[#allocation8 + $0x24] sm:$0xf]
    %v12506 = vld [vmem:[#allocation8 + $0x28] sm:$0xf]
    %v12507 = vld [vmem:[#allocation8 + $0x2c] sm:$0xf]
    %v12508 = vld [vmem:[#allocation8 + $0x30] sm:$0xf]
    %v12509 = vld [vmem:[#allocation8 + $0x34] sm:$0xf]
    %v12510 = vld [vmem:[#allocation8 + $0x38] sm:$0xf]
    %v12511 = vld [vmem:[#allocation8 + $0x3c] sm:$0xf]
    %v12512 = vld [vmem:[#allocation8 + $0x40] sm:$0xf]
    %v12513 = vld [vmem:[#allocation8 + $0x44] sm:$0xf]
    %v12514 = vld [vmem:[#allocation8 + $0x48] sm:$0xf]
    %v12515 = vld [vmem:[#allocation8 + $0x4c] sm:$0xf]
    %v12516 = vld [vmem:[#allocation8 + $0x50] sm:$0xf]
    %v12517 = vld [vmem:[#allocation8 + $0x54] sm:$0xf]
    %v12518 = vld [vmem:[#allocation8 + $0x58] sm:$0xf]
    %v12519 = vld [vmem:[#allocation8 + $0x5c] sm:$0xf]
    %v12520 = vld [vmem:[#allocation8 + $0x60] sm:$0xf]
    %v12521 = vld [vmem:[#allocation8 + $0x64] sm:$0xf]
    %v12522 = vld [vmem:[#allocation8 + $0x68] sm:$0xf]
    %v12523 = vld [vmem:[#allocation8 + $0x6c] sm:$0xf]
    %v12524 = vld [vmem:[#allocation8 + $0x70] sm:$0xf]
    %v12525 = vld [vmem:[#allocation8 + $0x74] sm:$0xf]
    %v12526 = vld [vmem:[#allocation8 + $0x78] sm:$0xf]
    %v12527 = vld [vmem:[#allocation8 + $0x7c] sm:$0xf]
    %v12528 = vld [vmem:[#allocation8 + $0x80] sm:$0xf]
    %v12529 = vld [vmem:[#allocation8 + $0x84] sm:$0xf]
    %v12530 = vld [vmem:[#allocation8 + $0x88] sm:$0xf]
    %v12531 = vld [vmem:[#allocation8 + $0x8c] sm:$0xf]
    %v12532 = vld [vmem:[#allocation8 + $0x90] sm:$0xf]
    %v12533 = vld [vmem:[#allocation8 + $0x94] sm:$0xf]
    %v12534 = vld [vmem:[#allocation8 + $0x98] sm:$0xf]
    %v12535 = vld [vmem:[#allocation8 + $0x9c] sm:$0xf]
    %v12536 = vld [vmem:[#allocation8 + $0xa0] sm:$0xf]
    %v12537 = vld [vmem:[#allocation8 + $0xa4] sm:$0xf]
    %v12538 = vld [vmem:[#allocation8 + $0xa8] sm:$0xf]
    %v12539 = vld [vmem:[#allocation8 + $0xac] sm:$0xf]
    %v12540 = vld [vmem:[#allocation8 + $0xb0] sm:$0xf]
    %v12541 = vld [vmem:[#allocation8 + $0xb4] sm:$0xf]
    %v12542 = vld [vmem:[#allocation8 + $0xb8] sm:$0xf]
    %v12543 = vld [vmem:[#allocation8 + $0xbc] sm:$0xf]
    %v12544 = vld [vmem:[#allocation10] sm:$0x1]
    %v12546 = vlaneseq
    %v12547 = vshrl.u32 %v12546, 7
    %v12548 = vsub.s32 0, %v12547
    %v12549 = vrot.slane %v12544, %v12548
    %v12575 = vunpack.c.l.b16 %v12472
    %v12576 = vunpack.c.l.b16 %v12473
    %v12577 = vunpack.c.l.b16 %v12474
    %v12578 = vunpack.c.l.b16 %v12475
    %v12579 = vunpack.c.l.b16 %v12476
    %v12580 = vunpack.c.l.b16 %v12477
    %v12581 = vunpack.c.l.b16 %v12478
    %v12582 = vunpack.c.l.b16 %v12479
    %v12583 = vunpack.c.l.b16 %v12480
    %v12584 = vunpack.c.l.b16 %v12481
    %v12585 = vunpack.c.l.b16 %v12482
    %v12586 = vunpack.c.l.b16 %v12483
    %v12587 = vunpack.c.l.b16 %v12484
    %v12588 = vunpack.c.l.b16 %v12485
    %v12589 = vunpack.c.l.b16 %v12486
    %v12590 = vunpack.c.l.b16 %v12487
    %v12591 = vunpack.c.l.b16 %v12488
    %v12592 = vunpack.c.l.b16 %v12489
    %v12593 = vunpack.c.l.b16 %v12490
    %v12594 = vunpack.c.l.b16 %v12491
    %v12595 = vunpack.c.l.b16 %v12492
    %v12596 = vunpack.c.l.b16 %v12493
    %v12597 = vunpack.c.l.b16 %v12494
    %v12598 = vunpack.c.l.b16 %v12495
    %v12599 = vrot.slane %v12578, 7
    %vm12600 = vcmask 1041409
    %v12601 = vsel %vm12600, %v12599, %v12575
    %v12602 = vrot.slane %v12581, 6
    %vm12603 = vcmask 1042434
    %v12604 = vsel %vm12603, %v12602, %v12601
    %v12605 = vrot.slane %v12584, 5
    %vm12606 = vcmask 1043459
    %v12607 = vsel %vm12606, %v12605, %v12604
    %v12608 = vrot.slane %v12587, 4
    %vm12609 = vcmask 1044484
    %v12610 = vsel %vm12609, %v12608, %v12607
    %v12611 = vrot.slane %v12590, 3
    %vm12612 = vcmask 1045509
    %v12613 = vsel %vm12612, %v12611, %v12610
    %v12614 = vrot.slane %v12593, 2
    %vm12615 = vcmask 1046534
    %v12616 = vsel %vm12615, %v12614, %v12613
    %v12617 = vrot.slane %v12596, 1
    %vm12618 = vcmask 1047559
    %v12619 = vsel %vm12618, %v12617, %v12616
    %v12620 = vrot.slane %v12579, 7
    %v12621 = vsel %vm12600, %v12620, %v12576
    %v12622 = vrot.slane %v12582, 6
    %v12623 = vsel %vm12603, %v12622, %v12621
    %v12624 = vrot.slane %v12585, 5
    %v12625 = vsel %vm12606, %v12624, %v12623
    %v12626 = vrot.slane %v12588, 4
    %v12627 = vsel %vm12609, %v12626, %v12625
    %v12628 = vrot.slane %v12591, 3
    %v12629 = vsel %vm12612, %v12628, %v12627
    %v12630 = vrot.slane %v12594, 2
    %v12631 = vsel %vm12615, %v12630, %v12629
    %v12632 = vrot.slane %v12597, 1
    %v12633 = vsel %vm12618, %v12632, %v12631
    %v12634 = vrot.slane %v12580, 7
    %v12635 = vsel %vm12600, %v12634, %v12577
    %v12636 = vrot.slane %v12583, 6
    %v12637 = vsel %vm12603, %v12636, %v12635
    %v12638 = vrot.slane %v12586, 5
    %v12639 = vsel %vm12606, %v12638, %v12637
    %v12640 = vrot.slane %v12589, 4
    %v12641 = vsel %vm12609, %v12640, %v12639
    %v12642 = vrot.slane %v12592, 3
    %v12643 = vsel %vm12612, %v12642, %v12641
    %v12644 = vrot.slane %v12595, 2
    %v12645 = vsel %vm12615, %v12644, %v12643
    %v12646 = vrot.slane %v12598, 1
    %v12647 = vsel %vm12618, %v12646, %v12645
    %v12648 = vpack.c.b16 %v12619, %v12619
    %v12649 = vpack.c.b16 %v12633, %v12633
    %v12650 = vpack.c.b16 %v12647, %v12647
    %v12702 = vunpack.c.l.b16 %v12496
    %v12703 = vunpack.c.l.b16 %v12497
    %v12704 = vunpack.c.l.b16 %v12498
    %v12705 = vunpack.c.l.b16 %v12499
    %v12706 = vunpack.c.l.b16 %v12500
    %v12707 = vunpack.c.l.b16 %v12501
    %v12708 = vunpack.c.l.b16 %v12502
    %v12709 = vunpack.c.l.b16 %v12503
    %v12710 = vunpack.c.l.b16 %v12504
    %v12711 = vunpack.c.l.b16 %v12505
    %v12712 = vunpack.c.l.b16 %v12506
    %v12713 = vunpack.c.l.b16 %v12507
    %v12714 = vunpack.c.l.b16 %v12508
    %v12715 = vunpack.c.l.b16 %v12509
    %v12716 = vunpack.c.l.b16 %v12510
    %v12717 = vunpack.c.l.b16 %v12511
    %v12718 = vunpack.c.l.b16 %v12512
    %v12719 = vunpack.c.l.b16 %v12513
    %v12720 = vunpack.c.l.b16 %v12514
    %v12721 = vunpack.c.l.b16 %v12515
    %v12722 = vunpack.c.l.b16 %v12516
    %v12723 = vunpack.c.l.b16 %v12517
    %v12724 = vunpack.c.l.b16 %v12518
    %v12725 = vunpack.c.l.b16 %v12519
    %v12726 = vunpack.c.l.b16 %v12520
    %v12727 = vunpack.c.l.b16 %v12521
    %v12728 = vunpack.c.l.b16 %v12522
    %v12729 = vunpack.c.l.b16 %v12523
    %v12730 = vunpack.c.l.b16 %v12524
    %v12731 = vunpack.c.l.b16 %v12525
    %v12732 = vunpack.c.l.b16 %v12526
    %v12733 = vunpack.c.l.b16 %v12527
    %v12734 = vunpack.c.l.b16 %v12528
    %v12735 = vunpack.c.l.b16 %v12529
    %v12736 = vunpack.c.l.b16 %v12530
    %v12737 = vunpack.c.l.b16 %v12531
    %v12738 = vunpack.c.l.b16 %v12532
    %v12739 = vunpack.c.l.b16 %v12533
    %v12740 = vunpack.c.l.b16 %v12534
    %v12741 = vunpack.c.l.b16 %v12535
    %v12742 = vunpack.c.l.b16 %v12536
    %v12743 = vunpack.c.l.b16 %v12537
    %v12744 = vunpack.c.l.b16 %v12538
    %v12745 = vunpack.c.l.b16 %v12539
    %v12746 = vunpack.c.l.b16 %v12540
    %v12747 = vunpack.c.l.b16 %v12541
    %v12748 = vunpack.c.l.b16 %v12542
    %v12749 = vunpack.c.l.b16 %v12543
    %v12750 = vpack.c.b16 %v12703, %v12702
    %v12751 = vpack.c.b16 %v12705, %v12704
    %v12752 = vpack.c.b16 %v12707, %v12706
    %v12753 = vpack.c.b16 %v12709, %v12708
    %v12754 = vpack.c.b16 %v12711, %v12710
    %v12755 = vpack.c.b16 %v12713, %v12712
    %v12756 = vpack.c.b16 %v12715, %v12714
    %v12757 = vpack.c.b16 %v12717, %v12716
    %v12758 = vpack.c.b16 %v12719, %v12718
    %v12759 = vpack.c.b16 %v12721, %v12720
    %v12760 = vpack.c.b16 %v12723, %v12722
    %v12761 = vpack.c.b16 %v12725, %v12724
    %v12762 = vpack.c.b16 %v12727, %v12726
    %v12763 = vpack.c.b16 %v12729, %v12728
    %v12764 = vpack.c.b16 %v12731, %v12730
    %v12765 = vpack.c.b16 %v12733, %v12732
    %v12766 = vpack.c.b16 %v12735, %v12734
    %v12767 = vpack.c.b16 %v12737, %v12736
    %v12768 = vpack.c.b16 %v12739, %v12738
    %v12769 = vpack.c.b16 %v12741, %v12740
    %v12770 = vpack.c.b16 %v12743, %v12742
    %v12771 = vpack.c.b16 %v12745, %v12744
    %v12772 = vpack.c.b16 %v12747, %v12746
    %v12773 = vpack.c.b16 %v12749, %v12748
    %12798 = vmatprep.subr.bf16.mxu0 0
    %12799 = vmatpush1.bf16.msra.mxu0 %v12757
    %12800 = vmatprep.subr.bf16.mxu0 0
    %12801 = vmatpush1.bf16.msra.mxu0 %v12756
    %12802 = vmatprep.subr.bf16.mxu0 0
    %12803 = vmatpush1.bf16.msra.mxu0 %v12755
    %12804 = vmatprep.subr.bf16.mxu0 0
    %12805 = vmatpush1.bf16.msra.mxu0 %v12754
    %12806 = vmatprep.subr.bf16.mxu0 0
    %12807 = vmatpush1.bf16.msra.mxu0 %v12753
    %12808 = vmatprep.subr.bf16.mxu0 0
    %12809 = vmatpush1.bf16.msra.mxu0 %v12752
    %12810 = vmatprep.subr.bf16.mxu0 0
    %12811 = vmatpush1.bf16.msra.mxu0 %v12751
    %12812 = vmatprep.subr.bf16.mxu0 0
    %12813 = vmatpush1.bf16.msra.mxu0 %v12750
    %12814 = vmatprep.subr.bf16.mxu0 0
    %12815 = vmatpush2.bf16.msra.mxu0 %v12765
    %12816 = vmatprep.subr.bf16.mxu0 0
    %12817 = vmatpush2.bf16.msra.mxu0 %v12764
    %12818 = vmatprep.subr.bf16.mxu0 0
    %12819 = vmatpush2.bf16.msra.mxu0 %v12763
    %12820 = vmatprep.subr.bf16.mxu0 0
    %12821 = vmatpush2.bf16.msra.mxu0 %v12762
    %12822 = vmatprep.subr.bf16.mxu0 0
    %12823 = vmatpush2.bf16.msra.mxu0 %v12761
    %12824 = vmatprep.subr.bf16.mxu0 0
    %12825 = vmatpush2.bf16.msra.mxu0 %v12760
    %12826 = vmatprep.subr.bf16.mxu0 0
    %12827 = vmatpush2.bf16.msra.mxu0 %v12759
    %12828 = vmatprep.subr.bf16.mxu0 0
    %12829 = vmatpush2.bf16.msra.mxu0 %v12758
    %12830 = vmatprep.mubr.bf16.mxu0 %v12649
    %12831 = vmatmul.mubr.bf16.gmra.mxu0 %v12648
    %v12832 = vpop.f32.mrf.mxu0
    %v12833 = vadd.f32 %v12549, %v12832
    %v12834 = vpop.f32.mrf.mxu0
    %v12835 = vpop.f32.mrf.mxu0
    %v12836 = vpop.f32.mrf.mxu0
    %12837 = vdwg.mxu0
    %12838 = vmatprep.subr.bf16.mxu0 0
    %12839 = vmatpush1.bf16.msra.mxu0 %v12773
    %12840 = vmatprep.subr.bf16.mxu0 0
    %12841 = vmatpush1.bf16.msra.mxu0 %v12772
    %12842 = vmatprep.subr.bf16.mxu0 0
    %12843 = vmatpush1.bf16.msra.mxu0 %v12771
    %12844 = vmatprep.subr.bf16.mxu0 0
    %12845 = vmatpush1.bf16.msra.mxu0 %v12770
    %12846 = vmatprep.subr.bf16.mxu0 0
    %12847 = vmatpush1.bf16.msra.mxu0 %v12769
    %12848 = vmatprep.subr.bf16.mxu0 0
    %12849 = vmatpush1.bf16.msra.mxu0 %v12768
    %12850 = vmatprep.subr.bf16.mxu0 0
    %12851 = vmatpush1.bf16.msra.mxu0 %v12767
    %12852 = vmatprep.subr.bf16.mxu0 0
    %12853 = vmatpush1.bf16.msra.mxu0 %v12766
    %12854 = vmatprep.subr.bf16.mxu0 0
    %12855 = vmatpush2.bf16.msra.mxu0 0
    %12856 = vmatprep.subr.bf16.mxu0 0
    %12857 = vmatpush2.bf16.msra.mxu0 0
    %12858 = vmatprep.subr.bf16.mxu0 0
    %12859 = vmatpush2.bf16.msra.mxu0 0
    %12860 = vmatprep.subr.bf16.mxu0 0
    %12861 = vmatpush2.bf16.msra.mxu0 0
    %12862 = vmatprep.subr.bf16.mxu0 0
    %12863 = vmatpush2.bf16.msra.mxu0 0
    %12864 = vmatprep.subr.bf16.mxu0 0
    %12865 = vmatpush2.bf16.msra.mxu0 0
    %12866 = vmatprep.subr.bf16.mxu0 0
    %12867 = vmatpush2.bf16.msra.mxu0 0
    %12868 = vmatprep.subr.bf16.mxu0 0
    %12869 = vmatpush2.bf16.msra.mxu0 0
    %12870 = vmatprep.mubr.bf16.mxu0 0
    %12871 = vmatmul.mubr.bf16.gmra.mxu0 %v12650
    %v12872 = vpop.f32.mrf.mxu0
    %v12873 = vadd.f32 %v12833, %v12872
    %v12874 = vpop.f32.mrf.mxu0
    %v12875 = vpop.f32.mrf.mxu0
    %v12876 = vpop.f32.mrf.mxu0
    %12877 = vdwg.mxu0
    %v12878 = vmax.f32 %v12873, 0.0
    %v12879 = vpack.c.bf16 %v12878, %v12878
    %v12880 = vld [vmem:[#allocation11] sm:$0xf]
    %v12881 = vld [vmem:[#allocation11 + $0x4] sm:$0xf]
    %v12882 = vld [vmem:[#allocation11 + $0x8] sm:$0xf]
    %v12883 = vld [vmem:[#allocation11 + $0xc] sm:$0xf]
    %v12884 = vld [vmem:[#allocation11 + $0x10] sm:$0xf]
    %v12885 = vld [vmem:[#allocation11 + $0x14] sm:$0xf]
    %v12886 = vld [vmem:[#allocation11 + $0x18] sm:$0xf]
    %v12887 = vld [vmem:[#allocation11 + $0x1c] sm:$0xf]
    %v12888 = vld [vmem:[#allocation11 + $0x20] sm:$0xf]
    %v12889 = vld [vmem:[#allocation11 + $0x24] sm:$0xf]
    %v12890 = vld [vmem:[#allocation11 + $0x28] sm:$0xf]
    %v12891 = vld [vmem:[#allocation11 + $0x2c] sm:$0xf]
    %v12892 = vld [vmem:[#allocation11 + $0x30] sm:$0xf]
    %v12893 = vld [vmem:[#allocation11 + $0x34] sm:$0xf]
    %v12894 = vld [vmem:[#allocation11 + $0x38] sm:$0xf]
    %v12895 = vld [vmem:[#allocation11 + $0x3c] sm:$0xf]
    %v12896 = vld [vmem:[#allocation13] sm:$0x1]
    %v12898 = vlaneseq
    %v12899 = vshrl.u32 %v12898, 7
    %v12900 = vsub.s32 0, %v12899
    %v12901 = vrot.slane %v12896, %v12900
    %v12919 = vunpack.c.l.b16 %v12880
    %v12920 = vunpack.c.l.b16 %v12881
    %v12921 = vunpack.c.l.b16 %v12882
    %v12922 = vunpack.c.l.b16 %v12883
    %v12923 = vunpack.c.l.b16 %v12884
    %v12924 = vunpack.c.l.b16 %v12885
    %v12925 = vunpack.c.l.b16 %v12886
    %v12926 = vunpack.c.l.b16 %v12887
    %v12927 = vunpack.c.l.b16 %v12888
    %v12928 = vunpack.c.l.b16 %v12889
    %v12929 = vunpack.c.l.b16 %v12890
    %v12930 = vunpack.c.l.b16 %v12891
    %v12931 = vunpack.c.l.b16 %v12892
    %v12932 = vunpack.c.l.b16 %v12893
    %v12933 = vunpack.c.l.b16 %v12894
    %v12934 = vunpack.c.l.b16 %v12895
    %v12935 = vpack.c.b16 %v12920, %v12919
    %v12936 = vpack.c.b16 %v12922, %v12921
    %v12937 = vpack.c.b16 %v12924, %v12923
    %v12938 = vpack.c.b16 %v12926, %v12925
    %v12939 = vpack.c.b16 %v12928, %v12927
    %v12940 = vpack.c.b16 %v12930, %v12929
    %v12941 = vpack.c.b16 %v12932, %v12931
    %v12942 = vpack.c.b16 %v12934, %v12933
    %12951 = vmatprep.subr.bf16.mxu0 0
    %12952 = vmatpush1.bf16.msra.mxu0 %v12942
    %12953 = vmatprep.subr.bf16.mxu0 0
    %12954 = vmatpush1.bf16.msra.mxu0 %v12941
    %12955 = vmatprep.subr.bf16.mxu0 0
    %12956 = vmatpush1.bf16.msra.mxu0 %v12940
    %12957 = vmatprep.subr.bf16.mxu0 0
    %12958 = vmatpush1.bf16.msra.mxu0 %v12939
    %12959 = vmatprep.subr.bf16.mxu0 0
    %12960 = vmatpush1.bf16.msra.mxu0 %v12938
    %12961 = vmatprep.subr.bf16.mxu0 0
    %12962 = vmatpush1.bf16.msra.mxu0 %v12937
    %12963 = vmatprep.subr.bf16.mxu0 0
    %12964 = vmatpush1.bf16.msra.mxu0 %v12936
    %12965 = vmatprep.subr.bf16.mxu0 0
    %12966 = vmatpush1.bf16.msra.mxu0 %v12935
    %12967 = vmatprep.subr.bf16.mxu0 0
    %12968 = vmatpush2.bf16.msra.mxu0 0
    %12969 = vmatprep.subr.bf16.mxu0 0
    %12970 = vmatpush2.bf16.msra.mxu0 0
    %12971 = vmatprep.subr.bf16.mxu0 0
    %12972 = vmatpush2.bf16.msra.mxu0 0
    %12973 = vmatprep.subr.bf16.mxu0 0
    %12974 = vmatpush2.bf16.msra.mxu0 0
    %12975 = vmatprep.subr.bf16.mxu0 0
    %12976 = vmatpush2.bf16.msra.mxu0 0
    %12977 = vmatprep.subr.bf16.mxu0 0
    %12978 = vmatpush2.bf16.msra.mxu0 0
    %12979 = vmatprep.subr.bf16.mxu0 0
    %12980 = vmatpush2.bf16.msra.mxu0 0
    %12981 = vmatprep.subr.bf16.mxu0 0
    %12982 = vmatpush2.bf16.msra.mxu0 0
    %12983 = vmatprep.mubr.bf16.mxu0 0
    %12984 = vmatmul.mubr.bf16.gmra.mxu0 %v12879
    %v12985 = vpop.f32.mrf.mxu0
    %v12986 = vadd.f32 %v12901, %v12985
    %v12987 = vpop.f32.mrf.mxu0
    %v12988 = vpop.f32.mrf.mxu0
    %v12989 = vpop.f32.mrf.mxu0
    %12990 = vdwg.mxu0
    %12991 = vmax.xlane.f32.xlu0 %v12986
    %v12992 = vpop.xlane.xlu0 %12991
    %v12993 = vsub.f32 %v12986, %v12992
    %v12994 = vmul.f32 %v12993, 1.442695
    %v12995 = vpow.pop %v12994
    %12996 = vadd.xlane.f32.xlu0 %v12995
    %v12997 = vpop.xlane.xlu0 %12996
    %v12998 = vrcp.pop %v12997
    %v12999 = vmul.f32 %v12995, %v12998
    %13000 = vst [vmem:[#allocation14] sm:$0xff] %v12999
    // Predicated region
    $region62: #{tpu_custom_call.1} parent=1 // pred_check
      _
    $region63: #{tpu_custom_call.1} parent=1 // pred_check_branch
      %13002 = sbr.rel (0) target = $region65
    $region64: #{tpu_custom_call.1} parent=1 // pred_region
      %s13004 = ssub.s32 128, 128
      %13005 = vsyncadd [#allocation4], %s13004
      %s13007 = sshll.u32 [#allocation14], 4
      %s13008 = int_to_ptr.vmem [resolvable:$true] %s13007
      %13010 = dma.vmem_to_hbm [thread:$0]  %s13008, 128, %s8, [#allocation4]
    $region65: #{tpu_custom_call.1} parent=1 // pred_fallthru
      _
    // Predicated region
    $region66: #{tpu_custom_call.1} parent=1 // pred_check
      _
    $region67: #{tpu_custom_call.1} parent=1 // pred_check_branch
      %13012 = sbr.rel (0) target = $region69
    $region68: #{tpu_custom_call.1} parent=1 // pred_region
      %13013 = dma.done [#allocation4], 128
    $region69: #{tpu_custom_call.1} parent=1 // pred_fallthru
      _
    %13014 = vsyncpa [#allocation3], 1
    %13015 = vsyncpa [#allocation6], 1
    %13016 = vsyncpa [#allocation9], 1
    %13017 = vsyncpa [#allocation12], 1
    %13018 = vsyncpa [#allocation4], 1

</llo_original>
